<compile_context>
chip_gen: v6e
topology: v6e:2x2x1
jax: 0.10.0
libtpu: 0.0.40
codegen_flags: <defaults>
</compile_context>

<pallas_src>
import functools

import jax
import jax.numpy as jnp
from jax.experimental import pallas as pl
from jax.experimental.pallas import tpu as pltpu

HEADS = 8
HEAD_DIM = 32
HIDDEN = HEADS * HEAD_DIM
LN_EPS = 1e-5
_MIB = 1024 * 1024


def _layernorm(x, gamma, beta):
    mu = jnp.mean(x, axis=-1, keepdims=True)
    var = jnp.mean(jnp.square(x - mu), axis=-1, keepdims=True)
    return (x - mu) * jax.lax.rsqrt(var + LN_EPS) * gamma + beta


def _node_attn_kernel(node_ref, edge_ref,
                      ln_n_g_ref, ln_n_b_ref,
                      w_qg_ref, w_kv_ref, bg_ref,
                      wbT_ref, wo_ref, bo_ref,
                      out_ref,
                      qg_sc, kh_sc, vh_sc,
                      *, n_valid):
    tq = out_ref.shape[1]          # query rows handled this grid step
    n = node_ref.shape[1]          # padded sequence length (kv rows)
    qi = pl.program_id(1)

    # ---- once per batch element: node LN + fused K/V and Q/G projections ----
    # (q-tile grid axis is "arbitrary", so qi == 0 always runs first for each b and
    #  the scratch caches below are valid for every following q tile of this b).
    @pl.when(qi == 0)
    def _():
        xn = _layernorm(node_ref[0].astype(jnp.float32),
                        ln_n_g_ref[0], ln_n_b_ref[0])                         # (N, Dn)
        qg_sc[...] = jnp.dot(xn, w_qg_ref[...],
                             preferred_element_type=jnp.float32)              # (N, 2H)
        kv = jnp.dot(xn, w_kv_ref[...],
                     preferred_element_type=jnp.float32)                      # (N, 2H)
        kh_sc[...] = jnp.transpose(kv[:, :HIDDEN].reshape(n, HEADS, HEAD_DIM),
                                   (1, 0, 2)).astype(jnp.bfloat16)            # (H, N, d)
        vh_sc[...] = jnp.transpose(kv[:, HIDDEN:].reshape(n, HEADS, HEAD_DIM),
                                   (1, 0, 2)).astype(jnp.bfloat16)            # (H, N, d)

    # ---- per q-tile: Q / gate sliced from the cached projection ----
    row0 = pl.multiple_of(qi * tq, 8)
    qg = qg_sc[pl.ds(row0, tq), :]                                            # (tq, 2H)
    qh = jnp.transpose(qg[:, :HIDDEN].reshape(tq, HEADS, HEAD_DIM),
                       (1, 0, 2)).astype(jnp.bfloat16)                        # (H, tq, d)
    g = jax.nn.sigmoid(qg[:, HIDDEN:] + bg_ref[0])                            # (tq, H*d)
    gh = jnp.transpose(g.reshape(tq, HEADS, HEAD_DIM), (1, 0, 2))             # (H, tq, d)

    # ---- edge LayerNorm + head-major bias, lane-dense in N ----
    # Re-present the tile as (tq, De, N): the LN elementwise ops run on full 128-lane
    # vregs, mean/var reduce over the De sublanes, and the bias matmul contracts De
    # with a lane-dense N output (no hidden relayout before the MXU op).
    ef = jnp.swapaxes(edge_ref[0].astype(jnp.float32), 1, 2)                  # (tq, De, N)
    mu = jnp.mean(ef, axis=1, keepdims=True)
    var = jnp.mean(jnp.square(ef - mu), axis=1, keepdims=True)
    en = ((ef - mu) * jax.lax.rsqrt(var + LN_EPS)).astype(jnp.bfloat16)       # (tq, De, N)
    bias = jnp.einsum('hc,qcj->hqj', wbT_ref[...].astype(jnp.bfloat16), en,
                      preferred_element_type=jnp.float32)                     # (H, tq, N)

    # ---- head-batched attention (scale already folded into Wq) ----
    logits = jnp.einsum('hqd,hkd->hqk', qh, kh_sc[...],
                        preferred_element_type=jnp.float32) + bias            # (H, tq, N)
    if n_valid < n:   # padded key columns must not enter the softmax
        mask = jax.lax.broadcasted_iota(jnp.int32, (1, 1, n), 2) < n_valid
        logits = jnp.where(mask, logits, -1e30)
    m = jnp.max(logits, axis=-1, keepdims=True)
    p = jnp.exp(logits - m)
    inv_l = 1.0 / jnp.sum(p, axis=-1, keepdims=True)        # exact: one divide per row
    attn = (p * inv_l).astype(jnp.bfloat16)

    o = jnp.einsum('hqk,hkd->hqd', attn, vh_sc[...],
                   preferred_element_type=jnp.float32)                        # (H, tq, d)

    # ---- gate + head-major output projection (no transpose-back of o) ----
    out_h = jnp.einsum('hqd,hdn->hqn', o * gh, wo_ref[...],
                       preferred_element_type=jnp.float32)                    # (H, tq, Dn)
    out_ref[0] = (jnp.sum(out_h, axis=0) + bo_ref[0]).astype(out_ref.dtype)


def _vmem_limit_and_budget():
    """Generation-aware VMEM limit (leaves headroom for compiler scratch) + tile budget."""
    try:
        cap = pltpu.get_tpu_info().vmem_capacity_bytes
    except Exception:                    # unknown backend: assume v7x-sized (64 MiB) VMEM
        cap = 64 * _MIB
    limit = max(min(cap - 20 * _MIB, 100 * _MIB), 24 * _MIB)
    return int(limit), int(limit * 0.8)


def _pick_q_tile(n_pad, node_dim, edge_dim, edge_itemsize, budget):
    """Largest q-tile (multiple of 8, dividing padded N) whose per-step VMEM working
    set fits the budget."""
    def step_bytes(tq):
        e = tq * n_pad * edge_dim
        return (2 * e * edge_itemsize            # double-buffered edge DMA tile
                + 2 * e * 4                      # f32 cast + (tq, De, N) LN copy
                + e * 2                          # bf16 normalized copy (en)
                + 3 * HEADS * tq * n_pad * 4     # live (H, tq, N) f32 slabs (bias/logits/p)
                + 2 * n_pad * node_dim * 4       # node block (double-buffered)
                + n_pad * 2 * HIDDEN * 4         # cached Q/gate projections (scratch)
                + 2 * HEADS * n_pad * HEAD_DIM * 2   # cached head-major K,V (bf16 scratch)
                + 2 * tq * node_dim * 4)         # output tile (double-buffered)

    for cand in range(n_pad, 7, -8):
        if n_pad % cand == 0 and step_bytes(cand) <= budget:
            return cand
    # TODO(synk): tile the kv/j axis with an online (flash-style) softmax so the
    # per-step working set becomes independent of N for very long sequences.
    return 8


def node_attention_with_edge_bias(node, edge, params, *, tq=None):
    """node: (B, N, node_dim) f32; edge: (B, N, N, edge_dim) in f32 or bf16
    (bf16 halves the dominant HBM stream and is the recommended production dtype)."""
    B, N, Dn = node.shape
    De = edge.shape[-1]
    n_pad = -(-N // 8) * 8

    vmem_limit, budget = _vmem_limit_and_budget()
    if tq is None:
        tq = _pick_q_tile(n_pad, Dn, De, edge.dtype.itemsize, budget)
    assert n_pad % tq == 0 and tq % 8 == 0, (N, n_pad, tq)

    if n_pad != N:
        node = jnp.pad(node, ((0, 0), (0, n_pad - N), (0, 0)))
        edge = jnp.pad(edge, ((0, 0), (0, n_pad - N), (0, n_pad - N), (0, 0)))

    scale = HEAD_DIM ** (-0.5)
    # Fuse projections; fold the attention scale into Wq.
    w_qg = jnp.concatenate([params["wq"] * scale, params["wg"]], axis=1)   # (Dn, 2H)
    w_kv = jnp.concatenate([params["wk"], params["wv"]], axis=1)           # (Dn, 2H)
    # Fold the edge-LN gamma into the bias projection, stored head-major (H, De).
    # The beta @ Wb term is constant along the softmax axis and cancels exactly.
    wbT = (params["ln_e_g"][0][:, None] * params["wb"]).T                  # (H, De)
    wo_h = params["wo"].reshape(HEADS, HEAD_DIM, Dn)                       # head-major Wo

    def whole(a):
        zeros = (0,) * a.ndim
        return pl.BlockSpec(a.shape, lambda b, qi: zeros)

    out = pl.pallas_call(
        functools.partial(_node_attn_kernel, n_valid=N),
        out_shape=jax.ShapeDtypeStruct((B, n_pad, Dn), node.dtype),
        grid=(B, n_pad // tq),
        in_specs=[
            pl.BlockSpec((1, n_pad, Dn), lambda b, qi: (b, 0, 0)),           # node (all rows)
            pl.BlockSpec((1, tq, n_pad, De), lambda b, qi: (b, qi, 0, 0)),   # edge (q tile)
            whole(params["ln_n_g"]), whole(params["ln_n_b"]),
            whole(w_qg), whole(w_kv), whole(params["bg"]),
            whole(wbT), whole(wo_h), whole(params["bo"]),
        ],
        out_specs=pl.BlockSpec((1, tq, Dn), lambda b, qi: (b, qi, 0)),
        scratch_shapes=[
            pltpu.VMEM((n_pad, 2 * HIDDEN), jnp.float32),         # cached Q/gate projections
            pltpu.VMEM((HEADS, n_pad, HEAD_DIM), jnp.bfloat16),   # cached head-major K
            pltpu.VMEM((HEADS, n_pad, HEAD_DIM), jnp.bfloat16),   # cached head-major V
        ],
        compiler_params=pltpu.CompilerParams(
            # Batch axis "parallel" (v7x megacore shards it at B >= 2); the q-tile axis
            # must be "arbitrary" so the per-batch K/V cache written at qi == 0 is reused.
            dimension_semantics=("parallel", "arbitrary"),
            vmem_limit_bytes=vmem_limit),
    )(node, edge,
      params["ln_n_g"], params["ln_n_b"],
      w_qg, w_kv, params["bg"],
      wbT, wo_h, params["bo"])
    return out[:, :N, :]


def reference(node, edge, params):
    """Pure-JAX mirror of the PyTorch forward (for correctness check)."""
    B, N, Dn = node.shape
    h, d = HEADS, HEAD_DIM

    def ln(x, gamma, beta):
        mu = jnp.mean(x, -1, keepdims=True)
        var = jnp.mean((x - mu) ** 2, -1, keepdims=True)
        return (x - mu) * jax.lax.rsqrt(var + LN_EPS) * gamma + beta

    x = ln(node, params["ln_n_g"][0], params["ln_n_b"][0])
    y = ln(edge, params["ln_e_g"][0], params["ln_e_b"][0])
    q = x @ params["wq"]
    k = x @ params["wk"]
    v = x @ params["wv"]
    g = jax.nn.sigmoid(x @ params["wg"] + params["bg"][0])
    b = y @ params["wb"]                                  # (B, N, N, h)

    def split(t):  # 'b i (h d) -> b h i d'
        return jnp.transpose(t.reshape(B, N, h, d), (0, 2, 1, 3))

    q, k, v, g = map(split, (q, k, v, g))
    b = jnp.transpose(b, (0, 3, 1, 2))                    # (B, h, N, N)
    logits = jnp.einsum('bhid,bhjd->bhij', q, k) * (d ** -0.5) + b
    attn = jax.nn.softmax(logits, axis=-1)
    res = jnp.einsum('bhij,bhjd->bhid', attn, v) * g      # (B, h, N, d)
    res = jnp.transpose(res, (0, 2, 1, 3)).reshape(B, N, h * d)
    return res @ params["wo"] + params["bo"][0]


def init_params(key, node_dim, edge_dim):
    ks = jax.random.split(key, 8)
    s = lambda fan_in: 1.0 / jnp.sqrt(fan_in)
    return {
        "ln_n_g": jnp.ones((1, node_dim), jnp.float32),
        "ln_n_b": jnp.zeros((1, node_dim), jnp.float32),
        "ln_e_g": jnp.ones((1, edge_dim), jnp.float32),
        "ln_e_b": jnp.zeros((1, edge_dim), jnp.float32),
        "wq": jax.random.normal(ks[0], (node_dim, HIDDEN), jnp.float32) * s(node_dim),
        "wk": jax.random.normal(ks[1], (node_dim, HIDDEN), jnp.float32) * s(node_dim),
        "wv": jax.random.normal(ks[2], (node_dim, HIDDEN), jnp.float32) * s(node_dim),
        "wb": jax.random.normal(ks[3], (edge_dim, HEADS), jnp.float32) * s(edge_dim),
        "wg": jax.random.normal(ks[4], (node_dim, HIDDEN), jnp.float32) * s(node_dim),
        "bg": jax.random.normal(ks[5], (1, HIDDEN), jnp.float32) * 0.1,
        "wo": jax.random.normal(ks[6], (HIDDEN, node_dim), jnp.float32) * s(HIDDEN),
        "bo": jax.random.normal(ks[7], (1, node_dim), jnp.float32) * 0.1,
    }


if __name__ == "__main__":
    key = jax.random.PRNGKey(0)
    k_node, k_edge, k_param = jax.random.split(key, 3)

    B, N, NODE_DIM, EDGE_DIM = 2, 32, 32, 16
    node = jax.random.normal(k_node, (B, N, NODE_DIM), jnp.float32)
    # bf16 edge is the production default (halves the dominant HBM stream); the
    # reference consumes the same bf16-quantized values so the check isolates kernel error.
    edge = jax.random.normal(k_edge, (B, N, N, EDGE_DIM), jnp.float32).astype(jnp.bfloat16)
    params = init_params(k_param, NODE_DIM, EDGE_DIM)

    # tq=16 exercises the (batch, q-tile) grid and the per-batch K/V cache reuse.
    out = jax.block_until_ready(node_attention_with_edge_bias(node, edge, params, tq=16))
    ref = reference(node, edge.astype(jnp.float32), params)
    assert out.shape == (B, N, NODE_DIM)
    err = jnp.max(jnp.abs(out - ref))
    # Tolerance covers bf16 MXU operands (edge/q/k/v/probs) with f32 accumulation;
    # structural errors would be orders of magnitude larger.
    assert jnp.allclose(out, ref, atol=5e-3, rtol=5e-3), f"max err {err}"

    # Non-multiple-of-8 sequence length exercises the padding + key-mask path
    # (and the generation-aware automatic q-tile pick).
    N2 = 28
    node2, edge2 = node[:, :N2], edge[:, :N2, :N2]
    out2 = jax.block_until_ready(node_attention_with_edge_bias(node2, edge2, params))
    ref2 = reference(node2, edge2.astype(jnp.float32), params)
    assert out2.shape == (B, N2, NODE_DIM)
    err2 = jnp.max(jnp.abs(out2 - ref2))
    assert jnp.allclose(out2, ref2, atol=5e-3, rtol=5e-3), f"max err {err2}"

    print("KERNEL_OK")
</pallas_src>

<mosaic_0001>
module attributes {stable_mosaic.version = 11 : i64} {
  func.func @_node_attn_kernel(%arg0: i32, %arg1: i32, %arg2: memref<1x32x32xf32, #tpu.memory_space<vmem>>, %arg3: memref<1x16x32x16xbf16, #tpu.memory_space<vmem>>, %arg4: memref<1x32xf32, #tpu.memory_space<vmem>>, %arg5: memref<1x32xf32, #tpu.memory_space<vmem>>, %arg6: memref<32x512xf32, #tpu.memory_space<vmem>>, %arg7: memref<32x512xf32, #tpu.memory_space<vmem>>, %arg8: memref<1x256xf32, #tpu.memory_space<vmem>>, %arg9: memref<8x16xf32, #tpu.memory_space<vmem>>, %arg10: memref<8x32x32xf32, #tpu.memory_space<vmem>>, %arg11: memref<1x32xf32, #tpu.memory_space<vmem>>, %arg12: memref<1x16x32xf32, #tpu.memory_space<vmem>>, %arg13: memref<32x512xf32, #tpu.memory_space<vmem>>, %arg14: memref<8x32x32xbf16, #tpu.memory_space<vmem>>, %arg15: memref<8x32x32xbf16, #tpu.memory_space<vmem>>) attributes {dimension_semantics = [#tpu.dimension_semantics<parallel>, #tpu.dimension_semantics<arbitrary>], iteration_bounds = array<i64: 2, 2>, scalar_prefetch = 0 : i64, scratch_operands = 3 : i64, tpu.core_type = #tpu.core_type<tc>, window_params = [{transform_indices = @transform_0, window_bounds = array<i64: 1, 32, 32>}, {transform_indices = @transform_1, window_bounds = array<i64: 1, 16, 32, 16>}, {pipeline_mode = #tpu.pipeline_mode<synchronous>, transform_indices = @transform_2, window_bounds = array<i64: 1, 32>}, {pipeline_mode = #tpu.pipeline_mode<synchronous>, transform_indices = @transform_3, window_bounds = array<i64: 1, 32>}, {pipeline_mode = #tpu.pipeline_mode<synchronous>, transform_indices = @transform_4, window_bounds = array<i64: 32, 512>}, {pipeline_mode = #tpu.pipeline_mode<synchronous>, transform_indices = @transform_5, window_bounds = array<i64: 32, 512>}, {pipeline_mode = #tpu.pipeline_mode<synchronous>, transform_indices = @transform_6, window_bounds = array<i64: 1, 256>}, {pipeline_mode = #tpu.pipeline_mode<synchronous>, transform_indices = @transform_7, window_bounds = array<i64: 8, 16>}, {pipeline_mode = #tpu.pipeline_mode<synchronous>, transform_indices = @transform_8, window_bounds = array<i64: 8, 32, 32>}, {pipeline_mode = #tpu.pipeline_mode<synchronous>, transform_indices = @transform_9, window_bounds = array<i64: 1, 32>}, {transform_indices = @transform_10, window_bounds = array<i64: 1, 16, 32>}]} {
    %c0_i32 = arith.constant 0 : i32
    %0 = arith.cmpi eq, %arg1, %c0_i32 : i32
    %1 = arith.extui %0 : i1 to i32
    %c0_i32_0 = arith.constant 0 : i32
    %2 = arith.cmpi ne, %1, %c0_i32_0 : i32
    scf.if %2 {
      %c0_36 = arith.constant 0 : index
      %c0_37 = arith.constant 0 : index
      %c0_38 = arith.constant 0 : index
      %79 = vector.load %arg2[%c0_36, %c0_37, %c0_38] : memref<1x32x32xf32, #tpu.memory_space<vmem>>, vector<1x32x32xf32>
      %80 = vector.shape_cast %79 : vector<1x32x32xf32> to vector<32x32xf32>
      %c0_39 = arith.constant 0 : index
      %c0_40 = arith.constant 0 : index
      %81 = vector.load %arg4[%c0_39, %c0_40] : memref<1x32xf32, #tpu.memory_space<vmem>>, vector<1x32xf32>
      %82 = vector.shape_cast %81 : vector<1x32xf32> to vector<32xf32>
      %c0_41 = arith.constant 0 : index
      %c0_42 = arith.constant 0 : index
      %83 = vector.load %arg5[%c0_41, %c0_42] : memref<1x32xf32, #tpu.memory_space<vmem>>, vector<1x32xf32>
      %84 = vector.shape_cast %83 : vector<1x32xf32> to vector<32xf32>
      %cst_43 = arith.constant dense<0.000000e+00> : vector<32xf32>
      %85 = vector.multi_reduction <add>, %80, %cst_43 [1] : vector<32x32xf32> to vector<32xf32>
      %86 = vector.shape_cast %85 : vector<32xf32> to vector<32x1xf32>
      %cst_44 = arith.constant 3.200000e+01 : f32
      %87 = vector.broadcast %cst_44 : f32 to vector<32x1xf32>
      %88 = arith.divf %86, %87 : vector<32x1xf32>
      %89 = vector.broadcast %88 : vector<32x1xf32> to vector<32x32xf32>
      %90 = arith.subf %80, %89 : vector<32x32xf32>
      %91 = arith.mulf %90, %90 : vector<32x32xf32>
      %cst_45 = arith.constant dense<0.000000e+00> : vector<32xf32>
      %92 = vector.multi_reduction <add>, %91, %cst_45 [1] : vector<32x32xf32> to vector<32xf32>
      %93 = vector.shape_cast %92 : vector<32xf32> to vector<32x1xf32>
      %cst_46 = arith.constant 3.200000e+01 : f32
      %94 = vector.broadcast %cst_46 : f32 to vector<32x1xf32>
      %95 = arith.divf %93, %94 : vector<32x1xf32>
      %96 = vector.broadcast %88 : vector<32x1xf32> to vector<32x32xf32>
      %97 = arith.subf %80, %96 : vector<32x32xf32>
      %cst_47 = arith.constant 9.99999974E-6 : f32
      %98 = vector.broadcast %cst_47 : f32 to vector<32x1xf32>
      %99 = arith.addf %95, %98 : vector<32x1xf32>
      %100 = math.rsqrt %99 : vector<32x1xf32>
      %101 = vector.broadcast %100 : vector<32x1xf32> to vector<32x32xf32>
      %102 = arith.mulf %97, %101 : vector<32x32xf32>
      %103 = vector.shape_cast %82 : vector<32xf32> to vector<1x32xf32>
      %104 = vector.broadcast %103 : vector<1x32xf32> to vector<32x32xf32>
      %105 = arith.mulf %102, %104 : vector<32x32xf32>
      %106 = vector.shape_cast %84 : vector<32xf32> to vector<1x32xf32>
      %107 = vector.broadcast %106 : vector<1x32xf32> to vector<32x32xf32>
      %108 = arith.addf %105, %107 : vector<32x32xf32>
      %c0_48 = arith.constant 0 : index
      %c0_49 = arith.constant 0 : index
      %109 = vector.load %arg6[%c0_48, %c0_49] : memref<32x512xf32, #tpu.memory_space<vmem>>, vector<32x512xf32>
      %cst_50 = arith.constant dense<0.000000e+00> : vector<32x512xf32>
      %110 = tpu.matmul %108, %109, %cst_50 {dimension_numbers = #tpu.dot_dimension_numbers<[1], [0], [0], [1], [0, 0, 1, 1], [], []>} : vector<32x32xf32>, vector<32x512xf32>, vector<32x512xf32> -> vector<32x512xf32>
      %c0_51 = arith.constant 0 : index
      %c0_52 = arith.constant 0 : index
      %111 = vector.load %arg13[%c0_51, %c0_52] : memref<32x512xf32, #tpu.memory_space<vmem>>, vector<32x512xf32>
      tpu.vector_store %arg13[%c0_51, %c0_52], %110 {strides = array<i32>} : memref<32x512xf32, #tpu.memory_space<vmem>>, vector<32x512xf32>,
      %c0_53 = arith.constant 0 : index
      %c0_54 = arith.constant 0 : index
      %112 = vector.load %arg7[%c0_53, %c0_54] : memref<32x512xf32, #tpu.memory_space<vmem>>, vector<32x512xf32>
      %cst_55 = arith.constant dense<0.000000e+00> : vector<32x512xf32>
      %113 = tpu.matmul %108, %112, %cst_55 {dimension_numbers = #tpu.dot_dimension_numbers<[1], [0], [0], [1], [0, 0, 1, 1], [], []>} : vector<32x32xf32>, vector<32x512xf32>, vector<32x512xf32> -> vector<32x512xf32>
      %114 = vector.extract_strided_slice %113 {offsets = [0, 0], sizes = [32, 256], strides = [1, 1]} : vector<32x512xf32> to vector<32x256xf32>
      %115 = vector.shape_cast %114 : vector<32x256xf32> to vector<32x8x32xf32>
      %116 = tpu.transpose %115, [1, 0, 2] : vector<32x8x32xf32> -> vector<8x32x32xf32>
      %117 = arith.truncf %116 : vector<8x32x32xf32> to vector<8x32x32xbf16>
      %c0_56 = arith.constant 0 : index
      %c0_57 = arith.constant 0 : index
      %c0_58 = arith.constant 0 : index
      %118 = vector.load %arg14[%c0_56, %c0_57, %c0_58] : memref<8x32x32xbf16, #tpu.memory_space<vmem>>, vector<8x32x32xbf16>
      tpu.vector_store %arg14[%c0_56, %c0_57, %c0_58], %117 {strides = array<i32>} : memref<8x32x32xbf16, #tpu.memory_space<vmem>>, vector<8x32x32xbf16>,
      %119 = vector.extract_strided_slice %113 {offsets = [0, 256], sizes = [32, 256], strides = [1, 1]} : vector<32x512xf32> to vector<32x256xf32>
      %120 = vector.shape_cast %119 : vector<32x256xf32> to vector<32x8x32xf32>
      %121 = tpu.transpose %120, [1, 0, 2] : vector<32x8x32xf32> -> vector<8x32x32xf32>
      %122 = arith.truncf %121 : vector<8x32x32xf32> to vector<8x32x32xbf16>
      %c0_59 = arith.constant 0 : index
      %c0_60 = arith.constant 0 : index
      %c0_61 = arith.constant 0 : index
      %123 = vector.load %arg15[%c0_59, %c0_60, %c0_61] : memref<8x32x32xbf16, #tpu.memory_space<vmem>>, vector<8x32x32xbf16>
      tpu.vector_store %arg15[%c0_59, %c0_60, %c0_61], %122 {strides = array<i32>} : memref<8x32x32xbf16, #tpu.memory_space<vmem>>, vector<8x32x32xbf16>,
    } else {
    }
    %c16_i32 = arith.constant 16 : i32
    %3 = arith.muli %arg1, %c16_i32 : i32
    %4 = tpu.assume_multiple %3, 8 : i32
    %5 = arith.index_cast %4 : i32 to index
    %c0 = arith.constant 0 : index
    %6 = vector.load %arg13[%5, %c0] : memref<32x512xf32, #tpu.memory_space<vmem>>, vector<16x512xf32>
    %7 = vector.extract_strided_slice %6 {offsets = [0, 0], sizes = [16, 256], strides = [1, 1]} : vector<16x512xf32> to vector<16x256xf32>
    %8 = vector.shape_cast %7 : vector<16x256xf32> to vector<16x8x32xf32>
    %9 = tpu.transpose %8, [1, 0, 2] : vector<16x8x32xf32> -> vector<8x16x32xf32>
    %10 = arith.truncf %9 : vector<8x16x32xf32> to vector<8x16x32xbf16>
    %11 = vector.extract_strided_slice %6 {offsets = [0, 256], sizes = [16, 256], strides = [1, 1]} : vector<16x512xf32> to vector<16x256xf32>
    %c0_1 = arith.constant 0 : index
    %c0_2 = arith.constant 0 : index
    %12 = vector.load %arg8[%c0_1, %c0_2] : memref<1x256xf32, #tpu.memory_space<vmem>>, vector<1x256xf32>
    %13 = vector.shape_cast %12 : vector<1x256xf32> to vector<256xf32>
    %14 = vector.shape_cast %13 : vector<256xf32> to vector<1x256xf32>
    %15 = vector.broadcast %14 : vector<1x256xf32> to vector<16x256xf32>
    %16 = arith.addf %11, %15 : vector<16x256xf32>
    %17 = arith.negf %16 : vector<16x256xf32>
    %18 = math.exp %17 : vector<16x256xf32>
    %cst = arith.constant 1.000000e+00 : f32
    %19 = vector.broadcast %cst : f32 to vector<16x256xf32>
    %20 = arith.addf %19, %18 : vector<16x256xf32>
    %21 = arith.divf %19, %20 : vector<16x256xf32>
    %22 = vector.shape_cast %21 : vector<16x256xf32> to vector<16x8x32xf32>
    %23 = tpu.transpose %22, [1, 0, 2] : vector<16x8x32xf32> -> vector<8x16x32xf32>
    %c0_3 = arith.constant 0 : index
    %c0_4 = arith.constant 0 : index
    %c0_5 = arith.constant 0 : index
    %c0_6 = arith.constant 0 : index
    %24 = vector.load %arg3[%c0_3, %c0_4, %c0_5, %c0_6] : memref<1x16x32x16xbf16, #tpu.memory_space<vmem>>, vector<1x16x32x16xbf16>
    %25 = vector.shape_cast %24 : vector<1x16x32x16xbf16> to vector<16x32x16xbf16>
    %26 = arith.extf %25 : vector<16x32x16xbf16> to vector<16x32x16xf32>
    %27 = tpu.transpose %26, [0, 2, 1] : vector<16x32x16xf32> -> vector<16x16x32xf32>
    %cst_7 = arith.constant dense<0.000000e+00> : vector<16x32xf32>
    %28 = vector.multi_reduction <add>, %27, %cst_7 [1] : vector<16x16x32xf32> to vector<16x32xf32>
    %29 = vector.shape_cast %28 : vector<16x32xf32> to vector<16x1x32xf32>
    %cst_8 = arith.constant 1.600000e+01 : f32
    %30 = vector.broadcast %cst_8 : f32 to vector<16x1x32xf32>
    %31 = arith.divf %29, %30 : vector<16x1x32xf32>
    %32 = vector.broadcast %31 : vector<16x1x32xf32> to vector<16x16x32xf32>
    %33 = arith.subf %27, %32 : vector<16x16x32xf32>
    %34 = arith.mulf %33, %33 : vector<16x16x32xf32>
    %cst_9 = arith.constant dense<0.000000e+00> : vector<16x32xf32>
    %35 = vector.multi_reduction <add>, %34, %cst_9 [1] : vector<16x16x32xf32> to vector<16x32xf32>
    %36 = vector.shape_cast %35 : vector<16x32xf32> to vector<16x1x32xf32>
    %cst_10 = arith.constant 1.600000e+01 : f32
    %37 = vector.broadcast %cst_10 : f32 to vector<16x1x32xf32>
    %38 = arith.divf %36, %37 : vector<16x1x32xf32>
    %39 = vector.broadcast %31 : vector<16x1x32xf32> to vector<16x16x32xf32>
    %40 = arith.subf %27, %39 : vector<16x16x32xf32>
    %cst_11 = arith.constant 9.99999974E-6 : f32
    %41 = vector.broadcast %cst_11 : f32 to vector<16x1x32xf32>
    %42 = arith.addf %38, %41 : vector<16x1x32xf32>
    %43 = math.rsqrt %42 : vector<16x1x32xf32>
    %44 = vector.broadcast %43 : vector<16x1x32xf32> to vector<16x16x32xf32>
    %45 = arith.mulf %40, %44 : vector<16x16x32xf32>
    %46 = arith.truncf %45 : vector<16x16x32xf32> to vector<16x16x32xbf16>
    %c0_12 = arith.constant 0 : index
    %c0_13 = arith.constant 0 : index
    %47 = vector.load %arg9[%c0_12, %c0_13] : memref<8x16xf32, #tpu.memory_space<vmem>>, vector<8x16xf32>
    %48 = arith.truncf %47 : vector<8x16xf32> to vector<8x16xbf16>
    "tpu.trace_start"() <{level = 10 : i32, message = "hc,qcj->hqj"}> : () -> ()
    %cst_14 = arith.constant dense<0.000000e+00> : vector<8x16x32xf32>
    %49 = tpu.matmul %48, %46, %cst_14 {dimension_numbers = #tpu.dot_dimension_numbers<[1], [1], [0], [0, 2], [0, 0, 1, 0, 1, 2], [], []>} : vector<8x16xbf16>, vector<16x16x32xbf16>, vector<8x16x32xf32> -> vector<8x16x32xf32>
    "tpu.trace_stop"() : () -> ()
    %c0_15 = arith.constant 0 : index
    %c0_16 = arith.constant 0 : index
    %c0_17 = arith.constant 0 : index
    %50 = vector.load %arg14[%c0_15, %c0_16, %c0_17] : memref<8x32x32xbf16, #tpu.memory_space<vmem>>, vector<8x32x32xbf16>
    "tpu.trace_start"() <{level = 10 : i32, message = "hqd,hkd->hqk"}> : () -> ()
    %cst_18 = arith.constant dense<0.000000e+00> : vector<8x16x32xf32>
    %51 = tpu.matmul %10, %50, %cst_18 {dimension_numbers = #tpu.dot_dimension_numbers<[2], [2], [1], [1], [0, 0, 0, 1, 1, 1], [0], [0]>} : vector<8x16x32xbf16>, vector<8x32x32xbf16>, vector<8x16x32xf32> -> vector<8x16x32xf32>
    "tpu.trace_stop"() : () -> ()
    %52 = arith.addf %51, %49 : vector<8x16x32xf32>
    %cst_19 = arith.constant dense<0xFF800000> : vector<8x16xf32>
    %53 = vector.multi_reduction <maximumf>, %52, %cst_19 [2] : vector<8x16x32xf32> to vector<8x16xf32>
    %54 = vector.shape_cast %53 : vector<8x16xf32> to vector<8x16x1xf32>
    %55 = vector.broadcast %54 : vector<8x16x1xf32> to vector<8x16x32xf32>
    %56 = arith.subf %52, %55 : vector<8x16x32xf32>
    %57 = math.exp %56 : vector<8x16x32xf32>
    %cst_20 = arith.constant dense<0.000000e+00> : vector<8x16xf32>
    %58 = vector.multi_reduction <add>, %57, %cst_20 [2] : vector<8x16x32xf32> to vector<8x16xf32>
    %59 = vector.shape_cast %58 : vector<8x16xf32> to vector<8x16x1xf32>
    %cst_21 = arith.constant 1.000000e+00 : f32
    %60 = vector.broadcast %cst_21 : f32 to vector<8x16x1xf32>
    %61 = arith.divf %60, %59 : vector<8x16x1xf32>
    %62 = vector.broadcast %61 : vector<8x16x1xf32> to vector<8x16x32xf32>
    %63 = arith.mulf %57, %62 : vector<8x16x32xf32>
    %64 = arith.truncf %63 : vector<8x16x32xf32> to vector<8x16x32xbf16>
    %c0_22 = arith.constant 0 : index
    %c0_23 = arith.constant 0 : index
    %c0_24 = arith.constant 0 : index
    %65 = vector.load %arg15[%c0_22, %c0_23, %c0_24] : memref<8x32x32xbf16, #tpu.memory_space<vmem>>, vector<8x32x32xbf16>
    "tpu.trace_start"() <{level = 10 : i32, message = "hqk,hkd->hqd"}> : () -> ()
    %cst_25 = arith.constant dense<0.000000e+00> : vector<8x16x32xf32>
    %66 = tpu.matmul %64, %65, %cst_25 {dimension_numbers = #tpu.dot_dimension_numbers<[2], [1], [1], [2], [0, 0, 0, 1, 1, 2], [0], [0]>} : vector<8x16x32xbf16>, vector<8x32x32xbf16>, vector<8x16x32xf32> -> vector<8x16x32xf32>
    "tpu.trace_stop"() : () -> ()
    %67 = arith.mulf %66, %23 : vector<8x16x32xf32>
    %c0_26 = arith.constant 0 : index
    %c0_27 = arith.constant 0 : index
    %c0_28 = arith.constant 0 : index
    %68 = vector.load %arg10[%c0_26, %c0_27, %c0_28] : memref<8x32x32xf32, #tpu.memory_space<vmem>>, vector<8x32x32xf32>
    "tpu.trace_start"() <{level = 10 : i32, message = "hqd,hdn->hqn"}> : () -> ()
    %cst_29 = arith.constant dense<0.000000e+00> : vector<8x16x32xf32>
    %69 = tpu.matmul %67, %68, %cst_29 {dimension_numbers = #tpu.dot_dimension_numbers<[2], [1], [1], [2], [0, 0, 0, 1, 1, 2], [0], [0]>} : vector<8x16x32xf32>, vector<8x32x32xf32>, vector<8x16x32xf32> -> vector<8x16x32xf32>
    "tpu.trace_stop"() : () -> ()
    %cst_30 = arith.constant dense<0.000000e+00> : vector<16x32xf32>
    %70 = vector.multi_reduction <add>, %69, %cst_30 [0] : vector<8x16x32xf32> to vector<16x32xf32>
    %c0_31 = arith.constant 0 : index
    %c0_32 = arith.constant 0 : index
    %71 = vector.load %arg11[%c0_31, %c0_32] : memref<1x32xf32, #tpu.memory_space<vmem>>, vector<1x32xf32>
    %72 = vector.shape_cast %71 : vector<1x32xf32> to vector<32xf32>
    %73 = vector.shape_cast %72 : vector<32xf32> to vector<1x32xf32>
    %74 = vector.broadcast %73 : vector<1x32xf32> to vector<16x32xf32>
    %75 = arith.addf %70, %74 : vector<16x32xf32>
    %c0_33 = arith.constant 0 : index
    %c0_34 = arith.constant 0 : index
    %c0_35 = arith.constant 0 : index
    %76 = vector.load %arg12[%c0_33, %c0_34, %c0_35] : memref<1x16x32xf32, #tpu.memory_space<vmem>>, vector<1x16x32xf32>
    %77 = vector.shape_cast %76 : vector<1x16x32xf32> to vector<16x32xf32>
    %78 = vector.shape_cast %75 : vector<16x32xf32> to vector<1x16x32xf32>
    tpu.vector_store %arg12[%c0_33, %c0_34, %c0_35], %78 {strides = array<i32>} : memref<1x16x32xf32, #tpu.memory_space<vmem>>, vector<1x16x32xf32>,
    return
  }
  func.func @transform_0(%arg0: i32, %arg1: i32) -> (i32, i32, i32) {
    %c0_i32 = arith.constant 0 : i32
    %c0_i32_0 = arith.constant 0 : i32
    %c0_i32_1 = arith.constant 0 : i32
    return %arg0, %c0_i32, %c0_i32_0 : i32, i32, i32
  }
  func.func @transform_1(%arg0: i32, %arg1: i32) -> (i32, i32, i32, i32) {
    %c0_i32 = arith.constant 0 : i32
    %c0_i32_0 = arith.constant 0 : i32
    %c0_i32_1 = arith.constant 0 : i32
    return %arg0, %arg1, %c0_i32, %c0_i32_0 : i32, i32, i32, i32
  }
  func.func @transform_2(%arg0: i32, %arg1: i32) -> (i32, i32) {
    %c0_i32 = arith.constant 0 : i32
    %c0_i32_0 = arith.constant 0 : i32
    %c0_i32_1 = arith.constant 0 : i32
    return %c0_i32, %c0_i32_0 : i32, i32
  }
  func.func @transform_3(%arg0: i32, %arg1: i32) -> (i32, i32) {
    %c0_i32 = arith.constant 0 : i32
    %c0_i32_0 = arith.constant 0 : i32
    %c0_i32_1 = arith.constant 0 : i32
    return %c0_i32, %c0_i32_0 : i32, i32
  }
  func.func @transform_4(%arg0: i32, %arg1: i32) -> (i32, i32) {
    %c0_i32 = arith.constant 0 : i32
    %c0_i32_0 = arith.constant 0 : i32
    %c0_i32_1 = arith.constant 0 : i32
    return %c0_i32, %c0_i32_0 : i32, i32
  }
  func.func @transform_5(%arg0: i32, %arg1: i32) -> (i32, i32) {
    %c0_i32 = arith.constant 0 : i32
    %c0_i32_0 = arith.constant 0 : i32
    %c0_i32_1 = arith.constant 0 : i32
    return %c0_i32, %c0_i32_0 : i32, i32
  }
  func.func @transform_6(%arg0: i32, %arg1: i32) -> (i32, i32) {
    %c0_i32 = arith.constant 0 : i32
    %c0_i32_0 = arith.constant 0 : i32
    %c0_i32_1 = arith.constant 0 : i32
    return %c0_i32, %c0_i32_0 : i32, i32
  }
  func.func @transform_7(%arg0: i32, %arg1: i32) -> (i32, i32) {
    %c0_i32 = arith.constant 0 : i32
    %c0_i32_0 = arith.constant 0 : i32
    %c0_i32_1 = arith.constant 0 : i32
    return %c0_i32, %c0_i32_0 : i32, i32
  }
  func.func @transform_8(%arg0: i32, %arg1: i32) -> (i32, i32, i32) {
    %c0_i32 = arith.constant 0 : i32
    %c0_i32_0 = arith.constant 0 : i32
    %c0_i32_1 = arith.constant 0 : i32
    %c0_i32_2 = arith.constant 0 : i32
    return %c0_i32, %c0_i32_0, %c0_i32_1 : i32, i32, i32
  }
  func.func @transform_9(%arg0: i32, %arg1: i32) -> (i32, i32) {
    %c0_i32 = arith.constant 0 : i32
    %c0_i32_0 = arith.constant 0 : i32
    %c0_i32_1 = arith.constant 0 : i32
    return %c0_i32, %c0_i32_0 : i32, i32
  }
  func.func @transform_10(%arg0: i32, %arg1: i32) -> (i32, i32, i32) {
    %c0_i32 = arith.constant 0 : i32
    %c0_i32_0 = arith.constant 0 : i32
    return %arg0, %arg1, %c0_i32 : i32, i32, i32
  }
}

</mosaic_0001>

<llo_original>
// kernel: tpu_custom_call.1
$region0: #{tpu_custom_call.1}
  #allocation0 [shape = 'u32[]', space=smem, size = 0x4, offset = 0x4, fixed_abs, tag = 'smem constant byte address 0x4 - core index']
  #allocation1 [shape = 'u32[144,128]{1,0:T(1,128)}', space=vmem, size = 0x12000, scoped, tag = 'internal scratch']
  #allocation2 [shape = 'f32[32,512]{1,0:T(8,128)}', space=vmem, size = 0x10000, scoped, tag = 'scratch operand']
  #allocation3 [shape = 'bf16[8,32,32]{2,1,0:T(8,128)(2,1)}', space=vmem, size = 0x10000, scoped, tag = 'scratch operand']
  #allocation4 [shape = 'bf16[8,32,32]{2,1,0:T(8,128)(2,1)}', space=vmem, size = 0x10000, scoped, tag = 'scratch operand']
  %s0 = inlined_call_operand.vmem [shape: f32[2,32,32], index: 0, kind: input, shape index: {}]
  %s1 = inlined_call_operand.vmem [shape: bf16[2,32,32,16], index: 1, kind: input, shape index: {}]
  %s2 = inlined_call_operand.vmem [shape: f32[1,32], index: 2, kind: input, shape index: {}]
  %s3 = inlined_call_operand.vmem [shape: f32[1,32], index: 3, kind: input, shape index: {}]
  %s4 = inlined_call_operand.vmem [shape: f32[32,512], index: 4, kind: input, shape index: {}]
  %s5 = inlined_call_operand.vmem [shape: f32[32,512], index: 5, kind: input, shape index: {}]
  %s6 = inlined_call_operand.vmem [shape: f32[1,256], index: 6, kind: input, shape index: {}]
  %s7 = inlined_call_operand.vmem [shape: f32[8,16], index: 7, kind: input, shape index: {}]
  %s8 = inlined_call_operand.vmem [shape: f32[8,32,32], index: 8, kind: input, shape index: {}]
  %s9 = inlined_call_operand.vmem [shape: f32[1,32], index: 9, kind: input, shape index: {}]
  %s10 = inlined_call_operand.hbm [shape: f32[2,32,32], index: 10, kind: output, shape index: {}]
  %s11 = sld [smem:[#allocation0]]
  $region77: #{tpu_custom_call.1} parent=0
    _
  %s13 = ssub.s32 1, %s11
  %s14 = scalar_select 0, %s13, %s11
  $region1: #{tpu_custom_call.1} parent=0
    #allocation5 [shape = 'u8[16384]{0}', space=vmem, size = 0x4000, scoped, tag = 'output window, operand 0']
    #allocation6 [shape = 's32[2]{0}', space=sflag, size = 0x8, scoped, tag = 'scoped memory for tpu_custom_call.1']
    %15 = vsyncpa [#allocation6], 0
    %s16 = scalar_lea.sflag [#allocation6], 1
    %17 = vsyncpa %s16, 0
    loop: start=0, step=1, limit=6
    $region2: #{tpu_custom_call.1} parent=1 // loop_pre_header
      _
    $region3: #{tpu_custom_call.1} parent=1 // loop_header
      %s19 = sphi 0, %s23
      %p20 = scmp.ge.s32.totalorder %s19, 6
      %s26 = sphi 0, %s38
      %s27 = sphi 0, %s34
      %s28 = sphi 0, %s26
      %s29 = sphi 0, %s27
      %s30 = sphi 0, %s28
      %s31 = sphi 0, %s29
      %s41 = sphi 0, %s43
      %s44 = sphi 0, %s41
      %s45 = sphi 0, %s44
      %s61 = sphi 0, %s45
      %s69 = sphi 0, %s71
      %s72 = sphi 0, %s69
      %s73 = sphi 0, %s72
      %s89 = sphi 0, %s73
      %s93 = sphi 0, %s93
      %s95 = sphi 0, %s93
      %s96 = sphi 0, %s95
      %s110 = sphi 0, %s96
      %s114 = sphi 0, %s114
      %s116 = sphi 0, %s114
      %s117 = sphi 0, %s116
      %s131 = sphi 0, %s117
      %s135 = sphi 0, %s135
      %s137 = sphi 0, %s135
      %s138 = sphi 0, %s137
      %s152 = sphi 0, %s138
      %s156 = sphi 0, %s156
      %s158 = sphi 0, %s156
      %s159 = sphi 0, %s158
      %s173 = sphi 0, %s159
      %s177 = sphi 0, %s177
      %s179 = sphi 0, %s177
      %s180 = sphi 0, %s179
      %s194 = sphi 0, %s180
      %s198 = sphi 0, %s198
      %s200 = sphi 0, %s198
      %s201 = sphi 0, %s200
      %s215 = sphi 0, %s201
      %s219 = sphi 0, %s219
      %s221 = sphi 0, %s219
      %s222 = sphi 0, %s221
      %s236 = sphi 0, %s222
      %s240 = sphi 0, %s240
      %s242 = sphi 0, %s240
      %s243 = sphi 0, %s242
      %s257 = sphi 0, %s243
      %s265 = sphi 0, %s267
      %s268 = sphi 0, %s265
      %s269 = sphi 0, %s268
      %s285 = sphi 0, %s269
    $region4: #{tpu_custom_call.1} parent=1 // loop_header_branch
      %22 = sbr.rel (%p20) target = $region8
    $region5: #{tpu_custom_call.1} parent=1 // loop_body
      %s24 = ssub.s32 %s19, 1
      %s25 = ssub.s32 %s19, 2
      %s32 = sadd.s32 1, %s27
      %p33 = scmp.ge.s32.totalorder %s32, 2
      %s34 = scalar_select %p33, 0, %s32
      %s35 = sadd.s32 1, %s26
      %s36 = scalar_select %p33, %s35, %s26
      %p37 = scmp.ge.s32.totalorder %s36, 2
      %s38 = scalar_select %p37, 0, %s36
      %s39 = ssub.s32 %s26, %s38
      %p40 = scmp.eq.s32.totalorder %s39, 0
      %s42 = sadd.s32 %s41, 1
      %s43 = scalar_select %p40, %s41, %s42
      %p46 = pneg %p40
      %p47 = scmp.eq.s32.totalorder %s19, 3
      %p48 = por %p46, %p47
      %p49 = scmp.ne.s32.totalorder %s41, %s44
      %p50 = scmp.eq.s32.totalorder %s19, 0
      %p51 = por %p49, %p50
      %p52 = scmp.ne.s32.totalorder %s41, %s44
      %p53 = scmp.eq.s32.totalorder %s24, 3
      %p54 = por %p52, %p53
      %p55 = scmp.ne.s32.totalorder %s44, %s45
      %p56 = scmp.eq.s32.totalorder %s24, 0
      %p57 = por %p55, %p56
      %p58 = scmp.ne.s32.totalorder %s44, %s45
      %p59 = scmp.eq.s32.totalorder %s25, 3
      %p60 = por %p58, %p59
      %p62 = scmp.ne.s32.totalorder %s45, %s61
      %p63 = scmp.eq.s32.totalorder %s25, 0
      %p64 = por %p62, %p63
      %s65 = ssub.s32 %s26, %s38
      %s66 = ssub.s32 %s27, %s34
      %s67 = sor.u32 %s65, %s66
      %p68 = scmp.eq.s32.totalorder %s67, 0
      %s70 = sadd.s32 %s69, 1
      %s71 = scalar_select %p68, %s69, %s70
      %p74 = pneg %p68
      %p75 = scmp.eq.s32.totalorder %s19, 3
      %p76 = por %p74, %p75
      %p77 = scmp.ne.s32.totalorder %s69, %s72
      %p78 = scmp.eq.s32.totalorder %s19, 0
      %p79 = por %p77, %p78
      %p80 = scmp.ne.s32.totalorder %s69, %s72
      %p81 = scmp.eq.s32.totalorder %s24, 3
      %p82 = por %p80, %p81
      %p83 = scmp.ne.s32.totalorder %s72, %s73
      %p84 = scmp.eq.s32.totalorder %s24, 0
      %p85 = por %p83, %p84
      %p86 = scmp.ne.s32.totalorder %s72, %s73
      %p87 = scmp.eq.s32.totalorder %s25, 3
      %p88 = por %p86, %p87
      %p90 = scmp.ne.s32.totalorder %s73, %s89
      %p91 = scmp.eq.s32.totalorder %s25, 0
      %p92 = por %p90, %p91
      %s94 = sadd.s32 %s93, 1
      %p97 = scmp.eq.s32.totalorder %s19, 3
      %p98 = scmp.ne.s32.totalorder %s93, %s95
      %p99 = scmp.eq.s32.totalorder %s19, 0
      %p100 = por %p98, %p99
      %p101 = scmp.ne.s32.totalorder %s93, %s95
      %p102 = scmp.eq.s32.totalorder %s24, 3
      %p103 = por %p101, %p102
      %p104 = scmp.ne.s32.totalorder %s95, %s96
      %p105 = scmp.eq.s32.totalorder %s24, 0
      %p106 = por %p104, %p105
      %p107 = scmp.ne.s32.totalorder %s95, %s96
      %p108 = scmp.eq.s32.totalorder %s25, 3
      %p109 = por %p107, %p108
      %p111 = scmp.ne.s32.totalorder %s96, %s110
      %p112 = scmp.eq.s32.totalorder %s25, 0
      %p113 = por %p111, %p112
      %s115 = sadd.s32 %s114, 1
      %p118 = scmp.eq.s32.totalorder %s19, 3
      %p119 = scmp.ne.s32.totalorder %s114, %s116
      %p120 = scmp.eq.s32.totalorder %s19, 0
      %p121 = por %p119, %p120
      %p122 = scmp.ne.s32.totalorder %s114, %s116
      %p123 = scmp.eq.s32.totalorder %s24, 3
      %p124 = por %p122, %p123
      %p125 = scmp.ne.s32.totalorder %s116, %s117
      %p126 = scmp.eq.s32.totalorder %s24, 0
      %p127 = por %p125, %p126
      %p128 = scmp.ne.s32.totalorder %s116, %s117
      %p129 = scmp.eq.s32.totalorder %s25, 3
      %p130 = por %p128, %p129
      %p132 = scmp.ne.s32.totalorder %s117, %s131
      %p133 = scmp.eq.s32.totalorder %s25, 0
      %p134 = por %p132, %p133
      %s136 = sadd.s32 %s135, 1
      %p139 = scmp.eq.s32.totalorder %s19, 3
      %p140 = scmp.ne.s32.totalorder %s135, %s137
      %p141 = scmp.eq.s32.totalorder %s19, 0
      %p142 = por %p140, %p141
      %p143 = scmp.ne.s32.totalorder %s135, %s137
      %p144 = scmp.eq.s32.totalorder %s24, 3
      %p145 = por %p143, %p144
      %p146 = scmp.ne.s32.totalorder %s137, %s138
      %p147 = scmp.eq.s32.totalorder %s24, 0
      %p148 = por %p146, %p147
      %p149 = scmp.ne.s32.totalorder %s137, %s138
      %p150 = scmp.eq.s32.totalorder %s25, 3
      %p151 = por %p149, %p150
      %p153 = scmp.ne.s32.totalorder %s138, %s152
      %p154 = scmp.eq.s32.totalorder %s25, 0
      %p155 = por %p153, %p154
      %s157 = sadd.s32 %s156, 1
      %p160 = scmp.eq.s32.totalorder %s19, 3
      %p161 = scmp.ne.s32.totalorder %s156, %s158
      %p162 = scmp.eq.s32.totalorder %s19, 0
      %p163 = por %p161, %p162
      %p164 = scmp.ne.s32.totalorder %s156, %s158
      %p165 = scmp.eq.s32.totalorder %s24, 3
      %p166 = por %p164, %p165
      %p167 = scmp.ne.s32.totalorder %s158, %s159
      %p168 = scmp.eq.s32.totalorder %s24, 0
      %p169 = por %p167, %p168
      %p170 = scmp.ne.s32.totalorder %s158, %s159
      %p171 = scmp.eq.s32.totalorder %s25, 3
      %p172 = por %p170, %p171
      %p174 = scmp.ne.s32.totalorder %s159, %s173
      %p175 = scmp.eq.s32.totalorder %s25, 0
      %p176 = por %p174, %p175
      %s178 = sadd.s32 %s177, 1
      %p181 = scmp.eq.s32.totalorder %s19, 3
      %p182 = scmp.ne.s32.totalorder %s177, %s179
      %p183 = scmp.eq.s32.totalorder %s19, 0
      %p184 = por %p182, %p183
      %p185 = scmp.ne.s32.totalorder %s177, %s179
      %p186 = scmp.eq.s32.totalorder %s24, 3
      %p187 = por %p185, %p186
      %p188 = scmp.ne.s32.totalorder %s179, %s180
      %p189 = scmp.eq.s32.totalorder %s24, 0
      %p190 = por %p188, %p189
      %p191 = scmp.ne.s32.totalorder %s179, %s180
      %p192 = scmp.eq.s32.totalorder %s25, 3
      %p193 = por %p191, %p192
      %p195 = scmp.ne.s32.totalorder %s180, %s194
      %p196 = scmp.eq.s32.totalorder %s25, 0
      %p197 = por %p195, %p196
      %s199 = sadd.s32 %s198, 1
      %p202 = scmp.eq.s32.totalorder %s19, 3
      %p203 = scmp.ne.s32.totalorder %s198, %s200
      %p204 = scmp.eq.s32.totalorder %s19, 0
      %p205 = por %p203, %p204
      %p206 = scmp.ne.s32.totalorder %s198, %s200
      %p207 = scmp.eq.s32.totalorder %s24, 3
      %p208 = por %p206, %p207
      %p209 = scmp.ne.s32.totalorder %s200, %s201
      %p210 = scmp.eq.s32.totalorder %s24, 0
      %p211 = por %p209, %p210
      %p212 = scmp.ne.s32.totalorder %s200, %s201
      %p213 = scmp.eq.s32.totalorder %s25, 3
      %p214 = por %p212, %p213
      %p216 = scmp.ne.s32.totalorder %s201, %s215
      %p217 = scmp.eq.s32.totalorder %s25, 0
      %p218 = por %p216, %p217
      %s220 = sadd.s32 %s219, 1
      %p223 = scmp.eq.s32.totalorder %s19, 3
      %p224 = scmp.ne.s32.totalorder %s219, %s221
      %p225 = scmp.eq.s32.totalorder %s19, 0
      %p226 = por %p224, %p225
      %p227 = scmp.ne.s32.totalorder %s219, %s221
      %p228 = scmp.eq.s32.totalorder %s24, 3
      %p229 = por %p227, %p228
      %p230 = scmp.ne.s32.totalorder %s221, %s222
      %p231 = scmp.eq.s32.totalorder %s24, 0
      %p232 = por %p230, %p231
      %p233 = scmp.ne.s32.totalorder %s221, %s222
      %p234 = scmp.eq.s32.totalorder %s25, 3
      %p235 = por %p233, %p234
      %p237 = scmp.ne.s32.totalorder %s222, %s236
      %p238 = scmp.eq.s32.totalorder %s25, 0
      %p239 = por %p237, %p238
      %s241 = sadd.s32 %s240, 1
      %p244 = scmp.eq.s32.totalorder %s19, 3
      %p245 = scmp.ne.s32.totalorder %s240, %s242
      %p246 = scmp.eq.s32.totalorder %s19, 0
      %p247 = por %p245, %p246
      %p248 = scmp.ne.s32.totalorder %s240, %s242
      %p249 = scmp.eq.s32.totalorder %s24, 3
      %p250 = por %p248, %p249
      %p251 = scmp.ne.s32.totalorder %s242, %s243
      %p252 = scmp.eq.s32.totalorder %s24, 0
      %p253 = por %p251, %p252
      %p254 = scmp.ne.s32.totalorder %s242, %s243
      %p255 = scmp.eq.s32.totalorder %s25, 3
      %p256 = por %p254, %p255
      %p258 = scmp.ne.s32.totalorder %s243, %s257
      %p259 = scmp.eq.s32.totalorder %s25, 0
      %p260 = por %p258, %p259
      %s261 = ssub.s32 %s26, %s38
      %s262 = ssub.s32 %s27, %s34
      %s263 = sor.u32 %s261, %s262
      %p264 = scmp.eq.s32.totalorder %s263, 0
      %s266 = sadd.s32 %s265, 1
      %s267 = scalar_select %p264, %s265, %s266
      %p270 = pneg %p264
      %p271 = scmp.eq.s32.totalorder %s19, 3
      %p272 = por %p270, %p271
      %p273 = scmp.ne.s32.totalorder %s265, %s268
      %p274 = scmp.eq.s32.totalorder %s19, 0
      %p275 = por %p273, %p274
      %p276 = scmp.ne.s32.totalorder %s265, %s268
      %p277 = scmp.eq.s32.totalorder %s24, 3
      %p278 = por %p276, %p277
      %p279 = scmp.ne.s32.totalorder %s268, %s269
      %p280 = scmp.eq.s32.totalorder %s24, 0
      %p281 = por %p279, %p280
      %p282 = scmp.ne.s32.totalorder %s268, %s269
      %p283 = scmp.eq.s32.totalorder %s25, 3
      %p284 = por %p282, %p283
      %p286 = scmp.ne.s32.totalorder %s269, %s285
      %p287 = scmp.eq.s32.totalorder %s25, 0
      %p288 = por %p286, %p287
      %p289 = scmp.le.s32.totalorder 1, %s19
      %p290 = scmp.lt.s32.totalorder %s19, 5
      %p291 = pnand %p289, %p290
      %p292 = pneg %p291
      // Predicated region
      $region9: #{tpu_custom_call.1} parent=5 // pred_check
        _
      $region10: #{tpu_custom_call.1} parent=5 // pred_check_branch
        %294 = sbr.rel (%p291) target = $region12
      $region11: #{tpu_custom_call.1} parent=5 // pred_region
        %s295 = ssub.s32 %s19, 1
        // Predicated region
        $region13: #{tpu_custom_call.1} parent=11 // pred_check
          %p296 = pneg %p106
        $region14: #{tpu_custom_call.1} parent=11 // pred_check_branch
          %298 = sbr.rel (%p296) target = $region16
        $region15: #{tpu_custom_call.1} parent=11 // pred_region
          _
        $region16: #{tpu_custom_call.1} parent=11 // pred_fallthru
          _
        // Predicated region
        $region17: #{tpu_custom_call.1} parent=11 // pred_check
          %p299 = pneg %p127
        $region18: #{tpu_custom_call.1} parent=11 // pred_check_branch
          %301 = sbr.rel (%p299) target = $region20
        $region19: #{tpu_custom_call.1} parent=11 // pred_region
          _
        $region20: #{tpu_custom_call.1} parent=11 // pred_fallthru
          _
        // Predicated region
        $region21: #{tpu_custom_call.1} parent=11 // pred_check
          %p302 = pneg %p148
        $region22: #{tpu_custom_call.1} parent=11 // pred_check_branch
          %304 = sbr.rel (%p302) target = $region24
        $region23: #{tpu_custom_call.1} parent=11 // pred_region
          _
        $region24: #{tpu_custom_call.1} parent=11 // pred_fallthru
          _
        // Predicated region
        $region25: #{tpu_custom_call.1} parent=11 // pred_check
          %p305 = pneg %p169
        $region26: #{tpu_custom_call.1} parent=11 // pred_check_branch
          %307 = sbr.rel (%p305) target = $region28
        $region27: #{tpu_custom_call.1} parent=11 // pred_region
          _
        $region28: #{tpu_custom_call.1} parent=11 // pred_fallthru
          _
        // Predicated region
        $region29: #{tpu_custom_call.1} parent=11 // pred_check
          %p308 = pneg %p190
        $region30: #{tpu_custom_call.1} parent=11 // pred_check_branch
          %310 = sbr.rel (%p308) target = $region32
        $region31: #{tpu_custom_call.1} parent=11 // pred_region
          _
        $region32: #{tpu_custom_call.1} parent=11 // pred_fallthru
          _
        // Predicated region
        $region33: #{tpu_custom_call.1} parent=11 // pred_check
          %p311 = pneg %p211
        $region34: #{tpu_custom_call.1} parent=11 // pred_check_branch
          %313 = sbr.rel (%p311) target = $region36
        $region35: #{tpu_custom_call.1} parent=11 // pred_region
          _
        $region36: #{tpu_custom_call.1} parent=11 // pred_fallthru
          _
        // Predicated region
        $region37: #{tpu_custom_call.1} parent=11 // pred_check
          %p314 = pneg %p232
        $region38: #{tpu_custom_call.1} parent=11 // pred_check_branch
          %316 = sbr.rel (%p314) target = $region40
        $region39: #{tpu_custom_call.1} parent=11 // pred_region
          _
        $region40: #{tpu_custom_call.1} parent=11 // pred_fallthru
          _
        // Predicated region
        $region41: #{tpu_custom_call.1} parent=11 // pred_check
          %p317 = pneg %p253
        $region42: #{tpu_custom_call.1} parent=11 // pred_check_branch
          %319 = sbr.rel (%p317) target = $region44
        $region43: #{tpu_custom_call.1} parent=11 // pred_region
          _
        $region44: #{tpu_custom_call.1} parent=11 // pred_fallthru
          _
      $region12: #{tpu_custom_call.1} parent=5 // pred_fallthru
        _
      %p320 = scmp.lt.s32.totalorder %s19, 4
      // Predicated region
      $region45: #{tpu_custom_call.1} parent=5 // pred_check
        %p321 = pneg %p320
      $region46: #{tpu_custom_call.1} parent=5 // pred_check_branch
        %323 = sbr.rel (%p321) target = $region48
      $region47: #{tpu_custom_call.1} parent=5 // pred_region
        // Predicated region
        $region49: #{tpu_custom_call.1} parent=47 // pred_check
          %p324 = pneg %p51
        $region50: #{tpu_custom_call.1} parent=47 // pred_check_branch
          %326 = sbr.rel (%p324) target = $region52
        $region51: #{tpu_custom_call.1} parent=47 // pred_region
          %p327 = scmp.lt.s32.totalorder %s26, 1
          %s328 = scalar_select %p327, %s26, 1
          %s329 = smul.addr %s328, 4
          %s330 = smul.addr %s329, 8
          %s331 = scalar_lea.vmem %s0, %s330
        $region52: #{tpu_custom_call.1} parent=47 // pred_fallthru
          _
        // Predicated region
        $region53: #{tpu_custom_call.1} parent=47 // pred_check
          %p332 = pneg %p79
        $region54: #{tpu_custom_call.1} parent=47 // pred_check_branch
          %334 = sbr.rel (%p332) target = $region56
        $region55: #{tpu_custom_call.1} parent=47 // pred_region
          %s335 = smul.u32 16, %s27
          %p336 = scmp.lt.s32.totalorder %s26, 1
          %s337 = scalar_select %p336, %s26, 1
          %p338 = scmp.lt.s32.totalorder %s335, 31
          %s339 = scalar_select %p338, %s335, 31
          %s340 = smul.addr %s339, 4
          %s341 = smul.addr %s337, 128
          %s342 = sadd.s32 %s340, %s341
          %s343 = smul.addr %s342, 4
          %s344 = scalar_lea.vmem %s1, %s343
          %s345 = smul.u32 16, %s27
        $region56: #{tpu_custom_call.1} parent=47 // pred_fallthru
          _
      $region48: #{tpu_custom_call.1} parent=5 // pred_fallthru
        _
      %p346 = scmp.le.s32.totalorder 1, %s19
      %p347 = scmp.lt.s32.totalorder %s19, 5
      %p348 = pnand %p346, %p347
      %p349 = pneg %p348
      // Predicated region
      $region57: #{tpu_custom_call.1} parent=5 // pred_check
        _
      $region58: #{tpu_custom_call.1} parent=5 // pred_check_branch
        %351 = sbr.rel (%p348) target = $region60
      $region59: #{tpu_custom_call.1} parent=5 // pred_region
        %s352 = ssub.s32 %s19, 1
        %p353 = scmp.lt.s32.totalorder %s28, 1
        %s354 = scalar_select %p353, %s28, 1
        %s355 = smul.addr %s354, 4
        %s356 = smul.addr %s355, 8
        %s357 = scalar_lea.vmem %s0, %s356
        %p358 = pneg %p57
        %p359 = pneg %p54
        %s360 = smul.u32 16, %s29
        %p361 = scmp.lt.s32.totalorder %s28, 1
        %s362 = scalar_select %p361, %s28, 1
        %p363 = scmp.lt.s32.totalorder %s360, 31
        %s364 = scalar_select %p363, %s360, 31
        %s365 = smul.addr %s364, 4
        %s366 = smul.addr %s362, 128
        %s367 = sadd.s32 %s365, %s366
        %s368 = smul.addr %s367, 4
        %s369 = scalar_lea.vmem %s1, %s368
        %p370 = pneg %p85
        %p371 = pneg %p82
        %p372 = pneg %p106
        %p373 = pneg %p103
        %p374 = pneg %p127
        %p375 = pneg %p124
        %p376 = pneg %p148
        %p377 = pneg %p145
        %p378 = pneg %p169
        %p379 = pneg %p166
        %p380 = pneg %p190
        %p381 = pneg %p187
        %p382 = pneg %p211
        %p383 = pneg %p208
        %p384 = pneg %p232
        %p385 = pneg %p229
        %p386 = pneg %p253
        %p387 = pneg %p250
        %p388 = pneg %p281
        %p389 = pneg %p278
        %s390 = sand.u32 %s268, 1
        %s391 = scalar_lea.sflag [#allocation6], %s390
        %s392 = sand.u32 %s268, 1
        %s393 = smul.addr %s392, 16
        %s394 = scalar_lea.vmem [#allocation5], %s393
        %p395 = scmp.lt.s32.totalorder %s28, 1
        %s396 = scalar_select %p395, %s28, 1
        %s397 = smul.addr %s396, 4
        %s398 = smul.addr %s397, 8
        %s399 = scalar_lea.vmem %s0, %s398
        %s400 = smul.u32 16, %s29
        %p401 = scmp.lt.s32.totalorder %s28, 1
        %s402 = scalar_select %p401, %s28, 1
        %p403 = scmp.lt.s32.totalorder %s400, 31
        %s404 = scalar_select %p403, %s400, 31
        %s405 = smul.addr %s404, 4
        %s406 = smul.addr %s402, 128
        %s407 = sadd.s32 %s405, %s406
        %s408 = smul.addr %s407, 4
        %s409 = scalar_lea.vmem %s1, %s408
        %s410 = smul.u32 16, %s29
        %s411 = smul.u32 2, %s29
        %p413 = scmp.eq.s32.totalorder %s29, 0
        // Predicated region
        $region61: #{tpu_custom_call.1} parent=59 // pred_check
          %p414 = pneg %p413
        $region62: #{tpu_custom_call.1} parent=59 // pred_check_branch
          %416 = sbr.rel (%p414) target = $region64
        $region63: #{tpu_custom_call.1} parent=59 // pred_region
          %v417 = vld [vmem:[%s399] sm:$0xff]
          %v418 = vld [vmem:[%s399 + $0x8] sm:$0xff]
          %v419 = vld [vmem:[%s399 + $0x10] sm:$0xff]
          %v420 = vld [vmem:[%s399 + $0x18] sm:$0xff]
          %v421 = vld [vmem:[%s2] sm:$0x1]
          %v422 = vld [vmem:[%s3] sm:$0x1]
          %vm423 = vcmask 261120
          %v424 = vsel %vm423, %v417, 0.0
          %425 = vadd.xlane.f32.xlu0 %v424
          %v426 = vpop.xlane.xlu0 %425
          %v427 = vsel %vm423, %v418, 0.0
          %428 = vadd.xlane.f32.xlu0 %v427
          %v429 = vpop.xlane.xlu0 %428
          %v430 = vsel %vm423, %v419, 0.0
          %431 = vadd.xlane.f32.xlu0 %v430
          %v432 = vpop.xlane.xlu0 %431
          %v433 = vsel %vm423, %v420, 0.0
          %434 = vadd.xlane.f32.xlu0 %v433
          %v435 = vpop.xlane.xlu0 %434
          %v436 = vrcp.pop 32.0
          %v437 = vmul.f32 %v426, %v436
          %v438 = vmul.f32 %v429, %v436
          %v439 = vmul.f32 %v432, %v436
          %v440 = vmul.f32 %v435, %v436
          %v441 = vsub.f32 %v417, %v437
          %v442 = vsub.f32 %v418, %v438
          %v443 = vsub.f32 %v419, %v439
          %v444 = vsub.f32 %v420, %v440
          %v445 = vmul.f32 %v441, %v441
          %v446 = vmul.f32 %v442, %v442
          %v447 = vmul.f32 %v443, %v443
          %v448 = vmul.f32 %v444, %v444
          %v449 = vsel %vm423, %v445, 0.0
          %450 = vadd.xlane.f32.xlu0 %v449
          %v451 = vpop.xlane.xlu0 %450
          %v452 = vsel %vm423, %v446, 0.0
          %453 = vadd.xlane.f32.xlu0 %v452
          %v454 = vpop.xlane.xlu0 %453
          %v455 = vsel %vm423, %v447, 0.0
          %456 = vadd.xlane.f32.xlu0 %v455
          %v457 = vpop.xlane.xlu0 %456
          %v458 = vsel %vm423, %v448, 0.0
          %459 = vadd.xlane.f32.xlu0 %v458
          %v460 = vpop.xlane.xlu0 %459
          %v461 = vmul.f32 %v451, %v436
          %v462 = vmul.f32 %v454, %v436
          %v463 = vmul.f32 %v457, %v436
          %v464 = vmul.f32 %v460, %v436
          %v465 = vadd.f32 %v461, 1e-05
          %v466 = vadd.f32 %v462, 1e-05
          %v467 = vadd.f32 %v463, 1e-05
          %v468 = vadd.f32 %v464, 1e-05
          %v469 = vrsqrt.pop %v465
          %v470 = vrsqrt.pop %v466
          %v471 = vrsqrt.pop %v467
          %v472 = vrsqrt.pop %v468
          %v473 = vmul.f32 %v441, %v469
          %v474 = vmul.f32 %v442, %v470
          %v475 = vmul.f32 %v443, %v471
          %v476 = vmul.f32 %v444, %v472
          %v478 = vlaneseq
          %v479 = vshrl.u32 %v478, 7
          %v480 = vsub.s32 0, %v479
          %v481 = vrot.slane %v421, %v480
          %v483 = vmul.f32 %v473, %v481
          %v484 = vmul.f32 %v474, %v481
          %v485 = vmul.f32 %v475, %v481
          %v486 = vmul.f32 %v476, %v481
          %v488 = vlaneseq
          %v489 = vshrl.u32 %v488, 7
          %v490 = vsub.s32 0, %v489
          %v491 = vrot.slane %v422, %v490
          %v493 = vadd.f32 %v483, %v491
          %v494 = vadd.f32 %v484, %v491
          %v495 = vadd.f32 %v485, %v491
          %v496 = vadd.f32 %v486, %v491
          %v497 = vld [vmem:[%s4] sm:$0xff]
          %v498 = vld [vmem:[%s4 + $0x8] sm:$0xff]
          %v499 = vld [vmem:[%s4 + $0x10] sm:$0xff]
          %v500 = vld [vmem:[%s4 + $0x18] sm:$0xff]
          %v501 = vld [vmem:[%s4 + $0x20] sm:$0xff]
          %v502 = vld [vmem:[%s4 + $0x28] sm:$0xff]
          %v503 = vld [vmem:[%s4 + $0x30] sm:$0xff]
          %v504 = vld [vmem:[%s4 + $0x38] sm:$0xff]
          %v505 = vld [vmem:[%s4 + $0x40] sm:$0xff]
          %v506 = vld [vmem:[%s4 + $0x48] sm:$0xff]
          %v507 = vld [vmem:[%s4 + $0x50] sm:$0xff]
          %v508 = vld [vmem:[%s4 + $0x58] sm:$0xff]
          %v509 = vld [vmem:[%s4 + $0x60] sm:$0xff]
          %v510 = vld [vmem:[%s4 + $0x68] sm:$0xff]
          %v511 = vld [vmem:[%s4 + $0x70] sm:$0xff]
          %v512 = vld [vmem:[%s4 + $0x78] sm:$0xff]
          %v514 = vsel %vm423, %v493, 0
          %v517 = vsel %vm423, %v494, 0
          %v520 = vsel %vm423, %v495, 0
          %v523 = vsel %vm423, %v496, 0
          %525 = vmatprep.subr.mxu0 0.0
          %526 = vmatpush1.msra.mxu0 0.0
          %527 = vmatprep.subr.mxu0 0.0
          %528 = vmatpush1.msra.mxu0 0.0
          %529 = vmatprep.subr.mxu0 0.0
          %530 = vmatpush1.msra.mxu0 0.0
          %531 = vmatprep.subr.mxu0 0.0
          %532 = vmatpush1.msra.mxu0 0.0
          %533 = vmatprep.subr.mxu0 0.0
          %534 = vmatpush1.msra.mxu0 0.0
          %535 = vmatprep.subr.mxu0 0.0
          %536 = vmatpush1.msra.mxu0 0.0
          %537 = vmatprep.subr.mxu0 0.0
          %538 = vmatpush1.msra.mxu0 0.0
          %539 = vmatprep.subr.mxu0 0.0
          %540 = vmatpush1.msra.mxu0 0.0
          %541 = vmatprep.subr.mxu0 0.0
          %542 = vmatpush1.msra.mxu0 0.0
          %543 = vmatprep.subr.mxu0 0.0
          %544 = vmatpush1.msra.mxu0 0.0
          %545 = vmatprep.subr.mxu0 0.0
          %546 = vmatpush1.msra.mxu0 0.0
          %547 = vmatprep.subr.mxu0 0.0
          %548 = vmatpush1.msra.mxu0 0.0
          %549 = vmatprep.subr.mxu0 %v510
          %550 = vmatpush1.msra.mxu0 %v509
          %551 = vmatprep.subr.mxu0 %v506
          %552 = vmatpush1.msra.mxu0 %v505
          %553 = vmatprep.subr.mxu0 %v502
          %554 = vmatpush1.msra.mxu0 %v501
          %555 = vmatprep.subr.mxu0 %v498
          %556 = vmatpush1.msra.mxu0 %v497
          %557 = vmatprep.subr.mxu0 0.0
          %558 = vmatpush2.msra.mxu0 0.0
          %559 = vmatprep.subr.mxu0 0.0
          %560 = vmatpush2.msra.mxu0 0.0
          %561 = vmatprep.subr.mxu0 0.0
          %562 = vmatpush2.msra.mxu0 0.0
          %563 = vmatprep.subr.mxu0 0.0
          %564 = vmatpush2.msra.mxu0 0.0
          %565 = vmatprep.subr.mxu0 0.0
          %566 = vmatpush2.msra.mxu0 0.0
          %567 = vmatprep.subr.mxu0 0.0
          %568 = vmatpush2.msra.mxu0 0.0
          %569 = vmatprep.subr.mxu0 0.0
          %570 = vmatpush2.msra.mxu0 0.0
          %571 = vmatprep.subr.mxu0 0.0
          %572 = vmatpush2.msra.mxu0 0.0
          %573 = vmatprep.subr.mxu0 0.0
          %574 = vmatpush2.msra.mxu0 0.0
          %575 = vmatprep.subr.mxu0 0.0
          %576 = vmatpush2.msra.mxu0 0.0
          %577 = vmatprep.subr.mxu0 0.0
          %578 = vmatpush2.msra.mxu0 0.0
          %579 = vmatprep.subr.mxu0 0.0
          %580 = vmatpush2.msra.mxu0 0.0
          %581 = vmatprep.subr.mxu0 0.0
          %582 = vmatpush2.msra.mxu0 0.0
          %583 = vmatprep.subr.mxu0 0.0
          %584 = vmatpush2.msra.mxu0 0.0
          %585 = vmatprep.subr.mxu0 0.0
          %586 = vmatpush2.msra.mxu0 0.0
          %587 = vmatprep.subr.mxu0 0.0
          %588 = vmatpush2.msra.mxu0 0.0
          %589 = vmatprep.mubr.f32.mxu0 0.0
          %590 = vmatmul.mubr.f32.gmra.mxu0 %v514
          %v591 = vpop.f32.mrf.mxu0
          %v592 = vadd.f32 0.0, %v591
          %v593 = vpop.f32.mrf.mxu0
          %v594 = vadd.f32 0.0, %v593
          %595 = vmatprep.mubr.f32.mxu0 0.0
          %596 = vmatmul.mubr.f32.gmra.mxu0 %v517
          %v597 = vpop.f32.mrf.mxu0
          %v598 = vadd.f32 0.0, %v597
          %v599 = vpop.f32.mrf.mxu0
          %v600 = vadd.f32 0.0, %v599
          %601 = vmatprep.mubr.f32.mxu0 0.0
          %602 = vmatmul.mubr.f32.gmra.mxu0 %v520
          %v603 = vpop.f32.mrf.mxu0
          %v604 = vadd.f32 0.0, %v603
          %v605 = vpop.f32.mrf.mxu0
          %v606 = vadd.f32 0.0, %v605
          %607 = vmatprep.mubr.f32.mxu0 0.0
          %608 = vmatmul.mubr.f32.gmra.mxu0 %v523
          %v609 = vpop.f32.mrf.mxu0
          %v610 = vadd.f32 0.0, %v609
          %v611 = vpop.f32.mrf.mxu0
          %v612 = vadd.f32 0.0, %v611
          %613 = vdwg.mxu0
          %614 = vmatprep.subr.mxu0 0.0
          %615 = vmatpush1.msra.mxu0 0.0
          %616 = vmatprep.subr.mxu0 0.0
          %617 = vmatpush1.msra.mxu0 0.0
          %618 = vmatprep.subr.mxu0 0.0
          %619 = vmatpush1.msra.mxu0 0.0
          %620 = vmatprep.subr.mxu0 0.0
          %621 = vmatpush1.msra.mxu0 0.0
          %622 = vmatprep.subr.mxu0 0.0
          %623 = vmatpush1.msra.mxu0 0.0
          %624 = vmatprep.subr.mxu0 0.0
          %625 = vmatpush1.msra.mxu0 0.0
          %626 = vmatprep.subr.mxu0 0.0
          %627 = vmatpush1.msra.mxu0 0.0
          %628 = vmatprep.subr.mxu0 0.0
          %629 = vmatpush1.msra.mxu0 0.0
          %630 = vmatprep.subr.mxu0 0.0
          %631 = vmatpush1.msra.mxu0 0.0
          %632 = vmatprep.subr.mxu0 0.0
          %633 = vmatpush1.msra.mxu0 0.0
          %634 = vmatprep.subr.mxu0 0.0
          %635 = vmatpush1.msra.mxu0 0.0
          %636 = vmatprep.subr.mxu0 0.0
          %637 = vmatpush1.msra.mxu0 0.0
          %638 = vmatprep.subr.mxu0 %v512
          %639 = vmatpush1.msra.mxu0 %v511
          %640 = vmatprep.subr.mxu0 %v508
          %641 = vmatpush1.msra.mxu0 %v507
          %642 = vmatprep.subr.mxu0 %v504
          %643 = vmatpush1.msra.mxu0 %v503
          %644 = vmatprep.subr.mxu0 %v500
          %645 = vmatpush1.msra.mxu0 %v499
          %646 = vmatprep.subr.mxu0 0.0
          %647 = vmatpush2.msra.mxu0 0.0
          %648 = vmatprep.subr.mxu0 0.0
          %649 = vmatpush2.msra.mxu0 0.0
          %650 = vmatprep.subr.mxu0 0.0
          %651 = vmatpush2.msra.mxu0 0.0
          %652 = vmatprep.subr.mxu0 0.0
          %653 = vmatpush2.msra.mxu0 0.0
          %654 = vmatprep.subr.mxu0 0.0
          %655 = vmatpush2.msra.mxu0 0.0
          %656 = vmatprep.subr.mxu0 0.0
          %657 = vmatpush2.msra.mxu0 0.0
          %658 = vmatprep.subr.mxu0 0.0
          %659 = vmatpush2.msra.mxu0 0.0
          %660 = vmatprep.subr.mxu0 0.0
          %661 = vmatpush2.msra.mxu0 0.0
          %662 = vmatprep.subr.mxu0 0.0
          %663 = vmatpush2.msra.mxu0 0.0
          %664 = vmatprep.subr.mxu0 0.0
          %665 = vmatpush2.msra.mxu0 0.0
          %666 = vmatprep.subr.mxu0 0.0
          %667 = vmatpush2.msra.mxu0 0.0
          %668 = vmatprep.subr.mxu0 0.0
          %669 = vmatpush2.msra.mxu0 0.0
          %670 = vmatprep.subr.mxu0 0.0
          %671 = vmatpush2.msra.mxu0 0.0
          %672 = vmatprep.subr.mxu0 0.0
          %673 = vmatpush2.msra.mxu0 0.0
          %674 = vmatprep.subr.mxu0 0.0
          %675 = vmatpush2.msra.mxu0 0.0
          %676 = vmatprep.subr.mxu0 0.0
          %677 = vmatpush2.msra.mxu0 0.0
          %678 = vmatprep.mubr.f32.mxu0 0.0
          %679 = vmatmul.mubr.f32.gmra.mxu0 %v514
          %v680 = vpop.f32.mrf.mxu0
          %v681 = vadd.f32 0.0, %v680
          %v682 = vpop.f32.mrf.mxu0
          %v683 = vadd.f32 0.0, %v682
          %684 = vmatprep.mubr.f32.mxu0 0.0
          %685 = vmatmul.mubr.f32.gmra.mxu0 %v517
          %v686 = vpop.f32.mrf.mxu0
          %v687 = vadd.f32 0.0, %v686
          %v688 = vpop.f32.mrf.mxu0
          %v689 = vadd.f32 0.0, %v688
          %690 = vmatprep.mubr.f32.mxu0 0.0
          %691 = vmatmul.mubr.f32.gmra.mxu0 %v520
          %v692 = vpop.f32.mrf.mxu0
          %v693 = vadd.f32 0.0, %v692
          %v694 = vpop.f32.mrf.mxu0
          %v695 = vadd.f32 0.0, %v694
          %696 = vmatprep.mubr.f32.mxu0 0.0
          %697 = vmatmul.mubr.f32.gmra.mxu0 %v523
          %v698 = vpop.f32.mrf.mxu0
          %v699 = vadd.f32 0.0, %v698
          %v700 = vpop.f32.mrf.mxu0
          %v701 = vadd.f32 0.0, %v700
          %702 = vdwg.mxu0
          %703 = vst [vmem:[#allocation2] sm:$0xff] %v592
          %704 = vst [vmem:[#allocation2 + $0x8] sm:$0xff] %v594
          %705 = vst [vmem:[#allocation2 + $0x10] sm:$0xff] %v681
          %706 = vst [vmem:[#allocation2 + $0x18] sm:$0xff] %v683
          %707 = vst [vmem:[#allocation2 + $0x20] sm:$0xff] %v598
          %708 = vst [vmem:[#allocation2 + $0x28] sm:$0xff] %v600
          %709 = vst [vmem:[#allocation2 + $0x30] sm:$0xff] %v687
          %710 = vst [vmem:[#allocation2 + $0x38] sm:$0xff] %v689
          %711 = vst [vmem:[#allocation2 + $0x40] sm:$0xff] %v604
          %712 = vst [vmem:[#allocation2 + $0x48] sm:$0xff] %v606
          %713 = vst [vmem:[#allocation2 + $0x50] sm:$0xff] %v693
          %714 = vst [vmem:[#allocation2 + $0x58] sm:$0xff] %v695
          %715 = vst [vmem:[#allocation2 + $0x60] sm:$0xff] %v610
          %716 = vst [vmem:[#allocation2 + $0x68] sm:$0xff] %v612
          %717 = vst [vmem:[#allocation2 + $0x70] sm:$0xff] %v699
          %718 = vst [vmem:[#allocation2 + $0x78] sm:$0xff] %v701
          %v719 = vld [vmem:[%s5] sm:$0xff]
          %v720 = vld [vmem:[%s5 + $0x8] sm:$0xff]
          %v721 = vld [vmem:[%s5 + $0x10] sm:$0xff]
          %v722 = vld [vmem:[%s5 + $0x18] sm:$0xff]
          %v723 = vld [vmem:[%s5 + $0x20] sm:$0xff]
          %v724 = vld [vmem:[%s5 + $0x28] sm:$0xff]
          %v725 = vld [vmem:[%s5 + $0x30] sm:$0xff]
          %v726 = vld [vmem:[%s5 + $0x38] sm:$0xff]
          %v727 = vld [vmem:[%s5 + $0x40] sm:$0xff]
          %v728 = vld [vmem:[%s5 + $0x48] sm:$0xff]
          %v729 = vld [vmem:[%s5 + $0x50] sm:$0xff]
          %v730 = vld [vmem:[%s5 + $0x58] sm:$0xff]
          %v731 = vld [vmem:[%s5 + $0x60] sm:$0xff]
          %v732 = vld [vmem:[%s5 + $0x68] sm:$0xff]
          %v733 = vld [vmem:[%s5 + $0x70] sm:$0xff]
          %v734 = vld [vmem:[%s5 + $0x78] sm:$0xff]
          %735 = vmatprep.subr.mxu0 0.0
          %736 = vmatpush1.msra.mxu0 0.0
          %737 = vmatprep.subr.mxu0 0.0
          %738 = vmatpush1.msra.mxu0 0.0
          %739 = vmatprep.subr.mxu0 0.0
          %740 = vmatpush1.msra.mxu0 0.0
          %741 = vmatprep.subr.mxu0 0.0
          %742 = vmatpush1.msra.mxu0 0.0
          %743 = vmatprep.subr.mxu0 0.0
          %744 = vmatpush1.msra.mxu0 0.0
          %745 = vmatprep.subr.mxu0 0.0
          %746 = vmatpush1.msra.mxu0 0.0
          %747 = vmatprep.subr.mxu0 0.0
          %748 = vmatpush1.msra.mxu0 0.0
          %749 = vmatprep.subr.mxu0 0.0
          %750 = vmatpush1.msra.mxu0 0.0
          %751 = vmatprep.subr.mxu0 0.0
          %752 = vmatpush1.msra.mxu0 0.0
          %753 = vmatprep.subr.mxu0 0.0
          %754 = vmatpush1.msra.mxu0 0.0
          %755 = vmatprep.subr.mxu0 0.0
          %756 = vmatpush1.msra.mxu0 0.0
          %757 = vmatprep.subr.mxu0 0.0
          %758 = vmatpush1.msra.mxu0 0.0
          %759 = vmatprep.subr.mxu0 %v732
          %760 = vmatpush1.msra.mxu0 %v731
          %761 = vmatprep.subr.mxu0 %v728
          %762 = vmatpush1.msra.mxu0 %v727
          %763 = vmatprep.subr.mxu0 %v724
          %764 = vmatpush1.msra.mxu0 %v723
          %765 = vmatprep.subr.mxu0 %v720
          %766 = vmatpush1.msra.mxu0 %v719
          %767 = vmatprep.subr.mxu0 0.0
          %768 = vmatpush2.msra.mxu0 0.0
          %769 = vmatprep.subr.mxu0 0.0
          %770 = vmatpush2.msra.mxu0 0.0
          %771 = vmatprep.subr.mxu0 0.0
          %772 = vmatpush2.msra.mxu0 0.0
          %773 = vmatprep.subr.mxu0 0.0
          %774 = vmatpush2.msra.mxu0 0.0
          %775 = vmatprep.subr.mxu0 0.0
          %776 = vmatpush2.msra.mxu0 0.0
          %777 = vmatprep.subr.mxu0 0.0
          %778 = vmatpush2.msra.mxu0 0.0
          %779 = vmatprep.subr.mxu0 0.0
          %780 = vmatpush2.msra.mxu0 0.0
          %781 = vmatprep.subr.mxu0 0.0
          %782 = vmatpush2.msra.mxu0 0.0
          %783 = vmatprep.subr.mxu0 0.0
          %784 = vmatpush2.msra.mxu0 0.0
          %785 = vmatprep.subr.mxu0 0.0
          %786 = vmatpush2.msra.mxu0 0.0
          %787 = vmatprep.subr.mxu0 0.0
          %788 = vmatpush2.msra.mxu0 0.0
          %789 = vmatprep.subr.mxu0 0.0
          %790 = vmatpush2.msra.mxu0 0.0
          %791 = vmatprep.subr.mxu0 0.0
          %792 = vmatpush2.msra.mxu0 0.0
          %793 = vmatprep.subr.mxu0 0.0
          %794 = vmatpush2.msra.mxu0 0.0
          %795 = vmatprep.subr.mxu0 0.0
          %796 = vmatpush2.msra.mxu0 0.0
          %797 = vmatprep.subr.mxu0 0.0
          %798 = vmatpush2.msra.mxu0 0.0
          %799 = vmatprep.mubr.f32.mxu0 0.0
          %800 = vmatmul.mubr.f32.gmra.mxu0 %v514
          %v801 = vpop.f32.mrf.mxu0
          %v802 = vadd.f32 0.0, %v801
          %v803 = vpop.f32.mrf.mxu0
          %v804 = vadd.f32 0.0, %v803
          %805 = vmatprep.mubr.f32.mxu0 0.0
          %806 = vmatmul.mubr.f32.gmra.mxu0 %v517
          %v807 = vpop.f32.mrf.mxu0
          %v808 = vadd.f32 0.0, %v807
          %v809 = vpop.f32.mrf.mxu0
          %v810 = vadd.f32 0.0, %v809
          %811 = vmatprep.mubr.f32.mxu0 0.0
          %812 = vmatmul.mubr.f32.gmra.mxu0 %v520
          %v813 = vpop.f32.mrf.mxu0
          %v814 = vadd.f32 0.0, %v813
          %v815 = vpop.f32.mrf.mxu0
          %v816 = vadd.f32 0.0, %v815
          %817 = vmatprep.mubr.f32.mxu0 0.0
          %818 = vmatmul.mubr.f32.gmra.mxu0 %v523
          %v819 = vpop.f32.mrf.mxu0
          %v820 = vadd.f32 0.0, %v819
          %v821 = vpop.f32.mrf.mxu0
          %v822 = vadd.f32 0.0, %v821
          %823 = vdwg.mxu0
          %824 = vmatprep.subr.mxu0 0.0
          %825 = vmatpush1.msra.mxu0 0.0
          %826 = vmatprep.subr.mxu0 0.0
          %827 = vmatpush1.msra.mxu0 0.0
          %828 = vmatprep.subr.mxu0 0.0
          %829 = vmatpush1.msra.mxu0 0.0
          %830 = vmatprep.subr.mxu0 0.0
          %831 = vmatpush1.msra.mxu0 0.0
          %832 = vmatprep.subr.mxu0 0.0
          %833 = vmatpush1.msra.mxu0 0.0
          %834 = vmatprep.subr.mxu0 0.0
          %835 = vmatpush1.msra.mxu0 0.0
          %836 = vmatprep.subr.mxu0 0.0
          %837 = vmatpush1.msra.mxu0 0.0
          %838 = vmatprep.subr.mxu0 0.0
          %839 = vmatpush1.msra.mxu0 0.0
          %840 = vmatprep.subr.mxu0 0.0
          %841 = vmatpush1.msra.mxu0 0.0
          %842 = vmatprep.subr.mxu0 0.0
          %843 = vmatpush1.msra.mxu0 0.0
          %844 = vmatprep.subr.mxu0 0.0
          %845 = vmatpush1.msra.mxu0 0.0
          %846 = vmatprep.subr.mxu0 0.0
          %847 = vmatpush1.msra.mxu0 0.0
          %848 = vmatprep.subr.mxu0 %v734
          %849 = vmatpush1.msra.mxu0 %v733
          %850 = vmatprep.subr.mxu0 %v730
          %851 = vmatpush1.msra.mxu0 %v729
          %852 = vmatprep.subr.mxu0 %v726
          %853 = vmatpush1.msra.mxu0 %v725
          %854 = vmatprep.subr.mxu0 %v722
          %855 = vmatpush1.msra.mxu0 %v721
          %856 = vmatprep.subr.mxu0 0.0
          %857 = vmatpush2.msra.mxu0 0.0
          %858 = vmatprep.subr.mxu0 0.0
          %859 = vmatpush2.msra.mxu0 0.0
          %860 = vmatprep.subr.mxu0 0.0
          %861 = vmatpush2.msra.mxu0 0.0
          %862 = vmatprep.subr.mxu0 0.0
          %863 = vmatpush2.msra.mxu0 0.0
          %864 = vmatprep.subr.mxu0 0.0
          %865 = vmatpush2.msra.mxu0 0.0
          %866 = vmatprep.subr.mxu0 0.0
          %867 = vmatpush2.msra.mxu0 0.0
          %868 = vmatprep.subr.mxu0 0.0
          %869 = vmatpush2.msra.mxu0 0.0
          %870 = vmatprep.subr.mxu0 0.0
          %871 = vmatpush2.msra.mxu0 0.0
          %872 = vmatprep.subr.mxu0 0.0
          %873 = vmatpush2.msra.mxu0 0.0
          %874 = vmatprep.subr.mxu0 0.0
          %875 = vmatpush2.msra.mxu0 0.0
          %876 = vmatprep.subr.mxu0 0.0
          %877 = vmatpush2.msra.mxu0 0.0
          %878 = vmatprep.subr.mxu0 0.0
          %879 = vmatpush2.msra.mxu0 0.0
          %880 = vmatprep.subr.mxu0 0.0
          %881 = vmatpush2.msra.mxu0 0.0
          %882 = vmatprep.subr.mxu0 0.0
          %883 = vmatpush2.msra.mxu0 0.0
          %884 = vmatprep.subr.mxu0 0.0
          %885 = vmatpush2.msra.mxu0 0.0
          %886 = vmatprep.subr.mxu0 0.0
          %887 = vmatpush2.msra.mxu0 0.0
          %888 = vmatprep.mubr.f32.mxu0 0.0
          %889 = vmatmul.mubr.f32.gmra.mxu0 %v514
          %v890 = vpop.f32.mrf.mxu0
          %v891 = vadd.f32 0.0, %v890
          %v892 = vpop.f32.mrf.mxu0
          %v893 = vadd.f32 0.0, %v892
          %894 = vmatprep.mubr.f32.mxu0 0.0
          %895 = vmatmul.mubr.f32.gmra.mxu0 %v517
          %v896 = vpop.f32.mrf.mxu0
          %v897 = vadd.f32 0.0, %v896
          %v898 = vpop.f32.mrf.mxu0
          %v899 = vadd.f32 0.0, %v898
          %900 = vmatprep.mubr.f32.mxu0 0.0
          %901 = vmatmul.mubr.f32.gmra.mxu0 %v520
          %v902 = vpop.f32.mrf.mxu0
          %v903 = vadd.f32 0.0, %v902
          %v904 = vpop.f32.mrf.mxu0
          %v905 = vadd.f32 0.0, %v904
          %906 = vmatprep.mubr.f32.mxu0 0.0
          %907 = vmatmul.mubr.f32.gmra.mxu0 %v523
          %v908 = vpop.f32.mrf.mxu0
          %v909 = vadd.f32 0.0, %v908
          %v910 = vpop.f32.mrf.mxu0
          %v911 = vadd.f32 0.0, %v910
          %912 = vdwg.mxu0
          %917 = vrot.lane.b32.xlu0 %v802, 96
          %v918 = vpop.permute.xlu0 %917
          %919 = vrot.lane.b32.xlu0 %v808, 96
          %v920 = vpop.permute.xlu0 %919
          %921 = vrot.lane.b32.xlu0 %v814, 96
          %v922 = vpop.permute.xlu0 %921
          %923 = vrot.lane.b32.xlu0 %v820, 96
          %v924 = vpop.permute.xlu0 %923
          %929 = vrot.lane.b32.xlu0 %v802, 64
          %v930 = vpop.permute.xlu0 %929
          %931 = vrot.lane.b32.xlu0 %v808, 64
          %v932 = vpop.permute.xlu0 %931
          %933 = vrot.lane.b32.xlu0 %v814, 64
          %v934 = vpop.permute.xlu0 %933
          %935 = vrot.lane.b32.xlu0 %v820, 64
          %v936 = vpop.permute.xlu0 %935
          %941 = vrot.lane.b32.xlu0 %v802, 32
          %v942 = vpop.permute.xlu0 %941
          %943 = vrot.lane.b32.xlu0 %v808, 32
          %v944 = vpop.permute.xlu0 %943
          %945 = vrot.lane.b32.xlu0 %v814, 32
          %v946 = vpop.permute.xlu0 %945
          %947 = vrot.lane.b32.xlu0 %v820, 32
          %v948 = vpop.permute.xlu0 %947
          %957 = vrot.lane.b32.xlu0 %v804, 96
          %v958 = vpop.permute.xlu0 %957
          %959 = vrot.lane.b32.xlu0 %v810, 96
          %v960 = vpop.permute.xlu0 %959
          %961 = vrot.lane.b32.xlu0 %v816, 96
          %v962 = vpop.permute.xlu0 %961
          %963 = vrot.lane.b32.xlu0 %v822, 96
          %v964 = vpop.permute.xlu0 %963
          %969 = vrot.lane.b32.xlu0 %v804, 64
          %v970 = vpop.permute.xlu0 %969
          %971 = vrot.lane.b32.xlu0 %v810, 64
          %v972 = vpop.permute.xlu0 %971
          %973 = vrot.lane.b32.xlu0 %v816, 64
          %v974 = vpop.permute.xlu0 %973
          %975 = vrot.lane.b32.xlu0 %v822, 64
          %v976 = vpop.permute.xlu0 %975
          %981 = vrot.lane.b32.xlu0 %v804, 32
          %v982 = vpop.permute.xlu0 %981
          %983 = vrot.lane.b32.xlu0 %v810, 32
          %v984 = vpop.permute.xlu0 %983
          %985 = vrot.lane.b32.xlu0 %v816, 32
          %v986 = vpop.permute.xlu0 %985
          %987 = vrot.lane.b32.xlu0 %v822, 32
          %v988 = vpop.permute.xlu0 %987
          %v993 = vcombine.low %v802, %v930
          %v994 = vcombine.high %v802, %v930
          %v996 = vunpack.c.l.s4 1983009808
          %v997 = vunpack.c.0.s8 %v996
          %v998 = vlaneseq
          %v999 = vshrl.u32 %v998, 7
          %v1000 = vsub.s32 %v997, %v999
          %v1001 = vrot.slane %v993, %v1000
          %v1003 = vunpack.c.l.s4 1983009808
          %v1004 = vunpack.c.0.s8 %v1003
          %v1005 = vlaneseq
          %v1006 = vshrl.u32 %v1005, 7
          %v1007 = vsub.s32 %v1004, %v1006
          %v1008 = vrot.slane %v994, %v1007
          %v1009 = vcombine.low %v918, %v942
          %v1010 = vcombine.high %v918, %v942
          %v1012 = vunpack.c.l.s4 1983009808
          %v1013 = vunpack.c.0.s8 %v1012
          %v1014 = vlaneseq
          %v1015 = vshrl.u32 %v1014, 7
          %v1016 = vsub.s32 %v1013, %v1015
          %v1017 = vrot.slane %v1009, %v1016
          %v1019 = vunpack.c.l.s4 1983009808
          %v1020 = vunpack.c.0.s8 %v1019
          %v1021 = vlaneseq
          %v1022 = vshrl.u32 %v1021, 7
          %v1023 = vsub.s32 %v1020, %v1022
          %v1024 = vrot.slane %v1010, %v1023
          %v1025 = vcombine.low %v804, %v970
          %v1026 = vcombine.high %v804, %v970
          %v1028 = vunpack.c.l.s4 1983009808
          %v1029 = vunpack.c.0.s8 %v1028
          %v1030 = vlaneseq
          %v1031 = vshrl.u32 %v1030, 7
          %v1032 = vsub.s32 %v1029, %v1031
          %v1033 = vrot.slane %v1025, %v1032
          %v1035 = vunpack.c.l.s4 1983009808
          %v1036 = vunpack.c.0.s8 %v1035
          %v1037 = vlaneseq
          %v1038 = vshrl.u32 %v1037, 7
          %v1039 = vsub.s32 %v1036, %v1038
          %v1040 = vrot.slane %v1026, %v1039
          %v1041 = vcombine.low %v958, %v982
          %v1042 = vcombine.high %v958, %v982
          %v1044 = vunpack.c.l.s4 1983009808
          %v1045 = vunpack.c.0.s8 %v1044
          %v1046 = vlaneseq
          %v1047 = vshrl.u32 %v1046, 7
          %v1048 = vsub.s32 %v1045, %v1047
          %v1049 = vrot.slane %v1041, %v1048
          %v1051 = vunpack.c.l.s4 1983009808
          %v1052 = vunpack.c.0.s8 %v1051
          %v1053 = vlaneseq
          %v1054 = vshrl.u32 %v1053, 7
          %v1055 = vsub.s32 %v1052, %v1054
          %v1056 = vrot.slane %v1042, %v1055
          %v1057 = vcombine.low %v1001, %v1017
          %v1058 = vcombine.high %v1001, %v1017
          %v1060 = vunpack.c.l.s4 1934713408
          %v1061 = vunpack.c.0.s8 %v1060
          %v1062 = vlaneseq
          %v1063 = vshrl.u32 %v1062, 7
          %v1064 = vsub.s32 %v1061, %v1063
          %v1065 = vrot.slane %v1057, %v1064
          %v1067 = vunpack.c.l.s4 1934713408
          %v1068 = vunpack.c.0.s8 %v1067
          %v1069 = vlaneseq
          %v1070 = vshrl.u32 %v1069, 7
          %v1071 = vsub.s32 %v1068, %v1070
          %v1072 = vrot.slane %v1058, %v1071
          %v1073 = vcombine.low %v1008, %v1024
          %v1074 = vcombine.high %v1008, %v1024
          %v1076 = vunpack.c.l.s4 1934713408
          %v1077 = vunpack.c.0.s8 %v1076
          %v1078 = vlaneseq
          %v1079 = vshrl.u32 %v1078, 7
          %v1080 = vsub.s32 %v1077, %v1079
          %v1081 = vrot.slane %v1073, %v1080
          %v1083 = vunpack.c.l.s4 1934713408
          %v1084 = vunpack.c.0.s8 %v1083
          %v1085 = vlaneseq
          %v1086 = vshrl.u32 %v1085, 7
          %v1087 = vsub.s32 %v1084, %v1086
          %v1088 = vrot.slane %v1074, %v1087
          %v1089 = vcombine.low %v1033, %v1049
          %v1090 = vcombine.high %v1033, %v1049
          %v1092 = vunpack.c.l.s4 1934713408
          %v1093 = vunpack.c.0.s8 %v1092
          %v1094 = vlaneseq
          %v1095 = vshrl.u32 %v1094, 7
          %v1096 = vsub.s32 %v1093, %v1095
          %v1097 = vrot.slane %v1089, %v1096
          %v1099 = vunpack.c.l.s4 1934713408
          %v1100 = vunpack.c.0.s8 %v1099
          %v1101 = vlaneseq
          %v1102 = vshrl.u32 %v1101, 7
          %v1103 = vsub.s32 %v1100, %v1102
          %v1104 = vrot.slane %v1090, %v1103
          %v1105 = vcombine.low %v1040, %v1056
          %v1106 = vcombine.high %v1040, %v1056
          %v1108 = vunpack.c.l.s4 1934713408
          %v1109 = vunpack.c.0.s8 %v1108
          %v1110 = vlaneseq
          %v1111 = vshrl.u32 %v1110, 7
          %v1112 = vsub.s32 %v1109, %v1111
          %v1113 = vrot.slane %v1105, %v1112
          %v1115 = vunpack.c.l.s4 1934713408
          %v1116 = vunpack.c.0.s8 %v1115
          %v1117 = vlaneseq
          %v1118 = vshrl.u32 %v1117, 7
          %v1119 = vsub.s32 %v1116, %v1118
          %v1120 = vrot.slane %v1106, %v1119
          %v1121 = vcombine.low %v1065, %v1097
          %v1122 = vcombine.high %v1065, %v1097
          %v1123 = vcombine.low %v1072, %v1104
          %v1124 = vcombine.high %v1072, %v1104
          %v1125 = vcombine.low %v1081, %v1113
          %v1126 = vcombine.high %v1081, %v1113
          %v1127 = vcombine.low %v1088, %v1120
          %v1128 = vcombine.high %v1088, %v1120
          %v1129 = vcombine.low %v808, %v932
          %v1130 = vcombine.high %v808, %v932
          %v1132 = vunpack.c.l.s4 1983009808
          %v1133 = vunpack.c.0.s8 %v1132
          %v1134 = vlaneseq
          %v1135 = vshrl.u32 %v1134, 7
          %v1136 = vsub.s32 %v1133, %v1135
          %v1137 = vrot.slane %v1129, %v1136
          %v1139 = vunpack.c.l.s4 1983009808
          %v1140 = vunpack.c.0.s8 %v1139
          %v1141 = vlaneseq
          %v1142 = vshrl.u32 %v1141, 7
          %v1143 = vsub.s32 %v1140, %v1142
          %v1144 = vrot.slane %v1130, %v1143
          %v1145 = vcombine.low %v920, %v944
          %v1146 = vcombine.high %v920, %v944
          %v1148 = vunpack.c.l.s4 1983009808
          %v1149 = vunpack.c.0.s8 %v1148
          %v1150 = vlaneseq
          %v1151 = vshrl.u32 %v1150, 7
          %v1152 = vsub.s32 %v1149, %v1151
          %v1153 = vrot.slane %v1145, %v1152
          %v1155 = vunpack.c.l.s4 1983009808
          %v1156 = vunpack.c.0.s8 %v1155
          %v1157 = vlaneseq
          %v1158 = vshrl.u32 %v1157, 7
          %v1159 = vsub.s32 %v1156, %v1158
          %v1160 = vrot.slane %v1146, %v1159
          %v1161 = vcombine.low %v810, %v972
          %v1162 = vcombine.high %v810, %v972
          %v1164 = vunpack.c.l.s4 1983009808
          %v1165 = vunpack.c.0.s8 %v1164
          %v1166 = vlaneseq
          %v1167 = vshrl.u32 %v1166, 7
          %v1168 = vsub.s32 %v1165, %v1167
          %v1169 = vrot.slane %v1161, %v1168
          %v1171 = vunpack.c.l.s4 1983009808
          %v1172 = vunpack.c.0.s8 %v1171
          %v1173 = vlaneseq
          %v1174 = vshrl.u32 %v1173, 7
          %v1175 = vsub.s32 %v1172, %v1174
          %v1176 = vrot.slane %v1162, %v1175
          %v1177 = vcombine.low %v960, %v984
          %v1178 = vcombine.high %v960, %v984
          %v1180 = vunpack.c.l.s4 1983009808
          %v1181 = vunpack.c.0.s8 %v1180
          %v1182 = vlaneseq
          %v1183 = vshrl.u32 %v1182, 7
          %v1184 = vsub.s32 %v1181, %v1183
          %v1185 = vrot.slane %v1177, %v1184
          %v1187 = vunpack.c.l.s4 1983009808
          %v1188 = vunpack.c.0.s8 %v1187
          %v1189 = vlaneseq
          %v1190 = vshrl.u32 %v1189, 7
          %v1191 = vsub.s32 %v1188, %v1190
          %v1192 = vrot.slane %v1178, %v1191
          %v1193 = vcombine.low %v1137, %v1153
          %v1194 = vcombine.high %v1137, %v1153
          %v1196 = vunpack.c.l.s4 1934713408
          %v1197 = vunpack.c.0.s8 %v1196
          %v1198 = vlaneseq
          %v1199 = vshrl.u32 %v1198, 7
          %v1200 = vsub.s32 %v1197, %v1199
          %v1201 = vrot.slane %v1193, %v1200
          %v1203 = vunpack.c.l.s4 1934713408
          %v1204 = vunpack.c.0.s8 %v1203
          %v1205 = vlaneseq
          %v1206 = vshrl.u32 %v1205, 7
          %v1207 = vsub.s32 %v1204, %v1206
          %v1208 = vrot.slane %v1194, %v1207
          %v1209 = vcombine.low %v1144, %v1160
          %v1210 = vcombine.high %v1144, %v1160
          %v1212 = vunpack.c.l.s4 1934713408
          %v1213 = vunpack.c.0.s8 %v1212
          %v1214 = vlaneseq
          %v1215 = vshrl.u32 %v1214, 7
          %v1216 = vsub.s32 %v1213, %v1215
          %v1217 = vrot.slane %v1209, %v1216
          %v1219 = vunpack.c.l.s4 1934713408
          %v1220 = vunpack.c.0.s8 %v1219
          %v1221 = vlaneseq
          %v1222 = vshrl.u32 %v1221, 7
          %v1223 = vsub.s32 %v1220, %v1222
          %v1224 = vrot.slane %v1210, %v1223
          %v1225 = vcombine.low %v1169, %v1185
          %v1226 = vcombine.high %v1169, %v1185
          %v1228 = vunpack.c.l.s4 1934713408
          %v1229 = vunpack.c.0.s8 %v1228
          %v1230 = vlaneseq
          %v1231 = vshrl.u32 %v1230, 7
          %v1232 = vsub.s32 %v1229, %v1231
          %v1233 = vrot.slane %v1225, %v1232
          %v1235 = vunpack.c.l.s4 1934713408
          %v1236 = vunpack.c.0.s8 %v1235
          %v1237 = vlaneseq
          %v1238 = vshrl.u32 %v1237, 7
          %v1239 = vsub.s32 %v1236, %v1238
          %v1240 = vrot.slane %v1226, %v1239
          %v1241 = vcombine.low %v1176, %v1192
          %v1242 = vcombine.high %v1176, %v1192
          %v1244 = vunpack.c.l.s4 1934713408
          %v1245 = vunpack.c.0.s8 %v1244
          %v1246 = vlaneseq
          %v1247 = vshrl.u32 %v1246, 7
          %v1248 = vsub.s32 %v1245, %v1247
          %v1249 = vrot.slane %v1241, %v1248
          %v1251 = vunpack.c.l.s4 1934713408
          %v1252 = vunpack.c.0.s8 %v1251
          %v1253 = vlaneseq
          %v1254 = vshrl.u32 %v1253, 7
          %v1255 = vsub.s32 %v1252, %v1254
          %v1256 = vrot.slane %v1242, %v1255
          %v1257 = vcombine.low %v1201, %v1233
          %v1258 = vcombine.high %v1201, %v1233
          %v1259 = vcombine.low %v1208, %v1240
          %v1260 = vcombine.high %v1208, %v1240
          %v1261 = vcombine.low %v1217, %v1249
          %v1262 = vcombine.high %v1217, %v1249
          %v1263 = vcombine.low %v1224, %v1256
          %v1264 = vcombine.high %v1224, %v1256
          %v1265 = vcombine.low %v814, %v934
          %v1266 = vcombine.high %v814, %v934
          %v1268 = vunpack.c.l.s4 1983009808
          %v1269 = vunpack.c.0.s8 %v1268
          %v1270 = vlaneseq
          %v1271 = vshrl.u32 %v1270, 7
          %v1272 = vsub.s32 %v1269, %v1271
          %v1273 = vrot.slane %v1265, %v1272
          %v1275 = vunpack.c.l.s4 1983009808
          %v1276 = vunpack.c.0.s8 %v1275
          %v1277 = vlaneseq
          %v1278 = vshrl.u32 %v1277, 7
          %v1279 = vsub.s32 %v1276, %v1278
          %v1280 = vrot.slane %v1266, %v1279
          %v1281 = vcombine.low %v922, %v946
          %v1282 = vcombine.high %v922, %v946
          %v1284 = vunpack.c.l.s4 1983009808
          %v1285 = vunpack.c.0.s8 %v1284
          %v1286 = vlaneseq
          %v1287 = vshrl.u32 %v1286, 7
          %v1288 = vsub.s32 %v1285, %v1287
          %v1289 = vrot.slane %v1281, %v1288
          %v1291 = vunpack.c.l.s4 1983009808
          %v1292 = vunpack.c.0.s8 %v1291
          %v1293 = vlaneseq
          %v1294 = vshrl.u32 %v1293, 7
          %v1295 = vsub.s32 %v1292, %v1294
          %v1296 = vrot.slane %v1282, %v1295
          %v1297 = vcombine.low %v816, %v974
          %v1298 = vcombine.high %v816, %v974
          %v1300 = vunpack.c.l.s4 1983009808
          %v1301 = vunpack.c.0.s8 %v1300
          %v1302 = vlaneseq
          %v1303 = vshrl.u32 %v1302, 7
          %v1304 = vsub.s32 %v1301, %v1303
          %v1305 = vrot.slane %v1297, %v1304
          %v1307 = vunpack.c.l.s4 1983009808
          %v1308 = vunpack.c.0.s8 %v1307
          %v1309 = vlaneseq
          %v1310 = vshrl.u32 %v1309, 7
          %v1311 = vsub.s32 %v1308, %v1310
          %v1312 = vrot.slane %v1298, %v1311
          %v1313 = vcombine.low %v962, %v986
          %v1314 = vcombine.high %v962, %v986
          %v1316 = vunpack.c.l.s4 1983009808
          %v1317 = vunpack.c.0.s8 %v1316
          %v1318 = vlaneseq
          %v1319 = vshrl.u32 %v1318, 7
          %v1320 = vsub.s32 %v1317, %v1319
          %v1321 = vrot.slane %v1313, %v1320
          %v1323 = vunpack.c.l.s4 1983009808
          %v1324 = vunpack.c.0.s8 %v1323
          %v1325 = vlaneseq
          %v1326 = vshrl.u32 %v1325, 7
          %v1327 = vsub.s32 %v1324, %v1326
          %v1328 = vrot.slane %v1314, %v1327
          %v1329 = vcombine.low %v1273, %v1289
          %v1330 = vcombine.high %v1273, %v1289
          %v1332 = vunpack.c.l.s4 1934713408
          %v1333 = vunpack.c.0.s8 %v1332
          %v1334 = vlaneseq
          %v1335 = vshrl.u32 %v1334, 7
          %v1336 = vsub.s32 %v1333, %v1335
          %v1337 = vrot.slane %v1329, %v1336
          %v1339 = vunpack.c.l.s4 1934713408
          %v1340 = vunpack.c.0.s8 %v1339
          %v1341 = vlaneseq
          %v1342 = vshrl.u32 %v1341, 7
          %v1343 = vsub.s32 %v1340, %v1342
          %v1344 = vrot.slane %v1330, %v1343
          %v1345 = vcombine.low %v1280, %v1296
          %v1346 = vcombine.high %v1280, %v1296
          %v1348 = vunpack.c.l.s4 1934713408
          %v1349 = vunpack.c.0.s8 %v1348
          %v1350 = vlaneseq
          %v1351 = vshrl.u32 %v1350, 7
          %v1352 = vsub.s32 %v1349, %v1351
          %v1353 = vrot.slane %v1345, %v1352
          %v1355 = vunpack.c.l.s4 1934713408
          %v1356 = vunpack.c.0.s8 %v1355
          %v1357 = vlaneseq
          %v1358 = vshrl.u32 %v1357, 7
          %v1359 = vsub.s32 %v1356, %v1358
          %v1360 = vrot.slane %v1346, %v1359
          %v1361 = vcombine.low %v1305, %v1321
          %v1362 = vcombine.high %v1305, %v1321
          %v1364 = vunpack.c.l.s4 1934713408
          %v1365 = vunpack.c.0.s8 %v1364
          %v1366 = vlaneseq
          %v1367 = vshrl.u32 %v1366, 7
          %v1368 = vsub.s32 %v1365, %v1367
          %v1369 = vrot.slane %v1361, %v1368
          %v1371 = vunpack.c.l.s4 1934713408
          %v1372 = vunpack.c.0.s8 %v1371
          %v1373 = vlaneseq
          %v1374 = vshrl.u32 %v1373, 7
          %v1375 = vsub.s32 %v1372, %v1374
          %v1376 = vrot.slane %v1362, %v1375
          %v1377 = vcombine.low %v1312, %v1328
          %v1378 = vcombine.high %v1312, %v1328
          %v1380 = vunpack.c.l.s4 1934713408
          %v1381 = vunpack.c.0.s8 %v1380
          %v1382 = vlaneseq
          %v1383 = vshrl.u32 %v1382, 7
          %v1384 = vsub.s32 %v1381, %v1383
          %v1385 = vrot.slane %v1377, %v1384
          %v1387 = vunpack.c.l.s4 1934713408
          %v1388 = vunpack.c.0.s8 %v1387
          %v1389 = vlaneseq
          %v1390 = vshrl.u32 %v1389, 7
          %v1391 = vsub.s32 %v1388, %v1390
          %v1392 = vrot.slane %v1378, %v1391
          %v1393 = vcombine.low %v1337, %v1369
          %v1394 = vcombine.high %v1337, %v1369
          %v1395 = vcombine.low %v1344, %v1376
          %v1396 = vcombine.high %v1344, %v1376
          %v1397 = vcombine.low %v1353, %v1385
          %v1398 = vcombine.high %v1353, %v1385
          %v1399 = vcombine.low %v1360, %v1392
          %v1400 = vcombine.high %v1360, %v1392
          %v1401 = vcombine.low %v820, %v936
          %v1402 = vcombine.high %v820, %v936
          %v1404 = vunpack.c.l.s4 1983009808
          %v1405 = vunpack.c.0.s8 %v1404
          %v1406 = vlaneseq
          %v1407 = vshrl.u32 %v1406, 7
          %v1408 = vsub.s32 %v1405, %v1407
          %v1409 = vrot.slane %v1401, %v1408
          %v1411 = vunpack.c.l.s4 1983009808
          %v1412 = vunpack.c.0.s8 %v1411
          %v1413 = vlaneseq
          %v1414 = vshrl.u32 %v1413, 7
          %v1415 = vsub.s32 %v1412, %v1414
          %v1416 = vrot.slane %v1402, %v1415
          %v1417 = vcombine.low %v924, %v948
          %v1418 = vcombine.high %v924, %v948
          %v1420 = vunpack.c.l.s4 1983009808
          %v1421 = vunpack.c.0.s8 %v1420
          %v1422 = vlaneseq
          %v1423 = vshrl.u32 %v1422, 7
          %v1424 = vsub.s32 %v1421, %v1423
          %v1425 = vrot.slane %v1417, %v1424
          %v1427 = vunpack.c.l.s4 1983009808
          %v1428 = vunpack.c.0.s8 %v1427
          %v1429 = vlaneseq
          %v1430 = vshrl.u32 %v1429, 7
          %v1431 = vsub.s32 %v1428, %v1430
          %v1432 = vrot.slane %v1418, %v1431
          %v1433 = vcombine.low %v822, %v976
          %v1434 = vcombine.high %v822, %v976
          %v1436 = vunpack.c.l.s4 1983009808
          %v1437 = vunpack.c.0.s8 %v1436
          %v1438 = vlaneseq
          %v1439 = vshrl.u32 %v1438, 7
          %v1440 = vsub.s32 %v1437, %v1439
          %v1441 = vrot.slane %v1433, %v1440
          %v1443 = vunpack.c.l.s4 1983009808
          %v1444 = vunpack.c.0.s8 %v1443
          %v1445 = vlaneseq
          %v1446 = vshrl.u32 %v1445, 7
          %v1447 = vsub.s32 %v1444, %v1446
          %v1448 = vrot.slane %v1434, %v1447
          %v1449 = vcombine.low %v964, %v988
          %v1450 = vcombine.high %v964, %v988
          %v1452 = vunpack.c.l.s4 1983009808
          %v1453 = vunpack.c.0.s8 %v1452
          %v1454 = vlaneseq
          %v1455 = vshrl.u32 %v1454, 7
          %v1456 = vsub.s32 %v1453, %v1455
          %v1457 = vrot.slane %v1449, %v1456
          %v1459 = vunpack.c.l.s4 1983009808
          %v1460 = vunpack.c.0.s8 %v1459
          %v1461 = vlaneseq
          %v1462 = vshrl.u32 %v1461, 7
          %v1463 = vsub.s32 %v1460, %v1462
          %v1464 = vrot.slane %v1450, %v1463
          %v1465 = vcombine.low %v1409, %v1425
          %v1466 = vcombine.high %v1409, %v1425
          %v1468 = vunpack.c.l.s4 1934713408
          %v1469 = vunpack.c.0.s8 %v1468
          %v1470 = vlaneseq
          %v1471 = vshrl.u32 %v1470, 7
          %v1472 = vsub.s32 %v1469, %v1471
          %v1473 = vrot.slane %v1465, %v1472
          %v1475 = vunpack.c.l.s4 1934713408
          %v1476 = vunpack.c.0.s8 %v1475
          %v1477 = vlaneseq
          %v1478 = vshrl.u32 %v1477, 7
          %v1479 = vsub.s32 %v1476, %v1478
          %v1480 = vrot.slane %v1466, %v1479
          %v1481 = vcombine.low %v1416, %v1432
          %v1482 = vcombine.high %v1416, %v1432
          %v1484 = vunpack.c.l.s4 1934713408
          %v1485 = vunpack.c.0.s8 %v1484
          %v1486 = vlaneseq
          %v1487 = vshrl.u32 %v1486, 7
          %v1488 = vsub.s32 %v1485, %v1487
          %v1489 = vrot.slane %v1481, %v1488
          %v1491 = vunpack.c.l.s4 1934713408
          %v1492 = vunpack.c.0.s8 %v1491
          %v1493 = vlaneseq
          %v1494 = vshrl.u32 %v1493, 7
          %v1495 = vsub.s32 %v1492, %v1494
          %v1496 = vrot.slane %v1482, %v1495
          %v1497 = vcombine.low %v1441, %v1457
          %v1498 = vcombine.high %v1441, %v1457
          %v1500 = vunpack.c.l.s4 1934713408
          %v1501 = vunpack.c.0.s8 %v1500
          %v1502 = vlaneseq
          %v1503 = vshrl.u32 %v1502, 7
          %v1504 = vsub.s32 %v1501, %v1503
          %v1505 = vrot.slane %v1497, %v1504
          %v1507 = vunpack.c.l.s4 1934713408
          %v1508 = vunpack.c.0.s8 %v1507
          %v1509 = vlaneseq
          %v1510 = vshrl.u32 %v1509, 7
          %v1511 = vsub.s32 %v1508, %v1510
          %v1512 = vrot.slane %v1498, %v1511
          %v1513 = vcombine.low %v1448, %v1464
          %v1514 = vcombine.high %v1448, %v1464
          %v1516 = vunpack.c.l.s4 1934713408
          %v1517 = vunpack.c.0.s8 %v1516
          %v1518 = vlaneseq
          %v1519 = vshrl.u32 %v1518, 7
          %v1520 = vsub.s32 %v1517, %v1519
          %v1521 = vrot.slane %v1513, %v1520
          %v1523 = vunpack.c.l.s4 1934713408
          %v1524 = vunpack.c.0.s8 %v1523
          %v1525 = vlaneseq
          %v1526 = vshrl.u32 %v1525, 7
          %v1527 = vsub.s32 %v1524, %v1526
          %v1528 = vrot.slane %v1514, %v1527
          %v1529 = vcombine.low %v1473, %v1505
          %v1530 = vcombine.high %v1473, %v1505
          %v1531 = vcombine.low %v1480, %v1512
          %v1532 = vcombine.high %v1480, %v1512
          %v1533 = vcombine.low %v1489, %v1521
          %v1534 = vcombine.high %v1489, %v1521
          %v1535 = vcombine.low %v1496, %v1528
          %v1536 = vcombine.high %v1496, %v1528
          %v1537 = vcombine.low %v1121, %v1123
          %v1538 = vcombine.high %v1121, %v1123
          %v1540 = vunpack.c.l.s4 1983009808
          %v1541 = vunpack.c.0.s8 %v1540
          %v1542 = vlaneseq
          %v1543 = vshrl.u32 %v1542, 7
          %v1544 = vsub.s32 %v1541, %v1543
          %v1545 = vrot.slane %v1537, %v1544
          %v1547 = vunpack.c.l.s4 1983009808
          %v1548 = vunpack.c.0.s8 %v1547
          %v1549 = vlaneseq
          %v1550 = vshrl.u32 %v1549, 7
          %v1551 = vsub.s32 %v1548, %v1550
          %v1552 = vrot.slane %v1538, %v1551
          %v1553 = vcombine.low %v1122, %v1124
          %v1554 = vcombine.high %v1122, %v1124
          %v1556 = vunpack.c.l.s4 1983009808
          %v1557 = vunpack.c.0.s8 %v1556
          %v1558 = vlaneseq
          %v1559 = vshrl.u32 %v1558, 7
          %v1560 = vsub.s32 %v1557, %v1559
          %v1561 = vrot.slane %v1553, %v1560
          %v1563 = vunpack.c.l.s4 1983009808
          %v1564 = vunpack.c.0.s8 %v1563
          %v1565 = vlaneseq
          %v1566 = vshrl.u32 %v1565, 7
          %v1567 = vsub.s32 %v1564, %v1566
          %v1568 = vrot.slane %v1554, %v1567
          %v1569 = vcombine.low %v1125, %v1127
          %v1570 = vcombine.high %v1125, %v1127
          %v1572 = vunpack.c.l.s4 1983009808
          %v1573 = vunpack.c.0.s8 %v1572
          %v1574 = vlaneseq
          %v1575 = vshrl.u32 %v1574, 7
          %v1576 = vsub.s32 %v1573, %v1575
          %v1577 = vrot.slane %v1569, %v1576
          %v1579 = vunpack.c.l.s4 1983009808
          %v1580 = vunpack.c.0.s8 %v1579
          %v1581 = vlaneseq
          %v1582 = vshrl.u32 %v1581, 7
          %v1583 = vsub.s32 %v1580, %v1582
          %v1584 = vrot.slane %v1570, %v1583
          %v1585 = vcombine.low %v1126, %v1128
          %v1586 = vcombine.high %v1126, %v1128
          %v1588 = vunpack.c.l.s4 1983009808
          %v1589 = vunpack.c.0.s8 %v1588
          %v1590 = vlaneseq
          %v1591 = vshrl.u32 %v1590, 7
          %v1592 = vsub.s32 %v1589, %v1591
          %v1593 = vrot.slane %v1585, %v1592
          %v1595 = vunpack.c.l.s4 1983009808
          %v1596 = vunpack.c.0.s8 %v1595
          %v1597 = vlaneseq
          %v1598 = vshrl.u32 %v1597, 7
          %v1599 = vsub.s32 %v1596, %v1598
          %v1600 = vrot.slane %v1586, %v1599
          %v1601 = vcombine.low %v1545, %v1561
          %v1602 = vcombine.high %v1545, %v1561
          %v1604 = vunpack.c.l.s4 1934713408
          %v1605 = vunpack.c.0.s8 %v1604
          %v1606 = vlaneseq
          %v1607 = vshrl.u32 %v1606, 7
          %v1608 = vsub.s32 %v1605, %v1607
          %v1609 = vrot.slane %v1601, %v1608
          %v1611 = vunpack.c.l.s4 1934713408
          %v1612 = vunpack.c.0.s8 %v1611
          %v1613 = vlaneseq
          %v1614 = vshrl.u32 %v1613, 7
          %v1615 = vsub.s32 %v1612, %v1614
          %v1616 = vrot.slane %v1602, %v1615
          %v1617 = vcombine.low %v1552, %v1568
          %v1618 = vcombine.high %v1552, %v1568
          %v1620 = vunpack.c.l.s4 1934713408
          %v1621 = vunpack.c.0.s8 %v1620
          %v1622 = vlaneseq
          %v1623 = vshrl.u32 %v1622, 7
          %v1624 = vsub.s32 %v1621, %v1623
          %v1625 = vrot.slane %v1617, %v1624
          %v1627 = vunpack.c.l.s4 1934713408
          %v1628 = vunpack.c.0.s8 %v1627
          %v1629 = vlaneseq
          %v1630 = vshrl.u32 %v1629, 7
          %v1631 = vsub.s32 %v1628, %v1630
          %v1632 = vrot.slane %v1618, %v1631
          %v1633 = vcombine.low %v1577, %v1593
          %v1634 = vcombine.high %v1577, %v1593
          %v1636 = vunpack.c.l.s4 1934713408
          %v1637 = vunpack.c.0.s8 %v1636
          %v1638 = vlaneseq
          %v1639 = vshrl.u32 %v1638, 7
          %v1640 = vsub.s32 %v1637, %v1639
          %v1641 = vrot.slane %v1633, %v1640
          %v1643 = vunpack.c.l.s4 1934713408
          %v1644 = vunpack.c.0.s8 %v1643
          %v1645 = vlaneseq
          %v1646 = vshrl.u32 %v1645, 7
          %v1647 = vsub.s32 %v1644, %v1646
          %v1648 = vrot.slane %v1634, %v1647
          %v1649 = vcombine.low %v1584, %v1600
          %v1650 = vcombine.high %v1584, %v1600
          %v1652 = vunpack.c.l.s4 1934713408
          %v1653 = vunpack.c.0.s8 %v1652
          %v1654 = vlaneseq
          %v1655 = vshrl.u32 %v1654, 7
          %v1656 = vsub.s32 %v1653, %v1655
          %v1657 = vrot.slane %v1649, %v1656
          %v1659 = vunpack.c.l.s4 1934713408
          %v1660 = vunpack.c.0.s8 %v1659
          %v1661 = vlaneseq
          %v1662 = vshrl.u32 %v1661, 7
          %v1663 = vsub.s32 %v1660, %v1662
          %v1664 = vrot.slane %v1650, %v1663
          %v1665 = vcombine.low %v1609, %v1641
          %v1666 = vcombine.high %v1609, %v1641
          %v1667 = vcombine.low %v1616, %v1648
          %v1668 = vcombine.high %v1616, %v1648
          %v1669 = vcombine.low %v1625, %v1657
          %v1670 = vcombine.high %v1625, %v1657
          %v1671 = vcombine.low %v1632, %v1664
          %v1672 = vcombine.high %v1632, %v1664
          %v1673 = vcombine.low %v1257, %v1259
          %v1674 = vcombine.high %v1257, %v1259
          %v1676 = vunpack.c.l.s4 1983009808
          %v1677 = vunpack.c.0.s8 %v1676
          %v1678 = vlaneseq
          %v1679 = vshrl.u32 %v1678, 7
          %v1680 = vsub.s32 %v1677, %v1679
          %v1681 = vrot.slane %v1673, %v1680
          %v1683 = vunpack.c.l.s4 1983009808
          %v1684 = vunpack.c.0.s8 %v1683
          %v1685 = vlaneseq
          %v1686 = vshrl.u32 %v1685, 7
          %v1687 = vsub.s32 %v1684, %v1686
          %v1688 = vrot.slane %v1674, %v1687
          %v1689 = vcombine.low %v1258, %v1260
          %v1690 = vcombine.high %v1258, %v1260
          %v1692 = vunpack.c.l.s4 1983009808
          %v1693 = vunpack.c.0.s8 %v1692
          %v1694 = vlaneseq
          %v1695 = vshrl.u32 %v1694, 7
          %v1696 = vsub.s32 %v1693, %v1695
          %v1697 = vrot.slane %v1689, %v1696
          %v1699 = vunpack.c.l.s4 1983009808
          %v1700 = vunpack.c.0.s8 %v1699
          %v1701 = vlaneseq
          %v1702 = vshrl.u32 %v1701, 7
          %v1703 = vsub.s32 %v1700, %v1702
          %v1704 = vrot.slane %v1690, %v1703
          %v1705 = vcombine.low %v1261, %v1263
          %v1706 = vcombine.high %v1261, %v1263
          %v1708 = vunpack.c.l.s4 1983009808
          %v1709 = vunpack.c.0.s8 %v1708
          %v1710 = vlaneseq
          %v1711 = vshrl.u32 %v1710, 7
          %v1712 = vsub.s32 %v1709, %v1711
          %v1713 = vrot.slane %v1705, %v1712
          %v1715 = vunpack.c.l.s4 1983009808
          %v1716 = vunpack.c.0.s8 %v1715
          %v1717 = vlaneseq
          %v1718 = vshrl.u32 %v1717, 7
          %v1719 = vsub.s32 %v1716, %v1718
          %v1720 = vrot.slane %v1706, %v1719
          %v1721 = vcombine.low %v1262, %v1264
          %v1722 = vcombine.high %v1262, %v1264
          %v1724 = vunpack.c.l.s4 1983009808
          %v1725 = vunpack.c.0.s8 %v1724
          %v1726 = vlaneseq
          %v1727 = vshrl.u32 %v1726, 7
          %v1728 = vsub.s32 %v1725, %v1727
          %v1729 = vrot.slane %v1721, %v1728
          %v1731 = vunpack.c.l.s4 1983009808
          %v1732 = vunpack.c.0.s8 %v1731
          %v1733 = vlaneseq
          %v1734 = vshrl.u32 %v1733, 7
          %v1735 = vsub.s32 %v1732, %v1734
          %v1736 = vrot.slane %v1722, %v1735
          %v1737 = vcombine.low %v1681, %v1697
          %v1738 = vcombine.high %v1681, %v1697
          %v1740 = vunpack.c.l.s4 1934713408
          %v1741 = vunpack.c.0.s8 %v1740
          %v1742 = vlaneseq
          %v1743 = vshrl.u32 %v1742, 7
          %v1744 = vsub.s32 %v1741, %v1743
          %v1745 = vrot.slane %v1737, %v1744
          %v1747 = vunpack.c.l.s4 1934713408
          %v1748 = vunpack.c.0.s8 %v1747
          %v1749 = vlaneseq
          %v1750 = vshrl.u32 %v1749, 7
          %v1751 = vsub.s32 %v1748, %v1750
          %v1752 = vrot.slane %v1738, %v1751
          %v1753 = vcombine.low %v1688, %v1704
          %v1754 = vcombine.high %v1688, %v1704
          %v1756 = vunpack.c.l.s4 1934713408
          %v1757 = vunpack.c.0.s8 %v1756
          %v1758 = vlaneseq
          %v1759 = vshrl.u32 %v1758, 7
          %v1760 = vsub.s32 %v1757, %v1759
          %v1761 = vrot.slane %v1753, %v1760
          %v1763 = vunpack.c.l.s4 1934713408
          %v1764 = vunpack.c.0.s8 %v1763
          %v1765 = vlaneseq
          %v1766 = vshrl.u32 %v1765, 7
          %v1767 = vsub.s32 %v1764, %v1766
          %v1768 = vrot.slane %v1754, %v1767
          %v1769 = vcombine.low %v1713, %v1729
          %v1770 = vcombine.high %v1713, %v1729
          %v1772 = vunpack.c.l.s4 1934713408
          %v1773 = vunpack.c.0.s8 %v1772
          %v1774 = vlaneseq
          %v1775 = vshrl.u32 %v1774, 7
          %v1776 = vsub.s32 %v1773, %v1775
          %v1777 = vrot.slane %v1769, %v1776
          %v1779 = vunpack.c.l.s4 1934713408
          %v1780 = vunpack.c.0.s8 %v1779
          %v1781 = vlaneseq
          %v1782 = vshrl.u32 %v1781, 7
          %v1783 = vsub.s32 %v1780, %v1782
          %v1784 = vrot.slane %v1770, %v1783
          %v1785 = vcombine.low %v1720, %v1736
          %v1786 = vcombine.high %v1720, %v1736
          %v1788 = vunpack.c.l.s4 1934713408
          %v1789 = vunpack.c.0.s8 %v1788
          %v1790 = vlaneseq
          %v1791 = vshrl.u32 %v1790, 7
          %v1792 = vsub.s32 %v1789, %v1791
          %v1793 = vrot.slane %v1785, %v1792
          %v1795 = vunpack.c.l.s4 1934713408
          %v1796 = vunpack.c.0.s8 %v1795
          %v1797 = vlaneseq
          %v1798 = vshrl.u32 %v1797, 7
          %v1799 = vsub.s32 %v1796, %v1798
          %v1800 = vrot.slane %v1786, %v1799
          %v1801 = vcombine.low %v1745, %v1777
          %v1802 = vcombine.high %v1745, %v1777
          %v1803 = vcombine.low %v1752, %v1784
          %v1804 = vcombine.high %v1752, %v1784
          %v1805 = vcombine.low %v1761, %v1793
          %v1806 = vcombine.high %v1761, %v1793
          %v1807 = vcombine.low %v1768, %v1800
          %v1808 = vcombine.high %v1768, %v1800
          %v1809 = vcombine.low %v1393, %v1395
          %v1810 = vcombine.high %v1393, %v1395
          %v1812 = vunpack.c.l.s4 1983009808
          %v1813 = vunpack.c.0.s8 %v1812
          %v1814 = vlaneseq
          %v1815 = vshrl.u32 %v1814, 7
          %v1816 = vsub.s32 %v1813, %v1815
          %v1817 = vrot.slane %v1809, %v1816
          %v1819 = vunpack.c.l.s4 1983009808
          %v1820 = vunpack.c.0.s8 %v1819
          %v1821 = vlaneseq
          %v1822 = vshrl.u32 %v1821, 7
          %v1823 = vsub.s32 %v1820, %v1822
          %v1824 = vrot.slane %v1810, %v1823
          %v1825 = vcombine.low %v1394, %v1396
          %v1826 = vcombine.high %v1394, %v1396
          %v1828 = vunpack.c.l.s4 1983009808
          %v1829 = vunpack.c.0.s8 %v1828
          %v1830 = vlaneseq
          %v1831 = vshrl.u32 %v1830, 7
          %v1832 = vsub.s32 %v1829, %v1831
          %v1833 = vrot.slane %v1825, %v1832
          %v1835 = vunpack.c.l.s4 1983009808
          %v1836 = vunpack.c.0.s8 %v1835
          %v1837 = vlaneseq
          %v1838 = vshrl.u32 %v1837, 7
          %v1839 = vsub.s32 %v1836, %v1838
          %v1840 = vrot.slane %v1826, %v1839
          %v1841 = vcombine.low %v1397, %v1399
          %v1842 = vcombine.high %v1397, %v1399
          %v1844 = vunpack.c.l.s4 1983009808
          %v1845 = vunpack.c.0.s8 %v1844
          %v1846 = vlaneseq
          %v1847 = vshrl.u32 %v1846, 7
          %v1848 = vsub.s32 %v1845, %v1847
          %v1849 = vrot.slane %v1841, %v1848
          %v1851 = vunpack.c.l.s4 1983009808
          %v1852 = vunpack.c.0.s8 %v1851
          %v1853 = vlaneseq
          %v1854 = vshrl.u32 %v1853, 7
          %v1855 = vsub.s32 %v1852, %v1854
          %v1856 = vrot.slane %v1842, %v1855
          %v1857 = vcombine.low %v1398, %v1400
          %v1858 = vcombine.high %v1398, %v1400
          %v1860 = vunpack.c.l.s4 1983009808
          %v1861 = vunpack.c.0.s8 %v1860
          %v1862 = vlaneseq
          %v1863 = vshrl.u32 %v1862, 7
          %v1864 = vsub.s32 %v1861, %v1863
          %v1865 = vrot.slane %v1857, %v1864
          %v1867 = vunpack.c.l.s4 1983009808
          %v1868 = vunpack.c.0.s8 %v1867
          %v1869 = vlaneseq
          %v1870 = vshrl.u32 %v1869, 7
          %v1871 = vsub.s32 %v1868, %v1870
          %v1872 = vrot.slane %v1858, %v1871
          %v1873 = vcombine.low %v1817, %v1833
          %v1874 = vcombine.high %v1817, %v1833
          %v1876 = vunpack.c.l.s4 1934713408
          %v1877 = vunpack.c.0.s8 %v1876
          %v1878 = vlaneseq
          %v1879 = vshrl.u32 %v1878, 7
          %v1880 = vsub.s32 %v1877, %v1879
          %v1881 = vrot.slane %v1873, %v1880
          %v1883 = vunpack.c.l.s4 1934713408
          %v1884 = vunpack.c.0.s8 %v1883
          %v1885 = vlaneseq
          %v1886 = vshrl.u32 %v1885, 7
          %v1887 = vsub.s32 %v1884, %v1886
          %v1888 = vrot.slane %v1874, %v1887
          %v1889 = vcombine.low %v1824, %v1840
          %v1890 = vcombine.high %v1824, %v1840
          %v1892 = vunpack.c.l.s4 1934713408
          %v1893 = vunpack.c.0.s8 %v1892
          %v1894 = vlaneseq
          %v1895 = vshrl.u32 %v1894, 7
          %v1896 = vsub.s32 %v1893, %v1895
          %v1897 = vrot.slane %v1889, %v1896
          %v1899 = vunpack.c.l.s4 1934713408
          %v1900 = vunpack.c.0.s8 %v1899
          %v1901 = vlaneseq
          %v1902 = vshrl.u32 %v1901, 7
          %v1903 = vsub.s32 %v1900, %v1902
          %v1904 = vrot.slane %v1890, %v1903
          %v1905 = vcombine.low %v1849, %v1865
          %v1906 = vcombine.high %v1849, %v1865
          %v1908 = vunpack.c.l.s4 1934713408
          %v1909 = vunpack.c.0.s8 %v1908
          %v1910 = vlaneseq
          %v1911 = vshrl.u32 %v1910, 7
          %v1912 = vsub.s32 %v1909, %v1911
          %v1913 = vrot.slane %v1905, %v1912
          %v1915 = vunpack.c.l.s4 1934713408
          %v1916 = vunpack.c.0.s8 %v1915
          %v1917 = vlaneseq
          %v1918 = vshrl.u32 %v1917, 7
          %v1919 = vsub.s32 %v1916, %v1918
          %v1920 = vrot.slane %v1906, %v1919
          %v1921 = vcombine.low %v1856, %v1872
          %v1922 = vcombine.high %v1856, %v1872
          %v1924 = vunpack.c.l.s4 1934713408
          %v1925 = vunpack.c.0.s8 %v1924
          %v1926 = vlaneseq
          %v1927 = vshrl.u32 %v1926, 7
          %v1928 = vsub.s32 %v1925, %v1927
          %v1929 = vrot.slane %v1921, %v1928
          %v1931 = vunpack.c.l.s4 1934713408
          %v1932 = vunpack.c.0.s8 %v1931
          %v1933 = vlaneseq
          %v1934 = vshrl.u32 %v1933, 7
          %v1935 = vsub.s32 %v1932, %v1934
          %v1936 = vrot.slane %v1922, %v1935
          %v1937 = vcombine.low %v1881, %v1913
          %v1938 = vcombine.high %v1881, %v1913
          %v1939 = vcombine.low %v1888, %v1920
          %v1940 = vcombine.high %v1888, %v1920
          %v1941 = vcombine.low %v1897, %v1929
          %v1942 = vcombine.high %v1897, %v1929
          %v1943 = vcombine.low %v1904, %v1936
          %v1944 = vcombine.high %v1904, %v1936
          %v1945 = vcombine.low %v1529, %v1531
          %v1946 = vcombine.high %v1529, %v1531
          %v1948 = vunpack.c.l.s4 1983009808
          %v1949 = vunpack.c.0.s8 %v1948
          %v1950 = vlaneseq
          %v1951 = vshrl.u32 %v1950, 7
          %v1952 = vsub.s32 %v1949, %v1951
          %v1953 = vrot.slane %v1945, %v1952
          %v1955 = vunpack.c.l.s4 1983009808
          %v1956 = vunpack.c.0.s8 %v1955
          %v1957 = vlaneseq
          %v1958 = vshrl.u32 %v1957, 7
          %v1959 = vsub.s32 %v1956, %v1958
          %v1960 = vrot.slane %v1946, %v1959
          %v1961 = vcombine.low %v1530, %v1532
          %v1962 = vcombine.high %v1530, %v1532
          %v1964 = vunpack.c.l.s4 1983009808
          %v1965 = vunpack.c.0.s8 %v1964
          %v1966 = vlaneseq
          %v1967 = vshrl.u32 %v1966, 7
          %v1968 = vsub.s32 %v1965, %v1967
          %v1969 = vrot.slane %v1961, %v1968
          %v1971 = vunpack.c.l.s4 1983009808
          %v1972 = vunpack.c.0.s8 %v1971
          %v1973 = vlaneseq
          %v1974 = vshrl.u32 %v1973, 7
          %v1975 = vsub.s32 %v1972, %v1974
          %v1976 = vrot.slane %v1962, %v1975
          %v1977 = vcombine.low %v1533, %v1535
          %v1978 = vcombine.high %v1533, %v1535
          %v1980 = vunpack.c.l.s4 1983009808
          %v1981 = vunpack.c.0.s8 %v1980
          %v1982 = vlaneseq
          %v1983 = vshrl.u32 %v1982, 7
          %v1984 = vsub.s32 %v1981, %v1983
          %v1985 = vrot.slane %v1977, %v1984
          %v1987 = vunpack.c.l.s4 1983009808
          %v1988 = vunpack.c.0.s8 %v1987
          %v1989 = vlaneseq
          %v1990 = vshrl.u32 %v1989, 7
          %v1991 = vsub.s32 %v1988, %v1990
          %v1992 = vrot.slane %v1978, %v1991
          %v1993 = vcombine.low %v1534, %v1536
          %v1994 = vcombine.high %v1534, %v1536
          %v1996 = vunpack.c.l.s4 1983009808
          %v1997 = vunpack.c.0.s8 %v1996
          %v1998 = vlaneseq
          %v1999 = vshrl.u32 %v1998, 7
          %v2000 = vsub.s32 %v1997, %v1999
          %v2001 = vrot.slane %v1993, %v2000
          %v2003 = vunpack.c.l.s4 1983009808
          %v2004 = vunpack.c.0.s8 %v2003
          %v2005 = vlaneseq
          %v2006 = vshrl.u32 %v2005, 7
          %v2007 = vsub.s32 %v2004, %v2006
          %v2008 = vrot.slane %v1994, %v2007
          %v2009 = vcombine.low %v1953, %v1969
          %v2010 = vcombine.high %v1953, %v1969
          %v2012 = vunpack.c.l.s4 1934713408
          %v2013 = vunpack.c.0.s8 %v2012
          %v2014 = vlaneseq
          %v2015 = vshrl.u32 %v2014, 7
          %v2016 = vsub.s32 %v2013, %v2015
          %v2017 = vrot.slane %v2009, %v2016
          %v2019 = vunpack.c.l.s4 1934713408
          %v2020 = vunpack.c.0.s8 %v2019
          %v2021 = vlaneseq
          %v2022 = vshrl.u32 %v2021, 7
          %v2023 = vsub.s32 %v2020, %v2022
          %v2024 = vrot.slane %v2010, %v2023
          %v2025 = vcombine.low %v1960, %v1976
          %v2026 = vcombine.high %v1960, %v1976
          %v2028 = vunpack.c.l.s4 1934713408
          %v2029 = vunpack.c.0.s8 %v2028
          %v2030 = vlaneseq
          %v2031 = vshrl.u32 %v2030, 7
          %v2032 = vsub.s32 %v2029, %v2031
          %v2033 = vrot.slane %v2025, %v2032
          %v2035 = vunpack.c.l.s4 1934713408
          %v2036 = vunpack.c.0.s8 %v2035
          %v2037 = vlaneseq
          %v2038 = vshrl.u32 %v2037, 7
          %v2039 = vsub.s32 %v2036, %v2038
          %v2040 = vrot.slane %v2026, %v2039
          %v2041 = vcombine.low %v1985, %v2001
          %v2042 = vcombine.high %v1985, %v2001
          %v2044 = vunpack.c.l.s4 1934713408
          %v2045 = vunpack.c.0.s8 %v2044
          %v2046 = vlaneseq
          %v2047 = vshrl.u32 %v2046, 7
          %v2048 = vsub.s32 %v2045, %v2047
          %v2049 = vrot.slane %v2041, %v2048
          %v2051 = vunpack.c.l.s4 1934713408
          %v2052 = vunpack.c.0.s8 %v2051
          %v2053 = vlaneseq
          %v2054 = vshrl.u32 %v2053, 7
          %v2055 = vsub.s32 %v2052, %v2054
          %v2056 = vrot.slane %v2042, %v2055
          %v2057 = vcombine.low %v1992, %v2008
          %v2058 = vcombine.high %v1992, %v2008
          %v2060 = vunpack.c.l.s4 1934713408
          %v2061 = vunpack.c.0.s8 %v2060
          %v2062 = vlaneseq
          %v2063 = vshrl.u32 %v2062, 7
          %v2064 = vsub.s32 %v2061, %v2063
          %v2065 = vrot.slane %v2057, %v2064
          %v2067 = vunpack.c.l.s4 1934713408
          %v2068 = vunpack.c.0.s8 %v2067
          %v2069 = vlaneseq
          %v2070 = vshrl.u32 %v2069, 7
          %v2071 = vsub.s32 %v2068, %v2070
          %v2072 = vrot.slane %v2058, %v2071
          %v2073 = vcombine.low %v2017, %v2049
          %v2074 = vcombine.high %v2017, %v2049
          %v2075 = vcombine.low %v2024, %v2056
          %v2076 = vcombine.high %v2024, %v2056
          %v2077 = vcombine.low %v2033, %v2065
          %v2078 = vcombine.high %v2033, %v2065
          %v2079 = vcombine.low %v2040, %v2072
          %v2080 = vcombine.high %v2040, %v2072
          %v2081 = vpack.c.bf16 %v1801, %v1665
          %v2082 = vpack.c.bf16 %v2073, %v1937
          %v2083 = vpack.c.bf16 %v1802, %v1666
          %v2084 = vpack.c.bf16 %v2074, %v1938
          %v2085 = vpack.c.bf16 %v1803, %v1667
          %v2086 = vpack.c.bf16 %v2075, %v1939
          %v2087 = vpack.c.bf16 %v1804, %v1668
          %v2088 = vpack.c.bf16 %v2076, %v1940
          %v2089 = vpack.c.bf16 %v1805, %v1669
          %v2090 = vpack.c.bf16 %v2077, %v1941
          %v2091 = vpack.c.bf16 %v1806, %v1670
          %v2092 = vpack.c.bf16 %v2078, %v1942
          %v2093 = vpack.c.bf16 %v1807, %v1671
          %v2094 = vpack.c.bf16 %v2079, %v1943
          %v2095 = vpack.c.bf16 %v1808, %v1672
          %v2096 = vpack.c.bf16 %v2080, %v1944
          %v2113 = vunpack.c.l.b16 %v2081
          %v2114 = vunpack.c.h.b16 %v2081
          %v2115 = vunpack.c.l.b16 %v2082
          %v2116 = vunpack.c.h.b16 %v2082
          %v2117 = vunpack.c.l.b16 %v2083
          %v2118 = vunpack.c.h.b16 %v2083
          %v2119 = vunpack.c.l.b16 %v2084
          %v2120 = vunpack.c.h.b16 %v2084
          %v2121 = vunpack.c.l.b16 %v2085
          %v2122 = vunpack.c.h.b16 %v2085
          %v2123 = vunpack.c.l.b16 %v2086
          %v2124 = vunpack.c.h.b16 %v2086
          %v2125 = vunpack.c.l.b16 %v2087
          %v2126 = vunpack.c.h.b16 %v2087
          %v2127 = vunpack.c.l.b16 %v2088
          %v2128 = vunpack.c.h.b16 %v2088
          %v2129 = vunpack.c.l.b16 %v2089
          %v2130 = vunpack.c.h.b16 %v2089
          %v2131 = vunpack.c.l.b16 %v2090
          %v2132 = vunpack.c.h.b16 %v2090
          %v2133 = vunpack.c.l.b16 %v2091
          %v2134 = vunpack.c.h.b16 %v2091
          %v2135 = vunpack.c.l.b16 %v2092
          %v2136 = vunpack.c.h.b16 %v2092
          %v2137 = vunpack.c.l.b16 %v2093
          %v2138 = vunpack.c.h.b16 %v2093
          %v2139 = vunpack.c.l.b16 %v2094
          %v2140 = vunpack.c.h.b16 %v2094
          %v2141 = vunpack.c.l.b16 %v2095
          %v2142 = vunpack.c.h.b16 %v2095
          %v2143 = vunpack.c.l.b16 %v2096
          %v2144 = vunpack.c.h.b16 %v2096
          %v2145 = vpack.c.b16 %v2113, %v2113
          %v2146 = vpack.c.b16 %v2114, %v2114
          %v2147 = vpack.c.b16 %v2115, %v2115
          %v2148 = vpack.c.b16 %v2116, %v2116
          %v2149 = vpack.c.b16 %v2117, %v2117
          %v2150 = vpack.c.b16 %v2118, %v2118
          %v2151 = vpack.c.b16 %v2119, %v2119
          %v2152 = vpack.c.b16 %v2120, %v2120
          %v2153 = vpack.c.b16 %v2121, %v2121
          %v2154 = vpack.c.b16 %v2122, %v2122
          %v2155 = vpack.c.b16 %v2123, %v2123
          %v2156 = vpack.c.b16 %v2124, %v2124
          %v2157 = vpack.c.b16 %v2125, %v2125
          %v2158 = vpack.c.b16 %v2126, %v2126
          %v2159 = vpack.c.b16 %v2127, %v2127
          %v2160 = vpack.c.b16 %v2128, %v2128
          %v2161 = vpack.c.b16 %v2129, %v2129
          %v2162 = vpack.c.b16 %v2130, %v2130
          %v2163 = vpack.c.b16 %v2131, %v2131
          %v2164 = vpack.c.b16 %v2132, %v2132
          %v2165 = vpack.c.b16 %v2133, %v2133
          %v2166 = vpack.c.b16 %v2134, %v2134
          %v2167 = vpack.c.b16 %v2135, %v2135
          %v2168 = vpack.c.b16 %v2136, %v2136
          %v2169 = vpack.c.b16 %v2137, %v2137
          %v2170 = vpack.c.b16 %v2138, %v2138
          %v2171 = vpack.c.b16 %v2139, %v2139
          %v2172 = vpack.c.b16 %v2140, %v2140
          %v2173 = vpack.c.b16 %v2141, %v2141
          %v2174 = vpack.c.b16 %v2142, %v2142
          %v2175 = vpack.c.b16 %v2143, %v2143
          %v2176 = vpack.c.b16 %v2144, %v2144
          %vm2209 = vcmask 257024
          %2210 = vst.msk [vmem:[#allocation3] sm:$0xf] %vm2209, %v2145
          %2211 = vst.msk [vmem:[#allocation3 + $0x4] sm:$0xf] %vm2209, %v2146
          %2212 = vst.msk [vmem:[#allocation3 + $0x8] sm:$0xf] %vm2209, %v2147
          %2213 = vst.msk [vmem:[#allocation3 + $0xc] sm:$0xf] %vm2209, %v2148
          %2214 = vst.msk [vmem:[#allocation3 + $0x10] sm:$0xf] %vm2209, %v2149
          %2215 = vst.msk [vmem:[#allocation3 + $0x14] sm:$0xf] %vm2209, %v2150
          %2216 = vst.msk [vmem:[#allocation3 + $0x18] sm:$0xf] %vm2209, %v2151
          %2217 = vst.msk [vmem:[#allocation3 + $0x1c] sm:$0xf] %vm2209, %v2152
          %2218 = vst.msk [vmem:[#allocation3 + $0x20] sm:$0xf] %vm2209, %v2153
          %2219 = vst.msk [vmem:[#allocation3 + $0x24] sm:$0xf] %vm2209, %v2154
          %2220 = vst.msk [vmem:[#allocation3 + $0x28] sm:$0xf] %vm2209, %v2155
          %2221 = vst.msk [vmem:[#allocation3 + $0x2c] sm:$0xf] %vm2209, %v2156
          %2222 = vst.msk [vmem:[#allocation3 + $0x30] sm:$0xf] %vm2209, %v2157
          %2223 = vst.msk [vmem:[#allocation3 + $0x34] sm:$0xf] %vm2209, %v2158
          %2224 = vst.msk [vmem:[#allocation3 + $0x38] sm:$0xf] %vm2209, %v2159
          %2225 = vst.msk [vmem:[#allocation3 + $0x3c] sm:$0xf] %vm2209, %v2160
          %2226 = vst.msk [vmem:[#allocation3 + $0x40] sm:$0xf] %vm2209, %v2161
          %2227 = vst.msk [vmem:[#allocation3 + $0x44] sm:$0xf] %vm2209, %v2162
          %2228 = vst.msk [vmem:[#allocation3 + $0x48] sm:$0xf] %vm2209, %v2163
          %2229 = vst.msk [vmem:[#allocation3 + $0x4c] sm:$0xf] %vm2209, %v2164
          %2230 = vst.msk [vmem:[#allocation3 + $0x50] sm:$0xf] %vm2209, %v2165
          %2231 = vst.msk [vmem:[#allocation3 + $0x54] sm:$0xf] %vm2209, %v2166
          %2232 = vst.msk [vmem:[#allocation3 + $0x58] sm:$0xf] %vm2209, %v2167
          %2233 = vst.msk [vmem:[#allocation3 + $0x5c] sm:$0xf] %vm2209, %v2168
          %2234 = vst.msk [vmem:[#allocation3 + $0x60] sm:$0xf] %vm2209, %v2169
          %2235 = vst.msk [vmem:[#allocation3 + $0x64] sm:$0xf] %vm2209, %v2170
          %2236 = vst.msk [vmem:[#allocation3 + $0x68] sm:$0xf] %vm2209, %v2171
          %2237 = vst.msk [vmem:[#allocation3 + $0x6c] sm:$0xf] %vm2209, %v2172
          %2238 = vst.msk [vmem:[#allocation3 + $0x70] sm:$0xf] %vm2209, %v2173
          %2239 = vst.msk [vmem:[#allocation3 + $0x74] sm:$0xf] %vm2209, %v2174
          %2240 = vst.msk [vmem:[#allocation3 + $0x78] sm:$0xf] %vm2209, %v2175
          %2241 = vst.msk [vmem:[#allocation3 + $0x7c] sm:$0xf] %vm2209, %v2176
          %2246 = vrot.lane.b32.xlu0 %v891, 96
          %v2247 = vpop.permute.xlu0 %2246
          %2248 = vrot.lane.b32.xlu0 %v897, 96
          %v2249 = vpop.permute.xlu0 %2248
          %2250 = vrot.lane.b32.xlu0 %v903, 96
          %v2251 = vpop.permute.xlu0 %2250
          %2252 = vrot.lane.b32.xlu0 %v909, 96
          %v2253 = vpop.permute.xlu0 %2252
          %2258 = vrot.lane.b32.xlu0 %v891, 64
          %v2259 = vpop.permute.xlu0 %2258
          %2260 = vrot.lane.b32.xlu0 %v897, 64
          %v2261 = vpop.permute.xlu0 %2260
          %2262 = vrot.lane.b32.xlu0 %v903, 64
          %v2263 = vpop.permute.xlu0 %2262
          %2264 = vrot.lane.b32.xlu0 %v909, 64
          %v2265 = vpop.permute.xlu0 %2264
          %2270 = vrot.lane.b32.xlu0 %v891, 32
          %v2271 = vpop.permute.xlu0 %2270
          %2272 = vrot.lane.b32.xlu0 %v897, 32
          %v2273 = vpop.permute.xlu0 %2272
          %2274 = vrot.lane.b32.xlu0 %v903, 32
          %v2275 = vpop.permute.xlu0 %2274
          %2276 = vrot.lane.b32.xlu0 %v909, 32
          %v2277 = vpop.permute.xlu0 %2276
          %2286 = vrot.lane.b32.xlu0 %v893, 96
          %v2287 = vpop.permute.xlu0 %2286
          %2288 = vrot.lane.b32.xlu0 %v899, 96
          %v2289 = vpop.permute.xlu0 %2288
          %2290 = vrot.lane.b32.xlu0 %v905, 96
          %v2291 = vpop.permute.xlu0 %2290
          %2292 = vrot.lane.b32.xlu0 %v911, 96
          %v2293 = vpop.permute.xlu0 %2292
          %2298 = vrot.lane.b32.xlu0 %v893, 64
          %v2299 = vpop.permute.xlu0 %2298
          %2300 = vrot.lane.b32.xlu0 %v899, 64
          %v2301 = vpop.permute.xlu0 %2300
          %2302 = vrot.lane.b32.xlu0 %v905, 64
          %v2303 = vpop.permute.xlu0 %2302
          %2304 = vrot.lane.b32.xlu0 %v911, 64
          %v2305 = vpop.permute.xlu0 %2304
          %2310 = vrot.lane.b32.xlu0 %v893, 32
          %v2311 = vpop.permute.xlu0 %2310
          %2312 = vrot.lane.b32.xlu0 %v899, 32
          %v2313 = vpop.permute.xlu0 %2312
          %2314 = vrot.lane.b32.xlu0 %v905, 32
          %v2315 = vpop.permute.xlu0 %2314
          %2316 = vrot.lane.b32.xlu0 %v911, 32
          %v2317 = vpop.permute.xlu0 %2316
          %v2322 = vcombine.low %v891, %v2259
          %v2323 = vcombine.high %v891, %v2259
          %v2325 = vunpack.c.l.s4 1983009808
          %v2326 = vunpack.c.0.s8 %v2325
          %v2327 = vlaneseq
          %v2328 = vshrl.u32 %v2327, 7
          %v2329 = vsub.s32 %v2326, %v2328
          %v2330 = vrot.slane %v2322, %v2329
          %v2332 = vunpack.c.l.s4 1983009808
          %v2333 = vunpack.c.0.s8 %v2332
          %v2334 = vlaneseq
          %v2335 = vshrl.u32 %v2334, 7
          %v2336 = vsub.s32 %v2333, %v2335
          %v2337 = vrot.slane %v2323, %v2336
          %v2338 = vcombine.low %v2247, %v2271
          %v2339 = vcombine.high %v2247, %v2271
          %v2341 = vunpack.c.l.s4 1983009808
          %v2342 = vunpack.c.0.s8 %v2341
          %v2343 = vlaneseq
          %v2344 = vshrl.u32 %v2343, 7
          %v2345 = vsub.s32 %v2342, %v2344
          %v2346 = vrot.slane %v2338, %v2345
          %v2348 = vunpack.c.l.s4 1983009808
          %v2349 = vunpack.c.0.s8 %v2348
          %v2350 = vlaneseq
          %v2351 = vshrl.u32 %v2350, 7
          %v2352 = vsub.s32 %v2349, %v2351
          %v2353 = vrot.slane %v2339, %v2352
          %v2354 = vcombine.low %v893, %v2299
          %v2355 = vcombine.high %v893, %v2299
          %v2357 = vunpack.c.l.s4 1983009808
          %v2358 = vunpack.c.0.s8 %v2357
          %v2359 = vlaneseq
          %v2360 = vshrl.u32 %v2359, 7
          %v2361 = vsub.s32 %v2358, %v2360
          %v2362 = vrot.slane %v2354, %v2361
          %v2364 = vunpack.c.l.s4 1983009808
          %v2365 = vunpack.c.0.s8 %v2364
          %v2366 = vlaneseq
          %v2367 = vshrl.u32 %v2366, 7
          %v2368 = vsub.s32 %v2365, %v2367
          %v2369 = vrot.slane %v2355, %v2368
          %v2370 = vcombine.low %v2287, %v2311
          %v2371 = vcombine.high %v2287, %v2311
          %v2373 = vunpack.c.l.s4 1983009808
          %v2374 = vunpack.c.0.s8 %v2373
          %v2375 = vlaneseq
          %v2376 = vshrl.u32 %v2375, 7
          %v2377 = vsub.s32 %v2374, %v2376
          %v2378 = vrot.slane %v2370, %v2377
          %v2380 = vunpack.c.l.s4 1983009808
          %v2381 = vunpack.c.0.s8 %v2380
          %v2382 = vlaneseq
          %v2383 = vshrl.u32 %v2382, 7
          %v2384 = vsub.s32 %v2381, %v2383
          %v2385 = vrot.slane %v2371, %v2384
          %v2386 = vcombine.low %v2330, %v2346
          %v2387 = vcombine.high %v2330, %v2346
          %v2389 = vunpack.c.l.s4 1934713408
          %v2390 = vunpack.c.0.s8 %v2389
          %v2391 = vlaneseq
          %v2392 = vshrl.u32 %v2391, 7
          %v2393 = vsub.s32 %v2390, %v2392
          %v2394 = vrot.slane %v2386, %v2393
          %v2396 = vunpack.c.l.s4 1934713408
          %v2397 = vunpack.c.0.s8 %v2396
          %v2398 = vlaneseq
          %v2399 = vshrl.u32 %v2398, 7
          %v2400 = vsub.s32 %v2397, %v2399
          %v2401 = vrot.slane %v2387, %v2400
          %v2402 = vcombine.low %v2337, %v2353
          %v2403 = vcombine.high %v2337, %v2353
          %v2405 = vunpack.c.l.s4 1934713408
          %v2406 = vunpack.c.0.s8 %v2405
          %v2407 = vlaneseq
          %v2408 = vshrl.u32 %v2407, 7
          %v2409 = vsub.s32 %v2406, %v2408
          %v2410 = vrot.slane %v2402, %v2409
          %v2412 = vunpack.c.l.s4 1934713408
          %v2413 = vunpack.c.0.s8 %v2412
          %v2414 = vlaneseq
          %v2415 = vshrl.u32 %v2414, 7
          %v2416 = vsub.s32 %v2413, %v2415
          %v2417 = vrot.slane %v2403, %v2416
          %v2418 = vcombine.low %v2362, %v2378
          %v2419 = vcombine.high %v2362, %v2378
          %v2421 = vunpack.c.l.s4 1934713408
          %v2422 = vunpack.c.0.s8 %v2421
          %v2423 = vlaneseq
          %v2424 = vshrl.u32 %v2423, 7
          %v2425 = vsub.s32 %v2422, %v2424
          %v2426 = vrot.slane %v2418, %v2425
          %v2428 = vunpack.c.l.s4 1934713408
          %v2429 = vunpack.c.0.s8 %v2428
          %v2430 = vlaneseq
          %v2431 = vshrl.u32 %v2430, 7
          %v2432 = vsub.s32 %v2429, %v2431
          %v2433 = vrot.slane %v2419, %v2432
          %v2434 = vcombine.low %v2369, %v2385
          %v2435 = vcombine.high %v2369, %v2385
          %v2437 = vunpack.c.l.s4 1934713408
          %v2438 = vunpack.c.0.s8 %v2437
          %v2439 = vlaneseq
          %v2440 = vshrl.u32 %v2439, 7
          %v2441 = vsub.s32 %v2438, %v2440
          %v2442 = vrot.slane %v2434, %v2441
          %v2444 = vunpack.c.l.s4 1934713408
          %v2445 = vunpack.c.0.s8 %v2444
          %v2446 = vlaneseq
          %v2447 = vshrl.u32 %v2446, 7
          %v2448 = vsub.s32 %v2445, %v2447
          %v2449 = vrot.slane %v2435, %v2448
          %v2450 = vcombine.low %v2394, %v2426
          %v2451 = vcombine.high %v2394, %v2426
          %v2452 = vcombine.low %v2401, %v2433
          %v2453 = vcombine.high %v2401, %v2433
          %v2454 = vcombine.low %v2410, %v2442
          %v2455 = vcombine.high %v2410, %v2442
          %v2456 = vcombine.low %v2417, %v2449
          %v2457 = vcombine.high %v2417, %v2449
          %v2458 = vcombine.low %v897, %v2261
          %v2459 = vcombine.high %v897, %v2261
          %v2461 = vunpack.c.l.s4 1983009808
          %v2462 = vunpack.c.0.s8 %v2461
          %v2463 = vlaneseq
          %v2464 = vshrl.u32 %v2463, 7
          %v2465 = vsub.s32 %v2462, %v2464
          %v2466 = vrot.slane %v2458, %v2465
          %v2468 = vunpack.c.l.s4 1983009808
          %v2469 = vunpack.c.0.s8 %v2468
          %v2470 = vlaneseq
          %v2471 = vshrl.u32 %v2470, 7
          %v2472 = vsub.s32 %v2469, %v2471
          %v2473 = vrot.slane %v2459, %v2472
          %v2474 = vcombine.low %v2249, %v2273
          %v2475 = vcombine.high %v2249, %v2273
          %v2477 = vunpack.c.l.s4 1983009808
          %v2478 = vunpack.c.0.s8 %v2477
          %v2479 = vlaneseq
          %v2480 = vshrl.u32 %v2479, 7
          %v2481 = vsub.s32 %v2478, %v2480
          %v2482 = vrot.slane %v2474, %v2481
          %v2484 = vunpack.c.l.s4 1983009808
          %v2485 = vunpack.c.0.s8 %v2484
          %v2486 = vlaneseq
          %v2487 = vshrl.u32 %v2486, 7
          %v2488 = vsub.s32 %v2485, %v2487
          %v2489 = vrot.slane %v2475, %v2488
          %v2490 = vcombine.low %v899, %v2301
          %v2491 = vcombine.high %v899, %v2301
          %v2493 = vunpack.c.l.s4 1983009808
          %v2494 = vunpack.c.0.s8 %v2493
          %v2495 = vlaneseq
          %v2496 = vshrl.u32 %v2495, 7
          %v2497 = vsub.s32 %v2494, %v2496
          %v2498 = vrot.slane %v2490, %v2497
          %v2500 = vunpack.c.l.s4 1983009808
          %v2501 = vunpack.c.0.s8 %v2500
          %v2502 = vlaneseq
          %v2503 = vshrl.u32 %v2502, 7
          %v2504 = vsub.s32 %v2501, %v2503
          %v2505 = vrot.slane %v2491, %v2504
          %v2506 = vcombine.low %v2289, %v2313
          %v2507 = vcombine.high %v2289, %v2313
          %v2509 = vunpack.c.l.s4 1983009808
          %v2510 = vunpack.c.0.s8 %v2509
          %v2511 = vlaneseq
          %v2512 = vshrl.u32 %v2511, 7
          %v2513 = vsub.s32 %v2510, %v2512
          %v2514 = vrot.slane %v2506, %v2513
          %v2516 = vunpack.c.l.s4 1983009808
          %v2517 = vunpack.c.0.s8 %v2516
          %v2518 = vlaneseq
          %v2519 = vshrl.u32 %v2518, 7
          %v2520 = vsub.s32 %v2517, %v2519
          %v2521 = vrot.slane %v2507, %v2520
          %v2522 = vcombine.low %v2466, %v2482
          %v2523 = vcombine.high %v2466, %v2482
          %v2525 = vunpack.c.l.s4 1934713408
          %v2526 = vunpack.c.0.s8 %v2525
          %v2527 = vlaneseq
          %v2528 = vshrl.u32 %v2527, 7
          %v2529 = vsub.s32 %v2526, %v2528
          %v2530 = vrot.slane %v2522, %v2529
          %v2532 = vunpack.c.l.s4 1934713408
          %v2533 = vunpack.c.0.s8 %v2532
          %v2534 = vlaneseq
          %v2535 = vshrl.u32 %v2534, 7
          %v2536 = vsub.s32 %v2533, %v2535
          %v2537 = vrot.slane %v2523, %v2536
          %v2538 = vcombine.low %v2473, %v2489
          %v2539 = vcombine.high %v2473, %v2489
          %v2541 = vunpack.c.l.s4 1934713408
          %v2542 = vunpack.c.0.s8 %v2541
          %v2543 = vlaneseq
          %v2544 = vshrl.u32 %v2543, 7
          %v2545 = vsub.s32 %v2542, %v2544
          %v2546 = vrot.slane %v2538, %v2545
          %v2548 = vunpack.c.l.s4 1934713408
          %v2549 = vunpack.c.0.s8 %v2548
          %v2550 = vlaneseq
          %v2551 = vshrl.u32 %v2550, 7
          %v2552 = vsub.s32 %v2549, %v2551
          %v2553 = vrot.slane %v2539, %v2552
          %v2554 = vcombine.low %v2498, %v2514
          %v2555 = vcombine.high %v2498, %v2514
          %v2557 = vunpack.c.l.s4 1934713408
          %v2558 = vunpack.c.0.s8 %v2557
          %v2559 = vlaneseq
          %v2560 = vshrl.u32 %v2559, 7
          %v2561 = vsub.s32 %v2558, %v2560
          %v2562 = vrot.slane %v2554, %v2561
          %v2564 = vunpack.c.l.s4 1934713408
          %v2565 = vunpack.c.0.s8 %v2564
          %v2566 = vlaneseq
          %v2567 = vshrl.u32 %v2566, 7
          %v2568 = vsub.s32 %v2565, %v2567
          %v2569 = vrot.slane %v2555, %v2568
          %v2570 = vcombine.low %v2505, %v2521
          %v2571 = vcombine.high %v2505, %v2521
          %v2573 = vunpack.c.l.s4 1934713408
          %v2574 = vunpack.c.0.s8 %v2573
          %v2575 = vlaneseq
          %v2576 = vshrl.u32 %v2575, 7
          %v2577 = vsub.s32 %v2574, %v2576
          %v2578 = vrot.slane %v2570, %v2577
          %v2580 = vunpack.c.l.s4 1934713408
          %v2581 = vunpack.c.0.s8 %v2580
          %v2582 = vlaneseq
          %v2583 = vshrl.u32 %v2582, 7
          %v2584 = vsub.s32 %v2581, %v2583
          %v2585 = vrot.slane %v2571, %v2584
          %v2586 = vcombine.low %v2530, %v2562
          %v2587 = vcombine.high %v2530, %v2562
          %v2588 = vcombine.low %v2537, %v2569
          %v2589 = vcombine.high %v2537, %v2569
          %v2590 = vcombine.low %v2546, %v2578
          %v2591 = vcombine.high %v2546, %v2578
          %v2592 = vcombine.low %v2553, %v2585
          %v2593 = vcombine.high %v2553, %v2585
          %v2594 = vcombine.low %v903, %v2263
          %v2595 = vcombine.high %v903, %v2263
          %v2597 = vunpack.c.l.s4 1983009808
          %v2598 = vunpack.c.0.s8 %v2597
          %v2599 = vlaneseq
          %v2600 = vshrl.u32 %v2599, 7
          %v2601 = vsub.s32 %v2598, %v2600
          %v2602 = vrot.slane %v2594, %v2601
          %v2604 = vunpack.c.l.s4 1983009808
          %v2605 = vunpack.c.0.s8 %v2604
          %v2606 = vlaneseq
          %v2607 = vshrl.u32 %v2606, 7
          %v2608 = vsub.s32 %v2605, %v2607
          %v2609 = vrot.slane %v2595, %v2608
          %v2610 = vcombine.low %v2251, %v2275
          %v2611 = vcombine.high %v2251, %v2275
          %v2613 = vunpack.c.l.s4 1983009808
          %v2614 = vunpack.c.0.s8 %v2613
          %v2615 = vlaneseq
          %v2616 = vshrl.u32 %v2615, 7
          %v2617 = vsub.s32 %v2614, %v2616
          %v2618 = vrot.slane %v2610, %v2617
          %v2620 = vunpack.c.l.s4 1983009808
          %v2621 = vunpack.c.0.s8 %v2620
          %v2622 = vlaneseq
          %v2623 = vshrl.u32 %v2622, 7
          %v2624 = vsub.s32 %v2621, %v2623
          %v2625 = vrot.slane %v2611, %v2624
          %v2626 = vcombine.low %v905, %v2303
          %v2627 = vcombine.high %v905, %v2303
          %v2629 = vunpack.c.l.s4 1983009808
          %v2630 = vunpack.c.0.s8 %v2629
          %v2631 = vlaneseq
          %v2632 = vshrl.u32 %v2631, 7
          %v2633 = vsub.s32 %v2630, %v2632
          %v2634 = vrot.slane %v2626, %v2633
          %v2636 = vunpack.c.l.s4 1983009808
          %v2637 = vunpack.c.0.s8 %v2636
          %v2638 = vlaneseq
          %v2639 = vshrl.u32 %v2638, 7
          %v2640 = vsub.s32 %v2637, %v2639
          %v2641 = vrot.slane %v2627, %v2640
          %v2642 = vcombine.low %v2291, %v2315
          %v2643 = vcombine.high %v2291, %v2315
          %v2645 = vunpack.c.l.s4 1983009808
          %v2646 = vunpack.c.0.s8 %v2645
          %v2647 = vlaneseq
          %v2648 = vshrl.u32 %v2647, 7
          %v2649 = vsub.s32 %v2646, %v2648
          %v2650 = vrot.slane %v2642, %v2649
          %v2652 = vunpack.c.l.s4 1983009808
          %v2653 = vunpack.c.0.s8 %v2652
          %v2654 = vlaneseq
          %v2655 = vshrl.u32 %v2654, 7
          %v2656 = vsub.s32 %v2653, %v2655
          %v2657 = vrot.slane %v2643, %v2656
          %v2658 = vcombine.low %v2602, %v2618
          %v2659 = vcombine.high %v2602, %v2618
          %v2661 = vunpack.c.l.s4 1934713408
          %v2662 = vunpack.c.0.s8 %v2661
          %v2663 = vlaneseq
          %v2664 = vshrl.u32 %v2663, 7
          %v2665 = vsub.s32 %v2662, %v2664
          %v2666 = vrot.slane %v2658, %v2665
          %v2668 = vunpack.c.l.s4 1934713408
          %v2669 = vunpack.c.0.s8 %v2668
          %v2670 = vlaneseq
          %v2671 = vshrl.u32 %v2670, 7
          %v2672 = vsub.s32 %v2669, %v2671
          %v2673 = vrot.slane %v2659, %v2672
          %v2674 = vcombine.low %v2609, %v2625
          %v2675 = vcombine.high %v2609, %v2625
          %v2677 = vunpack.c.l.s4 1934713408
          %v2678 = vunpack.c.0.s8 %v2677
          %v2679 = vlaneseq
          %v2680 = vshrl.u32 %v2679, 7
          %v2681 = vsub.s32 %v2678, %v2680
          %v2682 = vrot.slane %v2674, %v2681
          %v2684 = vunpack.c.l.s4 1934713408
          %v2685 = vunpack.c.0.s8 %v2684
          %v2686 = vlaneseq
          %v2687 = vshrl.u32 %v2686, 7
          %v2688 = vsub.s32 %v2685, %v2687
          %v2689 = vrot.slane %v2675, %v2688
          %v2690 = vcombine.low %v2634, %v2650
          %v2691 = vcombine.high %v2634, %v2650
          %v2693 = vunpack.c.l.s4 1934713408
          %v2694 = vunpack.c.0.s8 %v2693
          %v2695 = vlaneseq
          %v2696 = vshrl.u32 %v2695, 7
          %v2697 = vsub.s32 %v2694, %v2696
          %v2698 = vrot.slane %v2690, %v2697
          %v2700 = vunpack.c.l.s4 1934713408
          %v2701 = vunpack.c.0.s8 %v2700
          %v2702 = vlaneseq
          %v2703 = vshrl.u32 %v2702, 7
          %v2704 = vsub.s32 %v2701, %v2703
          %v2705 = vrot.slane %v2691, %v2704
          %v2706 = vcombine.low %v2641, %v2657
          %v2707 = vcombine.high %v2641, %v2657
          %v2709 = vunpack.c.l.s4 1934713408
          %v2710 = vunpack.c.0.s8 %v2709
          %v2711 = vlaneseq
          %v2712 = vshrl.u32 %v2711, 7
          %v2713 = vsub.s32 %v2710, %v2712
          %v2714 = vrot.slane %v2706, %v2713
          %v2716 = vunpack.c.l.s4 1934713408
          %v2717 = vunpack.c.0.s8 %v2716
          %v2718 = vlaneseq
          %v2719 = vshrl.u32 %v2718, 7
          %v2720 = vsub.s32 %v2717, %v2719
          %v2721 = vrot.slane %v2707, %v2720
          %v2722 = vcombine.low %v2666, %v2698
          %v2723 = vcombine.high %v2666, %v2698
          %v2724 = vcombine.low %v2673, %v2705
          %v2725 = vcombine.high %v2673, %v2705
          %v2726 = vcombine.low %v2682, %v2714
          %v2727 = vcombine.high %v2682, %v2714
          %v2728 = vcombine.low %v2689, %v2721
          %v2729 = vcombine.high %v2689, %v2721
          %v2730 = vcombine.low %v909, %v2265
          %v2731 = vcombine.high %v909, %v2265
          %v2733 = vunpack.c.l.s4 1983009808
          %v2734 = vunpack.c.0.s8 %v2733
          %v2735 = vlaneseq
          %v2736 = vshrl.u32 %v2735, 7
          %v2737 = vsub.s32 %v2734, %v2736
          %v2738 = vrot.slane %v2730, %v2737
          %v2740 = vunpack.c.l.s4 1983009808
          %v2741 = vunpack.c.0.s8 %v2740
          %v2742 = vlaneseq
          %v2743 = vshrl.u32 %v2742, 7
          %v2744 = vsub.s32 %v2741, %v2743
          %v2745 = vrot.slane %v2731, %v2744
          %v2746 = vcombine.low %v2253, %v2277
          %v2747 = vcombine.high %v2253, %v2277
          %v2749 = vunpack.c.l.s4 1983009808
          %v2750 = vunpack.c.0.s8 %v2749
          %v2751 = vlaneseq
          %v2752 = vshrl.u32 %v2751, 7
          %v2753 = vsub.s32 %v2750, %v2752
          %v2754 = vrot.slane %v2746, %v2753
          %v2756 = vunpack.c.l.s4 1983009808
          %v2757 = vunpack.c.0.s8 %v2756
          %v2758 = vlaneseq
          %v2759 = vshrl.u32 %v2758, 7
          %v2760 = vsub.s32 %v2757, %v2759
          %v2761 = vrot.slane %v2747, %v2760
          %v2762 = vcombine.low %v911, %v2305
          %v2763 = vcombine.high %v911, %v2305
          %v2765 = vunpack.c.l.s4 1983009808
          %v2766 = vunpack.c.0.s8 %v2765
          %v2767 = vlaneseq
          %v2768 = vshrl.u32 %v2767, 7
          %v2769 = vsub.s32 %v2766, %v2768
          %v2770 = vrot.slane %v2762, %v2769
          %v2772 = vunpack.c.l.s4 1983009808
          %v2773 = vunpack.c.0.s8 %v2772
          %v2774 = vlaneseq
          %v2775 = vshrl.u32 %v2774, 7
          %v2776 = vsub.s32 %v2773, %v2775
          %v2777 = vrot.slane %v2763, %v2776
          %v2778 = vcombine.low %v2293, %v2317
          %v2779 = vcombine.high %v2293, %v2317
          %v2781 = vunpack.c.l.s4 1983009808
          %v2782 = vunpack.c.0.s8 %v2781
          %v2783 = vlaneseq
          %v2784 = vshrl.u32 %v2783, 7
          %v2785 = vsub.s32 %v2782, %v2784
          %v2786 = vrot.slane %v2778, %v2785
          %v2788 = vunpack.c.l.s4 1983009808
          %v2789 = vunpack.c.0.s8 %v2788
          %v2790 = vlaneseq
          %v2791 = vshrl.u32 %v2790, 7
          %v2792 = vsub.s32 %v2789, %v2791
          %v2793 = vrot.slane %v2779, %v2792
          %v2794 = vcombine.low %v2738, %v2754
          %v2795 = vcombine.high %v2738, %v2754
          %v2797 = vunpack.c.l.s4 1934713408
          %v2798 = vunpack.c.0.s8 %v2797
          %v2799 = vlaneseq
          %v2800 = vshrl.u32 %v2799, 7
          %v2801 = vsub.s32 %v2798, %v2800
          %v2802 = vrot.slane %v2794, %v2801
          %v2804 = vunpack.c.l.s4 1934713408
          %v2805 = vunpack.c.0.s8 %v2804
          %v2806 = vlaneseq
          %v2807 = vshrl.u32 %v2806, 7
          %v2808 = vsub.s32 %v2805, %v2807
          %v2809 = vrot.slane %v2795, %v2808
          %v2810 = vcombine.low %v2745, %v2761
          %v2811 = vcombine.high %v2745, %v2761
          %v2813 = vunpack.c.l.s4 1934713408
          %v2814 = vunpack.c.0.s8 %v2813
          %v2815 = vlaneseq
          %v2816 = vshrl.u32 %v2815, 7
          %v2817 = vsub.s32 %v2814, %v2816
          %v2818 = vrot.slane %v2810, %v2817
          %v2820 = vunpack.c.l.s4 1934713408
          %v2821 = vunpack.c.0.s8 %v2820
          %v2822 = vlaneseq
          %v2823 = vshrl.u32 %v2822, 7
          %v2824 = vsub.s32 %v2821, %v2823
          %v2825 = vrot.slane %v2811, %v2824
          %v2826 = vcombine.low %v2770, %v2786
          %v2827 = vcombine.high %v2770, %v2786
          %v2829 = vunpack.c.l.s4 1934713408
          %v2830 = vunpack.c.0.s8 %v2829
          %v2831 = vlaneseq
          %v2832 = vshrl.u32 %v2831, 7
          %v2833 = vsub.s32 %v2830, %v2832
          %v2834 = vrot.slane %v2826, %v2833
          %v2836 = vunpack.c.l.s4 1934713408
          %v2837 = vunpack.c.0.s8 %v2836
          %v2838 = vlaneseq
          %v2839 = vshrl.u32 %v2838, 7
          %v2840 = vsub.s32 %v2837, %v2839
          %v2841 = vrot.slane %v2827, %v2840
          %v2842 = vcombine.low %v2777, %v2793
          %v2843 = vcombine.high %v2777, %v2793
          %v2845 = vunpack.c.l.s4 1934713408
          %v2846 = vunpack.c.0.s8 %v2845
          %v2847 = vlaneseq
          %v2848 = vshrl.u32 %v2847, 7
          %v2849 = vsub.s32 %v2846, %v2848
          %v2850 = vrot.slane %v2842, %v2849
          %v2852 = vunpack.c.l.s4 1934713408
          %v2853 = vunpack.c.0.s8 %v2852
          %v2854 = vlaneseq
          %v2855 = vshrl.u32 %v2854, 7
          %v2856 = vsub.s32 %v2853, %v2855
          %v2857 = vrot.slane %v2843, %v2856
          %v2858 = vcombine.low %v2802, %v2834
          %v2859 = vcombine.high %v2802, %v2834
          %v2860 = vcombine.low %v2809, %v2841
          %v2861 = vcombine.high %v2809, %v2841
          %v2862 = vcombine.low %v2818, %v2850
          %v2863 = vcombine.high %v2818, %v2850
          %v2864 = vcombine.low %v2825, %v2857
          %v2865 = vcombine.high %v2825, %v2857
          %v2866 = vcombine.low %v2450, %v2452
          %v2867 = vcombine.high %v2450, %v2452
          %v2869 = vunpack.c.l.s4 1983009808
          %v2870 = vunpack.c.0.s8 %v2869
          %v2871 = vlaneseq
          %v2872 = vshrl.u32 %v2871, 7
          %v2873 = vsub.s32 %v2870, %v2872
          %v2874 = vrot.slane %v2866, %v2873
          %v2876 = vunpack.c.l.s4 1983009808
          %v2877 = vunpack.c.0.s8 %v2876
          %v2878 = vlaneseq
          %v2879 = vshrl.u32 %v2878, 7
          %v2880 = vsub.s32 %v2877, %v2879
          %v2881 = vrot.slane %v2867, %v2880
          %v2882 = vcombine.low %v2451, %v2453
          %v2883 = vcombine.high %v2451, %v2453
          %v2885 = vunpack.c.l.s4 1983009808
          %v2886 = vunpack.c.0.s8 %v2885
          %v2887 = vlaneseq
          %v2888 = vshrl.u32 %v2887, 7
          %v2889 = vsub.s32 %v2886, %v2888
          %v2890 = vrot.slane %v2882, %v2889
          %v2892 = vunpack.c.l.s4 1983009808
          %v2893 = vunpack.c.0.s8 %v2892
          %v2894 = vlaneseq
          %v2895 = vshrl.u32 %v2894, 7
          %v2896 = vsub.s32 %v2893, %v2895
          %v2897 = vrot.slane %v2883, %v2896
          %v2898 = vcombine.low %v2454, %v2456
          %v2899 = vcombine.high %v2454, %v2456
          %v2901 = vunpack.c.l.s4 1983009808
          %v2902 = vunpack.c.0.s8 %v2901
          %v2903 = vlaneseq
          %v2904 = vshrl.u32 %v2903, 7
          %v2905 = vsub.s32 %v2902, %v2904
          %v2906 = vrot.slane %v2898, %v2905
          %v2908 = vunpack.c.l.s4 1983009808
          %v2909 = vunpack.c.0.s8 %v2908
          %v2910 = vlaneseq
          %v2911 = vshrl.u32 %v2910, 7
          %v2912 = vsub.s32 %v2909, %v2911
          %v2913 = vrot.slane %v2899, %v2912
          %v2914 = vcombine.low %v2455, %v2457
          %v2915 = vcombine.high %v2455, %v2457
          %v2917 = vunpack.c.l.s4 1983009808
          %v2918 = vunpack.c.0.s8 %v2917
          %v2919 = vlaneseq
          %v2920 = vshrl.u32 %v2919, 7
          %v2921 = vsub.s32 %v2918, %v2920
          %v2922 = vrot.slane %v2914, %v2921
          %v2924 = vunpack.c.l.s4 1983009808
          %v2925 = vunpack.c.0.s8 %v2924
          %v2926 = vlaneseq
          %v2927 = vshrl.u32 %v2926, 7
          %v2928 = vsub.s32 %v2925, %v2927
          %v2929 = vrot.slane %v2915, %v2928
          %v2930 = vcombine.low %v2874, %v2890
          %v2931 = vcombine.high %v2874, %v2890
          %v2933 = vunpack.c.l.s4 1934713408
          %v2934 = vunpack.c.0.s8 %v2933
          %v2935 = vlaneseq
          %v2936 = vshrl.u32 %v2935, 7
          %v2937 = vsub.s32 %v2934, %v2936
          %v2938 = vrot.slane %v2930, %v2937
          %v2940 = vunpack.c.l.s4 1934713408
          %v2941 = vunpack.c.0.s8 %v2940
          %v2942 = vlaneseq
          %v2943 = vshrl.u32 %v2942, 7
          %v2944 = vsub.s32 %v2941, %v2943
          %v2945 = vrot.slane %v2931, %v2944
          %v2946 = vcombine.low %v2881, %v2897
          %v2947 = vcombine.high %v2881, %v2897
          %v2949 = vunpack.c.l.s4 1934713408
          %v2950 = vunpack.c.0.s8 %v2949
          %v2951 = vlaneseq
          %v2952 = vshrl.u32 %v2951, 7
          %v2953 = vsub.s32 %v2950, %v2952
          %v2954 = vrot.slane %v2946, %v2953
          %v2956 = vunpack.c.l.s4 1934713408
          %v2957 = vunpack.c.0.s8 %v2956
          %v2958 = vlaneseq
          %v2959 = vshrl.u32 %v2958, 7
          %v2960 = vsub.s32 %v2957, %v2959
          %v2961 = vrot.slane %v2947, %v2960
          %v2962 = vcombine.low %v2906, %v2922
          %v2963 = vcombine.high %v2906, %v2922
          %v2965 = vunpack.c.l.s4 1934713408
          %v2966 = vunpack.c.0.s8 %v2965
          %v2967 = vlaneseq
          %v2968 = vshrl.u32 %v2967, 7
          %v2969 = vsub.s32 %v2966, %v2968
          %v2970 = vrot.slane %v2962, %v2969
          %v2972 = vunpack.c.l.s4 1934713408
          %v2973 = vunpack.c.0.s8 %v2972
          %v2974 = vlaneseq
          %v2975 = vshrl.u32 %v2974, 7
          %v2976 = vsub.s32 %v2973, %v2975
          %v2977 = vrot.slane %v2963, %v2976
          %v2978 = vcombine.low %v2913, %v2929
          %v2979 = vcombine.high %v2913, %v2929
          %v2981 = vunpack.c.l.s4 1934713408
          %v2982 = vunpack.c.0.s8 %v2981
          %v2983 = vlaneseq
          %v2984 = vshrl.u32 %v2983, 7
          %v2985 = vsub.s32 %v2982, %v2984
          %v2986 = vrot.slane %v2978, %v2985
          %v2988 = vunpack.c.l.s4 1934713408
          %v2989 = vunpack.c.0.s8 %v2988
          %v2990 = vlaneseq
          %v2991 = vshrl.u32 %v2990, 7
          %v2992 = vsub.s32 %v2989, %v2991
          %v2993 = vrot.slane %v2979, %v2992
          %v2994 = vcombine.low %v2938, %v2970
          %v2995 = vcombine.high %v2938, %v2970
          %v2996 = vcombine.low %v2945, %v2977
          %v2997 = vcombine.high %v2945, %v2977
          %v2998 = vcombine.low %v2954, %v2986
          %v2999 = vcombine.high %v2954, %v2986
          %v3000 = vcombine.low %v2961, %v2993
          %v3001 = vcombine.high %v2961, %v2993
          %v3002 = vcombine.low %v2586, %v2588
          %v3003 = vcombine.high %v2586, %v2588
          %v3005 = vunpack.c.l.s4 1983009808
          %v3006 = vunpack.c.0.s8 %v3005
          %v3007 = vlaneseq
          %v3008 = vshrl.u32 %v3007, 7
          %v3009 = vsub.s32 %v3006, %v3008
          %v3010 = vrot.slane %v3002, %v3009
          %v3012 = vunpack.c.l.s4 1983009808
          %v3013 = vunpack.c.0.s8 %v3012
          %v3014 = vlaneseq
          %v3015 = vshrl.u32 %v3014, 7
          %v3016 = vsub.s32 %v3013, %v3015
          %v3017 = vrot.slane %v3003, %v3016
          %v3018 = vcombine.low %v2587, %v2589
          %v3019 = vcombine.high %v2587, %v2589
          %v3021 = vunpack.c.l.s4 1983009808
          %v3022 = vunpack.c.0.s8 %v3021
          %v3023 = vlaneseq
          %v3024 = vshrl.u32 %v3023, 7
          %v3025 = vsub.s32 %v3022, %v3024
          %v3026 = vrot.slane %v3018, %v3025
          %v3028 = vunpack.c.l.s4 1983009808
          %v3029 = vunpack.c.0.s8 %v3028
          %v3030 = vlaneseq
          %v3031 = vshrl.u32 %v3030, 7
          %v3032 = vsub.s32 %v3029, %v3031
          %v3033 = vrot.slane %v3019, %v3032
          %v3034 = vcombine.low %v2590, %v2592
          %v3035 = vcombine.high %v2590, %v2592
          %v3037 = vunpack.c.l.s4 1983009808
          %v3038 = vunpack.c.0.s8 %v3037
          %v3039 = vlaneseq
          %v3040 = vshrl.u32 %v3039, 7
          %v3041 = vsub.s32 %v3038, %v3040
          %v3042 = vrot.slane %v3034, %v3041
          %v3044 = vunpack.c.l.s4 1983009808
          %v3045 = vunpack.c.0.s8 %v3044
          %v3046 = vlaneseq
          %v3047 = vshrl.u32 %v3046, 7
          %v3048 = vsub.s32 %v3045, %v3047
          %v3049 = vrot.slane %v3035, %v3048
          %v3050 = vcombine.low %v2591, %v2593
          %v3051 = vcombine.high %v2591, %v2593
          %v3053 = vunpack.c.l.s4 1983009808
          %v3054 = vunpack.c.0.s8 %v3053
          %v3055 = vlaneseq
          %v3056 = vshrl.u32 %v3055, 7
          %v3057 = vsub.s32 %v3054, %v3056
          %v3058 = vrot.slane %v3050, %v3057
          %v3060 = vunpack.c.l.s4 1983009808
          %v3061 = vunpack.c.0.s8 %v3060
          %v3062 = vlaneseq
          %v3063 = vshrl.u32 %v3062, 7
          %v3064 = vsub.s32 %v3061, %v3063
          %v3065 = vrot.slane %v3051, %v3064
          %v3066 = vcombine.low %v3010, %v3026
          %v3067 = vcombine.high %v3010, %v3026
          %v3069 = vunpack.c.l.s4 1934713408
          %v3070 = vunpack.c.0.s8 %v3069
          %v3071 = vlaneseq
          %v3072 = vshrl.u32 %v3071, 7
          %v3073 = vsub.s32 %v3070, %v3072
          %v3074 = vrot.slane %v3066, %v3073
          %v3076 = vunpack.c.l.s4 1934713408
          %v3077 = vunpack.c.0.s8 %v3076
          %v3078 = vlaneseq
          %v3079 = vshrl.u32 %v3078, 7
          %v3080 = vsub.s32 %v3077, %v3079
          %v3081 = vrot.slane %v3067, %v3080
          %v3082 = vcombine.low %v3017, %v3033
          %v3083 = vcombine.high %v3017, %v3033
          %v3085 = vunpack.c.l.s4 1934713408
          %v3086 = vunpack.c.0.s8 %v3085
          %v3087 = vlaneseq
          %v3088 = vshrl.u32 %v3087, 7
          %v3089 = vsub.s32 %v3086, %v3088
          %v3090 = vrot.slane %v3082, %v3089
          %v3092 = vunpack.c.l.s4 1934713408
          %v3093 = vunpack.c.0.s8 %v3092
          %v3094 = vlaneseq
          %v3095 = vshrl.u32 %v3094, 7
          %v3096 = vsub.s32 %v3093, %v3095
          %v3097 = vrot.slane %v3083, %v3096
          %v3098 = vcombine.low %v3042, %v3058
          %v3099 = vcombine.high %v3042, %v3058
          %v3101 = vunpack.c.l.s4 1934713408
          %v3102 = vunpack.c.0.s8 %v3101
          %v3103 = vlaneseq
          %v3104 = vshrl.u32 %v3103, 7
          %v3105 = vsub.s32 %v3102, %v3104
          %v3106 = vrot.slane %v3098, %v3105
          %v3108 = vunpack.c.l.s4 1934713408
          %v3109 = vunpack.c.0.s8 %v3108
          %v3110 = vlaneseq
          %v3111 = vshrl.u32 %v3110, 7
          %v3112 = vsub.s32 %v3109, %v3111
          %v3113 = vrot.slane %v3099, %v3112
          %v3114 = vcombine.low %v3049, %v3065
          %v3115 = vcombine.high %v3049, %v3065
          %v3117 = vunpack.c.l.s4 1934713408
          %v3118 = vunpack.c.0.s8 %v3117
          %v3119 = vlaneseq
          %v3120 = vshrl.u32 %v3119, 7
          %v3121 = vsub.s32 %v3118, %v3120
          %v3122 = vrot.slane %v3114, %v3121
          %v3124 = vunpack.c.l.s4 1934713408
          %v3125 = vunpack.c.0.s8 %v3124
          %v3126 = vlaneseq
          %v3127 = vshrl.u32 %v3126, 7
          %v3128 = vsub.s32 %v3125, %v3127
          %v3129 = vrot.slane %v3115, %v3128
          %v3130 = vcombine.low %v3074, %v3106
          %v3131 = vcombine.high %v3074, %v3106
          %v3132 = vcombine.low %v3081, %v3113
          %v3133 = vcombine.high %v3081, %v3113
          %v3134 = vcombine.low %v3090, %v3122
          %v3135 = vcombine.high %v3090, %v3122
          %v3136 = vcombine.low %v3097, %v3129
          %v3137 = vcombine.high %v3097, %v3129
          %v3138 = vcombine.low %v2722, %v2724
          %v3139 = vcombine.high %v2722, %v2724
          %v3141 = vunpack.c.l.s4 1983009808
          %v3142 = vunpack.c.0.s8 %v3141
          %v3143 = vlaneseq
          %v3144 = vshrl.u32 %v3143, 7
          %v3145 = vsub.s32 %v3142, %v3144
          %v3146 = vrot.slane %v3138, %v3145
          %v3148 = vunpack.c.l.s4 1983009808
          %v3149 = vunpack.c.0.s8 %v3148
          %v3150 = vlaneseq
          %v3151 = vshrl.u32 %v3150, 7
          %v3152 = vsub.s32 %v3149, %v3151
          %v3153 = vrot.slane %v3139, %v3152
          %v3154 = vcombine.low %v2723, %v2725
          %v3155 = vcombine.high %v2723, %v2725
          %v3157 = vunpack.c.l.s4 1983009808
          %v3158 = vunpack.c.0.s8 %v3157
          %v3159 = vlaneseq
          %v3160 = vshrl.u32 %v3159, 7
          %v3161 = vsub.s32 %v3158, %v3160
          %v3162 = vrot.slane %v3154, %v3161
          %v3164 = vunpack.c.l.s4 1983009808
          %v3165 = vunpack.c.0.s8 %v3164
          %v3166 = vlaneseq
          %v3167 = vshrl.u32 %v3166, 7
          %v3168 = vsub.s32 %v3165, %v3167
          %v3169 = vrot.slane %v3155, %v3168
          %v3170 = vcombine.low %v2726, %v2728
          %v3171 = vcombine.high %v2726, %v2728
          %v3173 = vunpack.c.l.s4 1983009808
          %v3174 = vunpack.c.0.s8 %v3173
          %v3175 = vlaneseq
          %v3176 = vshrl.u32 %v3175, 7
          %v3177 = vsub.s32 %v3174, %v3176
          %v3178 = vrot.slane %v3170, %v3177
          %v3180 = vunpack.c.l.s4 1983009808
          %v3181 = vunpack.c.0.s8 %v3180
          %v3182 = vlaneseq
          %v3183 = vshrl.u32 %v3182, 7
          %v3184 = vsub.s32 %v3181, %v3183
          %v3185 = vrot.slane %v3171, %v3184
          %v3186 = vcombine.low %v2727, %v2729
          %v3187 = vcombine.high %v2727, %v2729
          %v3189 = vunpack.c.l.s4 1983009808
          %v3190 = vunpack.c.0.s8 %v3189
          %v3191 = vlaneseq
          %v3192 = vshrl.u32 %v3191, 7
          %v3193 = vsub.s32 %v3190, %v3192
          %v3194 = vrot.slane %v3186, %v3193
          %v3196 = vunpack.c.l.s4 1983009808
          %v3197 = vunpack.c.0.s8 %v3196
          %v3198 = vlaneseq
          %v3199 = vshrl.u32 %v3198, 7
          %v3200 = vsub.s32 %v3197, %v3199
          %v3201 = vrot.slane %v3187, %v3200
          %v3202 = vcombine.low %v3146, %v3162
          %v3203 = vcombine.high %v3146, %v3162
          %v3205 = vunpack.c.l.s4 1934713408
          %v3206 = vunpack.c.0.s8 %v3205
          %v3207 = vlaneseq
          %v3208 = vshrl.u32 %v3207, 7
          %v3209 = vsub.s32 %v3206, %v3208
          %v3210 = vrot.slane %v3202, %v3209
          %v3212 = vunpack.c.l.s4 1934713408
          %v3213 = vunpack.c.0.s8 %v3212
          %v3214 = vlaneseq
          %v3215 = vshrl.u32 %v3214, 7
          %v3216 = vsub.s32 %v3213, %v3215
          %v3217 = vrot.slane %v3203, %v3216
          %v3218 = vcombine.low %v3153, %v3169
          %v3219 = vcombine.high %v3153, %v3169
          %v3221 = vunpack.c.l.s4 1934713408
          %v3222 = vunpack.c.0.s8 %v3221
          %v3223 = vlaneseq
          %v3224 = vshrl.u32 %v3223, 7
          %v3225 = vsub.s32 %v3222, %v3224
          %v3226 = vrot.slane %v3218, %v3225
          %v3228 = vunpack.c.l.s4 1934713408
          %v3229 = vunpack.c.0.s8 %v3228
          %v3230 = vlaneseq
          %v3231 = vshrl.u32 %v3230, 7
          %v3232 = vsub.s32 %v3229, %v3231
          %v3233 = vrot.slane %v3219, %v3232
          %v3234 = vcombine.low %v3178, %v3194
          %v3235 = vcombine.high %v3178, %v3194
          %v3237 = vunpack.c.l.s4 1934713408
          %v3238 = vunpack.c.0.s8 %v3237
          %v3239 = vlaneseq
          %v3240 = vshrl.u32 %v3239, 7
          %v3241 = vsub.s32 %v3238, %v3240
          %v3242 = vrot.slane %v3234, %v3241
          %v3244 = vunpack.c.l.s4 1934713408
          %v3245 = vunpack.c.0.s8 %v3244
          %v3246 = vlaneseq
          %v3247 = vshrl.u32 %v3246, 7
          %v3248 = vsub.s32 %v3245, %v3247
          %v3249 = vrot.slane %v3235, %v3248
          %v3250 = vcombine.low %v3185, %v3201
          %v3251 = vcombine.high %v3185, %v3201
          %v3253 = vunpack.c.l.s4 1934713408
          %v3254 = vunpack.c.0.s8 %v3253
          %v3255 = vlaneseq
          %v3256 = vshrl.u32 %v3255, 7
          %v3257 = vsub.s32 %v3254, %v3256
          %v3258 = vrot.slane %v3250, %v3257
          %v3260 = vunpack.c.l.s4 1934713408
          %v3261 = vunpack.c.0.s8 %v3260
          %v3262 = vlaneseq
          %v3263 = vshrl.u32 %v3262, 7
          %v3264 = vsub.s32 %v3261, %v3263
          %v3265 = vrot.slane %v3251, %v3264
          %v3266 = vcombine.low %v3210, %v3242
          %v3267 = vcombine.high %v3210, %v3242
          %v3268 = vcombine.low %v3217, %v3249
          %v3269 = vcombine.high %v3217, %v3249
          %v3270 = vcombine.low %v3226, %v3258
          %v3271 = vcombine.high %v3226, %v3258
          %v3272 = vcombine.low %v3233, %v3265
          %v3273 = vcombine.high %v3233, %v3265
          %v3274 = vcombine.low %v2858, %v2860
          %v3275 = vcombine.high %v2858, %v2860
          %v3277 = vunpack.c.l.s4 1983009808
          %v3278 = vunpack.c.0.s8 %v3277
          %v3279 = vlaneseq
          %v3280 = vshrl.u32 %v3279, 7
          %v3281 = vsub.s32 %v3278, %v3280
          %v3282 = vrot.slane %v3274, %v3281
          %v3284 = vunpack.c.l.s4 1983009808
          %v3285 = vunpack.c.0.s8 %v3284
          %v3286 = vlaneseq
          %v3287 = vshrl.u32 %v3286, 7
          %v3288 = vsub.s32 %v3285, %v3287
          %v3289 = vrot.slane %v3275, %v3288
          %v3290 = vcombine.low %v2859, %v2861
          %v3291 = vcombine.high %v2859, %v2861
          %v3293 = vunpack.c.l.s4 1983009808
          %v3294 = vunpack.c.0.s8 %v3293
          %v3295 = vlaneseq
          %v3296 = vshrl.u32 %v3295, 7
          %v3297 = vsub.s32 %v3294, %v3296
          %v3298 = vrot.slane %v3290, %v3297
          %v3300 = vunpack.c.l.s4 1983009808
          %v3301 = vunpack.c.0.s8 %v3300
          %v3302 = vlaneseq
          %v3303 = vshrl.u32 %v3302, 7
          %v3304 = vsub.s32 %v3301, %v3303
          %v3305 = vrot.slane %v3291, %v3304
          %v3306 = vcombine.low %v2862, %v2864
          %v3307 = vcombine.high %v2862, %v2864
          %v3309 = vunpack.c.l.s4 1983009808
          %v3310 = vunpack.c.0.s8 %v3309
          %v3311 = vlaneseq
          %v3312 = vshrl.u32 %v3311, 7
          %v3313 = vsub.s32 %v3310, %v3312
          %v3314 = vrot.slane %v3306, %v3313
          %v3316 = vunpack.c.l.s4 1983009808
          %v3317 = vunpack.c.0.s8 %v3316
          %v3318 = vlaneseq
          %v3319 = vshrl.u32 %v3318, 7
          %v3320 = vsub.s32 %v3317, %v3319
          %v3321 = vrot.slane %v3307, %v3320
          %v3322 = vcombine.low %v2863, %v2865
          %v3323 = vcombine.high %v2863, %v2865
          %v3325 = vunpack.c.l.s4 1983009808
          %v3326 = vunpack.c.0.s8 %v3325
          %v3327 = vlaneseq
          %v3328 = vshrl.u32 %v3327, 7
          %v3329 = vsub.s32 %v3326, %v3328
          %v3330 = vrot.slane %v3322, %v3329
          %v3332 = vunpack.c.l.s4 1983009808
          %v3333 = vunpack.c.0.s8 %v3332
          %v3334 = vlaneseq
          %v3335 = vshrl.u32 %v3334, 7
          %v3336 = vsub.s32 %v3333, %v3335
          %v3337 = vrot.slane %v3323, %v3336
          %v3338 = vcombine.low %v3282, %v3298
          %v3339 = vcombine.high %v3282, %v3298
          %v3341 = vunpack.c.l.s4 1934713408
          %v3342 = vunpack.c.0.s8 %v3341
          %v3343 = vlaneseq
          %v3344 = vshrl.u32 %v3343, 7
          %v3345 = vsub.s32 %v3342, %v3344
          %v3346 = vrot.slane %v3338, %v3345
          %v3348 = vunpack.c.l.s4 1934713408
          %v3349 = vunpack.c.0.s8 %v3348
          %v3350 = vlaneseq
          %v3351 = vshrl.u32 %v3350, 7
          %v3352 = vsub.s32 %v3349, %v3351
          %v3353 = vrot.slane %v3339, %v3352
          %v3354 = vcombine.low %v3289, %v3305
          %v3355 = vcombine.high %v3289, %v3305
          %v3357 = vunpack.c.l.s4 1934713408
          %v3358 = vunpack.c.0.s8 %v3357
          %v3359 = vlaneseq
          %v3360 = vshrl.u32 %v3359, 7
          %v3361 = vsub.s32 %v3358, %v3360
          %v3362 = vrot.slane %v3354, %v3361
          %v3364 = vunpack.c.l.s4 1934713408
          %v3365 = vunpack.c.0.s8 %v3364
          %v3366 = vlaneseq
          %v3367 = vshrl.u32 %v3366, 7
          %v3368 = vsub.s32 %v3365, %v3367
          %v3369 = vrot.slane %v3355, %v3368
          %v3370 = vcombine.low %v3314, %v3330
          %v3371 = vcombine.high %v3314, %v3330
          %v3373 = vunpack.c.l.s4 1934713408
          %v3374 = vunpack.c.0.s8 %v3373
          %v3375 = vlaneseq
          %v3376 = vshrl.u32 %v3375, 7
          %v3377 = vsub.s32 %v3374, %v3376
          %v3378 = vrot.slane %v3370, %v3377
          %v3380 = vunpack.c.l.s4 1934713408
          %v3381 = vunpack.c.0.s8 %v3380
          %v3382 = vlaneseq
          %v3383 = vshrl.u32 %v3382, 7
          %v3384 = vsub.s32 %v3381, %v3383
          %v3385 = vrot.slane %v3371, %v3384
          %v3386 = vcombine.low %v3321, %v3337
          %v3387 = vcombine.high %v3321, %v3337
          %v3389 = vunpack.c.l.s4 1934713408
          %v3390 = vunpack.c.0.s8 %v3389
          %v3391 = vlaneseq
          %v3392 = vshrl.u32 %v3391, 7
          %v3393 = vsub.s32 %v3390, %v3392
          %v3394 = vrot.slane %v3386, %v3393
          %v3396 = vunpack.c.l.s4 1934713408
          %v3397 = vunpack.c.0.s8 %v3396
          %v3398 = vlaneseq
          %v3399 = vshrl.u32 %v3398, 7
          %v3400 = vsub.s32 %v3397, %v3399
          %v3401 = vrot.slane %v3387, %v3400
          %v3402 = vcombine.low %v3346, %v3378
          %v3403 = vcombine.high %v3346, %v3378
          %v3404 = vcombine.low %v3353, %v3385
          %v3405 = vcombine.high %v3353, %v3385
          %v3406 = vcombine.low %v3362, %v3394
          %v3407 = vcombine.high %v3362, %v3394
          %v3408 = vcombine.low %v3369, %v3401
          %v3409 = vcombine.high %v3369, %v3401
          %v3410 = vpack.c.bf16 %v3130, %v2994
          %v3411 = vpack.c.bf16 %v3402, %v3266
          %v3412 = vpack.c.bf16 %v3131, %v2995
          %v3413 = vpack.c.bf16 %v3403, %v3267
          %v3414 = vpack.c.bf16 %v3132, %v2996
          %v3415 = vpack.c.bf16 %v3404, %v3268
          %v3416 = vpack.c.bf16 %v3133, %v2997
          %v3417 = vpack.c.bf16 %v3405, %v3269
          %v3418 = vpack.c.bf16 %v3134, %v2998
          %v3419 = vpack.c.bf16 %v3406, %v3270
          %v3420 = vpack.c.bf16 %v3135, %v2999
          %v3421 = vpack.c.bf16 %v3407, %v3271
          %v3422 = vpack.c.bf16 %v3136, %v3000
          %v3423 = vpack.c.bf16 %v3408, %v3272
          %v3424 = vpack.c.bf16 %v3137, %v3001
          %v3425 = vpack.c.bf16 %v3409, %v3273
          %v3442 = vunpack.c.l.b16 %v3410
          %v3443 = vunpack.c.h.b16 %v3410
          %v3444 = vunpack.c.l.b16 %v3411
          %v3445 = vunpack.c.h.b16 %v3411
          %v3446 = vunpack.c.l.b16 %v3412
          %v3447 = vunpack.c.h.b16 %v3412
          %v3448 = vunpack.c.l.b16 %v3413
          %v3449 = vunpack.c.h.b16 %v3413
          %v3450 = vunpack.c.l.b16 %v3414
          %v3451 = vunpack.c.h.b16 %v3414
          %v3452 = vunpack.c.l.b16 %v3415
          %v3453 = vunpack.c.h.b16 %v3415
          %v3454 = vunpack.c.l.b16 %v3416
          %v3455 = vunpack.c.h.b16 %v3416
          %v3456 = vunpack.c.l.b16 %v3417
          %v3457 = vunpack.c.h.b16 %v3417
          %v3458 = vunpack.c.l.b16 %v3418
          %v3459 = vunpack.c.h.b16 %v3418
          %v3460 = vunpack.c.l.b16 %v3419
          %v3461 = vunpack.c.h.b16 %v3419
          %v3462 = vunpack.c.l.b16 %v3420
          %v3463 = vunpack.c.h.b16 %v3420
          %v3464 = vunpack.c.l.b16 %v3421
          %v3465 = vunpack.c.h.b16 %v3421
          %v3466 = vunpack.c.l.b16 %v3422
          %v3467 = vunpack.c.h.b16 %v3422
          %v3468 = vunpack.c.l.b16 %v3423
          %v3469 = vunpack.c.h.b16 %v3423
          %v3470 = vunpack.c.l.b16 %v3424
          %v3471 = vunpack.c.h.b16 %v3424
          %v3472 = vunpack.c.l.b16 %v3425
          %v3473 = vunpack.c.h.b16 %v3425
          %v3474 = vpack.c.b16 %v3442, %v3442
          %v3475 = vpack.c.b16 %v3443, %v3443
          %v3476 = vpack.c.b16 %v3444, %v3444
          %v3477 = vpack.c.b16 %v3445, %v3445
          %v3478 = vpack.c.b16 %v3446, %v3446
          %v3479 = vpack.c.b16 %v3447, %v3447
          %v3480 = vpack.c.b16 %v3448, %v3448
          %v3481 = vpack.c.b16 %v3449, %v3449
          %v3482 = vpack.c.b16 %v3450, %v3450
          %v3483 = vpack.c.b16 %v3451, %v3451
          %v3484 = vpack.c.b16 %v3452, %v3452
          %v3485 = vpack.c.b16 %v3453, %v3453
          %v3486 = vpack.c.b16 %v3454, %v3454
          %v3487 = vpack.c.b16 %v3455, %v3455
          %v3488 = vpack.c.b16 %v3456, %v3456
          %v3489 = vpack.c.b16 %v3457, %v3457
          %v3490 = vpack.c.b16 %v3458, %v3458
          %v3491 = vpack.c.b16 %v3459, %v3459
          %v3492 = vpack.c.b16 %v3460, %v3460
          %v3493 = vpack.c.b16 %v3461, %v3461
          %v3494 = vpack.c.b16 %v3462, %v3462
          %v3495 = vpack.c.b16 %v3463, %v3463
          %v3496 = vpack.c.b16 %v3464, %v3464
          %v3497 = vpack.c.b16 %v3465, %v3465
          %v3498 = vpack.c.b16 %v3466, %v3466
          %v3499 = vpack.c.b16 %v3467, %v3467
          %v3500 = vpack.c.b16 %v3468, %v3468
          %v3501 = vpack.c.b16 %v3469, %v3469
          %v3502 = vpack.c.b16 %v3470, %v3470
          %v3503 = vpack.c.b16 %v3471, %v3471
          %v3504 = vpack.c.b16 %v3472, %v3472
          %v3505 = vpack.c.b16 %v3473, %v3473
          %3538 = vst.msk [vmem:[#allocation4] sm:$0xf] %vm2209, %v3474
          %3539 = vst.msk [vmem:[#allocation4 + $0x4] sm:$0xf] %vm2209, %v3475
          %3540 = vst.msk [vmem:[#allocation4 + $0x8] sm:$0xf] %vm2209, %v3476
          %3541 = vst.msk [vmem:[#allocation4 + $0xc] sm:$0xf] %vm2209, %v3477
          %3542 = vst.msk [vmem:[#allocation4 + $0x10] sm:$0xf] %vm2209, %v3478
          %3543 = vst.msk [vmem:[#allocation4 + $0x14] sm:$0xf] %vm2209, %v3479
          %3544 = vst.msk [vmem:[#allocation4 + $0x18] sm:$0xf] %vm2209, %v3480
          %3545 = vst.msk [vmem:[#allocation4 + $0x1c] sm:$0xf] %vm2209, %v3481
          %3546 = vst.msk [vmem:[#allocation4 + $0x20] sm:$0xf] %vm2209, %v3482
          %3547 = vst.msk [vmem:[#allocation4 + $0x24] sm:$0xf] %vm2209, %v3483
          %3548 = vst.msk [vmem:[#allocation4 + $0x28] sm:$0xf] %vm2209, %v3484
          %3549 = vst.msk [vmem:[#allocation4 + $0x2c] sm:$0xf] %vm2209, %v3485
          %3550 = vst.msk [vmem:[#allocation4 + $0x30] sm:$0xf] %vm2209, %v3486
          %3551 = vst.msk [vmem:[#allocation4 + $0x34] sm:$0xf] %vm2209, %v3487
          %3552 = vst.msk [vmem:[#allocation4 + $0x38] sm:$0xf] %vm2209, %v3488
          %3553 = vst.msk [vmem:[#allocation4 + $0x3c] sm:$0xf] %vm2209, %v3489
          %3554 = vst.msk [vmem:[#allocation4 + $0x40] sm:$0xf] %vm2209, %v3490
          %3555 = vst.msk [vmem:[#allocation4 + $0x44] sm:$0xf] %vm2209, %v3491
          %3556 = vst.msk [vmem:[#allocation4 + $0x48] sm:$0xf] %vm2209, %v3492
          %3557 = vst.msk [vmem:[#allocation4 + $0x4c] sm:$0xf] %vm2209, %v3493
          %3558 = vst.msk [vmem:[#allocation4 + $0x50] sm:$0xf] %vm2209, %v3494
          %3559 = vst.msk [vmem:[#allocation4 + $0x54] sm:$0xf] %vm2209, %v3495
          %3560 = vst.msk [vmem:[#allocation4 + $0x58] sm:$0xf] %vm2209, %v3496
          %3561 = vst.msk [vmem:[#allocation4 + $0x5c] sm:$0xf] %vm2209, %v3497
          %3562 = vst.msk [vmem:[#allocation4 + $0x60] sm:$0xf] %vm2209, %v3498
          %3563 = vst.msk [vmem:[#allocation4 + $0x64] sm:$0xf] %vm2209, %v3499
          %3564 = vst.msk [vmem:[#allocation4 + $0x68] sm:$0xf] %vm2209, %v3500
          %3565 = vst.msk [vmem:[#allocation4 + $0x6c] sm:$0xf] %vm2209, %v3501
          %3566 = vst.msk [vmem:[#allocation4 + $0x70] sm:$0xf] %vm2209, %v3502
          %3567 = vst.msk [vmem:[#allocation4 + $0x74] sm:$0xf] %vm2209, %v3503
          %3568 = vst.msk [vmem:[#allocation4 + $0x78] sm:$0xf] %vm2209, %v3504
          %3569 = vst.msk [vmem:[#allocation4 + $0x7c] sm:$0xf] %vm2209, %v3505
        $region64: #{tpu_custom_call.1} parent=59 // pred_fallthru
          _
        %s3570 = smul.u32 %s29, 16
        %s3571 = sshra.s32 %s3570, 3
        %s3572 = sand.u32 %s3570, 7
        %s3573 = smul.u32 %s3571, 4
        %s3574 = smul.addr %s3573, 8
        %s3575 = scalar_lea.vmem [#allocation2], %s3574
        %v3576 = vld [vmem:[%s3575] sm:$0xff]
        %v3577 = vld [vmem:[%s3575 + $0x8] sm:$0xff]
        %v3578 = vld [vmem:[%s3575 + $0x10] sm:$0xff]
        %v3579 = vld [vmem:[%s3575 + $0x18] sm:$0xff]
        %v3580 = vld [vmem:[%s3575 + $0x20] sm:$0xff]
        %v3581 = vld [vmem:[%s3575 + $0x28] sm:$0xff]
        %v3582 = vld [vmem:[%s3575 + $0x30] sm:$0xff]
        %v3583 = vld [vmem:[%s3575 + $0x38] sm:$0xff]
        %3586 = vrot.lane.b32.xlu0 %v3576, 96
        %v3587 = vpop.permute.xlu0 %3586
        %3588 = vrot.lane.b32.xlu0 %v3580, 96
        %v3589 = vpop.permute.xlu0 %3588
        %3592 = vrot.lane.b32.xlu0 %v3576, 64
        %v3593 = vpop.permute.xlu0 %3592
        %3594 = vrot.lane.b32.xlu0 %v3580, 64
        %v3595 = vpop.permute.xlu0 %3594
        %3598 = vrot.lane.b32.xlu0 %v3576, 32
        %v3599 = vpop.permute.xlu0 %3598
        %3600 = vrot.lane.b32.xlu0 %v3580, 32
        %v3601 = vpop.permute.xlu0 %3600
        %3606 = vrot.lane.b32.xlu0 %v3577, 96
        %v3607 = vpop.permute.xlu0 %3606
        %3608 = vrot.lane.b32.xlu0 %v3581, 96
        %v3609 = vpop.permute.xlu0 %3608
        %3612 = vrot.lane.b32.xlu0 %v3577, 64
        %v3613 = vpop.permute.xlu0 %3612
        %3614 = vrot.lane.b32.xlu0 %v3581, 64
        %v3615 = vpop.permute.xlu0 %3614
        %3618 = vrot.lane.b32.xlu0 %v3577, 32
        %v3619 = vpop.permute.xlu0 %3618
        %3620 = vrot.lane.b32.xlu0 %v3581, 32
        %v3621 = vpop.permute.xlu0 %3620
        %v3624 = vcombine.low %v3576, %v3593
        %v3625 = vcombine.high %v3576, %v3593
        %v3627 = vunpack.c.l.s4 1983009808
        %v3628 = vunpack.c.0.s8 %v3627
        %v3629 = vlaneseq
        %v3630 = vshrl.u32 %v3629, 7
        %v3631 = vsub.s32 %v3628, %v3630
        %v3632 = vrot.slane %v3624, %v3631
        %v3634 = vunpack.c.l.s4 1983009808
        %v3635 = vunpack.c.0.s8 %v3634
        %v3636 = vlaneseq
        %v3637 = vshrl.u32 %v3636, 7
        %v3638 = vsub.s32 %v3635, %v3637
        %v3639 = vrot.slane %v3625, %v3638
        %v3640 = vcombine.low %v3587, %v3599
        %v3641 = vcombine.high %v3587, %v3599
        %v3643 = vunpack.c.l.s4 1983009808
        %v3644 = vunpack.c.0.s8 %v3643
        %v3645 = vlaneseq
        %v3646 = vshrl.u32 %v3645, 7
        %v3647 = vsub.s32 %v3644, %v3646
        %v3648 = vrot.slane %v3640, %v3647
        %v3650 = vunpack.c.l.s4 1983009808
        %v3651 = vunpack.c.0.s8 %v3650
        %v3652 = vlaneseq
        %v3653 = vshrl.u32 %v3652, 7
        %v3654 = vsub.s32 %v3651, %v3653
        %v3655 = vrot.slane %v3641, %v3654
        %v3656 = vcombine.low %v3577, %v3613
        %v3657 = vcombine.high %v3577, %v3613
        %v3659 = vunpack.c.l.s4 1983009808
        %v3660 = vunpack.c.0.s8 %v3659
        %v3661 = vlaneseq
        %v3662 = vshrl.u32 %v3661, 7
        %v3663 = vsub.s32 %v3660, %v3662
        %v3664 = vrot.slane %v3656, %v3663
        %v3666 = vunpack.c.l.s4 1983009808
        %v3667 = vunpack.c.0.s8 %v3666
        %v3668 = vlaneseq
        %v3669 = vshrl.u32 %v3668, 7
        %v3670 = vsub.s32 %v3667, %v3669
        %v3671 = vrot.slane %v3657, %v3670
        %v3672 = vcombine.low %v3607, %v3619
        %v3673 = vcombine.high %v3607, %v3619
        %v3675 = vunpack.c.l.s4 1983009808
        %v3676 = vunpack.c.0.s8 %v3675
        %v3677 = vlaneseq
        %v3678 = vshrl.u32 %v3677, 7
        %v3679 = vsub.s32 %v3676, %v3678
        %v3680 = vrot.slane %v3672, %v3679
        %v3682 = vunpack.c.l.s4 1983009808
        %v3683 = vunpack.c.0.s8 %v3682
        %v3684 = vlaneseq
        %v3685 = vshrl.u32 %v3684, 7
        %v3686 = vsub.s32 %v3683, %v3685
        %v3687 = vrot.slane %v3673, %v3686
        %v3688 = vcombine.low %v3632, %v3648
        %v3689 = vcombine.high %v3632, %v3648
        %v3691 = vunpack.c.l.s4 1934713408
        %v3692 = vunpack.c.0.s8 %v3691
        %v3693 = vlaneseq
        %v3694 = vshrl.u32 %v3693, 7
        %v3695 = vsub.s32 %v3692, %v3694
        %v3696 = vrot.slane %v3688, %v3695
        %v3698 = vunpack.c.l.s4 1934713408
        %v3699 = vunpack.c.0.s8 %v3698
        %v3700 = vlaneseq
        %v3701 = vshrl.u32 %v3700, 7
        %v3702 = vsub.s32 %v3699, %v3701
        %v3703 = vrot.slane %v3689, %v3702
        %v3704 = vcombine.low %v3639, %v3655
        %v3705 = vcombine.high %v3639, %v3655
        %v3707 = vunpack.c.l.s4 1934713408
        %v3708 = vunpack.c.0.s8 %v3707
        %v3709 = vlaneseq
        %v3710 = vshrl.u32 %v3709, 7
        %v3711 = vsub.s32 %v3708, %v3710
        %v3712 = vrot.slane %v3704, %v3711
        %v3714 = vunpack.c.l.s4 1934713408
        %v3715 = vunpack.c.0.s8 %v3714
        %v3716 = vlaneseq
        %v3717 = vshrl.u32 %v3716, 7
        %v3718 = vsub.s32 %v3715, %v3717
        %v3719 = vrot.slane %v3705, %v3718
        %v3720 = vcombine.low %v3664, %v3680
        %v3721 = vcombine.high %v3664, %v3680
        %v3723 = vunpack.c.l.s4 1934713408
        %v3724 = vunpack.c.0.s8 %v3723
        %v3725 = vlaneseq
        %v3726 = vshrl.u32 %v3725, 7
        %v3727 = vsub.s32 %v3724, %v3726
        %v3728 = vrot.slane %v3720, %v3727
        %v3730 = vunpack.c.l.s4 1934713408
        %v3731 = vunpack.c.0.s8 %v3730
        %v3732 = vlaneseq
        %v3733 = vshrl.u32 %v3732, 7
        %v3734 = vsub.s32 %v3731, %v3733
        %v3735 = vrot.slane %v3721, %v3734
        %v3736 = vcombine.low %v3671, %v3687
        %v3737 = vcombine.high %v3671, %v3687
        %v3739 = vunpack.c.l.s4 1934713408
        %v3740 = vunpack.c.0.s8 %v3739
        %v3741 = vlaneseq
        %v3742 = vshrl.u32 %v3741, 7
        %v3743 = vsub.s32 %v3740, %v3742
        %v3744 = vrot.slane %v3736, %v3743
        %v3746 = vunpack.c.l.s4 1934713408
        %v3747 = vunpack.c.0.s8 %v3746
        %v3748 = vlaneseq
        %v3749 = vshrl.u32 %v3748, 7
        %v3750 = vsub.s32 %v3747, %v3749
        %v3751 = vrot.slane %v3737, %v3750
        %v3752 = vcombine.low %v3696, %v3728
        %v3753 = vcombine.high %v3696, %v3728
        %v3754 = vcombine.low %v3703, %v3735
        %v3755 = vcombine.high %v3703, %v3735
        %v3756 = vcombine.low %v3712, %v3744
        %v3757 = vcombine.high %v3712, %v3744
        %v3758 = vcombine.low %v3719, %v3751
        %v3759 = vcombine.high %v3719, %v3751
        %v3760 = vcombine.low %v3580, %v3595
        %v3761 = vcombine.high %v3580, %v3595
        %v3763 = vunpack.c.l.s4 1983009808
        %v3764 = vunpack.c.0.s8 %v3763
        %v3765 = vlaneseq
        %v3766 = vshrl.u32 %v3765, 7
        %v3767 = vsub.s32 %v3764, %v3766
        %v3768 = vrot.slane %v3760, %v3767
        %v3770 = vunpack.c.l.s4 1983009808
        %v3771 = vunpack.c.0.s8 %v3770
        %v3772 = vlaneseq
        %v3773 = vshrl.u32 %v3772, 7
        %v3774 = vsub.s32 %v3771, %v3773
        %v3775 = vrot.slane %v3761, %v3774
        %v3776 = vcombine.low %v3589, %v3601
        %v3777 = vcombine.high %v3589, %v3601
        %v3779 = vunpack.c.l.s4 1983009808
        %v3780 = vunpack.c.0.s8 %v3779
        %v3781 = vlaneseq
        %v3782 = vshrl.u32 %v3781, 7
        %v3783 = vsub.s32 %v3780, %v3782
        %v3784 = vrot.slane %v3776, %v3783
        %v3786 = vunpack.c.l.s4 1983009808
        %v3787 = vunpack.c.0.s8 %v3786
        %v3788 = vlaneseq
        %v3789 = vshrl.u32 %v3788, 7
        %v3790 = vsub.s32 %v3787, %v3789
        %v3791 = vrot.slane %v3777, %v3790
        %v3792 = vcombine.low %v3581, %v3615
        %v3793 = vcombine.high %v3581, %v3615
        %v3795 = vunpack.c.l.s4 1983009808
        %v3796 = vunpack.c.0.s8 %v3795
        %v3797 = vlaneseq
        %v3798 = vshrl.u32 %v3797, 7
        %v3799 = vsub.s32 %v3796, %v3798
        %v3800 = vrot.slane %v3792, %v3799
        %v3802 = vunpack.c.l.s4 1983009808
        %v3803 = vunpack.c.0.s8 %v3802
        %v3804 = vlaneseq
        %v3805 = vshrl.u32 %v3804, 7
        %v3806 = vsub.s32 %v3803, %v3805
        %v3807 = vrot.slane %v3793, %v3806
        %v3808 = vcombine.low %v3609, %v3621
        %v3809 = vcombine.high %v3609, %v3621
        %v3811 = vunpack.c.l.s4 1983009808
        %v3812 = vunpack.c.0.s8 %v3811
        %v3813 = vlaneseq
        %v3814 = vshrl.u32 %v3813, 7
        %v3815 = vsub.s32 %v3812, %v3814
        %v3816 = vrot.slane %v3808, %v3815
        %v3818 = vunpack.c.l.s4 1983009808
        %v3819 = vunpack.c.0.s8 %v3818
        %v3820 = vlaneseq
        %v3821 = vshrl.u32 %v3820, 7
        %v3822 = vsub.s32 %v3819, %v3821
        %v3823 = vrot.slane %v3809, %v3822
        %v3824 = vcombine.low %v3768, %v3784
        %v3825 = vcombine.high %v3768, %v3784
        %v3827 = vunpack.c.l.s4 1934713408
        %v3828 = vunpack.c.0.s8 %v3827
        %v3829 = vlaneseq
        %v3830 = vshrl.u32 %v3829, 7
        %v3831 = vsub.s32 %v3828, %v3830
        %v3832 = vrot.slane %v3824, %v3831
        %v3834 = vunpack.c.l.s4 1934713408
        %v3835 = vunpack.c.0.s8 %v3834
        %v3836 = vlaneseq
        %v3837 = vshrl.u32 %v3836, 7
        %v3838 = vsub.s32 %v3835, %v3837
        %v3839 = vrot.slane %v3825, %v3838
        %v3840 = vcombine.low %v3775, %v3791
        %v3841 = vcombine.high %v3775, %v3791
        %v3843 = vunpack.c.l.s4 1934713408
        %v3844 = vunpack.c.0.s8 %v3843
        %v3845 = vlaneseq
        %v3846 = vshrl.u32 %v3845, 7
        %v3847 = vsub.s32 %v3844, %v3846
        %v3848 = vrot.slane %v3840, %v3847
        %v3850 = vunpack.c.l.s4 1934713408
        %v3851 = vunpack.c.0.s8 %v3850
        %v3852 = vlaneseq
        %v3853 = vshrl.u32 %v3852, 7
        %v3854 = vsub.s32 %v3851, %v3853
        %v3855 = vrot.slane %v3841, %v3854
        %v3856 = vcombine.low %v3800, %v3816
        %v3857 = vcombine.high %v3800, %v3816
        %v3859 = vunpack.c.l.s4 1934713408
        %v3860 = vunpack.c.0.s8 %v3859
        %v3861 = vlaneseq
        %v3862 = vshrl.u32 %v3861, 7
        %v3863 = vsub.s32 %v3860, %v3862
        %v3864 = vrot.slane %v3856, %v3863
        %v3866 = vunpack.c.l.s4 1934713408
        %v3867 = vunpack.c.0.s8 %v3866
        %v3868 = vlaneseq
        %v3869 = vshrl.u32 %v3868, 7
        %v3870 = vsub.s32 %v3867, %v3869
        %v3871 = vrot.slane %v3857, %v3870
        %v3872 = vcombine.low %v3807, %v3823
        %v3873 = vcombine.high %v3807, %v3823
        %v3875 = vunpack.c.l.s4 1934713408
        %v3876 = vunpack.c.0.s8 %v3875
        %v3877 = vlaneseq
        %v3878 = vshrl.u32 %v3877, 7
        %v3879 = vsub.s32 %v3876, %v3878
        %v3880 = vrot.slane %v3872, %v3879
        %v3882 = vunpack.c.l.s4 1934713408
        %v3883 = vunpack.c.0.s8 %v3882
        %v3884 = vlaneseq
        %v3885 = vshrl.u32 %v3884, 7
        %v3886 = vsub.s32 %v3883, %v3885
        %v3887 = vrot.slane %v3873, %v3886
        %v3888 = vcombine.low %v3832, %v3864
        %v3889 = vcombine.high %v3832, %v3864
        %v3890 = vcombine.low %v3839, %v3871
        %v3891 = vcombine.high %v3839, %v3871
        %v3892 = vcombine.low %v3848, %v3880
        %v3893 = vcombine.high %v3848, %v3880
        %v3894 = vcombine.low %v3855, %v3887
        %v3895 = vcombine.high %v3855, %v3887
        %v3896 = vcombine.low %v3752, %v3754
        %v3897 = vcombine.high %v3752, %v3754
        %v3899 = vunpack.c.l.s4 1983009808
        %v3900 = vunpack.c.0.s8 %v3899
        %v3901 = vlaneseq
        %v3902 = vshrl.u32 %v3901, 7
        %v3903 = vsub.s32 %v3900, %v3902
        %v3904 = vrot.slane %v3896, %v3903
        %v3906 = vunpack.c.l.s4 1983009808
        %v3907 = vunpack.c.0.s8 %v3906
        %v3908 = vlaneseq
        %v3909 = vshrl.u32 %v3908, 7
        %v3910 = vsub.s32 %v3907, %v3909
        %v3911 = vrot.slane %v3897, %v3910
        %v3912 = vcombine.low %v3753, %v3755
        %v3913 = vcombine.high %v3753, %v3755
        %v3915 = vunpack.c.l.s4 1983009808
        %v3916 = vunpack.c.0.s8 %v3915
        %v3917 = vlaneseq
        %v3918 = vshrl.u32 %v3917, 7
        %v3919 = vsub.s32 %v3916, %v3918
        %v3920 = vrot.slane %v3912, %v3919
        %v3922 = vunpack.c.l.s4 1983009808
        %v3923 = vunpack.c.0.s8 %v3922
        %v3924 = vlaneseq
        %v3925 = vshrl.u32 %v3924, 7
        %v3926 = vsub.s32 %v3923, %v3925
        %v3927 = vrot.slane %v3913, %v3926
        %v3928 = vcombine.low %v3756, %v3758
        %v3929 = vcombine.high %v3756, %v3758
        %v3931 = vunpack.c.l.s4 1983009808
        %v3932 = vunpack.c.0.s8 %v3931
        %v3933 = vlaneseq
        %v3934 = vshrl.u32 %v3933, 7
        %v3935 = vsub.s32 %v3932, %v3934
        %v3936 = vrot.slane %v3928, %v3935
        %v3938 = vunpack.c.l.s4 1983009808
        %v3939 = vunpack.c.0.s8 %v3938
        %v3940 = vlaneseq
        %v3941 = vshrl.u32 %v3940, 7
        %v3942 = vsub.s32 %v3939, %v3941
        %v3943 = vrot.slane %v3929, %v3942
        %v3944 = vcombine.low %v3757, %v3759
        %v3945 = vcombine.high %v3757, %v3759
        %v3947 = vunpack.c.l.s4 1983009808
        %v3948 = vunpack.c.0.s8 %v3947
        %v3949 = vlaneseq
        %v3950 = vshrl.u32 %v3949, 7
        %v3951 = vsub.s32 %v3948, %v3950
        %v3952 = vrot.slane %v3944, %v3951
        %v3954 = vunpack.c.l.s4 1983009808
        %v3955 = vunpack.c.0.s8 %v3954
        %v3956 = vlaneseq
        %v3957 = vshrl.u32 %v3956, 7
        %v3958 = vsub.s32 %v3955, %v3957
        %v3959 = vrot.slane %v3945, %v3958
        %v3960 = vcombine.low %v3904, %v3920
        %v3961 = vcombine.high %v3904, %v3920
        %v3963 = vunpack.c.l.s4 1934713408
        %v3964 = vunpack.c.0.s8 %v3963
        %v3965 = vlaneseq
        %v3966 = vshrl.u32 %v3965, 7
        %v3967 = vsub.s32 %v3964, %v3966
        %v3968 = vrot.slane %v3960, %v3967
        %v3970 = vunpack.c.l.s4 1934713408
        %v3971 = vunpack.c.0.s8 %v3970
        %v3972 = vlaneseq
        %v3973 = vshrl.u32 %v3972, 7
        %v3974 = vsub.s32 %v3971, %v3973
        %v3975 = vrot.slane %v3961, %v3974
        %v3976 = vcombine.low %v3911, %v3927
        %v3977 = vcombine.high %v3911, %v3927
        %v3979 = vunpack.c.l.s4 1934713408
        %v3980 = vunpack.c.0.s8 %v3979
        %v3981 = vlaneseq
        %v3982 = vshrl.u32 %v3981, 7
        %v3983 = vsub.s32 %v3980, %v3982
        %v3984 = vrot.slane %v3976, %v3983
        %v3986 = vunpack.c.l.s4 1934713408
        %v3987 = vunpack.c.0.s8 %v3986
        %v3988 = vlaneseq
        %v3989 = vshrl.u32 %v3988, 7
        %v3990 = vsub.s32 %v3987, %v3989
        %v3991 = vrot.slane %v3977, %v3990
        %v3992 = vcombine.low %v3936, %v3952
        %v3993 = vcombine.high %v3936, %v3952
        %v3995 = vunpack.c.l.s4 1934713408
        %v3996 = vunpack.c.0.s8 %v3995
        %v3997 = vlaneseq
        %v3998 = vshrl.u32 %v3997, 7
        %v3999 = vsub.s32 %v3996, %v3998
        %v4000 = vrot.slane %v3992, %v3999
        %v4002 = vunpack.c.l.s4 1934713408
        %v4003 = vunpack.c.0.s8 %v4002
        %v4004 = vlaneseq
        %v4005 = vshrl.u32 %v4004, 7
        %v4006 = vsub.s32 %v4003, %v4005
        %v4007 = vrot.slane %v3993, %v4006
        %v4008 = vcombine.low %v3943, %v3959
        %v4009 = vcombine.high %v3943, %v3959
        %v4011 = vunpack.c.l.s4 1934713408
        %v4012 = vunpack.c.0.s8 %v4011
        %v4013 = vlaneseq
        %v4014 = vshrl.u32 %v4013, 7
        %v4015 = vsub.s32 %v4012, %v4014
        %v4016 = vrot.slane %v4008, %v4015
        %v4018 = vunpack.c.l.s4 1934713408
        %v4019 = vunpack.c.0.s8 %v4018
        %v4020 = vlaneseq
        %v4021 = vshrl.u32 %v4020, 7
        %v4022 = vsub.s32 %v4019, %v4021
        %v4023 = vrot.slane %v4009, %v4022
        %v4024 = vcombine.low %v3968, %v4000
        %v4025 = vcombine.high %v3968, %v4000
        %v4026 = vcombine.low %v3975, %v4007
        %v4027 = vcombine.high %v3975, %v4007
        %v4028 = vcombine.low %v3984, %v4016
        %v4029 = vcombine.high %v3984, %v4016
        %v4030 = vcombine.low %v3991, %v4023
        %v4031 = vcombine.high %v3991, %v4023
        %v4032 = vcombine.low %v3888, %v3890
        %v4033 = vcombine.high %v3888, %v3890
        %v4035 = vunpack.c.l.s4 1983009808
        %v4036 = vunpack.c.0.s8 %v4035
        %v4037 = vlaneseq
        %v4038 = vshrl.u32 %v4037, 7
        %v4039 = vsub.s32 %v4036, %v4038
        %v4040 = vrot.slane %v4032, %v4039
        %v4042 = vunpack.c.l.s4 1983009808
        %v4043 = vunpack.c.0.s8 %v4042
        %v4044 = vlaneseq
        %v4045 = vshrl.u32 %v4044, 7
        %v4046 = vsub.s32 %v4043, %v4045
        %v4047 = vrot.slane %v4033, %v4046
        %v4048 = vcombine.low %v3889, %v3891
        %v4049 = vcombine.high %v3889, %v3891
        %v4051 = vunpack.c.l.s4 1983009808
        %v4052 = vunpack.c.0.s8 %v4051
        %v4053 = vlaneseq
        %v4054 = vshrl.u32 %v4053, 7
        %v4055 = vsub.s32 %v4052, %v4054
        %v4056 = vrot.slane %v4048, %v4055
        %v4058 = vunpack.c.l.s4 1983009808
        %v4059 = vunpack.c.0.s8 %v4058
        %v4060 = vlaneseq
        %v4061 = vshrl.u32 %v4060, 7
        %v4062 = vsub.s32 %v4059, %v4061
        %v4063 = vrot.slane %v4049, %v4062
        %v4064 = vcombine.low %v3892, %v3894
        %v4065 = vcombine.high %v3892, %v3894
        %v4067 = vunpack.c.l.s4 1983009808
        %v4068 = vunpack.c.0.s8 %v4067
        %v4069 = vlaneseq
        %v4070 = vshrl.u32 %v4069, 7
        %v4071 = vsub.s32 %v4068, %v4070
        %v4072 = vrot.slane %v4064, %v4071
        %v4074 = vunpack.c.l.s4 1983009808
        %v4075 = vunpack.c.0.s8 %v4074
        %v4076 = vlaneseq
        %v4077 = vshrl.u32 %v4076, 7
        %v4078 = vsub.s32 %v4075, %v4077
        %v4079 = vrot.slane %v4065, %v4078
        %v4080 = vcombine.low %v3893, %v3895
        %v4081 = vcombine.high %v3893, %v3895
        %v4083 = vunpack.c.l.s4 1983009808
        %v4084 = vunpack.c.0.s8 %v4083
        %v4085 = vlaneseq
        %v4086 = vshrl.u32 %v4085, 7
        %v4087 = vsub.s32 %v4084, %v4086
        %v4088 = vrot.slane %v4080, %v4087
        %v4090 = vunpack.c.l.s4 1983009808
        %v4091 = vunpack.c.0.s8 %v4090
        %v4092 = vlaneseq
        %v4093 = vshrl.u32 %v4092, 7
        %v4094 = vsub.s32 %v4091, %v4093
        %v4095 = vrot.slane %v4081, %v4094
        %v4096 = vcombine.low %v4040, %v4056
        %v4097 = vcombine.high %v4040, %v4056
        %v4099 = vunpack.c.l.s4 1934713408
        %v4100 = vunpack.c.0.s8 %v4099
        %v4101 = vlaneseq
        %v4102 = vshrl.u32 %v4101, 7
        %v4103 = vsub.s32 %v4100, %v4102
        %v4104 = vrot.slane %v4096, %v4103
        %v4106 = vunpack.c.l.s4 1934713408
        %v4107 = vunpack.c.0.s8 %v4106
        %v4108 = vlaneseq
        %v4109 = vshrl.u32 %v4108, 7
        %v4110 = vsub.s32 %v4107, %v4109
        %v4111 = vrot.slane %v4097, %v4110
        %v4112 = vcombine.low %v4047, %v4063
        %v4113 = vcombine.high %v4047, %v4063
        %v4115 = vunpack.c.l.s4 1934713408
        %v4116 = vunpack.c.0.s8 %v4115
        %v4117 = vlaneseq
        %v4118 = vshrl.u32 %v4117, 7
        %v4119 = vsub.s32 %v4116, %v4118
        %v4120 = vrot.slane %v4112, %v4119
        %v4122 = vunpack.c.l.s4 1934713408
        %v4123 = vunpack.c.0.s8 %v4122
        %v4124 = vlaneseq
        %v4125 = vshrl.u32 %v4124, 7
        %v4126 = vsub.s32 %v4123, %v4125
        %v4127 = vrot.slane %v4113, %v4126
        %v4128 = vcombine.low %v4072, %v4088
        %v4129 = vcombine.high %v4072, %v4088
        %v4131 = vunpack.c.l.s4 1934713408
        %v4132 = vunpack.c.0.s8 %v4131
        %v4133 = vlaneseq
        %v4134 = vshrl.u32 %v4133, 7
        %v4135 = vsub.s32 %v4132, %v4134
        %v4136 = vrot.slane %v4128, %v4135
        %v4138 = vunpack.c.l.s4 1934713408
        %v4139 = vunpack.c.0.s8 %v4138
        %v4140 = vlaneseq
        %v4141 = vshrl.u32 %v4140, 7
        %v4142 = vsub.s32 %v4139, %v4141
        %v4143 = vrot.slane %v4129, %v4142
        %v4144 = vcombine.low %v4079, %v4095
        %v4145 = vcombine.high %v4079, %v4095
        %v4147 = vunpack.c.l.s4 1934713408
        %v4148 = vunpack.c.0.s8 %v4147
        %v4149 = vlaneseq
        %v4150 = vshrl.u32 %v4149, 7
        %v4151 = vsub.s32 %v4148, %v4150
        %v4152 = vrot.slane %v4144, %v4151
        %v4154 = vunpack.c.l.s4 1934713408
        %v4155 = vunpack.c.0.s8 %v4154
        %v4156 = vlaneseq
        %v4157 = vshrl.u32 %v4156, 7
        %v4158 = vsub.s32 %v4155, %v4157
        %v4159 = vrot.slane %v4145, %v4158
        %v4160 = vcombine.low %v4104, %v4136
        %v4161 = vcombine.high %v4104, %v4136
        %v4162 = vcombine.low %v4111, %v4143
        %v4163 = vcombine.high %v4111, %v4143
        %v4164 = vcombine.low %v4120, %v4152
        %v4165 = vcombine.high %v4120, %v4152
        %v4166 = vcombine.low %v4127, %v4159
        %v4167 = vcombine.high %v4127, %v4159
        %v4168 = vpack.c.bf16 %v4160, %v4024
        %v4169 = vpack.c.bf16 %v4161, %v4025
        %v4170 = vpack.c.bf16 %v4162, %v4026
        %v4171 = vpack.c.bf16 %v4163, %v4027
        %v4172 = vpack.c.bf16 %v4164, %v4028
        %v4173 = vpack.c.bf16 %v4165, %v4029
        %v4174 = vpack.c.bf16 %v4166, %v4030
        %v4175 = vpack.c.bf16 %v4167, %v4031
        %v4176 = vld [vmem:[%s6] sm:$0x3]
        %v4178 = vlaneseq
        %v4179 = vshrl.u32 %v4178, 7
        %v4180 = vsub.s32 0, %v4179
        %v4181 = vrot.slane %v4176, %v4180
        %v4182 = vlaneseq
        %v4183 = vshrl.u32 %v4182, 7
        %v4184 = vsub.s32 1, %v4183
        %v4185 = vrot.slane %v4176, %v4184
        %v4188 = vadd.f32 %v3578, %v4181
        %v4189 = vadd.f32 %v3579, %v4185
        %v4190 = vadd.f32 %v3582, %v4181
        %v4191 = vadd.f32 %v3583, %v4185
        %v4192 = vxor.u32 %v4188, 2147483648
        %v4193 = vxor.u32 %v4189, 2147483648
        %v4194 = vxor.u32 %v4190, 2147483648
        %v4195 = vxor.u32 %v4191, 2147483648
        %v4196 = vmul.f32 %v4192, 1.442695
        %v4197 = vpow.pop %v4196
        %v4198 = vmul.f32 %v4193, 1.442695
        %v4199 = vpow.pop %v4198
        %v4200 = vmul.f32 %v4194, 1.442695
        %v4201 = vpow.pop %v4200
        %v4202 = vmul.f32 %v4195, 1.442695
        %v4203 = vpow.pop %v4202
        %v4204 = vadd.f32 %v4197, 1.0
        %v4205 = vadd.f32 %v4199, 1.0
        %v4206 = vadd.f32 %v4201, 1.0
        %v4207 = vadd.f32 %v4203, 1.0
        %v4208 = vrcp.pop %v4204
        %v4209 = vmul.f32 1.0, %v4208
        %v4210 = vrcp.pop %v4205
        %v4211 = vmul.f32 1.0, %v4210
        %v4212 = vrcp.pop %v4206
        %v4213 = vmul.f32 1.0, %v4212
        %v4214 = vrcp.pop %v4207
        %v4215 = vmul.f32 1.0, %v4214
        %4218 = vrot.lane.b32.xlu0 %v4209, 96
        %v4219 = vpop.permute.xlu0 %4218
        %4220 = vrot.lane.b32.xlu0 %v4213, 96
        %v4221 = vpop.permute.xlu0 %4220
        %4224 = vrot.lane.b32.xlu0 %v4209, 64
        %v4225 = vpop.permute.xlu0 %4224
        %4226 = vrot.lane.b32.xlu0 %v4213, 64
        %v4227 = vpop.permute.xlu0 %4226
        %4230 = vrot.lane.b32.xlu0 %v4209, 32
        %v4231 = vpop.permute.xlu0 %4230
        %4232 = vrot.lane.b32.xlu0 %v4213, 32
        %v4233 = vpop.permute.xlu0 %4232
        %4238 = vrot.lane.b32.xlu0 %v4211, 96
        %v4239 = vpop.permute.xlu0 %4238
        %4240 = vrot.lane.b32.xlu0 %v4215, 96
        %v4241 = vpop.permute.xlu0 %4240
        %4244 = vrot.lane.b32.xlu0 %v4211, 64
        %v4245 = vpop.permute.xlu0 %4244
        %4246 = vrot.lane.b32.xlu0 %v4215, 64
        %v4247 = vpop.permute.xlu0 %4246
        %4250 = vrot.lane.b32.xlu0 %v4211, 32
        %v4251 = vpop.permute.xlu0 %4250
        %4252 = vrot.lane.b32.xlu0 %v4215, 32
        %v4253 = vpop.permute.xlu0 %4252
        %v4256 = vcombine.low %v4209, %v4225
        %v4257 = vcombine.high %v4209, %v4225
        %v4259 = vunpack.c.l.s4 1983009808
        %v4260 = vunpack.c.0.s8 %v4259
        %v4261 = vlaneseq
        %v4262 = vshrl.u32 %v4261, 7
        %v4263 = vsub.s32 %v4260, %v4262
        %v4264 = vrot.slane %v4256, %v4263
        %v4266 = vunpack.c.l.s4 1983009808
        %v4267 = vunpack.c.0.s8 %v4266
        %v4268 = vlaneseq
        %v4269 = vshrl.u32 %v4268, 7
        %v4270 = vsub.s32 %v4267, %v4269
        %v4271 = vrot.slane %v4257, %v4270
        %v4272 = vcombine.low %v4219, %v4231
        %v4273 = vcombine.high %v4219, %v4231
        %v4275 = vunpack.c.l.s4 1983009808
        %v4276 = vunpack.c.0.s8 %v4275
        %v4277 = vlaneseq
        %v4278 = vshrl.u32 %v4277, 7
        %v4279 = vsub.s32 %v4276, %v4278
        %v4280 = vrot.slane %v4272, %v4279
        %v4282 = vunpack.c.l.s4 1983009808
        %v4283 = vunpack.c.0.s8 %v4282
        %v4284 = vlaneseq
        %v4285 = vshrl.u32 %v4284, 7
        %v4286 = vsub.s32 %v4283, %v4285
        %v4287 = vrot.slane %v4273, %v4286
        %v4288 = vcombine.low %v4211, %v4245
        %v4289 = vcombine.high %v4211, %v4245
        %v4291 = vunpack.c.l.s4 1983009808
        %v4292 = vunpack.c.0.s8 %v4291
        %v4293 = vlaneseq
        %v4294 = vshrl.u32 %v4293, 7
        %v4295 = vsub.s32 %v4292, %v4294
        %v4296 = vrot.slane %v4288, %v4295
        %v4298 = vunpack.c.l.s4 1983009808
        %v4299 = vunpack.c.0.s8 %v4298
        %v4300 = vlaneseq
        %v4301 = vshrl.u32 %v4300, 7
        %v4302 = vsub.s32 %v4299, %v4301
        %v4303 = vrot.slane %v4289, %v4302
        %v4304 = vcombine.low %v4239, %v4251
        %v4305 = vcombine.high %v4239, %v4251
        %v4307 = vunpack.c.l.s4 1983009808
        %v4308 = vunpack.c.0.s8 %v4307
        %v4309 = vlaneseq
        %v4310 = vshrl.u32 %v4309, 7
        %v4311 = vsub.s32 %v4308, %v4310
        %v4312 = vrot.slane %v4304, %v4311
        %v4314 = vunpack.c.l.s4 1983009808
        %v4315 = vunpack.c.0.s8 %v4314
        %v4316 = vlaneseq
        %v4317 = vshrl.u32 %v4316, 7
        %v4318 = vsub.s32 %v4315, %v4317
        %v4319 = vrot.slane %v4305, %v4318
        %v4320 = vcombine.low %v4264, %v4280
        %v4321 = vcombine.high %v4264, %v4280
        %v4323 = vunpack.c.l.s4 1934713408
        %v4324 = vunpack.c.0.s8 %v4323
        %v4325 = vlaneseq
        %v4326 = vshrl.u32 %v4325, 7
        %v4327 = vsub.s32 %v4324, %v4326
        %v4328 = vrot.slane %v4320, %v4327
        %v4330 = vunpack.c.l.s4 1934713408
        %v4331 = vunpack.c.0.s8 %v4330
        %v4332 = vlaneseq
        %v4333 = vshrl.u32 %v4332, 7
        %v4334 = vsub.s32 %v4331, %v4333
        %v4335 = vrot.slane %v4321, %v4334
        %v4336 = vcombine.low %v4271, %v4287
        %v4337 = vcombine.high %v4271, %v4287
        %v4339 = vunpack.c.l.s4 1934713408
        %v4340 = vunpack.c.0.s8 %v4339
        %v4341 = vlaneseq
        %v4342 = vshrl.u32 %v4341, 7
        %v4343 = vsub.s32 %v4340, %v4342
        %v4344 = vrot.slane %v4336, %v4343
        %v4346 = vunpack.c.l.s4 1934713408
        %v4347 = vunpack.c.0.s8 %v4346
        %v4348 = vlaneseq
        %v4349 = vshrl.u32 %v4348, 7
        %v4350 = vsub.s32 %v4347, %v4349
        %v4351 = vrot.slane %v4337, %v4350
        %v4352 = vcombine.low %v4296, %v4312
        %v4353 = vcombine.high %v4296, %v4312
        %v4355 = vunpack.c.l.s4 1934713408
        %v4356 = vunpack.c.0.s8 %v4355
        %v4357 = vlaneseq
        %v4358 = vshrl.u32 %v4357, 7
        %v4359 = vsub.s32 %v4356, %v4358
        %v4360 = vrot.slane %v4352, %v4359
        %v4362 = vunpack.c.l.s4 1934713408
        %v4363 = vunpack.c.0.s8 %v4362
        %v4364 = vlaneseq
        %v4365 = vshrl.u32 %v4364, 7
        %v4366 = vsub.s32 %v4363, %v4365
        %v4367 = vrot.slane %v4353, %v4366
        %v4368 = vcombine.low %v4303, %v4319
        %v4369 = vcombine.high %v4303, %v4319
        %v4371 = vunpack.c.l.s4 1934713408
        %v4372 = vunpack.c.0.s8 %v4371
        %v4373 = vlaneseq
        %v4374 = vshrl.u32 %v4373, 7
        %v4375 = vsub.s32 %v4372, %v4374
        %v4376 = vrot.slane %v4368, %v4375
        %v4378 = vunpack.c.l.s4 1934713408
        %v4379 = vunpack.c.0.s8 %v4378
        %v4380 = vlaneseq
        %v4381 = vshrl.u32 %v4380, 7
        %v4382 = vsub.s32 %v4379, %v4381
        %v4383 = vrot.slane %v4369, %v4382
        %v4384 = vcombine.low %v4328, %v4360
        %v4385 = vcombine.high %v4328, %v4360
        %v4386 = vcombine.low %v4335, %v4367
        %v4387 = vcombine.high %v4335, %v4367
        %v4388 = vcombine.low %v4344, %v4376
        %v4389 = vcombine.high %v4344, %v4376
        %v4390 = vcombine.low %v4351, %v4383
        %v4391 = vcombine.high %v4351, %v4383
        %v4392 = vcombine.low %v4213, %v4227
        %v4393 = vcombine.high %v4213, %v4227
        %v4395 = vunpack.c.l.s4 1983009808
        %v4396 = vunpack.c.0.s8 %v4395
        %v4397 = vlaneseq
        %v4398 = vshrl.u32 %v4397, 7
        %v4399 = vsub.s32 %v4396, %v4398
        %v4400 = vrot.slane %v4392, %v4399
        %v4402 = vunpack.c.l.s4 1983009808
        %v4403 = vunpack.c.0.s8 %v4402
        %v4404 = vlaneseq
        %v4405 = vshrl.u32 %v4404, 7
        %v4406 = vsub.s32 %v4403, %v4405
        %v4407 = vrot.slane %v4393, %v4406
        %v4408 = vcombine.low %v4221, %v4233
        %v4409 = vcombine.high %v4221, %v4233
        %v4411 = vunpack.c.l.s4 1983009808
        %v4412 = vunpack.c.0.s8 %v4411
        %v4413 = vlaneseq
        %v4414 = vshrl.u32 %v4413, 7
        %v4415 = vsub.s32 %v4412, %v4414
        %v4416 = vrot.slane %v4408, %v4415
        %v4418 = vunpack.c.l.s4 1983009808
        %v4419 = vunpack.c.0.s8 %v4418
        %v4420 = vlaneseq
        %v4421 = vshrl.u32 %v4420, 7
        %v4422 = vsub.s32 %v4419, %v4421
        %v4423 = vrot.slane %v4409, %v4422
        %v4424 = vcombine.low %v4215, %v4247
        %v4425 = vcombine.high %v4215, %v4247
        %v4427 = vunpack.c.l.s4 1983009808
        %v4428 = vunpack.c.0.s8 %v4427
        %v4429 = vlaneseq
        %v4430 = vshrl.u32 %v4429, 7
        %v4431 = vsub.s32 %v4428, %v4430
        %v4432 = vrot.slane %v4424, %v4431
        %v4434 = vunpack.c.l.s4 1983009808
        %v4435 = vunpack.c.0.s8 %v4434
        %v4436 = vlaneseq
        %v4437 = vshrl.u32 %v4436, 7
        %v4438 = vsub.s32 %v4435, %v4437
        %v4439 = vrot.slane %v4425, %v4438
        %v4440 = vcombine.low %v4241, %v4253
        %v4441 = vcombine.high %v4241, %v4253
        %v4443 = vunpack.c.l.s4 1983009808
        %v4444 = vunpack.c.0.s8 %v4443
        %v4445 = vlaneseq
        %v4446 = vshrl.u32 %v4445, 7
        %v4447 = vsub.s32 %v4444, %v4446
        %v4448 = vrot.slane %v4440, %v4447
        %v4450 = vunpack.c.l.s4 1983009808
        %v4451 = vunpack.c.0.s8 %v4450
        %v4452 = vlaneseq
        %v4453 = vshrl.u32 %v4452, 7
        %v4454 = vsub.s32 %v4451, %v4453
        %v4455 = vrot.slane %v4441, %v4454
        %v4456 = vcombine.low %v4400, %v4416
        %v4457 = vcombine.high %v4400, %v4416
        %v4459 = vunpack.c.l.s4 1934713408
        %v4460 = vunpack.c.0.s8 %v4459
        %v4461 = vlaneseq
        %v4462 = vshrl.u32 %v4461, 7
        %v4463 = vsub.s32 %v4460, %v4462
        %v4464 = vrot.slane %v4456, %v4463
        %v4466 = vunpack.c.l.s4 1934713408
        %v4467 = vunpack.c.0.s8 %v4466
        %v4468 = vlaneseq
        %v4469 = vshrl.u32 %v4468, 7
        %v4470 = vsub.s32 %v4467, %v4469
        %v4471 = vrot.slane %v4457, %v4470
        %v4472 = vcombine.low %v4407, %v4423
        %v4473 = vcombine.high %v4407, %v4423
        %v4475 = vunpack.c.l.s4 1934713408
        %v4476 = vunpack.c.0.s8 %v4475
        %v4477 = vlaneseq
        %v4478 = vshrl.u32 %v4477, 7
        %v4479 = vsub.s32 %v4476, %v4478
        %v4480 = vrot.slane %v4472, %v4479
        %v4482 = vunpack.c.l.s4 1934713408
        %v4483 = vunpack.c.0.s8 %v4482
        %v4484 = vlaneseq
        %v4485 = vshrl.u32 %v4484, 7
        %v4486 = vsub.s32 %v4483, %v4485
        %v4487 = vrot.slane %v4473, %v4486
        %v4488 = vcombine.low %v4432, %v4448
        %v4489 = vcombine.high %v4432, %v4448
        %v4491 = vunpack.c.l.s4 1934713408
        %v4492 = vunpack.c.0.s8 %v4491
        %v4493 = vlaneseq
        %v4494 = vshrl.u32 %v4493, 7
        %v4495 = vsub.s32 %v4492, %v4494
        %v4496 = vrot.slane %v4488, %v4495
        %v4498 = vunpack.c.l.s4 1934713408
        %v4499 = vunpack.c.0.s8 %v4498
        %v4500 = vlaneseq
        %v4501 = vshrl.u32 %v4500, 7
        %v4502 = vsub.s32 %v4499, %v4501
        %v4503 = vrot.slane %v4489, %v4502
        %v4504 = vcombine.low %v4439, %v4455
        %v4505 = vcombine.high %v4439, %v4455
        %v4507 = vunpack.c.l.s4 1934713408
        %v4508 = vunpack.c.0.s8 %v4507
        %v4509 = vlaneseq
        %v4510 = vshrl.u32 %v4509, 7
        %v4511 = vsub.s32 %v4508, %v4510
        %v4512 = vrot.slane %v4504, %v4511
        %v4514 = vunpack.c.l.s4 1934713408
        %v4515 = vunpack.c.0.s8 %v4514
        %v4516 = vlaneseq
        %v4517 = vshrl.u32 %v4516, 7
        %v4518 = vsub.s32 %v4515, %v4517
        %v4519 = vrot.slane %v4505, %v4518
        %v4520 = vcombine.low %v4464, %v4496
        %v4521 = vcombine.high %v4464, %v4496
        %v4522 = vcombine.low %v4471, %v4503
        %v4523 = vcombine.high %v4471, %v4503
        %v4524 = vcombine.low %v4480, %v4512
        %v4525 = vcombine.high %v4480, %v4512
        %v4526 = vcombine.low %v4487, %v4519
        %v4527 = vcombine.high %v4487, %v4519
        %v4528 = vcombine.low %v4384, %v4386
        %v4529 = vcombine.high %v4384, %v4386
        %v4531 = vunpack.c.l.s4 1983009808
        %v4532 = vunpack.c.0.s8 %v4531
        %v4533 = vlaneseq
        %v4534 = vshrl.u32 %v4533, 7
        %v4535 = vsub.s32 %v4532, %v4534
        %v4536 = vrot.slane %v4528, %v4535
        %v4538 = vunpack.c.l.s4 1983009808
        %v4539 = vunpack.c.0.s8 %v4538
        %v4540 = vlaneseq
        %v4541 = vshrl.u32 %v4540, 7
        %v4542 = vsub.s32 %v4539, %v4541
        %v4543 = vrot.slane %v4529, %v4542
        %v4544 = vcombine.low %v4385, %v4387
        %v4545 = vcombine.high %v4385, %v4387
        %v4547 = vunpack.c.l.s4 1983009808
        %v4548 = vunpack.c.0.s8 %v4547
        %v4549 = vlaneseq
        %v4550 = vshrl.u32 %v4549, 7
        %v4551 = vsub.s32 %v4548, %v4550
        %v4552 = vrot.slane %v4544, %v4551
        %v4554 = vunpack.c.l.s4 1983009808
        %v4555 = vunpack.c.0.s8 %v4554
        %v4556 = vlaneseq
        %v4557 = vshrl.u32 %v4556, 7
        %v4558 = vsub.s32 %v4555, %v4557
        %v4559 = vrot.slane %v4545, %v4558
        %v4560 = vcombine.low %v4388, %v4390
        %v4561 = vcombine.high %v4388, %v4390
        %v4563 = vunpack.c.l.s4 1983009808
        %v4564 = vunpack.c.0.s8 %v4563
        %v4565 = vlaneseq
        %v4566 = vshrl.u32 %v4565, 7
        %v4567 = vsub.s32 %v4564, %v4566
        %v4568 = vrot.slane %v4560, %v4567
        %v4570 = vunpack.c.l.s4 1983009808
        %v4571 = vunpack.c.0.s8 %v4570
        %v4572 = vlaneseq
        %v4573 = vshrl.u32 %v4572, 7
        %v4574 = vsub.s32 %v4571, %v4573
        %v4575 = vrot.slane %v4561, %v4574
        %v4576 = vcombine.low %v4389, %v4391
        %v4577 = vcombine.high %v4389, %v4391
        %v4579 = vunpack.c.l.s4 1983009808
        %v4580 = vunpack.c.0.s8 %v4579
        %v4581 = vlaneseq
        %v4582 = vshrl.u32 %v4581, 7
        %v4583 = vsub.s32 %v4580, %v4582
        %v4584 = vrot.slane %v4576, %v4583
        %v4586 = vunpack.c.l.s4 1983009808
        %v4587 = vunpack.c.0.s8 %v4586
        %v4588 = vlaneseq
        %v4589 = vshrl.u32 %v4588, 7
        %v4590 = vsub.s32 %v4587, %v4589
        %v4591 = vrot.slane %v4577, %v4590
        %v4592 = vcombine.low %v4536, %v4552
        %v4593 = vcombine.high %v4536, %v4552
        %v4595 = vunpack.c.l.s4 1934713408
        %v4596 = vunpack.c.0.s8 %v4595
        %v4597 = vlaneseq
        %v4598 = vshrl.u32 %v4597, 7
        %v4599 = vsub.s32 %v4596, %v4598
        %v4600 = vrot.slane %v4592, %v4599
        %v4602 = vunpack.c.l.s4 1934713408
        %v4603 = vunpack.c.0.s8 %v4602
        %v4604 = vlaneseq
        %v4605 = vshrl.u32 %v4604, 7
        %v4606 = vsub.s32 %v4603, %v4605
        %v4607 = vrot.slane %v4593, %v4606
        %v4608 = vcombine.low %v4543, %v4559
        %v4609 = vcombine.high %v4543, %v4559
        %v4611 = vunpack.c.l.s4 1934713408
        %v4612 = vunpack.c.0.s8 %v4611
        %v4613 = vlaneseq
        %v4614 = vshrl.u32 %v4613, 7
        %v4615 = vsub.s32 %v4612, %v4614
        %v4616 = vrot.slane %v4608, %v4615
        %v4618 = vunpack.c.l.s4 1934713408
        %v4619 = vunpack.c.0.s8 %v4618
        %v4620 = vlaneseq
        %v4621 = vshrl.u32 %v4620, 7
        %v4622 = vsub.s32 %v4619, %v4621
        %v4623 = vrot.slane %v4609, %v4622
        %v4624 = vcombine.low %v4568, %v4584
        %v4625 = vcombine.high %v4568, %v4584
        %v4627 = vunpack.c.l.s4 1934713408
        %v4628 = vunpack.c.0.s8 %v4627
        %v4629 = vlaneseq
        %v4630 = vshrl.u32 %v4629, 7
        %v4631 = vsub.s32 %v4628, %v4630
        %v4632 = vrot.slane %v4624, %v4631
        %v4634 = vunpack.c.l.s4 1934713408
        %v4635 = vunpack.c.0.s8 %v4634
        %v4636 = vlaneseq
        %v4637 = vshrl.u32 %v4636, 7
        %v4638 = vsub.s32 %v4635, %v4637
        %v4639 = vrot.slane %v4625, %v4638
        %v4640 = vcombine.low %v4575, %v4591
        %v4641 = vcombine.high %v4575, %v4591
        %v4643 = vunpack.c.l.s4 1934713408
        %v4644 = vunpack.c.0.s8 %v4643
        %v4645 = vlaneseq
        %v4646 = vshrl.u32 %v4645, 7
        %v4647 = vsub.s32 %v4644, %v4646
        %v4648 = vrot.slane %v4640, %v4647
        %v4650 = vunpack.c.l.s4 1934713408
        %v4651 = vunpack.c.0.s8 %v4650
        %v4652 = vlaneseq
        %v4653 = vshrl.u32 %v4652, 7
        %v4654 = vsub.s32 %v4651, %v4653
        %v4655 = vrot.slane %v4641, %v4654
        %v4656 = vcombine.low %v4600, %v4632
        %v4657 = vcombine.high %v4600, %v4632
        %v4658 = vcombine.low %v4607, %v4639
        %v4659 = vcombine.high %v4607, %v4639
        %v4660 = vcombine.low %v4616, %v4648
        %v4661 = vcombine.high %v4616, %v4648
        %v4662 = vcombine.low %v4623, %v4655
        %v4663 = vcombine.high %v4623, %v4655
        %v4664 = vcombine.low %v4520, %v4522
        %v4665 = vcombine.high %v4520, %v4522
        %v4667 = vunpack.c.l.s4 1983009808
        %v4668 = vunpack.c.0.s8 %v4667
        %v4669 = vlaneseq
        %v4670 = vshrl.u32 %v4669, 7
        %v4671 = vsub.s32 %v4668, %v4670
        %v4672 = vrot.slane %v4664, %v4671
        %v4674 = vunpack.c.l.s4 1983009808
        %v4675 = vunpack.c.0.s8 %v4674
        %v4676 = vlaneseq
        %v4677 = vshrl.u32 %v4676, 7
        %v4678 = vsub.s32 %v4675, %v4677
        %v4679 = vrot.slane %v4665, %v4678
        %v4680 = vcombine.low %v4521, %v4523
        %v4681 = vcombine.high %v4521, %v4523
        %v4683 = vunpack.c.l.s4 1983009808
        %v4684 = vunpack.c.0.s8 %v4683
        %v4685 = vlaneseq
        %v4686 = vshrl.u32 %v4685, 7
        %v4687 = vsub.s32 %v4684, %v4686
        %v4688 = vrot.slane %v4680, %v4687
        %v4690 = vunpack.c.l.s4 1983009808
        %v4691 = vunpack.c.0.s8 %v4690
        %v4692 = vlaneseq
        %v4693 = vshrl.u32 %v4692, 7
        %v4694 = vsub.s32 %v4691, %v4693
        %v4695 = vrot.slane %v4681, %v4694
        %v4696 = vcombine.low %v4524, %v4526
        %v4697 = vcombine.high %v4524, %v4526
        %v4699 = vunpack.c.l.s4 1983009808
        %v4700 = vunpack.c.0.s8 %v4699
        %v4701 = vlaneseq
        %v4702 = vshrl.u32 %v4701, 7
        %v4703 = vsub.s32 %v4700, %v4702
        %v4704 = vrot.slane %v4696, %v4703
        %v4706 = vunpack.c.l.s4 1983009808
        %v4707 = vunpack.c.0.s8 %v4706
        %v4708 = vlaneseq
        %v4709 = vshrl.u32 %v4708, 7
        %v4710 = vsub.s32 %v4707, %v4709
        %v4711 = vrot.slane %v4697, %v4710
        %v4712 = vcombine.low %v4525, %v4527
        %v4713 = vcombine.high %v4525, %v4527
        %v4715 = vunpack.c.l.s4 1983009808
        %v4716 = vunpack.c.0.s8 %v4715
        %v4717 = vlaneseq
        %v4718 = vshrl.u32 %v4717, 7
        %v4719 = vsub.s32 %v4716, %v4718
        %v4720 = vrot.slane %v4712, %v4719
        %v4722 = vunpack.c.l.s4 1983009808
        %v4723 = vunpack.c.0.s8 %v4722
        %v4724 = vlaneseq
        %v4725 = vshrl.u32 %v4724, 7
        %v4726 = vsub.s32 %v4723, %v4725
        %v4727 = vrot.slane %v4713, %v4726
        %v4728 = vcombine.low %v4672, %v4688
        %v4729 = vcombine.high %v4672, %v4688
        %v4731 = vunpack.c.l.s4 1934713408
        %v4732 = vunpack.c.0.s8 %v4731
        %v4733 = vlaneseq
        %v4734 = vshrl.u32 %v4733, 7
        %v4735 = vsub.s32 %v4732, %v4734
        %v4736 = vrot.slane %v4728, %v4735
        %v4738 = vunpack.c.l.s4 1934713408
        %v4739 = vunpack.c.0.s8 %v4738
        %v4740 = vlaneseq
        %v4741 = vshrl.u32 %v4740, 7
        %v4742 = vsub.s32 %v4739, %v4741
        %v4743 = vrot.slane %v4729, %v4742
        %v4744 = vcombine.low %v4679, %v4695
        %v4745 = vcombine.high %v4679, %v4695
        %v4747 = vunpack.c.l.s4 1934713408
        %v4748 = vunpack.c.0.s8 %v4747
        %v4749 = vlaneseq
        %v4750 = vshrl.u32 %v4749, 7
        %v4751 = vsub.s32 %v4748, %v4750
        %v4752 = vrot.slane %v4744, %v4751
        %v4754 = vunpack.c.l.s4 1934713408
        %v4755 = vunpack.c.0.s8 %v4754
        %v4756 = vlaneseq
        %v4757 = vshrl.u32 %v4756, 7
        %v4758 = vsub.s32 %v4755, %v4757
        %v4759 = vrot.slane %v4745, %v4758
        %v4760 = vcombine.low %v4704, %v4720
        %v4761 = vcombine.high %v4704, %v4720
        %v4763 = vunpack.c.l.s4 1934713408
        %v4764 = vunpack.c.0.s8 %v4763
        %v4765 = vlaneseq
        %v4766 = vshrl.u32 %v4765, 7
        %v4767 = vsub.s32 %v4764, %v4766
        %v4768 = vrot.slane %v4760, %v4767
        %v4770 = vunpack.c.l.s4 1934713408
        %v4771 = vunpack.c.0.s8 %v4770
        %v4772 = vlaneseq
        %v4773 = vshrl.u32 %v4772, 7
        %v4774 = vsub.s32 %v4771, %v4773
        %v4775 = vrot.slane %v4761, %v4774
        %v4776 = vcombine.low %v4711, %v4727
        %v4777 = vcombine.high %v4711, %v4727
        %v4779 = vunpack.c.l.s4 1934713408
        %v4780 = vunpack.c.0.s8 %v4779
        %v4781 = vlaneseq
        %v4782 = vshrl.u32 %v4781, 7
        %v4783 = vsub.s32 %v4780, %v4782
        %v4784 = vrot.slane %v4776, %v4783
        %v4786 = vunpack.c.l.s4 1934713408
        %v4787 = vunpack.c.0.s8 %v4786
        %v4788 = vlaneseq
        %v4789 = vshrl.u32 %v4788, 7
        %v4790 = vsub.s32 %v4787, %v4789
        %v4791 = vrot.slane %v4777, %v4790
        %v4792 = vcombine.low %v4736, %v4768
        %v4793 = vcombine.high %v4736, %v4768
        %v4794 = vcombine.low %v4743, %v4775
        %v4795 = vcombine.high %v4743, %v4775
        %v4796 = vcombine.low %v4752, %v4784
        %v4797 = vcombine.high %v4752, %v4784
        %v4798 = vcombine.low %v4759, %v4791
        %v4799 = vcombine.high %v4759, %v4791
        %v4800 = vld [vmem:[%s409] sm:$0xf]
        %v4801 = vld [vmem:[%s409 + $0x4] sm:$0xf]
        %v4802 = vld [vmem:[%s409 + $0x8] sm:$0xf]
        %v4803 = vld [vmem:[%s409 + $0xc] sm:$0xf]
        %v4804 = vld [vmem:[%s409 + $0x10] sm:$0xf]
        %v4805 = vld [vmem:[%s409 + $0x14] sm:$0xf]
        %v4806 = vld [vmem:[%s409 + $0x18] sm:$0xf]
        %v4807 = vld [vmem:[%s409 + $0x1c] sm:$0xf]
        %v4808 = vld [vmem:[%s409 + $0x20] sm:$0xf]
        %v4809 = vld [vmem:[%s409 + $0x24] sm:$0xf]
        %v4810 = vld [vmem:[%s409 + $0x28] sm:$0xf]
        %v4811 = vld [vmem:[%s409 + $0x2c] sm:$0xf]
        %v4812 = vld [vmem:[%s409 + $0x30] sm:$0xf]
        %v4813 = vld [vmem:[%s409 + $0x34] sm:$0xf]
        %v4814 = vld [vmem:[%s409 + $0x38] sm:$0xf]
        %v4815 = vld [vmem:[%s409 + $0x3c] sm:$0xf]
        %v4816 = vld [vmem:[%s409 + $0x40] sm:$0xf]
        %v4817 = vld [vmem:[%s409 + $0x44] sm:$0xf]
        %v4818 = vld [vmem:[%s409 + $0x48] sm:$0xf]
        %v4819 = vld [vmem:[%s409 + $0x4c] sm:$0xf]
        %v4820 = vld [vmem:[%s409 + $0x50] sm:$0xf]
        %v4821 = vld [vmem:[%s409 + $0x54] sm:$0xf]
        %v4822 = vld [vmem:[%s409 + $0x58] sm:$0xf]
        %v4823 = vld [vmem:[%s409 + $0x5c] sm:$0xf]
        %v4824 = vld [vmem:[%s409 + $0x60] sm:$0xf]
        %v4825 = vld [vmem:[%s409 + $0x64] sm:$0xf]
        %v4826 = vld [vmem:[%s409 + $0x68] sm:$0xf]
        %v4827 = vld [vmem:[%s409 + $0x6c] sm:$0xf]
        %v4828 = vld [vmem:[%s409 + $0x70] sm:$0xf]
        %v4829 = vld [vmem:[%s409 + $0x74] sm:$0xf]
        %v4830 = vld [vmem:[%s409 + $0x78] sm:$0xf]
        %v4831 = vld [vmem:[%s409 + $0x7c] sm:$0xf]
        %v4832 = vld [vmem:[%s409 + $0x80] sm:$0xf]
        %v4833 = vld [vmem:[%s409 + $0x84] sm:$0xf]
        %v4834 = vld [vmem:[%s409 + $0x88] sm:$0xf]
        %v4835 = vld [vmem:[%s409 + $0x8c] sm:$0xf]
        %v4836 = vld [vmem:[%s409 + $0x90] sm:$0xf]
        %v4837 = vld [vmem:[%s409 + $0x94] sm:$0xf]
        %v4838 = vld [vmem:[%s409 + $0x98] sm:$0xf]
        %v4839 = vld [vmem:[%s409 + $0x9c] sm:$0xf]
        %v4840 = vld [vmem:[%s409 + $0xa0] sm:$0xf]
        %v4841 = vld [vmem:[%s409 + $0xa4] sm:$0xf]
        %v4842 = vld [vmem:[%s409 + $0xa8] sm:$0xf]
        %v4843 = vld [vmem:[%s409 + $0xac] sm:$0xf]
        %v4844 = vld [vmem:[%s409 + $0xb0] sm:$0xf]
        %v4845 = vld [vmem:[%s409 + $0xb4] sm:$0xf]
        %v4846 = vld [vmem:[%s409 + $0xb8] sm:$0xf]
        %v4847 = vld [vmem:[%s409 + $0xbc] sm:$0xf]
        %v4848 = vld [vmem:[%s409 + $0xc0] sm:$0xf]
        %v4849 = vld [vmem:[%s409 + $0xc4] sm:$0xf]
        %v4850 = vld [vmem:[%s409 + $0xc8] sm:$0xf]
        %v4851 = vld [vmem:[%s409 + $0xcc] sm:$0xf]
        %v4852 = vld [vmem:[%s409 + $0xd0] sm:$0xf]
        %v4853 = vld [vmem:[%s409 + $0xd4] sm:$0xf]
        %v4854 = vld [vmem:[%s409 + $0xd8] sm:$0xf]
        %v4855 = vld [vmem:[%s409 + $0xdc] sm:$0xf]
        %v4856 = vld [vmem:[%s409 + $0xe0] sm:$0xf]
        %v4857 = vld [vmem:[%s409 + $0xe4] sm:$0xf]
        %v4858 = vld [vmem:[%s409 + $0xe8] sm:$0xf]
        %v4859 = vld [vmem:[%s409 + $0xec] sm:$0xf]
        %v4860 = vld [vmem:[%s409 + $0xf0] sm:$0xf]
        %v4861 = vld [vmem:[%s409 + $0xf4] sm:$0xf]
        %v4862 = vld [vmem:[%s409 + $0xf8] sm:$0xf]
        %v4863 = vld [vmem:[%s409 + $0xfc] sm:$0xf]
        %v4864 = vunpack.c.l.bf16 %v4800
        %v4865 = vunpack.c.l.bf16 %v4801
        %v4866 = vunpack.c.l.bf16 %v4802
        %v4867 = vunpack.c.l.bf16 %v4803
        %v4868 = vunpack.c.l.bf16 %v4804
        %v4869 = vunpack.c.l.bf16 %v4805
        %v4870 = vunpack.c.l.bf16 %v4806
        %v4871 = vunpack.c.l.bf16 %v4807
        %v4872 = vunpack.c.l.bf16 %v4808
        %v4873 = vunpack.c.l.bf16 %v4809
        %v4874 = vunpack.c.l.bf16 %v4810
        %v4875 = vunpack.c.l.bf16 %v4811
        %v4876 = vunpack.c.l.bf16 %v4812
        %v4877 = vunpack.c.l.bf16 %v4813
        %v4878 = vunpack.c.l.bf16 %v4814
        %v4879 = vunpack.c.l.bf16 %v4815
        %v4880 = vunpack.c.l.bf16 %v4816
        %v4881 = vunpack.c.l.bf16 %v4817
        %v4882 = vunpack.c.l.bf16 %v4818
        %v4883 = vunpack.c.l.bf16 %v4819
        %v4884 = vunpack.c.l.bf16 %v4820
        %v4885 = vunpack.c.l.bf16 %v4821
        %v4886 = vunpack.c.l.bf16 %v4822
        %v4887 = vunpack.c.l.bf16 %v4823
        %v4888 = vunpack.c.l.bf16 %v4824
        %v4889 = vunpack.c.l.bf16 %v4825
        %v4890 = vunpack.c.l.bf16 %v4826
        %v4891 = vunpack.c.l.bf16 %v4827
        %v4892 = vunpack.c.l.bf16 %v4828
        %v4893 = vunpack.c.l.bf16 %v4829
        %v4894 = vunpack.c.l.bf16 %v4830
        %v4895 = vunpack.c.l.bf16 %v4831
        %v4896 = vunpack.c.l.bf16 %v4832
        %v4897 = vunpack.c.l.bf16 %v4833
        %v4898 = vunpack.c.l.bf16 %v4834
        %v4899 = vunpack.c.l.bf16 %v4835
        %v4900 = vunpack.c.l.bf16 %v4836
        %v4901 = vunpack.c.l.bf16 %v4837
        %v4902 = vunpack.c.l.bf16 %v4838
        %v4903 = vunpack.c.l.bf16 %v4839
        %v4904 = vunpack.c.l.bf16 %v4840
        %v4905 = vunpack.c.l.bf16 %v4841
        %v4906 = vunpack.c.l.bf16 %v4842
        %v4907 = vunpack.c.l.bf16 %v4843
        %v4908 = vunpack.c.l.bf16 %v4844
        %v4909 = vunpack.c.l.bf16 %v4845
        %v4910 = vunpack.c.l.bf16 %v4846
        %v4911 = vunpack.c.l.bf16 %v4847
        %v4912 = vunpack.c.l.bf16 %v4848
        %v4913 = vunpack.c.l.bf16 %v4849
        %v4914 = vunpack.c.l.bf16 %v4850
        %v4915 = vunpack.c.l.bf16 %v4851
        %v4916 = vunpack.c.l.bf16 %v4852
        %v4917 = vunpack.c.l.bf16 %v4853
        %v4918 = vunpack.c.l.bf16 %v4854
        %v4919 = vunpack.c.l.bf16 %v4855
        %v4920 = vunpack.c.l.bf16 %v4856
        %v4921 = vunpack.c.l.bf16 %v4857
        %v4922 = vunpack.c.l.bf16 %v4858
        %v4923 = vunpack.c.l.bf16 %v4859
        %v4924 = vunpack.c.l.bf16 %v4860
        %v4925 = vunpack.c.l.bf16 %v4861
        %v4926 = vunpack.c.l.bf16 %v4862
        %v4927 = vunpack.c.l.bf16 %v4863
        %4928 = vxpose.xlu0.b32.start [1/16] %v4864, 128
        %4929 = vxpose.xlu0.b32.cont [2/16] %v4865, 128
        %4930 = vxpose.xlu0.b32.cont [3/16] %v4866, 128
        %4931 = vxpose.xlu0.b32.cont [4/16] %v4867, 128
        %4932 = vxpose.xlu0.b32.cont [5/16] 0.0, 128
        %4933 = vxpose.xlu0.b32.cont [6/16] 0.0, 128
        %4934 = vxpose.xlu0.b32.cont [7/16] 0.0, 128
        %4935 = vxpose.xlu0.b32.cont [8/16] 0.0, 128
        %4936 = vxpose.xlu0.b32.cont [9/16] 0.0, 128
        %4937 = vxpose.xlu0.b32.cont [10/16] 0.0, 128
        %4938 = vxpose.xlu0.b32.cont [11/16] 0.0, 128
        %4939 = vxpose.xlu0.b32.cont [12/16] 0.0, 128
        %4940 = vxpose.xlu0.b32.cont [13/16] 0.0, 128
        %4941 = vxpose.xlu0.b32.cont [14/16] 0.0, 128
        %4942 = vxpose.xlu0.b32.cont [15/16] 0.0, 128
        %4943 = vxpose.xlu0.b32.end [16/16] 0.0, 128
        %v4944 = vpop.trf.xlu0
        %v4945 = vpop.trf.xlu0
        %v4946 = vpop.trf.xlu0
        %v4947 = vpop.trf.xlu0
        %v4948 = vpop.trf.xlu0
        %v4949 = vpop.trf.xlu0
        %v4950 = vpop.trf.xlu0
        %v4951 = vpop.trf.xlu0
        %v4952 = vpop.trf.xlu0
        %v4953 = vpop.trf.xlu0
        %v4954 = vpop.trf.xlu0
        %v4955 = vpop.trf.xlu0
        %v4956 = vpop.trf.xlu0
        %v4957 = vpop.trf.xlu0
        %v4958 = vpop.trf.xlu0
        %v4959 = vpop.trf.xlu0
        %4960 = vxpose.xlu0.b32.start [1/16] %v4868, 128
        %4961 = vxpose.xlu0.b32.cont [2/16] %v4869, 128
        %4962 = vxpose.xlu0.b32.cont [3/16] %v4870, 128
        %4963 = vxpose.xlu0.b32.cont [4/16] %v4871, 128
        %4964 = vxpose.xlu0.b32.cont [5/16] 0.0, 128
        %4965 = vxpose.xlu0.b32.cont [6/16] 0.0, 128
        %4966 = vxpose.xlu0.b32.cont [7/16] 0.0, 128
        %4967 = vxpose.xlu0.b32.cont [8/16] 0.0, 128
        %4968 = vxpose.xlu0.b32.cont [9/16] 0.0, 128
        %4969 = vxpose.xlu0.b32.cont [10/16] 0.0, 128
        %4970 = vxpose.xlu0.b32.cont [11/16] 0.0, 128
        %4971 = vxpose.xlu0.b32.cont [12/16] 0.0, 128
        %4972 = vxpose.xlu0.b32.cont [13/16] 0.0, 128
        %4973 = vxpose.xlu0.b32.cont [14/16] 0.0, 128
        %4974 = vxpose.xlu0.b32.cont [15/16] 0.0, 128
        %4975 = vxpose.xlu0.b32.end [16/16] 0.0, 128
        %v4976 = vpop.trf.xlu0
        %v4977 = vpop.trf.xlu0
        %v4978 = vpop.trf.xlu0
        %v4979 = vpop.trf.xlu0
        %v4980 = vpop.trf.xlu0
        %v4981 = vpop.trf.xlu0
        %v4982 = vpop.trf.xlu0
        %v4983 = vpop.trf.xlu0
        %v4984 = vpop.trf.xlu0
        %v4985 = vpop.trf.xlu0
        %v4986 = vpop.trf.xlu0
        %v4987 = vpop.trf.xlu0
        %v4988 = vpop.trf.xlu0
        %v4989 = vpop.trf.xlu0
        %v4990 = vpop.trf.xlu0
        %v4991 = vpop.trf.xlu0
        %4992 = vxpose.xlu0.b32.start [1/16] %v4872, 128
        %4993 = vxpose.xlu0.b32.cont [2/16] %v4873, 128
        %4994 = vxpose.xlu0.b32.cont [3/16] %v4874, 128
        %4995 = vxpose.xlu0.b32.cont [4/16] %v4875, 128
        %4996 = vxpose.xlu0.b32.cont [5/16] 0.0, 128
        %4997 = vxpose.xlu0.b32.cont [6/16] 0.0, 128
        %4998 = vxpose.xlu0.b32.cont [7/16] 0.0, 128
        %4999 = vxpose.xlu0.b32.cont [8/16] 0.0, 128
        %5000 = vxpose.xlu0.b32.cont [9/16] 0.0, 128
        %5001 = vxpose.xlu0.b32.cont [10/16] 0.0, 128
        %5002 = vxpose.xlu0.b32.cont [11/16] 0.0, 128
        %5003 = vxpose.xlu0.b32.cont [12/16] 0.0, 128
        %5004 = vxpose.xlu0.b32.cont [13/16] 0.0, 128
        %5005 = vxpose.xlu0.b32.cont [14/16] 0.0, 128
        %5006 = vxpose.xlu0.b32.cont [15/16] 0.0, 128
        %5007 = vxpose.xlu0.b32.end [16/16] 0.0, 128
        %v5008 = vpop.trf.xlu0
        %v5009 = vpop.trf.xlu0
        %v5010 = vpop.trf.xlu0
        %v5011 = vpop.trf.xlu0
        %v5012 = vpop.trf.xlu0
        %v5013 = vpop.trf.xlu0
        %v5014 = vpop.trf.xlu0
        %v5015 = vpop.trf.xlu0
        %v5016 = vpop.trf.xlu0
        %v5017 = vpop.trf.xlu0
        %v5018 = vpop.trf.xlu0
        %v5019 = vpop.trf.xlu0
        %v5020 = vpop.trf.xlu0
        %v5021 = vpop.trf.xlu0
        %v5022 = vpop.trf.xlu0
        %v5023 = vpop.trf.xlu0
        %5024 = vxpose.xlu0.b32.start [1/16] %v4876, 128
        %5025 = vxpose.xlu0.b32.cont [2/16] %v4877, 128
        %5026 = vxpose.xlu0.b32.cont [3/16] %v4878, 128
        %5027 = vxpose.xlu0.b32.cont [4/16] %v4879, 128
        %5028 = vxpose.xlu0.b32.cont [5/16] 0.0, 128
        %5029 = vxpose.xlu0.b32.cont [6/16] 0.0, 128
        %5030 = vxpose.xlu0.b32.cont [7/16] 0.0, 128
        %5031 = vxpose.xlu0.b32.cont [8/16] 0.0, 128
        %5032 = vxpose.xlu0.b32.cont [9/16] 0.0, 128
        %5033 = vxpose.xlu0.b32.cont [10/16] 0.0, 128
        %5034 = vxpose.xlu0.b32.cont [11/16] 0.0, 128
        %5035 = vxpose.xlu0.b32.cont [12/16] 0.0, 128
        %5036 = vxpose.xlu0.b32.cont [13/16] 0.0, 128
        %5037 = vxpose.xlu0.b32.cont [14/16] 0.0, 128
        %5038 = vxpose.xlu0.b32.cont [15/16] 0.0, 128
        %5039 = vxpose.xlu0.b32.end [16/16] 0.0, 128
        %v5040 = vpop.trf.xlu0
        %v5041 = vpop.trf.xlu0
        %v5042 = vpop.trf.xlu0
        %v5043 = vpop.trf.xlu0
        %v5044 = vpop.trf.xlu0
        %v5045 = vpop.trf.xlu0
        %v5046 = vpop.trf.xlu0
        %v5047 = vpop.trf.xlu0
        %v5048 = vpop.trf.xlu0
        %v5049 = vpop.trf.xlu0
        %v5050 = vpop.trf.xlu0
        %v5051 = vpop.trf.xlu0
        %v5052 = vpop.trf.xlu0
        %v5053 = vpop.trf.xlu0
        %v5054 = vpop.trf.xlu0
        %v5055 = vpop.trf.xlu0
        %5056 = vxpose.xlu0.b32.start [1/16] %v4880, 128
        %5057 = vxpose.xlu0.b32.cont [2/16] %v4881, 128
        %5058 = vxpose.xlu0.b32.cont [3/16] %v4882, 128
        %5059 = vxpose.xlu0.b32.cont [4/16] %v4883, 128
        %5060 = vxpose.xlu0.b32.cont [5/16] 0.0, 128
        %5061 = vxpose.xlu0.b32.cont [6/16] 0.0, 128
        %5062 = vxpose.xlu0.b32.cont [7/16] 0.0, 128
        %5063 = vxpose.xlu0.b32.cont [8/16] 0.0, 128
        %5064 = vxpose.xlu0.b32.cont [9/16] 0.0, 128
        %5065 = vxpose.xlu0.b32.cont [10/16] 0.0, 128
        %5066 = vxpose.xlu0.b32.cont [11/16] 0.0, 128
        %5067 = vxpose.xlu0.b32.cont [12/16] 0.0, 128
        %5068 = vxpose.xlu0.b32.cont [13/16] 0.0, 128
        %5069 = vxpose.xlu0.b32.cont [14/16] 0.0, 128
        %5070 = vxpose.xlu0.b32.cont [15/16] 0.0, 128
        %5071 = vxpose.xlu0.b32.end [16/16] 0.0, 128
        %v5072 = vpop.trf.xlu0
        %v5073 = vpop.trf.xlu0
        %v5074 = vpop.trf.xlu0
        %v5075 = vpop.trf.xlu0
        %v5076 = vpop.trf.xlu0
        %v5077 = vpop.trf.xlu0
        %v5078 = vpop.trf.xlu0
        %v5079 = vpop.trf.xlu0
        %v5080 = vpop.trf.xlu0
        %v5081 = vpop.trf.xlu0
        %v5082 = vpop.trf.xlu0
        %v5083 = vpop.trf.xlu0
        %v5084 = vpop.trf.xlu0
        %v5085 = vpop.trf.xlu0
        %v5086 = vpop.trf.xlu0
        %v5087 = vpop.trf.xlu0
        %5088 = vxpose.xlu0.b32.start [1/16] %v4884, 128
        %5089 = vxpose.xlu0.b32.cont [2/16] %v4885, 128
        %5090 = vxpose.xlu0.b32.cont [3/16] %v4886, 128
        %5091 = vxpose.xlu0.b32.cont [4/16] %v4887, 128
        %5092 = vxpose.xlu0.b32.cont [5/16] 0.0, 128
        %5093 = vxpose.xlu0.b32.cont [6/16] 0.0, 128
        %5094 = vxpose.xlu0.b32.cont [7/16] 0.0, 128
        %5095 = vxpose.xlu0.b32.cont [8/16] 0.0, 128
        %5096 = vxpose.xlu0.b32.cont [9/16] 0.0, 128
        %5097 = vxpose.xlu0.b32.cont [10/16] 0.0, 128
        %5098 = vxpose.xlu0.b32.cont [11/16] 0.0, 128
        %5099 = vxpose.xlu0.b32.cont [12/16] 0.0, 128
        %5100 = vxpose.xlu0.b32.cont [13/16] 0.0, 128
        %5101 = vxpose.xlu0.b32.cont [14/16] 0.0, 128
        %5102 = vxpose.xlu0.b32.cont [15/16] 0.0, 128
        %5103 = vxpose.xlu0.b32.end [16/16] 0.0, 128
        %v5104 = vpop.trf.xlu0
        %v5105 = vpop.trf.xlu0
        %v5106 = vpop.trf.xlu0
        %v5107 = vpop.trf.xlu0
        %v5108 = vpop.trf.xlu0
        %v5109 = vpop.trf.xlu0
        %v5110 = vpop.trf.xlu0
        %v5111 = vpop.trf.xlu0
        %v5112 = vpop.trf.xlu0
        %v5113 = vpop.trf.xlu0
        %v5114 = vpop.trf.xlu0
        %v5115 = vpop.trf.xlu0
        %v5116 = vpop.trf.xlu0
        %v5117 = vpop.trf.xlu0
        %v5118 = vpop.trf.xlu0
        %v5119 = vpop.trf.xlu0
        %5120 = vxpose.xlu0.b32.start [1/16] %v4888, 128
        %5121 = vxpose.xlu0.b32.cont [2/16] %v4889, 128
        %5122 = vxpose.xlu0.b32.cont [3/16] %v4890, 128
        %5123 = vxpose.xlu0.b32.cont [4/16] %v4891, 128
        %5124 = vxpose.xlu0.b32.cont [5/16] 0.0, 128
        %5125 = vxpose.xlu0.b32.cont [6/16] 0.0, 128
        %5126 = vxpose.xlu0.b32.cont [7/16] 0.0, 128
        %5127 = vxpose.xlu0.b32.cont [8/16] 0.0, 128
        %5128 = vxpose.xlu0.b32.cont [9/16] 0.0, 128
        %5129 = vxpose.xlu0.b32.cont [10/16] 0.0, 128
        %5130 = vxpose.xlu0.b32.cont [11/16] 0.0, 128
        %5131 = vxpose.xlu0.b32.cont [12/16] 0.0, 128
        %5132 = vxpose.xlu0.b32.cont [13/16] 0.0, 128
        %5133 = vxpose.xlu0.b32.cont [14/16] 0.0, 128
        %5134 = vxpose.xlu0.b32.cont [15/16] 0.0, 128
        %5135 = vxpose.xlu0.b32.end [16/16] 0.0, 128
        %v5136 = vpop.trf.xlu0
        %v5137 = vpop.trf.xlu0
        %v5138 = vpop.trf.xlu0
        %v5139 = vpop.trf.xlu0
        %v5140 = vpop.trf.xlu0
        %v5141 = vpop.trf.xlu0
        %v5142 = vpop.trf.xlu0
        %v5143 = vpop.trf.xlu0
        %v5144 = vpop.trf.xlu0
        %v5145 = vpop.trf.xlu0
        %v5146 = vpop.trf.xlu0
        %v5147 = vpop.trf.xlu0
        %v5148 = vpop.trf.xlu0
        %v5149 = vpop.trf.xlu0
        %v5150 = vpop.trf.xlu0
        %v5151 = vpop.trf.xlu0
        %5152 = vxpose.xlu0.b32.start [1/16] %v4892, 128
        %5153 = vxpose.xlu0.b32.cont [2/16] %v4893, 128
        %5154 = vxpose.xlu0.b32.cont [3/16] %v4894, 128
        %5155 = vxpose.xlu0.b32.cont [4/16] %v4895, 128
        %5156 = vxpose.xlu0.b32.cont [5/16] 0.0, 128
        %5157 = vxpose.xlu0.b32.cont [6/16] 0.0, 128
        %5158 = vxpose.xlu0.b32.cont [7/16] 0.0, 128
        %5159 = vxpose.xlu0.b32.cont [8/16] 0.0, 128
        %5160 = vxpose.xlu0.b32.cont [9/16] 0.0, 128
        %5161 = vxpose.xlu0.b32.cont [10/16] 0.0, 128
        %5162 = vxpose.xlu0.b32.cont [11/16] 0.0, 128
        %5163 = vxpose.xlu0.b32.cont [12/16] 0.0, 128
        %5164 = vxpose.xlu0.b32.cont [13/16] 0.0, 128
        %5165 = vxpose.xlu0.b32.cont [14/16] 0.0, 128
        %5166 = vxpose.xlu0.b32.cont [15/16] 0.0, 128
        %5167 = vxpose.xlu0.b32.end [16/16] 0.0, 128
        %v5168 = vpop.trf.xlu0
        %v5169 = vpop.trf.xlu0
        %v5170 = vpop.trf.xlu0
        %v5171 = vpop.trf.xlu0
        %v5172 = vpop.trf.xlu0
        %v5173 = vpop.trf.xlu0
        %v5174 = vpop.trf.xlu0
        %v5175 = vpop.trf.xlu0
        %v5176 = vpop.trf.xlu0
        %v5177 = vpop.trf.xlu0
        %v5178 = vpop.trf.xlu0
        %v5179 = vpop.trf.xlu0
        %v5180 = vpop.trf.xlu0
        %v5181 = vpop.trf.xlu0
        %v5182 = vpop.trf.xlu0
        %v5183 = vpop.trf.xlu0
        %5184 = vxpose.xlu0.b32.start [1/16] %v4896, 128
        %5185 = vxpose.xlu0.b32.cont [2/16] %v4897, 128
        %5186 = vxpose.xlu0.b32.cont [3/16] %v4898, 128
        %5187 = vxpose.xlu0.b32.cont [4/16] %v4899, 128
        %5188 = vxpose.xlu0.b32.cont [5/16] 0.0, 128
        %5189 = vxpose.xlu0.b32.cont [6/16] 0.0, 128
        %5190 = vxpose.xlu0.b32.cont [7/16] 0.0, 128
        %5191 = vxpose.xlu0.b32.cont [8/16] 0.0, 128
        %5192 = vxpose.xlu0.b32.cont [9/16] 0.0, 128
        %5193 = vxpose.xlu0.b32.cont [10/16] 0.0, 128
        %5194 = vxpose.xlu0.b32.cont [11/16] 0.0, 128
        %5195 = vxpose.xlu0.b32.cont [12/16] 0.0, 128
        %5196 = vxpose.xlu0.b32.cont [13/16] 0.0, 128
        %5197 = vxpose.xlu0.b32.cont [14/16] 0.0, 128
        %5198 = vxpose.xlu0.b32.cont [15/16] 0.0, 128
        %5199 = vxpose.xlu0.b32.end [16/16] 0.0, 128
        %v5200 = vpop.trf.xlu0
        %v5201 = vpop.trf.xlu0
        %v5202 = vpop.trf.xlu0
        %v5203 = vpop.trf.xlu0
        %v5204 = vpop.trf.xlu0
        %v5205 = vpop.trf.xlu0
        %v5206 = vpop.trf.xlu0
        %v5207 = vpop.trf.xlu0
        %v5208 = vpop.trf.xlu0
        %v5209 = vpop.trf.xlu0
        %v5210 = vpop.trf.xlu0
        %v5211 = vpop.trf.xlu0
        %v5212 = vpop.trf.xlu0
        %v5213 = vpop.trf.xlu0
        %v5214 = vpop.trf.xlu0
        %v5215 = vpop.trf.xlu0
        %5216 = vxpose.xlu0.b32.start [1/16] %v4900, 128
        %5217 = vxpose.xlu0.b32.cont [2/16] %v4901, 128
        %5218 = vxpose.xlu0.b32.cont [3/16] %v4902, 128
        %5219 = vxpose.xlu0.b32.cont [4/16] %v4903, 128
        %5220 = vxpose.xlu0.b32.cont [5/16] 0.0, 128
        %5221 = vxpose.xlu0.b32.cont [6/16] 0.0, 128
        %5222 = vxpose.xlu0.b32.cont [7/16] 0.0, 128
        %5223 = vxpose.xlu0.b32.cont [8/16] 0.0, 128
        %5224 = vxpose.xlu0.b32.cont [9/16] 0.0, 128
        %5225 = vxpose.xlu0.b32.cont [10/16] 0.0, 128
        %5226 = vxpose.xlu0.b32.cont [11/16] 0.0, 128
        %5227 = vxpose.xlu0.b32.cont [12/16] 0.0, 128
        %5228 = vxpose.xlu0.b32.cont [13/16] 0.0, 128
        %5229 = vxpose.xlu0.b32.cont [14/16] 0.0, 128
        %5230 = vxpose.xlu0.b32.cont [15/16] 0.0, 128
        %5231 = vxpose.xlu0.b32.end [16/16] 0.0, 128
        %v5232 = vpop.trf.xlu0
        %v5233 = vpop.trf.xlu0
        %v5234 = vpop.trf.xlu0
        %v5235 = vpop.trf.xlu0
        %v5236 = vpop.trf.xlu0
        %v5237 = vpop.trf.xlu0
        %v5238 = vpop.trf.xlu0
        %v5239 = vpop.trf.xlu0
        %v5240 = vpop.trf.xlu0
        %v5241 = vpop.trf.xlu0
        %v5242 = vpop.trf.xlu0
        %v5243 = vpop.trf.xlu0
        %v5244 = vpop.trf.xlu0
        %v5245 = vpop.trf.xlu0
        %v5246 = vpop.trf.xlu0
        %v5247 = vpop.trf.xlu0
        %5248 = vxpose.xlu0.b32.start [1/16] %v4904, 128
        %5249 = vxpose.xlu0.b32.cont [2/16] %v4905, 128
        %5250 = vxpose.xlu0.b32.cont [3/16] %v4906, 128
        %5251 = vxpose.xlu0.b32.cont [4/16] %v4907, 128
        %5252 = vxpose.xlu0.b32.cont [5/16] 0.0, 128
        %5253 = vxpose.xlu0.b32.cont [6/16] 0.0, 128
        %5254 = vxpose.xlu0.b32.cont [7/16] 0.0, 128
        %5255 = vxpose.xlu0.b32.cont [8/16] 0.0, 128
        %5256 = vxpose.xlu0.b32.cont [9/16] 0.0, 128
        %5257 = vxpose.xlu0.b32.cont [10/16] 0.0, 128
        %5258 = vxpose.xlu0.b32.cont [11/16] 0.0, 128
        %5259 = vxpose.xlu0.b32.cont [12/16] 0.0, 128
        %5260 = vxpose.xlu0.b32.cont [13/16] 0.0, 128
        %5261 = vxpose.xlu0.b32.cont [14/16] 0.0, 128
        %5262 = vxpose.xlu0.b32.cont [15/16] 0.0, 128
        %5263 = vxpose.xlu0.b32.end [16/16] 0.0, 128
        %v5264 = vpop.trf.xlu0
        %v5265 = vpop.trf.xlu0
        %v5266 = vpop.trf.xlu0
        %v5267 = vpop.trf.xlu0
        %v5268 = vpop.trf.xlu0
        %v5269 = vpop.trf.xlu0
        %v5270 = vpop.trf.xlu0
        %v5271 = vpop.trf.xlu0
        %v5272 = vpop.trf.xlu0
        %v5273 = vpop.trf.xlu0
        %v5274 = vpop.trf.xlu0
        %v5275 = vpop.trf.xlu0
        %v5276 = vpop.trf.xlu0
        %v5277 = vpop.trf.xlu0
        %v5278 = vpop.trf.xlu0
        %v5279 = vpop.trf.xlu0
        %5280 = vxpose.xlu0.b32.start [1/16] %v4908, 128
        %5281 = vxpose.xlu0.b32.cont [2/16] %v4909, 128
        %5282 = vxpose.xlu0.b32.cont [3/16] %v4910, 128
        %5283 = vxpose.xlu0.b32.cont [4/16] %v4911, 128
        %5284 = vxpose.xlu0.b32.cont [5/16] 0.0, 128
        %5285 = vxpose.xlu0.b32.cont [6/16] 0.0, 128
        %5286 = vxpose.xlu0.b32.cont [7/16] 0.0, 128
        %5287 = vxpose.xlu0.b32.cont [8/16] 0.0, 128
        %5288 = vxpose.xlu0.b32.cont [9/16] 0.0, 128
        %5289 = vxpose.xlu0.b32.cont [10/16] 0.0, 128
        %5290 = vxpose.xlu0.b32.cont [11/16] 0.0, 128
        %5291 = vxpose.xlu0.b32.cont [12/16] 0.0, 128
        %5292 = vxpose.xlu0.b32.cont [13/16] 0.0, 128
        %5293 = vxpose.xlu0.b32.cont [14/16] 0.0, 128
        %5294 = vxpose.xlu0.b32.cont [15/16] 0.0, 128
        %5295 = vxpose.xlu0.b32.end [16/16] 0.0, 128
        %v5296 = vpop.trf.xlu0
        %v5297 = vpop.trf.xlu0
        %v5298 = vpop.trf.xlu0
        %v5299 = vpop.trf.xlu0
        %v5300 = vpop.trf.xlu0
        %v5301 = vpop.trf.xlu0
        %v5302 = vpop.trf.xlu0
        %v5303 = vpop.trf.xlu0
        %v5304 = vpop.trf.xlu0
        %v5305 = vpop.trf.xlu0
        %v5306 = vpop.trf.xlu0
        %v5307 = vpop.trf.xlu0
        %v5308 = vpop.trf.xlu0
        %v5309 = vpop.trf.xlu0
        %v5310 = vpop.trf.xlu0
        %v5311 = vpop.trf.xlu0
        %5312 = vxpose.xlu0.b32.start [1/16] %v4912, 128
        %5313 = vxpose.xlu0.b32.cont [2/16] %v4913, 128
        %5314 = vxpose.xlu0.b32.cont [3/16] %v4914, 128
        %5315 = vxpose.xlu0.b32.cont [4/16] %v4915, 128
        %5316 = vxpose.xlu0.b32.cont [5/16] 0.0, 128
        %5317 = vxpose.xlu0.b32.cont [6/16] 0.0, 128
        %5318 = vxpose.xlu0.b32.cont [7/16] 0.0, 128
        %5319 = vxpose.xlu0.b32.cont [8/16] 0.0, 128
        %5320 = vxpose.xlu0.b32.cont [9/16] 0.0, 128
        %5321 = vxpose.xlu0.b32.cont [10/16] 0.0, 128
        %5322 = vxpose.xlu0.b32.cont [11/16] 0.0, 128
        %5323 = vxpose.xlu0.b32.cont [12/16] 0.0, 128
        %5324 = vxpose.xlu0.b32.cont [13/16] 0.0, 128
        %5325 = vxpose.xlu0.b32.cont [14/16] 0.0, 128
        %5326 = vxpose.xlu0.b32.cont [15/16] 0.0, 128
        %5327 = vxpose.xlu0.b32.end [16/16] 0.0, 128
        %v5328 = vpop.trf.xlu0
        %v5329 = vpop.trf.xlu0
        %v5330 = vpop.trf.xlu0
        %v5331 = vpop.trf.xlu0
        %v5332 = vpop.trf.xlu0
        %v5333 = vpop.trf.xlu0
        %v5334 = vpop.trf.xlu0
        %v5335 = vpop.trf.xlu0
        %v5336 = vpop.trf.xlu0
        %v5337 = vpop.trf.xlu0
        %v5338 = vpop.trf.xlu0
        %v5339 = vpop.trf.xlu0
        %v5340 = vpop.trf.xlu0
        %v5341 = vpop.trf.xlu0
        %v5342 = vpop.trf.xlu0
        %v5343 = vpop.trf.xlu0
        %5344 = vxpose.xlu0.b32.start [1/16] %v4916, 128
        %5345 = vxpose.xlu0.b32.cont [2/16] %v4917, 128
        %5346 = vxpose.xlu0.b32.cont [3/16] %v4918, 128
        %5347 = vxpose.xlu0.b32.cont [4/16] %v4919, 128
        %5348 = vxpose.xlu0.b32.cont [5/16] 0.0, 128
        %5349 = vxpose.xlu0.b32.cont [6/16] 0.0, 128
        %5350 = vxpose.xlu0.b32.cont [7/16] 0.0, 128
        %5351 = vxpose.xlu0.b32.cont [8/16] 0.0, 128
        %5352 = vxpose.xlu0.b32.cont [9/16] 0.0, 128
        %5353 = vxpose.xlu0.b32.cont [10/16] 0.0, 128
        %5354 = vxpose.xlu0.b32.cont [11/16] 0.0, 128
        %5355 = vxpose.xlu0.b32.cont [12/16] 0.0, 128
        %5356 = vxpose.xlu0.b32.cont [13/16] 0.0, 128
        %5357 = vxpose.xlu0.b32.cont [14/16] 0.0, 128
        %5358 = vxpose.xlu0.b32.cont [15/16] 0.0, 128
        %5359 = vxpose.xlu0.b32.end [16/16] 0.0, 128
        %v5360 = vpop.trf.xlu0
        %v5361 = vpop.trf.xlu0
        %v5362 = vpop.trf.xlu0
        %v5363 = vpop.trf.xlu0
        %v5364 = vpop.trf.xlu0
        %v5365 = vpop.trf.xlu0
        %v5366 = vpop.trf.xlu0
        %v5367 = vpop.trf.xlu0
        %v5368 = vpop.trf.xlu0
        %v5369 = vpop.trf.xlu0
        %v5370 = vpop.trf.xlu0
        %v5371 = vpop.trf.xlu0
        %v5372 = vpop.trf.xlu0
        %v5373 = vpop.trf.xlu0
        %v5374 = vpop.trf.xlu0
        %v5375 = vpop.trf.xlu0
        %5376 = vxpose.xlu0.b32.start [1/16] %v4920, 128
        %5377 = vxpose.xlu0.b32.cont [2/16] %v4921, 128
        %5378 = vxpose.xlu0.b32.cont [3/16] %v4922, 128
        %5379 = vxpose.xlu0.b32.cont [4/16] %v4923, 128
        %5380 = vxpose.xlu0.b32.cont [5/16] 0.0, 128
        %5381 = vxpose.xlu0.b32.cont [6/16] 0.0, 128
        %5382 = vxpose.xlu0.b32.cont [7/16] 0.0, 128
        %5383 = vxpose.xlu0.b32.cont [8/16] 0.0, 128
        %5384 = vxpose.xlu0.b32.cont [9/16] 0.0, 128
        %5385 = vxpose.xlu0.b32.cont [10/16] 0.0, 128
        %5386 = vxpose.xlu0.b32.cont [11/16] 0.0, 128
        %5387 = vxpose.xlu0.b32.cont [12/16] 0.0, 128
        %5388 = vxpose.xlu0.b32.cont [13/16] 0.0, 128
        %5389 = vxpose.xlu0.b32.cont [14/16] 0.0, 128
        %5390 = vxpose.xlu0.b32.cont [15/16] 0.0, 128
        %5391 = vxpose.xlu0.b32.end [16/16] 0.0, 128
        %v5392 = vpop.trf.xlu0
        %v5393 = vpop.trf.xlu0
        %v5394 = vpop.trf.xlu0
        %v5395 = vpop.trf.xlu0
        %v5396 = vpop.trf.xlu0
        %v5397 = vpop.trf.xlu0
        %v5398 = vpop.trf.xlu0
        %v5399 = vpop.trf.xlu0
        %v5400 = vpop.trf.xlu0
        %v5401 = vpop.trf.xlu0
        %v5402 = vpop.trf.xlu0
        %v5403 = vpop.trf.xlu0
        %v5404 = vpop.trf.xlu0
        %v5405 = vpop.trf.xlu0
        %v5406 = vpop.trf.xlu0
        %v5407 = vpop.trf.xlu0
        %5408 = vxpose.xlu0.b32.start [1/16] %v4924, 128
        %5409 = vxpose.xlu0.b32.cont [2/16] %v4925, 128
        %5410 = vxpose.xlu0.b32.cont [3/16] %v4926, 128
        %5411 = vxpose.xlu0.b32.cont [4/16] %v4927, 128
        %5412 = vxpose.xlu0.b32.cont [5/16] 0.0, 128
        %5413 = vxpose.xlu0.b32.cont [6/16] 0.0, 128
        %5414 = vxpose.xlu0.b32.cont [7/16] 0.0, 128
        %5415 = vxpose.xlu0.b32.cont [8/16] 0.0, 128
        %5416 = vxpose.xlu0.b32.cont [9/16] 0.0, 128
        %5417 = vxpose.xlu0.b32.cont [10/16] 0.0, 128
        %5418 = vxpose.xlu0.b32.cont [11/16] 0.0, 128
        %5419 = vxpose.xlu0.b32.cont [12/16] 0.0, 128
        %5420 = vxpose.xlu0.b32.cont [13/16] 0.0, 128
        %5421 = vxpose.xlu0.b32.cont [14/16] 0.0, 128
        %5422 = vxpose.xlu0.b32.cont [15/16] 0.0, 128
        %5423 = vxpose.xlu0.b32.end [16/16] 0.0, 128
        %v5424 = vpop.trf.xlu0
        %v5425 = vpop.trf.xlu0
        %v5426 = vpop.trf.xlu0
        %v5427 = vpop.trf.xlu0
        %v5428 = vpop.trf.xlu0
        %v5429 = vpop.trf.xlu0
        %v5430 = vpop.trf.xlu0
        %v5431 = vpop.trf.xlu0
        %v5432 = vpop.trf.xlu0
        %v5433 = vpop.trf.xlu0
        %v5434 = vpop.trf.xlu0
        %v5435 = vpop.trf.xlu0
        %v5436 = vpop.trf.xlu0
        %v5437 = vpop.trf.xlu0
        %v5438 = vpop.trf.xlu0
        %v5439 = vpop.trf.xlu0
        %vm5440 = vcmask 261120
        %v5441 = vsel %vm5440, %v4944, 0.0
        %v5442 = vsel %vm5440, %v4945, 0.0
        %v5443 = vadd.f32 %v5441, %v5442
        %v5444 = vrot.slane %v5443, 4
        %v5445 = vadd.f32 %v5443, %v5444
        %v5446 = vrot.slane %v5445, 2
        %v5447 = vadd.f32 %v5445, %v5446
        %v5448 = vrot.slane %v5447, 1
        %v5449 = vadd.f32 %v5447, %v5448
        %v5450 = vsel %vm5440, %v4976, 0.0
        %v5451 = vsel %vm5440, %v4977, 0.0
        %v5452 = vadd.f32 %v5450, %v5451
        %v5453 = vrot.slane %v5452, 4
        %v5454 = vadd.f32 %v5452, %v5453
        %v5455 = vrot.slane %v5454, 2
        %v5456 = vadd.f32 %v5454, %v5455
        %v5457 = vrot.slane %v5456, 1
        %v5458 = vadd.f32 %v5456, %v5457
        %v5459 = vsel %vm5440, %v5008, 0.0
        %v5460 = vsel %vm5440, %v5009, 0.0
        %v5461 = vadd.f32 %v5459, %v5460
        %v5462 = vrot.slane %v5461, 4
        %v5463 = vadd.f32 %v5461, %v5462
        %v5464 = vrot.slane %v5463, 2
        %v5465 = vadd.f32 %v5463, %v5464
        %v5466 = vrot.slane %v5465, 1
        %v5467 = vadd.f32 %v5465, %v5466
        %v5468 = vsel %vm5440, %v5040, 0.0
        %v5469 = vsel %vm5440, %v5041, 0.0
        %v5470 = vadd.f32 %v5468, %v5469
        %v5471 = vrot.slane %v5470, 4
        %v5472 = vadd.f32 %v5470, %v5471
        %v5473 = vrot.slane %v5472, 2
        %v5474 = vadd.f32 %v5472, %v5473
        %v5475 = vrot.slane %v5474, 1
        %v5476 = vadd.f32 %v5474, %v5475
        %v5477 = vsel %vm5440, %v5072, 0.0
        %v5478 = vsel %vm5440, %v5073, 0.0
        %v5479 = vadd.f32 %v5477, %v5478
        %v5480 = vrot.slane %v5479, 4
        %v5481 = vadd.f32 %v5479, %v5480
        %v5482 = vrot.slane %v5481, 2
        %v5483 = vadd.f32 %v5481, %v5482
        %v5484 = vrot.slane %v5483, 1
        %v5485 = vadd.f32 %v5483, %v5484
        %v5486 = vsel %vm5440, %v5104, 0.0
        %v5487 = vsel %vm5440, %v5105, 0.0
        %v5488 = vadd.f32 %v5486, %v5487
        %v5489 = vrot.slane %v5488, 4
        %v5490 = vadd.f32 %v5488, %v5489
        %v5491 = vrot.slane %v5490, 2
        %v5492 = vadd.f32 %v5490, %v5491
        %v5493 = vrot.slane %v5492, 1
        %v5494 = vadd.f32 %v5492, %v5493
        %v5495 = vsel %vm5440, %v5136, 0.0
        %v5496 = vsel %vm5440, %v5137, 0.0
        %v5497 = vadd.f32 %v5495, %v5496
        %v5498 = vrot.slane %v5497, 4
        %v5499 = vadd.f32 %v5497, %v5498
        %v5500 = vrot.slane %v5499, 2
        %v5501 = vadd.f32 %v5499, %v5500
        %v5502 = vrot.slane %v5501, 1
        %v5503 = vadd.f32 %v5501, %v5502
        %v5504 = vsel %vm5440, %v5168, 0.0
        %v5505 = vsel %vm5440, %v5169, 0.0
        %v5506 = vadd.f32 %v5504, %v5505
        %v5507 = vrot.slane %v5506, 4
        %v5508 = vadd.f32 %v5506, %v5507
        %v5509 = vrot.slane %v5508, 2
        %v5510 = vadd.f32 %v5508, %v5509
        %v5511 = vrot.slane %v5510, 1
        %v5512 = vadd.f32 %v5510, %v5511
        %v5513 = vsel %vm5440, %v5200, 0.0
        %v5514 = vsel %vm5440, %v5201, 0.0
        %v5515 = vadd.f32 %v5513, %v5514
        %v5516 = vrot.slane %v5515, 4
        %v5517 = vadd.f32 %v5515, %v5516
        %v5518 = vrot.slane %v5517, 2
        %v5519 = vadd.f32 %v5517, %v5518
        %v5520 = vrot.slane %v5519, 1
        %v5521 = vadd.f32 %v5519, %v5520
        %v5522 = vsel %vm5440, %v5232, 0.0
        %v5523 = vsel %vm5440, %v5233, 0.0
        %v5524 = vadd.f32 %v5522, %v5523
        %v5525 = vrot.slane %v5524, 4
        %v5526 = vadd.f32 %v5524, %v5525
        %v5527 = vrot.slane %v5526, 2
        %v5528 = vadd.f32 %v5526, %v5527
        %v5529 = vrot.slane %v5528, 1
        %v5530 = vadd.f32 %v5528, %v5529
        %v5531 = vsel %vm5440, %v5264, 0.0
        %v5532 = vsel %vm5440, %v5265, 0.0
        %v5533 = vadd.f32 %v5531, %v5532
        %v5534 = vrot.slane %v5533, 4
        %v5535 = vadd.f32 %v5533, %v5534
        %v5536 = vrot.slane %v5535, 2
        %v5537 = vadd.f32 %v5535, %v5536
        %v5538 = vrot.slane %v5537, 1
        %v5539 = vadd.f32 %v5537, %v5538
        %v5540 = vsel %vm5440, %v5296, 0.0
        %v5541 = vsel %vm5440, %v5297, 0.0
        %v5542 = vadd.f32 %v5540, %v5541
        %v5543 = vrot.slane %v5542, 4
        %v5544 = vadd.f32 %v5542, %v5543
        %v5545 = vrot.slane %v5544, 2
        %v5546 = vadd.f32 %v5544, %v5545
        %v5547 = vrot.slane %v5546, 1
        %v5548 = vadd.f32 %v5546, %v5547
        %v5549 = vsel %vm5440, %v5328, 0.0
        %v5550 = vsel %vm5440, %v5329, 0.0
        %v5551 = vadd.f32 %v5549, %v5550
        %v5552 = vrot.slane %v5551, 4
        %v5553 = vadd.f32 %v5551, %v5552
        %v5554 = vrot.slane %v5553, 2
        %v5555 = vadd.f32 %v5553, %v5554
        %v5556 = vrot.slane %v5555, 1
        %v5557 = vadd.f32 %v5555, %v5556
        %v5558 = vsel %vm5440, %v5360, 0.0
        %v5559 = vsel %vm5440, %v5361, 0.0
        %v5560 = vadd.f32 %v5558, %v5559
        %v5561 = vrot.slane %v5560, 4
        %v5562 = vadd.f32 %v5560, %v5561
        %v5563 = vrot.slane %v5562, 2
        %v5564 = vadd.f32 %v5562, %v5563
        %v5565 = vrot.slane %v5564, 1
        %v5566 = vadd.f32 %v5564, %v5565
        %v5567 = vsel %vm5440, %v5392, 0.0
        %v5568 = vsel %vm5440, %v5393, 0.0
        %v5569 = vadd.f32 %v5567, %v5568
        %v5570 = vrot.slane %v5569, 4
        %v5571 = vadd.f32 %v5569, %v5570
        %v5572 = vrot.slane %v5571, 2
        %v5573 = vadd.f32 %v5571, %v5572
        %v5574 = vrot.slane %v5573, 1
        %v5575 = vadd.f32 %v5573, %v5574
        %v5576 = vsel %vm5440, %v5424, 0.0
        %v5577 = vsel %vm5440, %v5425, 0.0
        %v5578 = vadd.f32 %v5576, %v5577
        %v5579 = vrot.slane %v5578, 4
        %v5580 = vadd.f32 %v5578, %v5579
        %v5581 = vrot.slane %v5580, 2
        %v5582 = vadd.f32 %v5580, %v5581
        %v5583 = vrot.slane %v5582, 1
        %v5584 = vadd.f32 %v5582, %v5583
        %v5585 = vrcp.pop 16.0
        %v5586 = vmul.f32 %v5449, %v5585
        %v5587 = vmul.f32 %v5458, %v5585
        %v5588 = vmul.f32 %v5467, %v5585
        %v5589 = vmul.f32 %v5476, %v5585
        %v5590 = vmul.f32 %v5485, %v5585
        %v5591 = vmul.f32 %v5494, %v5585
        %v5592 = vmul.f32 %v5503, %v5585
        %v5593 = vmul.f32 %v5512, %v5585
        %v5594 = vmul.f32 %v5521, %v5585
        %v5595 = vmul.f32 %v5530, %v5585
        %v5596 = vmul.f32 %v5539, %v5585
        %v5597 = vmul.f32 %v5548, %v5585
        %v5598 = vmul.f32 %v5557, %v5585
        %v5599 = vmul.f32 %v5566, %v5585
        %v5600 = vmul.f32 %v5575, %v5585
        %v5601 = vmul.f32 %v5584, %v5585
        %v5602 = vsub.f32 %v4944, %v5586
        %v5603 = vsub.f32 %v4945, %v5586
        %v5604 = vsub.f32 %v4976, %v5587
        %v5605 = vsub.f32 %v4977, %v5587
        %v5606 = vsub.f32 %v5008, %v5588
        %v5607 = vsub.f32 %v5009, %v5588
        %v5608 = vsub.f32 %v5040, %v5589
        %v5609 = vsub.f32 %v5041, %v5589
        %v5610 = vsub.f32 %v5072, %v5590
        %v5611 = vsub.f32 %v5073, %v5590
        %v5612 = vsub.f32 %v5104, %v5591
        %v5613 = vsub.f32 %v5105, %v5591
        %v5614 = vsub.f32 %v5136, %v5592
        %v5615 = vsub.f32 %v5137, %v5592
        %v5616 = vsub.f32 %v5168, %v5593
        %v5617 = vsub.f32 %v5169, %v5593
        %v5618 = vsub.f32 %v5200, %v5594
        %v5619 = vsub.f32 %v5201, %v5594
        %v5620 = vsub.f32 %v5232, %v5595
        %v5621 = vsub.f32 %v5233, %v5595
        %v5622 = vsub.f32 %v5264, %v5596
        %v5623 = vsub.f32 %v5265, %v5596
        %v5624 = vsub.f32 %v5296, %v5597
        %v5625 = vsub.f32 %v5297, %v5597
        %v5626 = vsub.f32 %v5328, %v5598
        %v5627 = vsub.f32 %v5329, %v5598
        %v5628 = vsub.f32 %v5360, %v5599
        %v5629 = vsub.f32 %v5361, %v5599
        %v5630 = vsub.f32 %v5392, %v5600
        %v5631 = vsub.f32 %v5393, %v5600
        %v5632 = vsub.f32 %v5424, %v5601
        %v5633 = vsub.f32 %v5425, %v5601
        %v5634 = vmul.f32 %v5602, %v5602
        %v5635 = vmul.f32 %v5603, %v5603
        %v5636 = vmul.f32 %v5604, %v5604
        %v5637 = vmul.f32 %v5605, %v5605
        %v5638 = vmul.f32 %v5606, %v5606
        %v5639 = vmul.f32 %v5607, %v5607
        %v5640 = vmul.f32 %v5608, %v5608
        %v5641 = vmul.f32 %v5609, %v5609
        %v5642 = vmul.f32 %v5610, %v5610
        %v5643 = vmul.f32 %v5611, %v5611
        %v5644 = vmul.f32 %v5612, %v5612
        %v5645 = vmul.f32 %v5613, %v5613
        %v5646 = vmul.f32 %v5614, %v5614
        %v5647 = vmul.f32 %v5615, %v5615
        %v5648 = vmul.f32 %v5616, %v5616
        %v5649 = vmul.f32 %v5617, %v5617
        %v5650 = vmul.f32 %v5618, %v5618
        %v5651 = vmul.f32 %v5619, %v5619
        %v5652 = vmul.f32 %v5620, %v5620
        %v5653 = vmul.f32 %v5621, %v5621
        %v5654 = vmul.f32 %v5622, %v5622
        %v5655 = vmul.f32 %v5623, %v5623
        %v5656 = vmul.f32 %v5624, %v5624
        %v5657 = vmul.f32 %v5625, %v5625
        %v5658 = vmul.f32 %v5626, %v5626
        %v5659 = vmul.f32 %v5627, %v5627
        %v5660 = vmul.f32 %v5628, %v5628
        %v5661 = vmul.f32 %v5629, %v5629
        %v5662 = vmul.f32 %v5630, %v5630
        %v5663 = vmul.f32 %v5631, %v5631
        %v5664 = vmul.f32 %v5632, %v5632
        %v5665 = vmul.f32 %v5633, %v5633
        %v5666 = vsel %vm5440, %v5634, 0.0
        %v5667 = vsel %vm5440, %v5635, 0.0
        %v5668 = vadd.f32 %v5666, %v5667
        %v5669 = vrot.slane %v5668, 4
        %v5670 = vadd.f32 %v5668, %v5669
        %v5671 = vrot.slane %v5670, 2
        %v5672 = vadd.f32 %v5670, %v5671
        %v5673 = vrot.slane %v5672, 1
        %v5674 = vadd.f32 %v5672, %v5673
        %v5675 = vsel %vm5440, %v5636, 0.0
        %v5676 = vsel %vm5440, %v5637, 0.0
        %v5677 = vadd.f32 %v5675, %v5676
        %v5678 = vrot.slane %v5677, 4
        %v5679 = vadd.f32 %v5677, %v5678
        %v5680 = vrot.slane %v5679, 2
        %v5681 = vadd.f32 %v5679, %v5680
        %v5682 = vrot.slane %v5681, 1
        %v5683 = vadd.f32 %v5681, %v5682
        %v5684 = vsel %vm5440, %v5638, 0.0
        %v5685 = vsel %vm5440, %v5639, 0.0
        %v5686 = vadd.f32 %v5684, %v5685
        %v5687 = vrot.slane %v5686, 4
        %v5688 = vadd.f32 %v5686, %v5687
        %v5689 = vrot.slane %v5688, 2
        %v5690 = vadd.f32 %v5688, %v5689
        %v5691 = vrot.slane %v5690, 1
        %v5692 = vadd.f32 %v5690, %v5691
        %v5693 = vsel %vm5440, %v5640, 0.0
        %v5694 = vsel %vm5440, %v5641, 0.0
        %v5695 = vadd.f32 %v5693, %v5694
        %v5696 = vrot.slane %v5695, 4
        %v5697 = vadd.f32 %v5695, %v5696
        %v5698 = vrot.slane %v5697, 2
        %v5699 = vadd.f32 %v5697, %v5698
        %v5700 = vrot.slane %v5699, 1
        %v5701 = vadd.f32 %v5699, %v5700
        %v5702 = vsel %vm5440, %v5642, 0.0
        %v5703 = vsel %vm5440, %v5643, 0.0
        %v5704 = vadd.f32 %v5702, %v5703
        %v5705 = vrot.slane %v5704, 4
        %v5706 = vadd.f32 %v5704, %v5705
        %v5707 = vrot.slane %v5706, 2
        %v5708 = vadd.f32 %v5706, %v5707
        %v5709 = vrot.slane %v5708, 1
        %v5710 = vadd.f32 %v5708, %v5709
        %v5711 = vsel %vm5440, %v5644, 0.0
        %v5712 = vsel %vm5440, %v5645, 0.0
        %v5713 = vadd.f32 %v5711, %v5712
        %v5714 = vrot.slane %v5713, 4
        %v5715 = vadd.f32 %v5713, %v5714
        %v5716 = vrot.slane %v5715, 2
        %v5717 = vadd.f32 %v5715, %v5716
        %v5718 = vrot.slane %v5717, 1
        %v5719 = vadd.f32 %v5717, %v5718
        %v5720 = vsel %vm5440, %v5646, 0.0
        %v5721 = vsel %vm5440, %v5647, 0.0
        %v5722 = vadd.f32 %v5720, %v5721
        %v5723 = vrot.slane %v5722, 4
        %v5724 = vadd.f32 %v5722, %v5723
        %v5725 = vrot.slane %v5724, 2
        %v5726 = vadd.f32 %v5724, %v5725
        %v5727 = vrot.slane %v5726, 1
        %v5728 = vadd.f32 %v5726, %v5727
        %v5729 = vsel %vm5440, %v5648, 0.0
        %v5730 = vsel %vm5440, %v5649, 0.0
        %v5731 = vadd.f32 %v5729, %v5730
        %v5732 = vrot.slane %v5731, 4
        %v5733 = vadd.f32 %v5731, %v5732
        %v5734 = vrot.slane %v5733, 2
        %v5735 = vadd.f32 %v5733, %v5734
        %v5736 = vrot.slane %v5735, 1
        %v5737 = vadd.f32 %v5735, %v5736
        %v5738 = vsel %vm5440, %v5650, 0.0
        %v5739 = vsel %vm5440, %v5651, 0.0
        %v5740 = vadd.f32 %v5738, %v5739
        %v5741 = vrot.slane %v5740, 4
        %v5742 = vadd.f32 %v5740, %v5741
        %v5743 = vrot.slane %v5742, 2
        %v5744 = vadd.f32 %v5742, %v5743
        %v5745 = vrot.slane %v5744, 1
        %v5746 = vadd.f32 %v5744, %v5745
        %v5747 = vsel %vm5440, %v5652, 0.0
        %v5748 = vsel %vm5440, %v5653, 0.0
        %v5749 = vadd.f32 %v5747, %v5748
        %v5750 = vrot.slane %v5749, 4
        %v5751 = vadd.f32 %v5749, %v5750
        %v5752 = vrot.slane %v5751, 2
        %v5753 = vadd.f32 %v5751, %v5752
        %v5754 = vrot.slane %v5753, 1
        %v5755 = vadd.f32 %v5753, %v5754
        %v5756 = vsel %vm5440, %v5654, 0.0
        %v5757 = vsel %vm5440, %v5655, 0.0
        %v5758 = vadd.f32 %v5756, %v5757
        %v5759 = vrot.slane %v5758, 4
        %v5760 = vadd.f32 %v5758, %v5759
        %v5761 = vrot.slane %v5760, 2
        %v5762 = vadd.f32 %v5760, %v5761
        %v5763 = vrot.slane %v5762, 1
        %v5764 = vadd.f32 %v5762, %v5763
        %v5765 = vsel %vm5440, %v5656, 0.0
        %v5766 = vsel %vm5440, %v5657, 0.0
        %v5767 = vadd.f32 %v5765, %v5766
        %v5768 = vrot.slane %v5767, 4
        %v5769 = vadd.f32 %v5767, %v5768
        %v5770 = vrot.slane %v5769, 2
        %v5771 = vadd.f32 %v5769, %v5770
        %v5772 = vrot.slane %v5771, 1
        %v5773 = vadd.f32 %v5771, %v5772
        %v5774 = vsel %vm5440, %v5658, 0.0
        %v5775 = vsel %vm5440, %v5659, 0.0
        %v5776 = vadd.f32 %v5774, %v5775
        %v5777 = vrot.slane %v5776, 4
        %v5778 = vadd.f32 %v5776, %v5777
        %v5779 = vrot.slane %v5778, 2
        %v5780 = vadd.f32 %v5778, %v5779
        %v5781 = vrot.slane %v5780, 1
        %v5782 = vadd.f32 %v5780, %v5781
        %v5783 = vsel %vm5440, %v5660, 0.0
        %v5784 = vsel %vm5440, %v5661, 0.0
        %v5785 = vadd.f32 %v5783, %v5784
        %v5786 = vrot.slane %v5785, 4
        %v5787 = vadd.f32 %v5785, %v5786
        %v5788 = vrot.slane %v5787, 2
        %v5789 = vadd.f32 %v5787, %v5788
        %v5790 = vrot.slane %v5789, 1
        %v5791 = vadd.f32 %v5789, %v5790
        %v5792 = vsel %vm5440, %v5662, 0.0
        %v5793 = vsel %vm5440, %v5663, 0.0
        %v5794 = vadd.f32 %v5792, %v5793
        %v5795 = vrot.slane %v5794, 4
        %v5796 = vadd.f32 %v5794, %v5795
        %v5797 = vrot.slane %v5796, 2
        %v5798 = vadd.f32 %v5796, %v5797
        %v5799 = vrot.slane %v5798, 1
        %v5800 = vadd.f32 %v5798, %v5799
        %v5801 = vsel %vm5440, %v5664, 0.0
        %v5802 = vsel %vm5440, %v5665, 0.0
        %v5803 = vadd.f32 %v5801, %v5802
        %v5804 = vrot.slane %v5803, 4
        %v5805 = vadd.f32 %v5803, %v5804
        %v5806 = vrot.slane %v5805, 2
        %v5807 = vadd.f32 %v5805, %v5806
        %v5808 = vrot.slane %v5807, 1
        %v5809 = vadd.f32 %v5807, %v5808
        %v5810 = vmul.f32 %v5674, %v5585
        %v5811 = vmul.f32 %v5683, %v5585
        %v5812 = vmul.f32 %v5692, %v5585
        %v5813 = vmul.f32 %v5701, %v5585
        %v5814 = vmul.f32 %v5710, %v5585
        %v5815 = vmul.f32 %v5719, %v5585
        %v5816 = vmul.f32 %v5728, %v5585
        %v5817 = vmul.f32 %v5737, %v5585
        %v5818 = vmul.f32 %v5746, %v5585
        %v5819 = vmul.f32 %v5755, %v5585
        %v5820 = vmul.f32 %v5764, %v5585
        %v5821 = vmul.f32 %v5773, %v5585
        %v5822 = vmul.f32 %v5782, %v5585
        %v5823 = vmul.f32 %v5791, %v5585
        %v5824 = vmul.f32 %v5800, %v5585
        %v5825 = vmul.f32 %v5809, %v5585
        %v5826 = vadd.f32 %v5810, 1e-05
        %v5827 = vadd.f32 %v5811, 1e-05
        %v5828 = vadd.f32 %v5812, 1e-05
        %v5829 = vadd.f32 %v5813, 1e-05
        %v5830 = vadd.f32 %v5814, 1e-05
        %v5831 = vadd.f32 %v5815, 1e-05
        %v5832 = vadd.f32 %v5816, 1e-05
        %v5833 = vadd.f32 %v5817, 1e-05
        %v5834 = vadd.f32 %v5818, 1e-05
        %v5835 = vadd.f32 %v5819, 1e-05
        %v5836 = vadd.f32 %v5820, 1e-05
        %v5837 = vadd.f32 %v5821, 1e-05
        %v5838 = vadd.f32 %v5822, 1e-05
        %v5839 = vadd.f32 %v5823, 1e-05
        %v5840 = vadd.f32 %v5824, 1e-05
        %v5841 = vadd.f32 %v5825, 1e-05
        %v5842 = vrsqrt.pop %v5826
        %v5843 = vrsqrt.pop %v5827
        %v5844 = vrsqrt.pop %v5828
        %v5845 = vrsqrt.pop %v5829
        %v5846 = vrsqrt.pop %v5830
        %v5847 = vrsqrt.pop %v5831
        %v5848 = vrsqrt.pop %v5832
        %v5849 = vrsqrt.pop %v5833
        %v5850 = vrsqrt.pop %v5834
        %v5851 = vrsqrt.pop %v5835
        %v5852 = vrsqrt.pop %v5836
        %v5853 = vrsqrt.pop %v5837
        %v5854 = vrsqrt.pop %v5838
        %v5855 = vrsqrt.pop %v5839
        %v5856 = vrsqrt.pop %v5840
        %v5857 = vrsqrt.pop %v5841
        %v5858 = vmul.f32 %v5602, %v5842
        %v5859 = vmul.f32 %v5603, %v5842
        %v5860 = vmul.f32 %v5604, %v5843
        %v5861 = vmul.f32 %v5605, %v5843
        %v5862 = vmul.f32 %v5606, %v5844
        %v5863 = vmul.f32 %v5607, %v5844
        %v5864 = vmul.f32 %v5608, %v5845
        %v5865 = vmul.f32 %v5609, %v5845
        %v5866 = vmul.f32 %v5610, %v5846
        %v5867 = vmul.f32 %v5611, %v5846
        %v5868 = vmul.f32 %v5612, %v5847
        %v5869 = vmul.f32 %v5613, %v5847
        %v5870 = vmul.f32 %v5614, %v5848
        %v5871 = vmul.f32 %v5615, %v5848
        %v5872 = vmul.f32 %v5616, %v5849
        %v5873 = vmul.f32 %v5617, %v5849
        %v5874 = vmul.f32 %v5618, %v5850
        %v5875 = vmul.f32 %v5619, %v5850
        %v5876 = vmul.f32 %v5620, %v5851
        %v5877 = vmul.f32 %v5621, %v5851
        %v5878 = vmul.f32 %v5622, %v5852
        %v5879 = vmul.f32 %v5623, %v5852
        %v5880 = vmul.f32 %v5624, %v5853
        %v5881 = vmul.f32 %v5625, %v5853
        %v5882 = vmul.f32 %v5626, %v5854
        %v5883 = vmul.f32 %v5627, %v5854
        %v5884 = vmul.f32 %v5628, %v5855
        %v5885 = vmul.f32 %v5629, %v5855
        %v5886 = vmul.f32 %v5630, %v5856
        %v5887 = vmul.f32 %v5631, %v5856
        %v5888 = vmul.f32 %v5632, %v5857
        %v5889 = vmul.f32 %v5633, %v5857
        %v5890 = vpack.c.bf16 %v5859, %v5858
        %v5891 = vpack.c.bf16 %v5861, %v5860
        %v5892 = vpack.c.bf16 %v5863, %v5862
        %v5893 = vpack.c.bf16 %v5865, %v5864
        %v5894 = vpack.c.bf16 %v5867, %v5866
        %v5895 = vpack.c.bf16 %v5869, %v5868
        %v5896 = vpack.c.bf16 %v5871, %v5870
        %v5897 = vpack.c.bf16 %v5873, %v5872
        %v5898 = vpack.c.bf16 %v5875, %v5874
        %v5899 = vpack.c.bf16 %v5877, %v5876
        %v5900 = vpack.c.bf16 %v5879, %v5878
        %v5901 = vpack.c.bf16 %v5881, %v5880
        %v5902 = vpack.c.bf16 %v5883, %v5882
        %v5903 = vpack.c.bf16 %v5885, %v5884
        %v5904 = vpack.c.bf16 %v5887, %v5886
        %v5905 = vpack.c.bf16 %v5889, %v5888
        %v5906 = vld [vmem:[%s7] sm:$0xff]
        %v5907 = vpack.c.bf16 %v5906, %v5906
        %v5908 = vcombine.low %v5890, %v5894
        %v5909 = vcombine.high %v5890, %v5894
        %v5911 = vunpack.c.l.s4 1983009808
        %v5912 = vunpack.c.0.s8 %v5911
        %v5913 = vlaneseq
        %v5914 = vshrl.u32 %v5913, 7
        %v5915 = vsub.s32 %v5912, %v5914
        %v5916 = vrot.slane %v5908, %v5915
        %v5918 = vunpack.c.l.s4 1983009808
        %v5919 = vunpack.c.0.s8 %v5918
        %v5920 = vlaneseq
        %v5921 = vshrl.u32 %v5920, 7
        %v5922 = vsub.s32 %v5919, %v5921
        %v5923 = vrot.slane %v5909, %v5922
        %v5924 = vcombine.low %v5892, %v5896
        %v5925 = vcombine.high %v5892, %v5896
        %v5927 = vunpack.c.l.s4 1983009808
        %v5928 = vunpack.c.0.s8 %v5927
        %v5929 = vlaneseq
        %v5930 = vshrl.u32 %v5929, 7
        %v5931 = vsub.s32 %v5928, %v5930
        %v5932 = vrot.slane %v5924, %v5931
        %v5934 = vunpack.c.l.s4 1983009808
        %v5935 = vunpack.c.0.s8 %v5934
        %v5936 = vlaneseq
        %v5937 = vshrl.u32 %v5936, 7
        %v5938 = vsub.s32 %v5935, %v5937
        %v5939 = vrot.slane %v5925, %v5938
        %v5940 = vcombine.low %v5898, %v5902
        %v5941 = vcombine.high %v5898, %v5902
        %v5943 = vunpack.c.l.s4 1983009808
        %v5944 = vunpack.c.0.s8 %v5943
        %v5945 = vlaneseq
        %v5946 = vshrl.u32 %v5945, 7
        %v5947 = vsub.s32 %v5944, %v5946
        %v5948 = vrot.slane %v5940, %v5947
        %v5950 = vunpack.c.l.s4 1983009808
        %v5951 = vunpack.c.0.s8 %v5950
        %v5952 = vlaneseq
        %v5953 = vshrl.u32 %v5952, 7
        %v5954 = vsub.s32 %v5951, %v5953
        %v5955 = vrot.slane %v5941, %v5954
        %v5956 = vcombine.low %v5900, %v5904
        %v5957 = vcombine.high %v5900, %v5904
        %v5959 = vunpack.c.l.s4 1983009808
        %v5960 = vunpack.c.0.s8 %v5959
        %v5961 = vlaneseq
        %v5962 = vshrl.u32 %v5961, 7
        %v5963 = vsub.s32 %v5960, %v5962
        %v5964 = vrot.slane %v5956, %v5963
        %v5966 = vunpack.c.l.s4 1983009808
        %v5967 = vunpack.c.0.s8 %v5966
        %v5968 = vlaneseq
        %v5969 = vshrl.u32 %v5968, 7
        %v5970 = vsub.s32 %v5967, %v5969
        %v5971 = vrot.slane %v5957, %v5970
        %v5972 = vcombine.low %v5916, %v5932
        %v5973 = vcombine.high %v5916, %v5932
        %v5975 = vunpack.c.l.s4 1934713408
        %v5976 = vunpack.c.0.s8 %v5975
        %v5977 = vlaneseq
        %v5978 = vshrl.u32 %v5977, 7
        %v5979 = vsub.s32 %v5976, %v5978
        %v5980 = vrot.slane %v5972, %v5979
        %v5982 = vunpack.c.l.s4 1934713408
        %v5983 = vunpack.c.0.s8 %v5982
        %v5984 = vlaneseq
        %v5985 = vshrl.u32 %v5984, 7
        %v5986 = vsub.s32 %v5983, %v5985
        %v5987 = vrot.slane %v5973, %v5986
        %v5988 = vcombine.low %v5923, %v5939
        %v5989 = vcombine.high %v5923, %v5939
        %v5991 = vunpack.c.l.s4 1934713408
        %v5992 = vunpack.c.0.s8 %v5991
        %v5993 = vlaneseq
        %v5994 = vshrl.u32 %v5993, 7
        %v5995 = vsub.s32 %v5992, %v5994
        %v5996 = vrot.slane %v5988, %v5995
        %v5998 = vunpack.c.l.s4 1934713408
        %v5999 = vunpack.c.0.s8 %v5998
        %v6000 = vlaneseq
        %v6001 = vshrl.u32 %v6000, 7
        %v6002 = vsub.s32 %v5999, %v6001
        %v6003 = vrot.slane %v5989, %v6002
        %v6004 = vcombine.low %v5948, %v5964
        %v6005 = vcombine.high %v5948, %v5964
        %v6007 = vunpack.c.l.s4 1934713408
        %v6008 = vunpack.c.0.s8 %v6007
        %v6009 = vlaneseq
        %v6010 = vshrl.u32 %v6009, 7
        %v6011 = vsub.s32 %v6008, %v6010
        %v6012 = vrot.slane %v6004, %v6011
        %v6014 = vunpack.c.l.s4 1934713408
        %v6015 = vunpack.c.0.s8 %v6014
        %v6016 = vlaneseq
        %v6017 = vshrl.u32 %v6016, 7
        %v6018 = vsub.s32 %v6015, %v6017
        %v6019 = vrot.slane %v6005, %v6018
        %v6020 = vcombine.low %v5955, %v5971
        %v6021 = vcombine.high %v5955, %v5971
        %v6023 = vunpack.c.l.s4 1934713408
        %v6024 = vunpack.c.0.s8 %v6023
        %v6025 = vlaneseq
        %v6026 = vshrl.u32 %v6025, 7
        %v6027 = vsub.s32 %v6024, %v6026
        %v6028 = vrot.slane %v6020, %v6027
        %v6030 = vunpack.c.l.s4 1934713408
        %v6031 = vunpack.c.0.s8 %v6030
        %v6032 = vlaneseq
        %v6033 = vshrl.u32 %v6032, 7
        %v6034 = vsub.s32 %v6031, %v6033
        %v6035 = vrot.slane %v6021, %v6034
        %v6036 = vcombine.low %v5980, %v6012
        %v6037 = vcombine.high %v5980, %v6012
        %v6038 = vcombine.low %v5987, %v6019
        %v6039 = vcombine.high %v5987, %v6019
        %v6040 = vcombine.low %v5996, %v6028
        %v6041 = vcombine.high %v5996, %v6028
        %v6042 = vcombine.low %v6003, %v6035
        %v6043 = vcombine.high %v6003, %v6035
        %v6044 = vcombine.low %v5891, %v5895
        %v6045 = vcombine.high %v5891, %v5895
        %v6047 = vunpack.c.l.s4 1983009808
        %v6048 = vunpack.c.0.s8 %v6047
        %v6049 = vlaneseq
        %v6050 = vshrl.u32 %v6049, 7
        %v6051 = vsub.s32 %v6048, %v6050
        %v6052 = vrot.slane %v6044, %v6051
        %v6054 = vunpack.c.l.s4 1983009808
        %v6055 = vunpack.c.0.s8 %v6054
        %v6056 = vlaneseq
        %v6057 = vshrl.u32 %v6056, 7
        %v6058 = vsub.s32 %v6055, %v6057
        %v6059 = vrot.slane %v6045, %v6058
        %v6060 = vcombine.low %v5893, %v5897
        %v6061 = vcombine.high %v5893, %v5897
        %v6063 = vunpack.c.l.s4 1983009808
        %v6064 = vunpack.c.0.s8 %v6063
        %v6065 = vlaneseq
        %v6066 = vshrl.u32 %v6065, 7
        %v6067 = vsub.s32 %v6064, %v6066
        %v6068 = vrot.slane %v6060, %v6067
        %v6070 = vunpack.c.l.s4 1983009808
        %v6071 = vunpack.c.0.s8 %v6070
        %v6072 = vlaneseq
        %v6073 = vshrl.u32 %v6072, 7
        %v6074 = vsub.s32 %v6071, %v6073
        %v6075 = vrot.slane %v6061, %v6074
        %v6076 = vcombine.low %v5899, %v5903
        %v6077 = vcombine.high %v5899, %v5903
        %v6079 = vunpack.c.l.s4 1983009808
        %v6080 = vunpack.c.0.s8 %v6079
        %v6081 = vlaneseq
        %v6082 = vshrl.u32 %v6081, 7
        %v6083 = vsub.s32 %v6080, %v6082
        %v6084 = vrot.slane %v6076, %v6083
        %v6086 = vunpack.c.l.s4 1983009808
        %v6087 = vunpack.c.0.s8 %v6086
        %v6088 = vlaneseq
        %v6089 = vshrl.u32 %v6088, 7
        %v6090 = vsub.s32 %v6087, %v6089
        %v6091 = vrot.slane %v6077, %v6090
        %v6092 = vcombine.low %v5901, %v5905
        %v6093 = vcombine.high %v5901, %v5905
        %v6095 = vunpack.c.l.s4 1983009808
        %v6096 = vunpack.c.0.s8 %v6095
        %v6097 = vlaneseq
        %v6098 = vshrl.u32 %v6097, 7
        %v6099 = vsub.s32 %v6096, %v6098
        %v6100 = vrot.slane %v6092, %v6099
        %v6102 = vunpack.c.l.s4 1983009808
        %v6103 = vunpack.c.0.s8 %v6102
        %v6104 = vlaneseq
        %v6105 = vshrl.u32 %v6104, 7
        %v6106 = vsub.s32 %v6103, %v6105
        %v6107 = vrot.slane %v6093, %v6106
        %v6108 = vcombine.low %v6052, %v6068
        %v6109 = vcombine.high %v6052, %v6068
        %v6111 = vunpack.c.l.s4 1934713408
        %v6112 = vunpack.c.0.s8 %v6111
        %v6113 = vlaneseq
        %v6114 = vshrl.u32 %v6113, 7
        %v6115 = vsub.s32 %v6112, %v6114
        %v6116 = vrot.slane %v6108, %v6115
        %v6118 = vunpack.c.l.s4 1934713408
        %v6119 = vunpack.c.0.s8 %v6118
        %v6120 = vlaneseq
        %v6121 = vshrl.u32 %v6120, 7
        %v6122 = vsub.s32 %v6119, %v6121
        %v6123 = vrot.slane %v6109, %v6122
        %v6124 = vcombine.low %v6059, %v6075
        %v6125 = vcombine.high %v6059, %v6075
        %v6127 = vunpack.c.l.s4 1934713408
        %v6128 = vunpack.c.0.s8 %v6127
        %v6129 = vlaneseq
        %v6130 = vshrl.u32 %v6129, 7
        %v6131 = vsub.s32 %v6128, %v6130
        %v6132 = vrot.slane %v6124, %v6131
        %v6134 = vunpack.c.l.s4 1934713408
        %v6135 = vunpack.c.0.s8 %v6134
        %v6136 = vlaneseq
        %v6137 = vshrl.u32 %v6136, 7
        %v6138 = vsub.s32 %v6135, %v6137
        %v6139 = vrot.slane %v6125, %v6138
        %v6140 = vcombine.low %v6084, %v6100
        %v6141 = vcombine.high %v6084, %v6100
        %v6143 = vunpack.c.l.s4 1934713408
        %v6144 = vunpack.c.0.s8 %v6143
        %v6145 = vlaneseq
        %v6146 = vshrl.u32 %v6145, 7
        %v6147 = vsub.s32 %v6144, %v6146
        %v6148 = vrot.slane %v6140, %v6147
        %v6150 = vunpack.c.l.s4 1934713408
        %v6151 = vunpack.c.0.s8 %v6150
        %v6152 = vlaneseq
        %v6153 = vshrl.u32 %v6152, 7
        %v6154 = vsub.s32 %v6151, %v6153
        %v6155 = vrot.slane %v6141, %v6154
        %v6156 = vcombine.low %v6091, %v6107
        %v6157 = vcombine.high %v6091, %v6107
        %v6159 = vunpack.c.l.s4 1934713408
        %v6160 = vunpack.c.0.s8 %v6159
        %v6161 = vlaneseq
        %v6162 = vshrl.u32 %v6161, 7
        %v6163 = vsub.s32 %v6160, %v6162
        %v6164 = vrot.slane %v6156, %v6163
        %v6166 = vunpack.c.l.s4 1934713408
        %v6167 = vunpack.c.0.s8 %v6166
        %v6168 = vlaneseq
        %v6169 = vshrl.u32 %v6168, 7
        %v6170 = vsub.s32 %v6167, %v6169
        %v6171 = vrot.slane %v6157, %v6170
        %v6172 = vcombine.low %v6116, %v6148
        %v6173 = vcombine.high %v6116, %v6148
        %v6174 = vcombine.low %v6123, %v6155
        %v6175 = vcombine.high %v6123, %v6155
        %v6176 = vcombine.low %v6132, %v6164
        %v6177 = vcombine.high %v6132, %v6164
        %v6178 = vcombine.low %v6139, %v6171
        %v6179 = vcombine.high %v6139, %v6171
        %v6182 = vpack.i.b16 %v6172, %v6036
        %v6184 = vshrl.u32 %v6036, 16
        %v6185 = vshrl.u32 %v6172, 16
        %v6186 = vpack.i.b16 %v6185, %v6184
        %v6190 = vpack.i.b16 %v6173, %v6037
        %v6192 = vshrl.u32 %v6037, 16
        %v6193 = vshrl.u32 %v6173, 16
        %v6194 = vpack.i.b16 %v6193, %v6192
        %v6198 = vpack.i.b16 %v6174, %v6038
        %v6200 = vshrl.u32 %v6038, 16
        %v6201 = vshrl.u32 %v6174, 16
        %v6202 = vpack.i.b16 %v6201, %v6200
        %v6206 = vpack.i.b16 %v6175, %v6039
        %v6208 = vshrl.u32 %v6039, 16
        %v6209 = vshrl.u32 %v6175, 16
        %v6210 = vpack.i.b16 %v6209, %v6208
        %v6214 = vpack.i.b16 %v6176, %v6040
        %v6216 = vshrl.u32 %v6040, 16
        %v6217 = vshrl.u32 %v6176, 16
        %v6218 = vpack.i.b16 %v6217, %v6216
        %v6222 = vpack.i.b16 %v6177, %v6041
        %v6224 = vshrl.u32 %v6041, 16
        %v6225 = vshrl.u32 %v6177, 16
        %v6226 = vpack.i.b16 %v6225, %v6224
        %v6230 = vpack.i.b16 %v6178, %v6042
        %v6232 = vshrl.u32 %v6042, 16
        %v6233 = vshrl.u32 %v6178, 16
        %v6234 = vpack.i.b16 %v6233, %v6232
        %v6238 = vpack.i.b16 %v6179, %v6043
        %v6240 = vshrl.u32 %v6043, 16
        %v6241 = vshrl.u32 %v6179, 16
        %v6242 = vpack.i.b16 %v6241, %v6240
        %v6244 = vcombine.low %v6182, %v6198
        %v6245 = vcombine.high %v6182, %v6198
        %v6247 = vunpack.c.l.s4 1983009808
        %v6248 = vunpack.c.0.s8 %v6247
        %v6249 = vlaneseq
        %v6250 = vshrl.u32 %v6249, 7
        %v6251 = vsub.s32 %v6248, %v6250
        %v6252 = vrot.slane %v6244, %v6251
        %v6254 = vunpack.c.l.s4 1983009808
        %v6255 = vunpack.c.0.s8 %v6254
        %v6256 = vlaneseq
        %v6257 = vshrl.u32 %v6256, 7
        %v6258 = vsub.s32 %v6255, %v6257
        %v6259 = vrot.slane %v6245, %v6258
        %v6260 = vcombine.low %v6190, %v6206
        %v6261 = vcombine.high %v6190, %v6206
        %v6263 = vunpack.c.l.s4 1983009808
        %v6264 = vunpack.c.0.s8 %v6263
        %v6265 = vlaneseq
        %v6266 = vshrl.u32 %v6265, 7
        %v6267 = vsub.s32 %v6264, %v6266
        %v6268 = vrot.slane %v6260, %v6267
        %v6270 = vunpack.c.l.s4 1983009808
        %v6271 = vunpack.c.0.s8 %v6270
        %v6272 = vlaneseq
        %v6273 = vshrl.u32 %v6272, 7
        %v6274 = vsub.s32 %v6271, %v6273
        %v6275 = vrot.slane %v6261, %v6274
        %v6276 = vcombine.low %v6214, %v6230
        %v6277 = vcombine.high %v6214, %v6230
        %v6279 = vunpack.c.l.s4 1983009808
        %v6280 = vunpack.c.0.s8 %v6279
        %v6281 = vlaneseq
        %v6282 = vshrl.u32 %v6281, 7
        %v6283 = vsub.s32 %v6280, %v6282
        %v6284 = vrot.slane %v6276, %v6283
        %v6286 = vunpack.c.l.s4 1983009808
        %v6287 = vunpack.c.0.s8 %v6286
        %v6288 = vlaneseq
        %v6289 = vshrl.u32 %v6288, 7
        %v6290 = vsub.s32 %v6287, %v6289
        %v6291 = vrot.slane %v6277, %v6290
        %v6292 = vcombine.low %v6222, %v6238
        %v6293 = vcombine.high %v6222, %v6238
        %v6295 = vunpack.c.l.s4 1983009808
        %v6296 = vunpack.c.0.s8 %v6295
        %v6297 = vlaneseq
        %v6298 = vshrl.u32 %v6297, 7
        %v6299 = vsub.s32 %v6296, %v6298
        %v6300 = vrot.slane %v6292, %v6299
        %v6302 = vunpack.c.l.s4 1983009808
        %v6303 = vunpack.c.0.s8 %v6302
        %v6304 = vlaneseq
        %v6305 = vshrl.u32 %v6304, 7
        %v6306 = vsub.s32 %v6303, %v6305
        %v6307 = vrot.slane %v6293, %v6306
        %v6308 = vcombine.low %v6252, %v6268
        %v6309 = vcombine.high %v6252, %v6268
        %v6311 = vunpack.c.l.s4 1934713408
        %v6312 = vunpack.c.0.s8 %v6311
        %v6313 = vlaneseq
        %v6314 = vshrl.u32 %v6313, 7
        %v6315 = vsub.s32 %v6312, %v6314
        %v6316 = vrot.slane %v6308, %v6315
        %v6318 = vunpack.c.l.s4 1934713408
        %v6319 = vunpack.c.0.s8 %v6318
        %v6320 = vlaneseq
        %v6321 = vshrl.u32 %v6320, 7
        %v6322 = vsub.s32 %v6319, %v6321
        %v6323 = vrot.slane %v6309, %v6322
        %v6324 = vcombine.low %v6259, %v6275
        %v6325 = vcombine.high %v6259, %v6275
        %v6327 = vunpack.c.l.s4 1934713408
        %v6328 = vunpack.c.0.s8 %v6327
        %v6329 = vlaneseq
        %v6330 = vshrl.u32 %v6329, 7
        %v6331 = vsub.s32 %v6328, %v6330
        %v6332 = vrot.slane %v6324, %v6331
        %v6334 = vunpack.c.l.s4 1934713408
        %v6335 = vunpack.c.0.s8 %v6334
        %v6336 = vlaneseq
        %v6337 = vshrl.u32 %v6336, 7
        %v6338 = vsub.s32 %v6335, %v6337
        %v6339 = vrot.slane %v6325, %v6338
        %v6340 = vcombine.low %v6284, %v6300
        %v6341 = vcombine.high %v6284, %v6300
        %v6343 = vunpack.c.l.s4 1934713408
        %v6344 = vunpack.c.0.s8 %v6343
        %v6345 = vlaneseq
        %v6346 = vshrl.u32 %v6345, 7
        %v6347 = vsub.s32 %v6344, %v6346
        %v6348 = vrot.slane %v6340, %v6347
        %v6350 = vunpack.c.l.s4 1934713408
        %v6351 = vunpack.c.0.s8 %v6350
        %v6352 = vlaneseq
        %v6353 = vshrl.u32 %v6352, 7
        %v6354 = vsub.s32 %v6351, %v6353
        %v6355 = vrot.slane %v6341, %v6354
        %v6356 = vcombine.low %v6291, %v6307
        %v6357 = vcombine.high %v6291, %v6307
        %v6359 = vunpack.c.l.s4 1934713408
        %v6360 = vunpack.c.0.s8 %v6359
        %v6361 = vlaneseq
        %v6362 = vshrl.u32 %v6361, 7
        %v6363 = vsub.s32 %v6360, %v6362
        %v6364 = vrot.slane %v6356, %v6363
        %v6366 = vunpack.c.l.s4 1934713408
        %v6367 = vunpack.c.0.s8 %v6366
        %v6368 = vlaneseq
        %v6369 = vshrl.u32 %v6368, 7
        %v6370 = vsub.s32 %v6367, %v6369
        %v6371 = vrot.slane %v6357, %v6370
        %v6372 = vcombine.low %v6316, %v6348
        %v6373 = vcombine.high %v6316, %v6348
        %v6374 = vcombine.low %v6323, %v6355
        %v6375 = vcombine.high %v6323, %v6355
        %v6376 = vcombine.low %v6332, %v6364
        %v6377 = vcombine.high %v6332, %v6364
        %v6378 = vcombine.low %v6339, %v6371
        %v6379 = vcombine.high %v6339, %v6371
        %v6380 = vcombine.low %v6186, %v6202
        %v6381 = vcombine.high %v6186, %v6202
        %v6383 = vunpack.c.l.s4 1983009808
        %v6384 = vunpack.c.0.s8 %v6383
        %v6385 = vlaneseq
        %v6386 = vshrl.u32 %v6385, 7
        %v6387 = vsub.s32 %v6384, %v6386
        %v6388 = vrot.slane %v6380, %v6387
        %v6390 = vunpack.c.l.s4 1983009808
        %v6391 = vunpack.c.0.s8 %v6390
        %v6392 = vlaneseq
        %v6393 = vshrl.u32 %v6392, 7
        %v6394 = vsub.s32 %v6391, %v6393
        %v6395 = vrot.slane %v6381, %v6394
        %v6396 = vcombine.low %v6194, %v6210
        %v6397 = vcombine.high %v6194, %v6210
        %v6399 = vunpack.c.l.s4 1983009808
        %v6400 = vunpack.c.0.s8 %v6399
        %v6401 = vlaneseq
        %v6402 = vshrl.u32 %v6401, 7
        %v6403 = vsub.s32 %v6400, %v6402
        %v6404 = vrot.slane %v6396, %v6403
        %v6406 = vunpack.c.l.s4 1983009808
        %v6407 = vunpack.c.0.s8 %v6406
        %v6408 = vlaneseq
        %v6409 = vshrl.u32 %v6408, 7
        %v6410 = vsub.s32 %v6407, %v6409
        %v6411 = vrot.slane %v6397, %v6410
        %v6412 = vcombine.low %v6218, %v6234
        %v6413 = vcombine.high %v6218, %v6234
        %v6415 = vunpack.c.l.s4 1983009808
        %v6416 = vunpack.c.0.s8 %v6415
        %v6417 = vlaneseq
        %v6418 = vshrl.u32 %v6417, 7
        %v6419 = vsub.s32 %v6416, %v6418
        %v6420 = vrot.slane %v6412, %v6419
        %v6422 = vunpack.c.l.s4 1983009808
        %v6423 = vunpack.c.0.s8 %v6422
        %v6424 = vlaneseq
        %v6425 = vshrl.u32 %v6424, 7
        %v6426 = vsub.s32 %v6423, %v6425
        %v6427 = vrot.slane %v6413, %v6426
        %v6428 = vcombine.low %v6226, %v6242
        %v6429 = vcombine.high %v6226, %v6242
        %v6431 = vunpack.c.l.s4 1983009808
        %v6432 = vunpack.c.0.s8 %v6431
        %v6433 = vlaneseq
        %v6434 = vshrl.u32 %v6433, 7
        %v6435 = vsub.s32 %v6432, %v6434
        %v6436 = vrot.slane %v6428, %v6435
        %v6438 = vunpack.c.l.s4 1983009808
        %v6439 = vunpack.c.0.s8 %v6438
        %v6440 = vlaneseq
        %v6441 = vshrl.u32 %v6440, 7
        %v6442 = vsub.s32 %v6439, %v6441
        %v6443 = vrot.slane %v6429, %v6442
        %v6444 = vcombine.low %v6388, %v6404
        %v6445 = vcombine.high %v6388, %v6404
        %v6447 = vunpack.c.l.s4 1934713408
        %v6448 = vunpack.c.0.s8 %v6447
        %v6449 = vlaneseq
        %v6450 = vshrl.u32 %v6449, 7
        %v6451 = vsub.s32 %v6448, %v6450
        %v6452 = vrot.slane %v6444, %v6451
        %v6454 = vunpack.c.l.s4 1934713408
        %v6455 = vunpack.c.0.s8 %v6454
        %v6456 = vlaneseq
        %v6457 = vshrl.u32 %v6456, 7
        %v6458 = vsub.s32 %v6455, %v6457
        %v6459 = vrot.slane %v6445, %v6458
        %v6460 = vcombine.low %v6395, %v6411
        %v6461 = vcombine.high %v6395, %v6411
        %v6463 = vunpack.c.l.s4 1934713408
        %v6464 = vunpack.c.0.s8 %v6463
        %v6465 = vlaneseq
        %v6466 = vshrl.u32 %v6465, 7
        %v6467 = vsub.s32 %v6464, %v6466
        %v6468 = vrot.slane %v6460, %v6467
        %v6470 = vunpack.c.l.s4 1934713408
        %v6471 = vunpack.c.0.s8 %v6470
        %v6472 = vlaneseq
        %v6473 = vshrl.u32 %v6472, 7
        %v6474 = vsub.s32 %v6471, %v6473
        %v6475 = vrot.slane %v6461, %v6474
        %v6476 = vcombine.low %v6420, %v6436
        %v6477 = vcombine.high %v6420, %v6436
        %v6479 = vunpack.c.l.s4 1934713408
        %v6480 = vunpack.c.0.s8 %v6479
        %v6481 = vlaneseq
        %v6482 = vshrl.u32 %v6481, 7
        %v6483 = vsub.s32 %v6480, %v6482
        %v6484 = vrot.slane %v6476, %v6483
        %v6486 = vunpack.c.l.s4 1934713408
        %v6487 = vunpack.c.0.s8 %v6486
        %v6488 = vlaneseq
        %v6489 = vshrl.u32 %v6488, 7
        %v6490 = vsub.s32 %v6487, %v6489
        %v6491 = vrot.slane %v6477, %v6490
        %v6492 = vcombine.low %v6427, %v6443
        %v6493 = vcombine.high %v6427, %v6443
        %v6495 = vunpack.c.l.s4 1934713408
        %v6496 = vunpack.c.0.s8 %v6495
        %v6497 = vlaneseq
        %v6498 = vshrl.u32 %v6497, 7
        %v6499 = vsub.s32 %v6496, %v6498
        %v6500 = vrot.slane %v6492, %v6499
        %v6502 = vunpack.c.l.s4 1934713408
        %v6503 = vunpack.c.0.s8 %v6502
        %v6504 = vlaneseq
        %v6505 = vshrl.u32 %v6504, 7
        %v6506 = vsub.s32 %v6503, %v6505
        %v6507 = vrot.slane %v6493, %v6506
        %v6508 = vcombine.low %v6452, %v6484
        %v6509 = vcombine.high %v6452, %v6484
        %v6510 = vcombine.low %v6459, %v6491
        %v6511 = vcombine.high %v6459, %v6491
        %v6512 = vcombine.low %v6468, %v6500
        %v6513 = vcombine.high %v6468, %v6500
        %v6514 = vcombine.low %v6475, %v6507
        %v6515 = vcombine.high %v6475, %v6507
        %v6518 = vpack.i.b16 %v6508, %v6372
        %v6519 = vshrl.u32 %v6372, 16
        %v6520 = vshrl.u32 %v6508, 16
        %v6521 = vpack.i.b16 %v6520, %v6519
        %v6524 = vpack.i.b16 %v6509, %v6373
        %v6525 = vshrl.u32 %v6373, 16
        %v6526 = vshrl.u32 %v6509, 16
        %v6527 = vpack.i.b16 %v6526, %v6525
        %v6530 = vpack.i.b16 %v6510, %v6374
        %v6531 = vshrl.u32 %v6374, 16
        %v6532 = vshrl.u32 %v6510, 16
        %v6533 = vpack.i.b16 %v6532, %v6531
        %v6536 = vpack.i.b16 %v6511, %v6375
        %v6537 = vshrl.u32 %v6375, 16
        %v6538 = vshrl.u32 %v6511, 16
        %v6539 = vpack.i.b16 %v6538, %v6537
        %v6542 = vpack.i.b16 %v6512, %v6376
        %v6543 = vshrl.u32 %v6376, 16
        %v6544 = vshrl.u32 %v6512, 16
        %v6545 = vpack.i.b16 %v6544, %v6543
        %v6548 = vpack.i.b16 %v6513, %v6377
        %v6549 = vshrl.u32 %v6377, 16
        %v6550 = vshrl.u32 %v6513, 16
        %v6551 = vpack.i.b16 %v6550, %v6549
        %v6554 = vpack.i.b16 %v6514, %v6378
        %v6555 = vshrl.u32 %v6378, 16
        %v6556 = vshrl.u32 %v6514, 16
        %v6557 = vpack.i.b16 %v6556, %v6555
        %v6560 = vpack.i.b16 %v6515, %v6379
        %v6561 = vshrl.u32 %v6379, 16
        %v6562 = vshrl.u32 %v6515, 16
        %v6563 = vpack.i.b16 %v6562, %v6561
        %6564 = vrot.lane.b32.xlu0 %v6521, 32
        %v6565 = vpop.permute.xlu0 %6564
        %6566 = vrot.lane.b32.xlu0 %v6524, 64
        %v6567 = vpop.permute.xlu0 %6566
        %6568 = vrot.lane.b32.xlu0 %v6527, 96
        %v6569 = vpop.permute.xlu0 %6568
        %6570 = vrot.lane.b32.xlu0 %v6533, 32
        %v6571 = vpop.permute.xlu0 %6570
        %6572 = vrot.lane.b32.xlu0 %v6536, 64
        %v6573 = vpop.permute.xlu0 %6572
        %6574 = vrot.lane.b32.xlu0 %v6539, 96
        %v6575 = vpop.permute.xlu0 %6574
        %6576 = vrot.lane.b32.xlu0 %v6545, 32
        %v6577 = vpop.permute.xlu0 %6576
        %6578 = vrot.lane.b32.xlu0 %v6548, 64
        %v6579 = vpop.permute.xlu0 %6578
        %6580 = vrot.lane.b32.xlu0 %v6551, 96
        %v6581 = vpop.permute.xlu0 %6580
        %6582 = vrot.lane.b32.xlu0 %v6557, 32
        %v6583 = vpop.permute.xlu0 %6582
        %6584 = vrot.lane.b32.xlu0 %v6560, 64
        %v6585 = vpop.permute.xlu0 %6584
        %6586 = vrot.lane.b32.xlu0 %v6563, 96
        %v6587 = vpop.permute.xlu0 %6586
        %v6590 = vsel %vm5440, %v6518, %v6565
        %vm6591 = vcmask 523264
        %v6593 = vsel %vm6591, %v6590, %v6567
        %vm6594 = vcmask 785408
        %v6596 = vsel %vm6594, %v6593, %v6569
        %v6600 = vsel %vm5440, %v6530, %v6571
        %v6602 = vsel %vm6591, %v6600, %v6573
        %v6604 = vsel %vm6594, %v6602, %v6575
        %v6608 = vsel %vm5440, %v6542, %v6577
        %v6610 = vsel %vm6591, %v6608, %v6579
        %v6612 = vsel %vm6594, %v6610, %v6581
        %v6616 = vsel %vm5440, %v6554, %v6583
        %v6618 = vsel %vm6591, %v6616, %v6585
        %v6620 = vsel %vm6594, %v6618, %v6587
        %v6622 = vcombine.low 0.0, 0.0
        %v6623 = vcombine.high 0.0, 0.0
        %v6625 = vunpack.c.l.s4 1983009808
        %v6626 = vunpack.c.0.s8 %v6625
        %v6627 = vlaneseq
        %v6628 = vshrl.u32 %v6627, 7
        %v6629 = vsub.s32 %v6626, %v6628
        %v6630 = vrot.slane %v6622, %v6629
        %v6632 = vunpack.c.l.s4 1983009808
        %v6633 = vunpack.c.0.s8 %v6632
        %v6634 = vlaneseq
        %v6635 = vshrl.u32 %v6634, 7
        %v6636 = vsub.s32 %v6633, %v6635
        %v6637 = vrot.slane %v6623, %v6636
        %v6638 = vcombine.low %v6630, %v6630
        %v6639 = vcombine.high %v6630, %v6630
        %v6641 = vunpack.c.l.s4 1934713408
        %v6642 = vunpack.c.0.s8 %v6641
        %v6643 = vlaneseq
        %v6644 = vshrl.u32 %v6643, 7
        %v6645 = vsub.s32 %v6642, %v6644
        %v6646 = vrot.slane %v6638, %v6645
        %v6648 = vunpack.c.l.s4 1934713408
        %v6649 = vunpack.c.0.s8 %v6648
        %v6650 = vlaneseq
        %v6651 = vshrl.u32 %v6650, 7
        %v6652 = vsub.s32 %v6649, %v6651
        %v6653 = vrot.slane %v6639, %v6652
        %v6654 = vcombine.low %v6637, %v6637
        %v6655 = vcombine.high %v6637, %v6637
        %v6657 = vunpack.c.l.s4 1934713408
        %v6658 = vunpack.c.0.s8 %v6657
        %v6659 = vlaneseq
        %v6660 = vshrl.u32 %v6659, 7
        %v6661 = vsub.s32 %v6658, %v6660
        %v6662 = vrot.slane %v6654, %v6661
        %v6664 = vunpack.c.l.s4 1934713408
        %v6665 = vunpack.c.0.s8 %v6664
        %v6666 = vlaneseq
        %v6667 = vshrl.u32 %v6666, 7
        %v6668 = vsub.s32 %v6665, %v6667
        %v6669 = vrot.slane %v6655, %v6668
        %v6670 = vcombine.low %v6646, %v6646
        %v6671 = vcombine.high %v6646, %v6646
        %v6672 = vcombine.low %v6653, %v6653
        %v6673 = vcombine.high %v6653, %v6653
        %v6674 = vcombine.low %v6662, %v6662
        %v6675 = vcombine.high %v6662, %v6662
        %v6676 = vcombine.low %v6669, %v6669
        %v6677 = vcombine.high %v6669, %v6669
        %6679 = vrot.lane.b32.xlu0 %v6671, 32
        %v6680 = vpop.permute.xlu0 %6679
        %6683 = vrot.lane.b32.xlu0 %v6672, 64
        %v6684 = vpop.permute.xlu0 %6683
        %6687 = vrot.lane.b32.xlu0 %v6673, 96
        %v6688 = vpop.permute.xlu0 %6687
        %6691 = vrot.lane.b32.xlu0 %v6675, 32
        %v6692 = vpop.permute.xlu0 %6691
        %6695 = vrot.lane.b32.xlu0 %v6676, 64
        %v6696 = vpop.permute.xlu0 %6695
        %6699 = vrot.lane.b32.xlu0 %v6677, 96
        %v6700 = vpop.permute.xlu0 %6699
        %v6702 = vsel %vm5440, %v6670, %v6680
        %v6703 = vsel %vm6591, %v6702, %v6684
        %v6704 = vsel %vm6594, %v6703, %v6688
        %v6705 = vsel %vm5440, %v6674, %v6692
        %v6706 = vsel %vm6591, %v6705, %v6696
        %v6707 = vsel %vm6594, %v6706, %v6700
        %vm6708 = vcmask 130048
        %v6710 = vsel %vm6708, %v5907, 0
        %6712 = vmatprep.subr.bf16.mxu0 0
        %6713 = vmatpush1.bf16.msra.mxu0 0
        %6714 = vmatprep.subr.bf16.mxu0 0
        %6715 = vmatpush1.bf16.msra.mxu0 0
        %6716 = vmatprep.subr.bf16.mxu0 0
        %6717 = vmatpush1.bf16.msra.mxu0 0
        %6718 = vmatprep.subr.bf16.mxu0 0
        %6719 = vmatpush1.bf16.msra.mxu0 0
        %6720 = vmatprep.subr.bf16.mxu0 0
        %6721 = vmatpush1.bf16.msra.mxu0 0
        %6722 = vmatprep.subr.bf16.mxu0 0
        %6723 = vmatpush1.bf16.msra.mxu0 0
        %6724 = vmatprep.subr.bf16.mxu0 0
        %6725 = vmatpush1.bf16.msra.mxu0 0
        %6726 = vmatprep.subr.bf16.mxu0 %v6604
        %6727 = vmatpush1.bf16.msra.mxu0 %v6596
        %6728 = vmatprep.subr.bf16.mxu0 0
        %6729 = vmatpush2.bf16.msra.mxu0 0
        %6730 = vmatprep.subr.bf16.mxu0 0
        %6731 = vmatpush2.bf16.msra.mxu0 0
        %6732 = vmatprep.subr.bf16.mxu0 0
        %6733 = vmatpush2.bf16.msra.mxu0 0
        %6734 = vmatprep.subr.bf16.mxu0 0
        %6735 = vmatpush2.bf16.msra.mxu0 0
        %6736 = vmatprep.subr.bf16.mxu0 0
        %6737 = vmatpush2.bf16.msra.mxu0 0
        %6738 = vmatprep.subr.bf16.mxu0 0
        %6739 = vmatpush2.bf16.msra.mxu0 0
        %6740 = vmatprep.subr.bf16.mxu0 0
        %6741 = vmatpush2.bf16.msra.mxu0 0
        %6742 = vmatprep.subr.bf16.mxu0 0
        %6743 = vmatpush2.bf16.msra.mxu0 0
        %6744 = vmatprep.mubr.bf16.mxu0 0
        %6745 = vmatmul.mubr.bf16.gmra.mxu0 %v6710
        %v6746 = vpop.f32.mrf.mxu0
        %v6747 = vadd.f32 %v6704, %v6746
        %v6748 = vpop.f32.mrf.mxu0
        %v6749 = vadd.f32 %v6707, %v6748
        %v6750 = vpop.f32.mrf.mxu0
        %v6751 = vpop.f32.mrf.mxu0
        %6752 = vdwg.mxu0
        %6753 = vmatprep.subr.bf16.mxu0 0
        %6754 = vmatpush1.bf16.msra.mxu0 0
        %6755 = vmatprep.subr.bf16.mxu0 0
        %6756 = vmatpush1.bf16.msra.mxu0 0
        %6757 = vmatprep.subr.bf16.mxu0 0
        %6758 = vmatpush1.bf16.msra.mxu0 0
        %6759 = vmatprep.subr.bf16.mxu0 0
        %6760 = vmatpush1.bf16.msra.mxu0 0
        %6761 = vmatprep.subr.bf16.mxu0 0
        %6762 = vmatpush1.bf16.msra.mxu0 0
        %6763 = vmatprep.subr.bf16.mxu0 0
        %6764 = vmatpush1.bf16.msra.mxu0 0
        %6765 = vmatprep.subr.bf16.mxu0 0
        %6766 = vmatpush1.bf16.msra.mxu0 0
        %6767 = vmatprep.subr.bf16.mxu0 %v6620
        %6768 = vmatpush1.bf16.msra.mxu0 %v6612
        %6769 = vmatprep.subr.bf16.mxu0 0
        %6770 = vmatpush2.bf16.msra.mxu0 0
        %6771 = vmatprep.subr.bf16.mxu0 0
        %6772 = vmatpush2.bf16.msra.mxu0 0
        %6773 = vmatprep.subr.bf16.mxu0 0
        %6774 = vmatpush2.bf16.msra.mxu0 0
        %6775 = vmatprep.subr.bf16.mxu0 0
        %6776 = vmatpush2.bf16.msra.mxu0 0
        %6777 = vmatprep.subr.bf16.mxu0 0
        %6778 = vmatpush2.bf16.msra.mxu0 0
        %6779 = vmatprep.subr.bf16.mxu0 0
        %6780 = vmatpush2.bf16.msra.mxu0 0
        %6781 = vmatprep.subr.bf16.mxu0 0
        %6782 = vmatpush2.bf16.msra.mxu0 0
        %6783 = vmatprep.subr.bf16.mxu0 0
        %6784 = vmatpush2.bf16.msra.mxu0 0
        %6785 = vmatprep.mubr.bf16.mxu0 0
        %6786 = vmatmul.mubr.bf16.gmra.mxu0 %v6710
        %v6787 = vpop.f32.mrf.mxu0
        %v6788 = vadd.f32 %v6704, %v6787
        %v6789 = vpop.f32.mrf.mxu0
        %v6790 = vadd.f32 %v6707, %v6789
        %v6791 = vpop.f32.mrf.mxu0
        %v6792 = vpop.f32.mrf.mxu0
        %6793 = vdwg.mxu0
        %6795 = vrot.lane.b32.xlu0 %v6747, 96
        %v6796 = vpop.permute.xlu0 %6795
        %6798 = vrot.lane.b32.xlu0 %v6747, 64
        %v6799 = vpop.permute.xlu0 %6798
        %6801 = vrot.lane.b32.xlu0 %v6747, 32
        %v6802 = vpop.permute.xlu0 %6801
        %6805 = vrot.lane.b32.xlu0 %v6749, 96
        %v6806 = vpop.permute.xlu0 %6805
        %6808 = vrot.lane.b32.xlu0 %v6749, 64
        %v6809 = vpop.permute.xlu0 %6808
        %6811 = vrot.lane.b32.xlu0 %v6749, 32
        %v6812 = vpop.permute.xlu0 %6811
        %6815 = vrot.lane.b32.xlu0 %v6788, 96
        %v6816 = vpop.permute.xlu0 %6815
        %6818 = vrot.lane.b32.xlu0 %v6788, 64
        %v6819 = vpop.permute.xlu0 %6818
        %6821 = vrot.lane.b32.xlu0 %v6788, 32
        %v6822 = vpop.permute.xlu0 %6821
        %6825 = vrot.lane.b32.xlu0 %v6790, 96
        %v6826 = vpop.permute.xlu0 %6825
        %6828 = vrot.lane.b32.xlu0 %v6790, 64
        %v6829 = vpop.permute.xlu0 %6828
        %6831 = vrot.lane.b32.xlu0 %v6790, 32
        %v6832 = vpop.permute.xlu0 %6831
        %v6834 = vcombine.low %v6747, %v6799
        %v6835 = vcombine.high %v6747, %v6799
        %v6837 = vunpack.c.l.s4 1983009808
        %v6838 = vunpack.c.0.s8 %v6837
        %v6839 = vlaneseq
        %v6840 = vshrl.u32 %v6839, 7
        %v6841 = vsub.s32 %v6838, %v6840
        %v6842 = vrot.slane %v6834, %v6841
        %v6844 = vunpack.c.l.s4 1983009808
        %v6845 = vunpack.c.0.s8 %v6844
        %v6846 = vlaneseq
        %v6847 = vshrl.u32 %v6846, 7
        %v6848 = vsub.s32 %v6845, %v6847
        %v6849 = vrot.slane %v6835, %v6848
        %v6850 = vcombine.low %v6796, %v6802
        %v6851 = vcombine.high %v6796, %v6802
        %v6853 = vunpack.c.l.s4 1983009808
        %v6854 = vunpack.c.0.s8 %v6853
        %v6855 = vlaneseq
        %v6856 = vshrl.u32 %v6855, 7
        %v6857 = vsub.s32 %v6854, %v6856
        %v6858 = vrot.slane %v6850, %v6857
        %v6860 = vunpack.c.l.s4 1983009808
        %v6861 = vunpack.c.0.s8 %v6860
        %v6862 = vlaneseq
        %v6863 = vshrl.u32 %v6862, 7
        %v6864 = vsub.s32 %v6861, %v6863
        %v6865 = vrot.slane %v6851, %v6864
        %v6866 = vcombine.low %v6749, %v6809
        %v6867 = vcombine.high %v6749, %v6809
        %v6869 = vunpack.c.l.s4 1983009808
        %v6870 = vunpack.c.0.s8 %v6869
        %v6871 = vlaneseq
        %v6872 = vshrl.u32 %v6871, 7
        %v6873 = vsub.s32 %v6870, %v6872
        %v6874 = vrot.slane %v6866, %v6873
        %v6876 = vunpack.c.l.s4 1983009808
        %v6877 = vunpack.c.0.s8 %v6876
        %v6878 = vlaneseq
        %v6879 = vshrl.u32 %v6878, 7
        %v6880 = vsub.s32 %v6877, %v6879
        %v6881 = vrot.slane %v6867, %v6880
        %v6882 = vcombine.low %v6806, %v6812
        %v6883 = vcombine.high %v6806, %v6812
        %v6885 = vunpack.c.l.s4 1983009808
        %v6886 = vunpack.c.0.s8 %v6885
        %v6887 = vlaneseq
        %v6888 = vshrl.u32 %v6887, 7
        %v6889 = vsub.s32 %v6886, %v6888
        %v6890 = vrot.slane %v6882, %v6889
        %v6892 = vunpack.c.l.s4 1983009808
        %v6893 = vunpack.c.0.s8 %v6892
        %v6894 = vlaneseq
        %v6895 = vshrl.u32 %v6894, 7
        %v6896 = vsub.s32 %v6893, %v6895
        %v6897 = vrot.slane %v6883, %v6896
        %v6898 = vcombine.low %v6842, %v6858
        %v6899 = vcombine.high %v6842, %v6858
        %v6901 = vunpack.c.l.s4 1934713408
        %v6902 = vunpack.c.0.s8 %v6901
        %v6903 = vlaneseq
        %v6904 = vshrl.u32 %v6903, 7
        %v6905 = vsub.s32 %v6902, %v6904
        %v6906 = vrot.slane %v6898, %v6905
        %v6908 = vunpack.c.l.s4 1934713408
        %v6909 = vunpack.c.0.s8 %v6908
        %v6910 = vlaneseq
        %v6911 = vshrl.u32 %v6910, 7
        %v6912 = vsub.s32 %v6909, %v6911
        %v6913 = vrot.slane %v6899, %v6912
        %v6914 = vcombine.low %v6849, %v6865
        %v6915 = vcombine.high %v6849, %v6865
        %v6917 = vunpack.c.l.s4 1934713408
        %v6918 = vunpack.c.0.s8 %v6917
        %v6919 = vlaneseq
        %v6920 = vshrl.u32 %v6919, 7
        %v6921 = vsub.s32 %v6918, %v6920
        %v6922 = vrot.slane %v6914, %v6921
        %v6924 = vunpack.c.l.s4 1934713408
        %v6925 = vunpack.c.0.s8 %v6924
        %v6926 = vlaneseq
        %v6927 = vshrl.u32 %v6926, 7
        %v6928 = vsub.s32 %v6925, %v6927
        %v6929 = vrot.slane %v6915, %v6928
        %v6930 = vcombine.low %v6874, %v6890
        %v6931 = vcombine.high %v6874, %v6890
        %v6933 = vunpack.c.l.s4 1934713408
        %v6934 = vunpack.c.0.s8 %v6933
        %v6935 = vlaneseq
        %v6936 = vshrl.u32 %v6935, 7
        %v6937 = vsub.s32 %v6934, %v6936
        %v6938 = vrot.slane %v6930, %v6937
        %v6940 = vunpack.c.l.s4 1934713408
        %v6941 = vunpack.c.0.s8 %v6940
        %v6942 = vlaneseq
        %v6943 = vshrl.u32 %v6942, 7
        %v6944 = vsub.s32 %v6941, %v6943
        %v6945 = vrot.slane %v6931, %v6944
        %v6946 = vcombine.low %v6881, %v6897
        %v6947 = vcombine.high %v6881, %v6897
        %v6949 = vunpack.c.l.s4 1934713408
        %v6950 = vunpack.c.0.s8 %v6949
        %v6951 = vlaneseq
        %v6952 = vshrl.u32 %v6951, 7
        %v6953 = vsub.s32 %v6950, %v6952
        %v6954 = vrot.slane %v6946, %v6953
        %v6956 = vunpack.c.l.s4 1934713408
        %v6957 = vunpack.c.0.s8 %v6956
        %v6958 = vlaneseq
        %v6959 = vshrl.u32 %v6958, 7
        %v6960 = vsub.s32 %v6957, %v6959
        %v6961 = vrot.slane %v6947, %v6960
        %v6962 = vcombine.low %v6906, %v6938
        %v6963 = vcombine.high %v6906, %v6938
        %v6964 = vcombine.low %v6913, %v6945
        %v6965 = vcombine.high %v6913, %v6945
        %v6966 = vcombine.low %v6922, %v6954
        %v6967 = vcombine.high %v6922, %v6954
        %v6968 = vcombine.low %v6929, %v6961
        %v6969 = vcombine.high %v6929, %v6961
        %v6970 = vcombine.low %v6788, %v6819
        %v6971 = vcombine.high %v6788, %v6819
        %v6973 = vunpack.c.l.s4 1983009808
        %v6974 = vunpack.c.0.s8 %v6973
        %v6975 = vlaneseq
        %v6976 = vshrl.u32 %v6975, 7
        %v6977 = vsub.s32 %v6974, %v6976
        %v6978 = vrot.slane %v6970, %v6977
        %v6980 = vunpack.c.l.s4 1983009808
        %v6981 = vunpack.c.0.s8 %v6980
        %v6982 = vlaneseq
        %v6983 = vshrl.u32 %v6982, 7
        %v6984 = vsub.s32 %v6981, %v6983
        %v6985 = vrot.slane %v6971, %v6984
        %v6986 = vcombine.low %v6816, %v6822
        %v6987 = vcombine.high %v6816, %v6822
        %v6989 = vunpack.c.l.s4 1983009808
        %v6990 = vunpack.c.0.s8 %v6989
        %v6991 = vlaneseq
        %v6992 = vshrl.u32 %v6991, 7
        %v6993 = vsub.s32 %v6990, %v6992
        %v6994 = vrot.slane %v6986, %v6993
        %v6996 = vunpack.c.l.s4 1983009808
        %v6997 = vunpack.c.0.s8 %v6996
        %v6998 = vlaneseq
        %v6999 = vshrl.u32 %v6998, 7
        %v7000 = vsub.s32 %v6997, %v6999
        %v7001 = vrot.slane %v6987, %v7000
        %v7002 = vcombine.low %v6790, %v6829
        %v7003 = vcombine.high %v6790, %v6829
        %v7005 = vunpack.c.l.s4 1983009808
        %v7006 = vunpack.c.0.s8 %v7005
        %v7007 = vlaneseq
        %v7008 = vshrl.u32 %v7007, 7
        %v7009 = vsub.s32 %v7006, %v7008
        %v7010 = vrot.slane %v7002, %v7009
        %v7012 = vunpack.c.l.s4 1983009808
        %v7013 = vunpack.c.0.s8 %v7012
        %v7014 = vlaneseq
        %v7015 = vshrl.u32 %v7014, 7
        %v7016 = vsub.s32 %v7013, %v7015
        %v7017 = vrot.slane %v7003, %v7016
        %v7018 = vcombine.low %v6826, %v6832
        %v7019 = vcombine.high %v6826, %v6832
        %v7021 = vunpack.c.l.s4 1983009808
        %v7022 = vunpack.c.0.s8 %v7021
        %v7023 = vlaneseq
        %v7024 = vshrl.u32 %v7023, 7
        %v7025 = vsub.s32 %v7022, %v7024
        %v7026 = vrot.slane %v7018, %v7025
        %v7028 = vunpack.c.l.s4 1983009808
        %v7029 = vunpack.c.0.s8 %v7028
        %v7030 = vlaneseq
        %v7031 = vshrl.u32 %v7030, 7
        %v7032 = vsub.s32 %v7029, %v7031
        %v7033 = vrot.slane %v7019, %v7032
        %v7034 = vcombine.low %v6978, %v6994
        %v7035 = vcombine.high %v6978, %v6994
        %v7037 = vunpack.c.l.s4 1934713408
        %v7038 = vunpack.c.0.s8 %v7037
        %v7039 = vlaneseq
        %v7040 = vshrl.u32 %v7039, 7
        %v7041 = vsub.s32 %v7038, %v7040
        %v7042 = vrot.slane %v7034, %v7041
        %v7044 = vunpack.c.l.s4 1934713408
        %v7045 = vunpack.c.0.s8 %v7044
        %v7046 = vlaneseq
        %v7047 = vshrl.u32 %v7046, 7
        %v7048 = vsub.s32 %v7045, %v7047
        %v7049 = vrot.slane %v7035, %v7048
        %v7050 = vcombine.low %v6985, %v7001
        %v7051 = vcombine.high %v6985, %v7001
        %v7053 = vunpack.c.l.s4 1934713408
        %v7054 = vunpack.c.0.s8 %v7053
        %v7055 = vlaneseq
        %v7056 = vshrl.u32 %v7055, 7
        %v7057 = vsub.s32 %v7054, %v7056
        %v7058 = vrot.slane %v7050, %v7057
        %v7060 = vunpack.c.l.s4 1934713408
        %v7061 = vunpack.c.0.s8 %v7060
        %v7062 = vlaneseq
        %v7063 = vshrl.u32 %v7062, 7
        %v7064 = vsub.s32 %v7061, %v7063
        %v7065 = vrot.slane %v7051, %v7064
        %v7066 = vcombine.low %v7010, %v7026
        %v7067 = vcombine.high %v7010, %v7026
        %v7069 = vunpack.c.l.s4 1934713408
        %v7070 = vunpack.c.0.s8 %v7069
        %v7071 = vlaneseq
        %v7072 = vshrl.u32 %v7071, 7
        %v7073 = vsub.s32 %v7070, %v7072
        %v7074 = vrot.slane %v7066, %v7073
        %v7076 = vunpack.c.l.s4 1934713408
        %v7077 = vunpack.c.0.s8 %v7076
        %v7078 = vlaneseq
        %v7079 = vshrl.u32 %v7078, 7
        %v7080 = vsub.s32 %v7077, %v7079
        %v7081 = vrot.slane %v7067, %v7080
        %v7082 = vcombine.low %v7017, %v7033
        %v7083 = vcombine.high %v7017, %v7033
        %v7085 = vunpack.c.l.s4 1934713408
        %v7086 = vunpack.c.0.s8 %v7085
        %v7087 = vlaneseq
        %v7088 = vshrl.u32 %v7087, 7
        %v7089 = vsub.s32 %v7086, %v7088
        %v7090 = vrot.slane %v7082, %v7089
        %v7092 = vunpack.c.l.s4 1934713408
        %v7093 = vunpack.c.0.s8 %v7092
        %v7094 = vlaneseq
        %v7095 = vshrl.u32 %v7094, 7
        %v7096 = vsub.s32 %v7093, %v7095
        %v7097 = vrot.slane %v7083, %v7096
        %v7098 = vcombine.low %v7042, %v7074
        %v7099 = vcombine.high %v7042, %v7074
        %v7100 = vcombine.low %v7049, %v7081
        %v7101 = vcombine.high %v7049, %v7081
        %v7102 = vcombine.low %v7058, %v7090
        %v7103 = vcombine.high %v7058, %v7090
        %v7104 = vcombine.low %v7065, %v7097
        %v7105 = vcombine.high %v7065, %v7097
        %v7106 = vld [vmem:[#allocation3] sm:$0xf]
        %v7107 = vld [vmem:[#allocation3 + $0x4] sm:$0xf]
        %v7108 = vld [vmem:[#allocation3 + $0x8] sm:$0xf]
        %v7109 = vld [vmem:[#allocation3 + $0xc] sm:$0xf]
        %v7110 = vld [vmem:[#allocation3 + $0x10] sm:$0xf]
        %v7111 = vld [vmem:[#allocation3 + $0x14] sm:$0xf]
        %v7112 = vld [vmem:[#allocation3 + $0x18] sm:$0xf]
        %v7113 = vld [vmem:[#allocation3 + $0x1c] sm:$0xf]
        %v7114 = vld [vmem:[#allocation3 + $0x20] sm:$0xf]
        %v7115 = vld [vmem:[#allocation3 + $0x24] sm:$0xf]
        %v7116 = vld [vmem:[#allocation3 + $0x28] sm:$0xf]
        %v7117 = vld [vmem:[#allocation3 + $0x2c] sm:$0xf]
        %v7118 = vld [vmem:[#allocation3 + $0x30] sm:$0xf]
        %v7119 = vld [vmem:[#allocation3 + $0x34] sm:$0xf]
        %v7120 = vld [vmem:[#allocation3 + $0x38] sm:$0xf]
        %v7121 = vld [vmem:[#allocation3 + $0x3c] sm:$0xf]
        %v7122 = vld [vmem:[#allocation3 + $0x40] sm:$0xf]
        %v7123 = vld [vmem:[#allocation3 + $0x44] sm:$0xf]
        %v7124 = vld [vmem:[#allocation3 + $0x48] sm:$0xf]
        %v7125 = vld [vmem:[#allocation3 + $0x4c] sm:$0xf]
        %v7126 = vld [vmem:[#allocation3 + $0x50] sm:$0xf]
        %v7127 = vld [vmem:[#allocation3 + $0x54] sm:$0xf]
        %v7128 = vld [vmem:[#allocation3 + $0x58] sm:$0xf]
        %v7129 = vld [vmem:[#allocation3 + $0x5c] sm:$0xf]
        %v7130 = vld [vmem:[#allocation3 + $0x60] sm:$0xf]
        %v7131 = vld [vmem:[#allocation3 + $0x64] sm:$0xf]
        %v7132 = vld [vmem:[#allocation3 + $0x68] sm:$0xf]
        %v7133 = vld [vmem:[#allocation3 + $0x6c] sm:$0xf]
        %v7134 = vld [vmem:[#allocation3 + $0x70] sm:$0xf]
        %v7135 = vld [vmem:[#allocation3 + $0x74] sm:$0xf]
        %v7136 = vld [vmem:[#allocation3 + $0x78] sm:$0xf]
        %v7137 = vld [vmem:[#allocation3 + $0x7c] sm:$0xf]
        %v7142 = vunpack.c.l.b16 %v7106
        %v7143 = vunpack.c.l.b16 %v7107
        %v7144 = vunpack.c.l.b16 %v7108
        %v7145 = vunpack.c.l.b16 %v7109
        %v7146 = vpack.c.b16 %v7143, %v7142
        %v7147 = vpack.c.b16 %v7145, %v7144
        %v7149 = vsel %vm5440, %v4168, 0
        %v7152 = vsel %vm5440, %v7146, 0
        %v7155 = vsel %vm5440, %v7147, 0
        %7157 = vmatprep.subr.bf16.mxu0 0
        %7158 = vmatpush1.bf16.xpose.msra.mxu0 0
        %7159 = vmatprep.subr.bf16.mxu0 0
        %7160 = vmatpush1.bf16.xpose.msra.mxu0 0
        %7161 = vmatprep.subr.bf16.mxu0 0
        %7162 = vmatpush1.bf16.xpose.msra.mxu0 0
        %7163 = vmatprep.subr.bf16.mxu0 0
        %7164 = vmatpush1.bf16.xpose.msra.mxu0 0
        %7165 = vmatprep.subr.bf16.mxu0 0
        %7166 = vmatpush1.bf16.xpose.msra.mxu0 0
        %7167 = vmatprep.subr.bf16.mxu0 0
        %7168 = vmatpush1.bf16.xpose.msra.mxu0 0
        %7169 = vmatprep.subr.bf16.mxu0 0
        %7170 = vmatpush1.bf16.xpose.msra.mxu0 %v7155
        %7171 = vmatprep.subr.bf16.mxu0 0
        %7172 = vmatpush1.bf16.xpose.msra.mxu0 %v7152
        %7173 = vmatprep.subr.bf16.mxu0 0
        %7174 = vmatpush2.bf16.xpose.msra.mxu0 0
        %7175 = vmatprep.subr.bf16.mxu0 0
        %7176 = vmatpush2.bf16.xpose.msra.mxu0 0
        %7177 = vmatprep.subr.bf16.mxu0 0
        %7178 = vmatpush2.bf16.xpose.msra.mxu0 0
        %7179 = vmatprep.subr.bf16.mxu0 0
        %7180 = vmatpush2.bf16.xpose.msra.mxu0 0
        %7181 = vmatprep.subr.bf16.mxu0 0
        %7182 = vmatpush2.bf16.xpose.msra.mxu0 0
        %7183 = vmatprep.subr.bf16.mxu0 0
        %7184 = vmatpush2.bf16.xpose.msra.mxu0 0
        %7185 = vmatprep.subr.bf16.mxu0 0
        %7186 = vmatpush2.bf16.xpose.msra.mxu0 0
        %7187 = vmatprep.subr.bf16.mxu0 0
        %7188 = vmatpush2.bf16.xpose.msra.mxu0 0
        %7189 = vmatprep.mubr.bf16.mxu0 0
        %7190 = vmatmul.mubr.bf16.gmra.mxu0 %v7149
        %v7191 = vpop.f32.mrf.mxu0
        %v7192 = vadd.f32 %v6962, %v7191
        %v7193 = vpop.f32.mrf.mxu0
        %v7194 = vpop.f32.mrf.mxu0
        %v7195 = vadd.f32 %v7098, %v7194
        %v7196 = vpop.f32.mrf.mxu0
        %7197 = vdwg.mxu0
        %v7202 = vunpack.c.l.b16 %v7110
        %v7203 = vunpack.c.l.b16 %v7111
        %v7204 = vunpack.c.l.b16 %v7112
        %v7205 = vunpack.c.l.b16 %v7113
        %v7206 = vpack.c.b16 %v7203, %v7202
        %v7207 = vpack.c.b16 %v7205, %v7204
        %v7209 = vsel %vm5440, %v4169, 0
        %v7212 = vsel %vm5440, %v7206, 0
        %v7215 = vsel %vm5440, %v7207, 0
        %7217 = vmatprep.subr.bf16.mxu0 0
        %7218 = vmatpush1.bf16.xpose.msra.mxu0 0
        %7219 = vmatprep.subr.bf16.mxu0 0
        %7220 = vmatpush1.bf16.xpose.msra.mxu0 0
        %7221 = vmatprep.subr.bf16.mxu0 0
        %7222 = vmatpush1.bf16.xpose.msra.mxu0 0
        %7223 = vmatprep.subr.bf16.mxu0 0
        %7224 = vmatpush1.bf16.xpose.msra.mxu0 0
        %7225 = vmatprep.subr.bf16.mxu0 0
        %7226 = vmatpush1.bf16.xpose.msra.mxu0 0
        %7227 = vmatprep.subr.bf16.mxu0 0
        %7228 = vmatpush1.bf16.xpose.msra.mxu0 0
        %7229 = vmatprep.subr.bf16.mxu0 0
        %7230 = vmatpush1.bf16.xpose.msra.mxu0 %v7215
        %7231 = vmatprep.subr.bf16.mxu0 0
        %7232 = vmatpush1.bf16.xpose.msra.mxu0 %v7212
        %7233 = vmatprep.subr.bf16.mxu0 0
        %7234 = vmatpush2.bf16.xpose.msra.mxu0 0
        %7235 = vmatprep.subr.bf16.mxu0 0
        %7236 = vmatpush2.bf16.xpose.msra.mxu0 0
        %7237 = vmatprep.subr.bf16.mxu0 0
        %7238 = vmatpush2.bf16.xpose.msra.mxu0 0
        %7239 = vmatprep.subr.bf16.mxu0 0
        %7240 = vmatpush2.bf16.xpose.msra.mxu0 0
        %7241 = vmatprep.subr.bf16.mxu0 0
        %7242 = vmatpush2.bf16.xpose.msra.mxu0 0
        %7243 = vmatprep.subr.bf16.mxu0 0
        %7244 = vmatpush2.bf16.xpose.msra.mxu0 0
        %7245 = vmatprep.subr.bf16.mxu0 0
        %7246 = vmatpush2.bf16.xpose.msra.mxu0 0
        %7247 = vmatprep.subr.bf16.mxu0 0
        %7248 = vmatpush2.bf16.xpose.msra.mxu0 0
        %7249 = vmatprep.mubr.bf16.mxu0 0
        %7250 = vmatmul.mubr.bf16.gmra.mxu0 %v7209
        %v7251 = vpop.f32.mrf.mxu0
        %v7252 = vadd.f32 %v6963, %v7251
        %v7253 = vpop.f32.mrf.mxu0
        %v7254 = vpop.f32.mrf.mxu0
        %v7255 = vadd.f32 %v7099, %v7254
        %v7256 = vpop.f32.mrf.mxu0
        %7257 = vdwg.mxu0
        %v7262 = vunpack.c.l.b16 %v7114
        %v7263 = vunpack.c.l.b16 %v7115
        %v7264 = vunpack.c.l.b16 %v7116
        %v7265 = vunpack.c.l.b16 %v7117
        %v7266 = vpack.c.b16 %v7263, %v7262
        %v7267 = vpack.c.b16 %v7265, %v7264
        %v7269 = vsel %vm5440, %v4170, 0
        %v7272 = vsel %vm5440, %v7266, 0
        %v7275 = vsel %vm5440, %v7267, 0
        %7277 = vmatprep.subr.bf16.mxu0 0
        %7278 = vmatpush1.bf16.xpose.msra.mxu0 0
        %7279 = vmatprep.subr.bf16.mxu0 0
        %7280 = vmatpush1.bf16.xpose.msra.mxu0 0
        %7281 = vmatprep.subr.bf16.mxu0 0
        %7282 = vmatpush1.bf16.xpose.msra.mxu0 0
        %7283 = vmatprep.subr.bf16.mxu0 0
        %7284 = vmatpush1.bf16.xpose.msra.mxu0 0
        %7285 = vmatprep.subr.bf16.mxu0 0
        %7286 = vmatpush1.bf16.xpose.msra.mxu0 0
        %7287 = vmatprep.subr.bf16.mxu0 0
        %7288 = vmatpush1.bf16.xpose.msra.mxu0 0
        %7289 = vmatprep.subr.bf16.mxu0 0
        %7290 = vmatpush1.bf16.xpose.msra.mxu0 %v7275
        %7291 = vmatprep.subr.bf16.mxu0 0
        %7292 = vmatpush1.bf16.xpose.msra.mxu0 %v7272
        %7293 = vmatprep.subr.bf16.mxu0 0
        %7294 = vmatpush2.bf16.xpose.msra.mxu0 0
        %7295 = vmatprep.subr.bf16.mxu0 0
        %7296 = vmatpush2.bf16.xpose.msra.mxu0 0
        %7297 = vmatprep.subr.bf16.mxu0 0
        %7298 = vmatpush2.bf16.xpose.msra.mxu0 0
        %7299 = vmatprep.subr.bf16.mxu0 0
        %7300 = vmatpush2.bf16.xpose.msra.mxu0 0
        %7301 = vmatprep.subr.bf16.mxu0 0
        %7302 = vmatpush2.bf16.xpose.msra.mxu0 0
        %7303 = vmatprep.subr.bf16.mxu0 0
        %7304 = vmatpush2.bf16.xpose.msra.mxu0 0
        %7305 = vmatprep.subr.bf16.mxu0 0
        %7306 = vmatpush2.bf16.xpose.msra.mxu0 0
        %7307 = vmatprep.subr.bf16.mxu0 0
        %7308 = vmatpush2.bf16.xpose.msra.mxu0 0
        %7309 = vmatprep.mubr.bf16.mxu0 0
        %7310 = vmatmul.mubr.bf16.gmra.mxu0 %v7269
        %v7311 = vpop.f32.mrf.mxu0
        %v7312 = vadd.f32 %v6964, %v7311
        %v7313 = vpop.f32.mrf.mxu0
        %v7314 = vpop.f32.mrf.mxu0
        %v7315 = vadd.f32 %v7100, %v7314
        %v7316 = vpop.f32.mrf.mxu0
        %7317 = vdwg.mxu0
        %v7322 = vunpack.c.l.b16 %v7118
        %v7323 = vunpack.c.l.b16 %v7119
        %v7324 = vunpack.c.l.b16 %v7120
        %v7325 = vunpack.c.l.b16 %v7121
        %v7326 = vpack.c.b16 %v7323, %v7322
        %v7327 = vpack.c.b16 %v7325, %v7324
        %v7329 = vsel %vm5440, %v4171, 0
        %v7332 = vsel %vm5440, %v7326, 0
        %v7335 = vsel %vm5440, %v7327, 0
        %7337 = vmatprep.subr.bf16.mxu0 0
        %7338 = vmatpush1.bf16.xpose.msra.mxu0 0
        %7339 = vmatprep.subr.bf16.mxu0 0
        %7340 = vmatpush1.bf16.xpose.msra.mxu0 0
        %7341 = vmatprep.subr.bf16.mxu0 0
        %7342 = vmatpush1.bf16.xpose.msra.mxu0 0
        %7343 = vmatprep.subr.bf16.mxu0 0
        %7344 = vmatpush1.bf16.xpose.msra.mxu0 0
        %7345 = vmatprep.subr.bf16.mxu0 0
        %7346 = vmatpush1.bf16.xpose.msra.mxu0 0
        %7347 = vmatprep.subr.bf16.mxu0 0
        %7348 = vmatpush1.bf16.xpose.msra.mxu0 0
        %7349 = vmatprep.subr.bf16.mxu0 0
        %7350 = vmatpush1.bf16.xpose.msra.mxu0 %v7335
        %7351 = vmatprep.subr.bf16.mxu0 0
        %7352 = vmatpush1.bf16.xpose.msra.mxu0 %v7332
        %7353 = vmatprep.subr.bf16.mxu0 0
        %7354 = vmatpush2.bf16.xpose.msra.mxu0 0
        %7355 = vmatprep.subr.bf16.mxu0 0
        %7356 = vmatpush2.bf16.xpose.msra.mxu0 0
        %7357 = vmatprep.subr.bf16.mxu0 0
        %7358 = vmatpush2.bf16.xpose.msra.mxu0 0
        %7359 = vmatprep.subr.bf16.mxu0 0
        %7360 = vmatpush2.bf16.xpose.msra.mxu0 0
        %7361 = vmatprep.subr.bf16.mxu0 0
        %7362 = vmatpush2.bf16.xpose.msra.mxu0 0
        %7363 = vmatprep.subr.bf16.mxu0 0
        %7364 = vmatpush2.bf16.xpose.msra.mxu0 0
        %7365 = vmatprep.subr.bf16.mxu0 0
        %7366 = vmatpush2.bf16.xpose.msra.mxu0 0
        %7367 = vmatprep.subr.bf16.mxu0 0
        %7368 = vmatpush2.bf16.xpose.msra.mxu0 0
        %7369 = vmatprep.mubr.bf16.mxu0 0
        %7370 = vmatmul.mubr.bf16.gmra.mxu0 %v7329
        %v7371 = vpop.f32.mrf.mxu0
        %v7372 = vadd.f32 %v6965, %v7371
        %v7373 = vpop.f32.mrf.mxu0
        %v7374 = vpop.f32.mrf.mxu0
        %v7375 = vadd.f32 %v7101, %v7374
        %v7376 = vpop.f32.mrf.mxu0
        %7377 = vdwg.mxu0
        %v7382 = vunpack.c.l.b16 %v7122
        %v7383 = vunpack.c.l.b16 %v7123
        %v7384 = vunpack.c.l.b16 %v7124
        %v7385 = vunpack.c.l.b16 %v7125
        %v7386 = vpack.c.b16 %v7383, %v7382
        %v7387 = vpack.c.b16 %v7385, %v7384
        %v7389 = vsel %vm5440, %v4172, 0
        %v7392 = vsel %vm5440, %v7386, 0
        %v7395 = vsel %vm5440, %v7387, 0
        %7397 = vmatprep.subr.bf16.mxu0 0
        %7398 = vmatpush1.bf16.xpose.msra.mxu0 0
        %7399 = vmatprep.subr.bf16.mxu0 0
        %7400 = vmatpush1.bf16.xpose.msra.mxu0 0
        %7401 = vmatprep.subr.bf16.mxu0 0
        %7402 = vmatpush1.bf16.xpose.msra.mxu0 0
        %7403 = vmatprep.subr.bf16.mxu0 0
        %7404 = vmatpush1.bf16.xpose.msra.mxu0 0
        %7405 = vmatprep.subr.bf16.mxu0 0
        %7406 = vmatpush1.bf16.xpose.msra.mxu0 0
        %7407 = vmatprep.subr.bf16.mxu0 0
        %7408 = vmatpush1.bf16.xpose.msra.mxu0 0
        %7409 = vmatprep.subr.bf16.mxu0 0
        %7410 = vmatpush1.bf16.xpose.msra.mxu0 %v7395
        %7411 = vmatprep.subr.bf16.mxu0 0
        %7412 = vmatpush1.bf16.xpose.msra.mxu0 %v7392
        %7413 = vmatprep.subr.bf16.mxu0 0
        %7414 = vmatpush2.bf16.xpose.msra.mxu0 0
        %7415 = vmatprep.subr.bf16.mxu0 0
        %7416 = vmatpush2.bf16.xpose.msra.mxu0 0
        %7417 = vmatprep.subr.bf16.mxu0 0
        %7418 = vmatpush2.bf16.xpose.msra.mxu0 0
        %7419 = vmatprep.subr.bf16.mxu0 0
        %7420 = vmatpush2.bf16.xpose.msra.mxu0 0
        %7421 = vmatprep.subr.bf16.mxu0 0
        %7422 = vmatpush2.bf16.xpose.msra.mxu0 0
        %7423 = vmatprep.subr.bf16.mxu0 0
        %7424 = vmatpush2.bf16.xpose.msra.mxu0 0
        %7425 = vmatprep.subr.bf16.mxu0 0
        %7426 = vmatpush2.bf16.xpose.msra.mxu0 0
        %7427 = vmatprep.subr.bf16.mxu0 0
        %7428 = vmatpush2.bf16.xpose.msra.mxu0 0
        %7429 = vmatprep.mubr.bf16.mxu0 0
        %7430 = vmatmul.mubr.bf16.gmra.mxu0 %v7389
        %v7431 = vpop.f32.mrf.mxu0
        %v7432 = vadd.f32 %v6966, %v7431
        %v7433 = vpop.f32.mrf.mxu0
        %v7434 = vpop.f32.mrf.mxu0
        %v7435 = vadd.f32 %v7102, %v7434
        %v7436 = vpop.f32.mrf.mxu0
        %7437 = vdwg.mxu0
        %v7442 = vunpack.c.l.b16 %v7126
        %v7443 = vunpack.c.l.b16 %v7127
        %v7444 = vunpack.c.l.b16 %v7128
        %v7445 = vunpack.c.l.b16 %v7129
        %v7446 = vpack.c.b16 %v7443, %v7442
        %v7447 = vpack.c.b16 %v7445, %v7444
        %v7449 = vsel %vm5440, %v4173, 0
        %v7452 = vsel %vm5440, %v7446, 0
        %v7455 = vsel %vm5440, %v7447, 0
        %7457 = vmatprep.subr.bf16.mxu0 0
        %7458 = vmatpush1.bf16.xpose.msra.mxu0 0
        %7459 = vmatprep.subr.bf16.mxu0 0
        %7460 = vmatpush1.bf16.xpose.msra.mxu0 0
        %7461 = vmatprep.subr.bf16.mxu0 0
        %7462 = vmatpush1.bf16.xpose.msra.mxu0 0
        %7463 = vmatprep.subr.bf16.mxu0 0
        %7464 = vmatpush1.bf16.xpose.msra.mxu0 0
        %7465 = vmatprep.subr.bf16.mxu0 0
        %7466 = vmatpush1.bf16.xpose.msra.mxu0 0
        %7467 = vmatprep.subr.bf16.mxu0 0
        %7468 = vmatpush1.bf16.xpose.msra.mxu0 0
        %7469 = vmatprep.subr.bf16.mxu0 0
        %7470 = vmatpush1.bf16.xpose.msra.mxu0 %v7455
        %7471 = vmatprep.subr.bf16.mxu0 0
        %7472 = vmatpush1.bf16.xpose.msra.mxu0 %v7452
        %7473 = vmatprep.subr.bf16.mxu0 0
        %7474 = vmatpush2.bf16.xpose.msra.mxu0 0
        %7475 = vmatprep.subr.bf16.mxu0 0
        %7476 = vmatpush2.bf16.xpose.msra.mxu0 0
        %7477 = vmatprep.subr.bf16.mxu0 0
        %7478 = vmatpush2.bf16.xpose.msra.mxu0 0
        %7479 = vmatprep.subr.bf16.mxu0 0
        %7480 = vmatpush2.bf16.xpose.msra.mxu0 0
        %7481 = vmatprep.subr.bf16.mxu0 0
        %7482 = vmatpush2.bf16.xpose.msra.mxu0 0
        %7483 = vmatprep.subr.bf16.mxu0 0
        %7484 = vmatpush2.bf16.xpose.msra.mxu0 0
        %7485 = vmatprep.subr.bf16.mxu0 0
        %7486 = vmatpush2.bf16.xpose.msra.mxu0 0
        %7487 = vmatprep.subr.bf16.mxu0 0
        %7488 = vmatpush2.bf16.xpose.msra.mxu0 0
        %7489 = vmatprep.mubr.bf16.mxu0 0
        %7490 = vmatmul.mubr.bf16.gmra.mxu0 %v7449
        %v7491 = vpop.f32.mrf.mxu0
        %v7492 = vadd.f32 %v6967, %v7491
        %v7493 = vpop.f32.mrf.mxu0
        %v7494 = vpop.f32.mrf.mxu0
        %v7495 = vadd.f32 %v7103, %v7494
        %v7496 = vpop.f32.mrf.mxu0
        %7497 = vdwg.mxu0
        %v7502 = vunpack.c.l.b16 %v7130
        %v7503 = vunpack.c.l.b16 %v7131
        %v7504 = vunpack.c.l.b16 %v7132
        %v7505 = vunpack.c.l.b16 %v7133
        %v7506 = vpack.c.b16 %v7503, %v7502
        %v7507 = vpack.c.b16 %v7505, %v7504
        %v7509 = vsel %vm5440, %v4174, 0
        %v7512 = vsel %vm5440, %v7506, 0
        %v7515 = vsel %vm5440, %v7507, 0
        %7517 = vmatprep.subr.bf16.mxu0 0
        %7518 = vmatpush1.bf16.xpose.msra.mxu0 0
        %7519 = vmatprep.subr.bf16.mxu0 0
        %7520 = vmatpush1.bf16.xpose.msra.mxu0 0
        %7521 = vmatprep.subr.bf16.mxu0 0
        %7522 = vmatpush1.bf16.xpose.msra.mxu0 0
        %7523 = vmatprep.subr.bf16.mxu0 0
        %7524 = vmatpush1.bf16.xpose.msra.mxu0 0
        %7525 = vmatprep.subr.bf16.mxu0 0
        %7526 = vmatpush1.bf16.xpose.msra.mxu0 0
        %7527 = vmatprep.subr.bf16.mxu0 0
        %7528 = vmatpush1.bf16.xpose.msra.mxu0 0
        %7529 = vmatprep.subr.bf16.mxu0 0
        %7530 = vmatpush1.bf16.xpose.msra.mxu0 %v7515
        %7531 = vmatprep.subr.bf16.mxu0 0
        %7532 = vmatpush1.bf16.xpose.msra.mxu0 %v7512
        %7533 = vmatprep.subr.bf16.mxu0 0
        %7534 = vmatpush2.bf16.xpose.msra.mxu0 0
        %7535 = vmatprep.subr.bf16.mxu0 0
        %7536 = vmatpush2.bf16.xpose.msra.mxu0 0
        %7537 = vmatprep.subr.bf16.mxu0 0
        %7538 = vmatpush2.bf16.xpose.msra.mxu0 0
        %7539 = vmatprep.subr.bf16.mxu0 0
        %7540 = vmatpush2.bf16.xpose.msra.mxu0 0
        %7541 = vmatprep.subr.bf16.mxu0 0
        %7542 = vmatpush2.bf16.xpose.msra.mxu0 0
        %7543 = vmatprep.subr.bf16.mxu0 0
        %7544 = vmatpush2.bf16.xpose.msra.mxu0 0
        %7545 = vmatprep.subr.bf16.mxu0 0
        %7546 = vmatpush2.bf16.xpose.msra.mxu0 0
        %7547 = vmatprep.subr.bf16.mxu0 0
        %7548 = vmatpush2.bf16.xpose.msra.mxu0 0
        %7549 = vmatprep.mubr.bf16.mxu0 0
        %7550 = vmatmul.mubr.bf16.gmra.mxu0 %v7509
        %v7551 = vpop.f32.mrf.mxu0
        %v7552 = vadd.f32 %v6968, %v7551
        %v7553 = vpop.f32.mrf.mxu0
        %v7554 = vpop.f32.mrf.mxu0
        %v7555 = vadd.f32 %v7104, %v7554
        %v7556 = vpop.f32.mrf.mxu0
        %7557 = vdwg.mxu0
        %v7562 = vunpack.c.l.b16 %v7134
        %v7563 = vunpack.c.l.b16 %v7135
        %v7564 = vunpack.c.l.b16 %v7136
        %v7565 = vunpack.c.l.b16 %v7137
        %v7566 = vpack.c.b16 %v7563, %v7562
        %v7567 = vpack.c.b16 %v7565, %v7564
        %v7569 = vsel %vm5440, %v4175, 0
        %v7572 = vsel %vm5440, %v7566, 0
        %v7575 = vsel %vm5440, %v7567, 0
        %7577 = vmatprep.subr.bf16.mxu0 0
        %7578 = vmatpush1.bf16.xpose.msra.mxu0 0
        %7579 = vmatprep.subr.bf16.mxu0 0
        %7580 = vmatpush1.bf16.xpose.msra.mxu0 0
        %7581 = vmatprep.subr.bf16.mxu0 0
        %7582 = vmatpush1.bf16.xpose.msra.mxu0 0
        %7583 = vmatprep.subr.bf16.mxu0 0
        %7584 = vmatpush1.bf16.xpose.msra.mxu0 0
        %7585 = vmatprep.subr.bf16.mxu0 0
        %7586 = vmatpush1.bf16.xpose.msra.mxu0 0
        %7587 = vmatprep.subr.bf16.mxu0 0
        %7588 = vmatpush1.bf16.xpose.msra.mxu0 0
        %7589 = vmatprep.subr.bf16.mxu0 0
        %7590 = vmatpush1.bf16.xpose.msra.mxu0 %v7575
        %7591 = vmatprep.subr.bf16.mxu0 0
        %7592 = vmatpush1.bf16.xpose.msra.mxu0 %v7572
        %7593 = vmatprep.subr.bf16.mxu0 0
        %7594 = vmatpush2.bf16.xpose.msra.mxu0 0
        %7595 = vmatprep.subr.bf16.mxu0 0
        %7596 = vmatpush2.bf16.xpose.msra.mxu0 0
        %7597 = vmatprep.subr.bf16.mxu0 0
        %7598 = vmatpush2.bf16.xpose.msra.mxu0 0
        %7599 = vmatprep.subr.bf16.mxu0 0
        %7600 = vmatpush2.bf16.xpose.msra.mxu0 0
        %7601 = vmatprep.subr.bf16.mxu0 0
        %7602 = vmatpush2.bf16.xpose.msra.mxu0 0
        %7603 = vmatprep.subr.bf16.mxu0 0
        %7604 = vmatpush2.bf16.xpose.msra.mxu0 0
        %7605 = vmatprep.subr.bf16.mxu0 0
        %7606 = vmatpush2.bf16.xpose.msra.mxu0 0
        %7607 = vmatprep.subr.bf16.mxu0 0
        %7608 = vmatpush2.bf16.xpose.msra.mxu0 0
        %7609 = vmatprep.mubr.bf16.mxu0 0
        %7610 = vmatmul.mubr.bf16.gmra.mxu0 %v7569
        %v7611 = vpop.f32.mrf.mxu0
        %v7612 = vadd.f32 %v6969, %v7611
        %v7613 = vpop.f32.mrf.mxu0
        %v7614 = vpop.f32.mrf.mxu0
        %v7615 = vadd.f32 %v7105, %v7614
        %v7616 = vpop.f32.mrf.mxu0
        %7617 = vdwg.mxu0
        %v7618 = vsel %vm5440, %v7192, -inf
        %7619 = vmax.xlane.f32.xlu0 %v7618
        %v7620 = vpop.xlane.xlu0 %7619
        %v7621 = vsel %vm5440, %v7195, -inf
        %7622 = vmax.xlane.f32.xlu0 %v7621
        %v7623 = vpop.xlane.xlu0 %7622
        %v7624 = vsel %vm5440, %v7252, -inf
        %7625 = vmax.xlane.f32.xlu0 %v7624
        %v7626 = vpop.xlane.xlu0 %7625
        %v7627 = vsel %vm5440, %v7255, -inf
        %7628 = vmax.xlane.f32.xlu0 %v7627
        %v7629 = vpop.xlane.xlu0 %7628
        %v7630 = vsel %vm5440, %v7312, -inf
        %7631 = vmax.xlane.f32.xlu0 %v7630
        %v7632 = vpop.xlane.xlu0 %7631
        %v7633 = vsel %vm5440, %v7315, -inf
        %7634 = vmax.xlane.f32.xlu0 %v7633
        %v7635 = vpop.xlane.xlu0 %7634
        %v7636 = vsel %vm5440, %v7372, -inf
        %7637 = vmax.xlane.f32.xlu0 %v7636
        %v7638 = vpop.xlane.xlu0 %7637
        %v7639 = vsel %vm5440, %v7375, -inf
        %7640 = vmax.xlane.f32.xlu0 %v7639
        %v7641 = vpop.xlane.xlu0 %7640
        %v7642 = vsel %vm5440, %v7432, -inf
        %7643 = vmax.xlane.f32.xlu0 %v7642
        %v7644 = vpop.xlane.xlu0 %7643
        %v7645 = vsel %vm5440, %v7435, -inf
        %7646 = vmax.xlane.f32.xlu0 %v7645
        %v7647 = vpop.xlane.xlu0 %7646
        %v7648 = vsel %vm5440, %v7492, -inf
        %7649 = vmax.xlane.f32.xlu0 %v7648
        %v7650 = vpop.xlane.xlu0 %7649
        %v7651 = vsel %vm5440, %v7495, -inf
        %7652 = vmax.xlane.f32.xlu0 %v7651
        %v7653 = vpop.xlane.xlu0 %7652
        %v7654 = vsel %vm5440, %v7552, -inf
        %7655 = vmax.xlane.f32.xlu0 %v7654
        %v7656 = vpop.xlane.xlu0 %7655
        %v7657 = vsel %vm5440, %v7555, -inf
        %7658 = vmax.xlane.f32.xlu0 %v7657
        %v7659 = vpop.xlane.xlu0 %7658
        %v7660 = vsel %vm5440, %v7612, -inf
        %7661 = vmax.xlane.f32.xlu0 %v7660
        %v7662 = vpop.xlane.xlu0 %7661
        %v7663 = vsel %vm5440, %v7615, -inf
        %7664 = vmax.xlane.f32.xlu0 %v7663
        %v7665 = vpop.xlane.xlu0 %7664
        %v7666 = vsub.f32 %v7192, %v7620
        %v7667 = vsub.f32 %v7195, %v7623
        %v7668 = vsub.f32 %v7252, %v7626
        %v7669 = vsub.f32 %v7255, %v7629
        %v7670 = vsub.f32 %v7312, %v7632
        %v7671 = vsub.f32 %v7315, %v7635
        %v7672 = vsub.f32 %v7372, %v7638
        %v7673 = vsub.f32 %v7375, %v7641
        %v7674 = vsub.f32 %v7432, %v7644
        %v7675 = vsub.f32 %v7435, %v7647
        %v7676 = vsub.f32 %v7492, %v7650
        %v7677 = vsub.f32 %v7495, %v7653
        %v7678 = vsub.f32 %v7552, %v7656
        %v7679 = vsub.f32 %v7555, %v7659
        %v7680 = vsub.f32 %v7612, %v7662
        %v7681 = vsub.f32 %v7615, %v7665
        %v7682 = vmul.f32 %v7666, 1.442695
        %v7683 = vpow.pop %v7682
        %v7684 = vmul.f32 %v7667, 1.442695
        %v7685 = vpow.pop %v7684
        %v7686 = vmul.f32 %v7668, 1.442695
        %v7687 = vpow.pop %v7686
        %v7688 = vmul.f32 %v7669, 1.442695
        %v7689 = vpow.pop %v7688
        %v7690 = vmul.f32 %v7670, 1.442695
        %v7691 = vpow.pop %v7690
        %v7692 = vmul.f32 %v7671, 1.442695
        %v7693 = vpow.pop %v7692
        %v7694 = vmul.f32 %v7672, 1.442695
        %v7695 = vpow.pop %v7694
        %v7696 = vmul.f32 %v7673, 1.442695
        %v7697 = vpow.pop %v7696
        %v7698 = vmul.f32 %v7674, 1.442695
        %v7699 = vpow.pop %v7698
        %v7700 = vmul.f32 %v7675, 1.442695
        %v7701 = vpow.pop %v7700
        %v7702 = vmul.f32 %v7676, 1.442695
        %v7703 = vpow.pop %v7702
        %v7704 = vmul.f32 %v7677, 1.442695
        %v7705 = vpow.pop %v7704
        %v7706 = vmul.f32 %v7678, 1.442695
        %v7707 = vpow.pop %v7706
        %v7708 = vmul.f32 %v7679, 1.442695
        %v7709 = vpow.pop %v7708
        %v7710 = vmul.f32 %v7680, 1.442695
        %v7711 = vpow.pop %v7710
        %v7712 = vmul.f32 %v7681, 1.442695
        %v7713 = vpow.pop %v7712
        %v7714 = vsel %vm5440, %v7683, 0.0
        %7715 = vadd.xlane.f32.xlu0 %v7714
        %v7716 = vpop.xlane.xlu0 %7715
        %v7717 = vsel %vm5440, %v7685, 0.0
        %7718 = vadd.xlane.f32.xlu0 %v7717
        %v7719 = vpop.xlane.xlu0 %7718
        %v7720 = vsel %vm5440, %v7687, 0.0
        %7721 = vadd.xlane.f32.xlu0 %v7720
        %v7722 = vpop.xlane.xlu0 %7721
        %v7723 = vsel %vm5440, %v7689, 0.0
        %7724 = vadd.xlane.f32.xlu0 %v7723
        %v7725 = vpop.xlane.xlu0 %7724
        %v7726 = vsel %vm5440, %v7691, 0.0
        %7727 = vadd.xlane.f32.xlu0 %v7726
        %v7728 = vpop.xlane.xlu0 %7727
        %v7729 = vsel %vm5440, %v7693, 0.0
        %7730 = vadd.xlane.f32.xlu0 %v7729
        %v7731 = vpop.xlane.xlu0 %7730
        %v7732 = vsel %vm5440, %v7695, 0.0
        %7733 = vadd.xlane.f32.xlu0 %v7732
        %v7734 = vpop.xlane.xlu0 %7733
        %v7735 = vsel %vm5440, %v7697, 0.0
        %7736 = vadd.xlane.f32.xlu0 %v7735
        %v7737 = vpop.xlane.xlu0 %7736
        %v7738 = vsel %vm5440, %v7699, 0.0
        %7739 = vadd.xlane.f32.xlu0 %v7738
        %v7740 = vpop.xlane.xlu0 %7739
        %v7741 = vsel %vm5440, %v7701, 0.0
        %7742 = vadd.xlane.f32.xlu0 %v7741
        %v7743 = vpop.xlane.xlu0 %7742
        %v7744 = vsel %vm5440, %v7703, 0.0
        %7745 = vadd.xlane.f32.xlu0 %v7744
        %v7746 = vpop.xlane.xlu0 %7745
        %v7747 = vsel %vm5440, %v7705, 0.0
        %7748 = vadd.xlane.f32.xlu0 %v7747
        %v7749 = vpop.xlane.xlu0 %7748
        %v7750 = vsel %vm5440, %v7707, 0.0
        %7751 = vadd.xlane.f32.xlu0 %v7750
        %v7752 = vpop.xlane.xlu0 %7751
        %v7753 = vsel %vm5440, %v7709, 0.0
        %7754 = vadd.xlane.f32.xlu0 %v7753
        %v7755 = vpop.xlane.xlu0 %7754
        %v7756 = vsel %vm5440, %v7711, 0.0
        %7757 = vadd.xlane.f32.xlu0 %v7756
        %v7758 = vpop.xlane.xlu0 %7757
        %v7759 = vsel %vm5440, %v7713, 0.0
        %7760 = vadd.xlane.f32.xlu0 %v7759
        %v7761 = vpop.xlane.xlu0 %7760
        %v7762 = vrcp.pop %v7716
        %v7763 = vmul.f32 1.0, %v7762
        %v7764 = vrcp.pop %v7719
        %v7765 = vmul.f32 1.0, %v7764
        %v7766 = vrcp.pop %v7722
        %v7767 = vmul.f32 1.0, %v7766
        %v7768 = vrcp.pop %v7725
        %v7769 = vmul.f32 1.0, %v7768
        %v7770 = vrcp.pop %v7728
        %v7771 = vmul.f32 1.0, %v7770
        %v7772 = vrcp.pop %v7731
        %v7773 = vmul.f32 1.0, %v7772
        %v7774 = vrcp.pop %v7734
        %v7775 = vmul.f32 1.0, %v7774
        %v7776 = vrcp.pop %v7737
        %v7777 = vmul.f32 1.0, %v7776
        %v7778 = vrcp.pop %v7740
        %v7779 = vmul.f32 1.0, %v7778
        %v7780 = vrcp.pop %v7743
        %v7781 = vmul.f32 1.0, %v7780
        %v7782 = vrcp.pop %v7746
        %v7783 = vmul.f32 1.0, %v7782
        %v7784 = vrcp.pop %v7749
        %v7785 = vmul.f32 1.0, %v7784
        %v7786 = vrcp.pop %v7752
        %v7787 = vmul.f32 1.0, %v7786
        %v7788 = vrcp.pop %v7755
        %v7789 = vmul.f32 1.0, %v7788
        %v7790 = vrcp.pop %v7758
        %v7791 = vmul.f32 1.0, %v7790
        %v7792 = vrcp.pop %v7761
        %v7793 = vmul.f32 1.0, %v7792
        %v7794 = vmul.f32 %v7683, %v7763
        %v7795 = vmul.f32 %v7685, %v7765
        %v7796 = vmul.f32 %v7687, %v7767
        %v7797 = vmul.f32 %v7689, %v7769
        %v7798 = vmul.f32 %v7691, %v7771
        %v7799 = vmul.f32 %v7693, %v7773
        %v7800 = vmul.f32 %v7695, %v7775
        %v7801 = vmul.f32 %v7697, %v7777
        %v7802 = vmul.f32 %v7699, %v7779
        %v7803 = vmul.f32 %v7701, %v7781
        %v7804 = vmul.f32 %v7703, %v7783
        %v7805 = vmul.f32 %v7705, %v7785
        %v7806 = vmul.f32 %v7707, %v7787
        %v7807 = vmul.f32 %v7709, %v7789
        %v7808 = vmul.f32 %v7711, %v7791
        %v7809 = vmul.f32 %v7713, %v7793
        %v7810 = vpack.c.bf16 %v7795, %v7794
        %v7811 = vpack.c.bf16 %v7797, %v7796
        %v7812 = vpack.c.bf16 %v7799, %v7798
        %v7813 = vpack.c.bf16 %v7801, %v7800
        %v7814 = vpack.c.bf16 %v7803, %v7802
        %v7815 = vpack.c.bf16 %v7805, %v7804
        %v7816 = vpack.c.bf16 %v7807, %v7806
        %v7817 = vpack.c.bf16 %v7809, %v7808
        %v7818 = vld [vmem:[#allocation4] sm:$0xf]
        %v7819 = vld [vmem:[#allocation4 + $0x4] sm:$0xf]
        %v7820 = vld [vmem:[#allocation4 + $0x8] sm:$0xf]
        %v7821 = vld [vmem:[#allocation4 + $0xc] sm:$0xf]
        %v7822 = vld [vmem:[#allocation4 + $0x10] sm:$0xf]
        %v7823 = vld [vmem:[#allocation4 + $0x14] sm:$0xf]
        %v7824 = vld [vmem:[#allocation4 + $0x18] sm:$0xf]
        %v7825 = vld [vmem:[#allocation4 + $0x1c] sm:$0xf]
        %v7826 = vld [vmem:[#allocation4 + $0x20] sm:$0xf]
        %v7827 = vld [vmem:[#allocation4 + $0x24] sm:$0xf]
        %v7828 = vld [vmem:[#allocation4 + $0x28] sm:$0xf]
        %v7829 = vld [vmem:[#allocation4 + $0x2c] sm:$0xf]
        %v7830 = vld [vmem:[#allocation4 + $0x30] sm:$0xf]
        %v7831 = vld [vmem:[#allocation4 + $0x34] sm:$0xf]
        %v7832 = vld [vmem:[#allocation4 + $0x38] sm:$0xf]
        %v7833 = vld [vmem:[#allocation4 + $0x3c] sm:$0xf]
        %v7834 = vld [vmem:[#allocation4 + $0x40] sm:$0xf]
        %v7835 = vld [vmem:[#allocation4 + $0x44] sm:$0xf]
        %v7836 = vld [vmem:[#allocation4 + $0x48] sm:$0xf]
        %v7837 = vld [vmem:[#allocation4 + $0x4c] sm:$0xf]
        %v7838 = vld [vmem:[#allocation4 + $0x50] sm:$0xf]
        %v7839 = vld [vmem:[#allocation4 + $0x54] sm:$0xf]
        %v7840 = vld [vmem:[#allocation4 + $0x58] sm:$0xf]
        %v7841 = vld [vmem:[#allocation4 + $0x5c] sm:$0xf]
        %v7842 = vld [vmem:[#allocation4 + $0x60] sm:$0xf]
        %v7843 = vld [vmem:[#allocation4 + $0x64] sm:$0xf]
        %v7844 = vld [vmem:[#allocation4 + $0x68] sm:$0xf]
        %v7845 = vld [vmem:[#allocation4 + $0x6c] sm:$0xf]
        %v7846 = vld [vmem:[#allocation4 + $0x70] sm:$0xf]
        %v7847 = vld [vmem:[#allocation4 + $0x74] sm:$0xf]
        %v7848 = vld [vmem:[#allocation4 + $0x78] sm:$0xf]
        %v7849 = vld [vmem:[#allocation4 + $0x7c] sm:$0xf]
        %v7854 = vunpack.c.l.b16 %v7818
        %v7855 = vunpack.c.l.b16 %v7819
        %v7856 = vunpack.c.l.b16 %v7820
        %v7857 = vunpack.c.l.b16 %v7821
        %v7858 = vpack.c.b16 %v7855, %v7854
        %v7859 = vpack.c.b16 %v7857, %v7856
        %v7863 = vsel %vm5440, %v7810, 0
        %7865 = vmatprep.subr.bf16.mxu0 0
        %7866 = vmatpush1.bf16.msra.mxu0 0
        %7867 = vmatprep.subr.bf16.mxu0 0
        %7868 = vmatpush1.bf16.msra.mxu0 0
        %7869 = vmatprep.subr.bf16.mxu0 0
        %7870 = vmatpush1.bf16.msra.mxu0 0
        %7871 = vmatprep.subr.bf16.mxu0 0
        %7872 = vmatpush1.bf16.msra.mxu0 0
        %7873 = vmatprep.subr.bf16.mxu0 0
        %7874 = vmatpush1.bf16.msra.mxu0 0
        %7875 = vmatprep.subr.bf16.mxu0 0
        %7876 = vmatpush1.bf16.msra.mxu0 0
        %7877 = vmatprep.subr.bf16.mxu0 0
        %7878 = vmatpush1.bf16.msra.mxu0 %v7859
        %7879 = vmatprep.subr.bf16.mxu0 0
        %7880 = vmatpush1.bf16.msra.mxu0 %v7858
        %7881 = vmatprep.subr.bf16.mxu0 0
        %7882 = vmatpush2.bf16.msra.mxu0 0
        %7883 = vmatprep.subr.bf16.mxu0 0
        %7884 = vmatpush2.bf16.msra.mxu0 0
        %7885 = vmatprep.subr.bf16.mxu0 0
        %7886 = vmatpush2.bf16.msra.mxu0 0
        %7887 = vmatprep.subr.bf16.mxu0 0
        %7888 = vmatpush2.bf16.msra.mxu0 0
        %7889 = vmatprep.subr.bf16.mxu0 0
        %7890 = vmatpush2.bf16.msra.mxu0 0
        %7891 = vmatprep.subr.bf16.mxu0 0
        %7892 = vmatpush2.bf16.msra.mxu0 0
        %7893 = vmatprep.subr.bf16.mxu0 0
        %7894 = vmatpush2.bf16.msra.mxu0 0
        %7895 = vmatprep.subr.bf16.mxu0 0
        %7896 = vmatpush2.bf16.msra.mxu0 0
        %7897 = vmatprep.mubr.bf16.mxu0 0
        %7898 = vmatmul.mubr.bf16.gmra.mxu0 %v7863
        %v7899 = vpop.f32.mrf.mxu0
        %v7900 = vadd.f32 0.0, %v7899
        %v7901 = vpop.f32.mrf.mxu0
        %v7902 = vpop.f32.mrf.mxu0
        %v7903 = vadd.f32 0.0, %v7902
        %v7904 = vpop.f32.mrf.mxu0
        %7905 = vdwg.mxu0
        %v7910 = vunpack.c.l.b16 %v7822
        %v7911 = vunpack.c.l.b16 %v7823
        %v7912 = vunpack.c.l.b16 %v7824
        %v7913 = vunpack.c.l.b16 %v7825
        %v7914 = vpack.c.b16 %v7911, %v7910
        %v7915 = vpack.c.b16 %v7913, %v7912
        %v7919 = vsel %vm5440, %v7811, 0
        %7921 = vmatprep.subr.bf16.mxu0 0
        %7922 = vmatpush1.bf16.msra.mxu0 0
        %7923 = vmatprep.subr.bf16.mxu0 0
        %7924 = vmatpush1.bf16.msra.mxu0 0
        %7925 = vmatprep.subr.bf16.mxu0 0
        %7926 = vmatpush1.bf16.msra.mxu0 0
        %7927 = vmatprep.subr.bf16.mxu0 0
        %7928 = vmatpush1.bf16.msra.mxu0 0
        %7929 = vmatprep.subr.bf16.mxu0 0
        %7930 = vmatpush1.bf16.msra.mxu0 0
        %7931 = vmatprep.subr.bf16.mxu0 0
        %7932 = vmatpush1.bf16.msra.mxu0 0
        %7933 = vmatprep.subr.bf16.mxu0 0
        %7934 = vmatpush1.bf16.msra.mxu0 %v7915
        %7935 = vmatprep.subr.bf16.mxu0 0
        %7936 = vmatpush1.bf16.msra.mxu0 %v7914
        %7937 = vmatprep.subr.bf16.mxu0 0
        %7938 = vmatpush2.bf16.msra.mxu0 0
        %7939 = vmatprep.subr.bf16.mxu0 0
        %7940 = vmatpush2.bf16.msra.mxu0 0
        %7941 = vmatprep.subr.bf16.mxu0 0
        %7942 = vmatpush2.bf16.msra.mxu0 0
        %7943 = vmatprep.subr.bf16.mxu0 0
        %7944 = vmatpush2.bf16.msra.mxu0 0
        %7945 = vmatprep.subr.bf16.mxu0 0
        %7946 = vmatpush2.bf16.msra.mxu0 0
        %7947 = vmatprep.subr.bf16.mxu0 0
        %7948 = vmatpush2.bf16.msra.mxu0 0
        %7949 = vmatprep.subr.bf16.mxu0 0
        %7950 = vmatpush2.bf16.msra.mxu0 0
        %7951 = vmatprep.subr.bf16.mxu0 0
        %7952 = vmatpush2.bf16.msra.mxu0 0
        %7953 = vmatprep.mubr.bf16.mxu0 0
        %7954 = vmatmul.mubr.bf16.gmra.mxu0 %v7919
        %v7955 = vpop.f32.mrf.mxu0
        %v7956 = vadd.f32 0.0, %v7955
        %v7957 = vpop.f32.mrf.mxu0
        %v7958 = vpop.f32.mrf.mxu0
        %v7959 = vadd.f32 0.0, %v7958
        %v7960 = vpop.f32.mrf.mxu0
        %7961 = vdwg.mxu0
        %v7966 = vunpack.c.l.b16 %v7826
        %v7967 = vunpack.c.l.b16 %v7827
        %v7968 = vunpack.c.l.b16 %v7828
        %v7969 = vunpack.c.l.b16 %v7829
        %v7970 = vpack.c.b16 %v7967, %v7966
        %v7971 = vpack.c.b16 %v7969, %v7968
        %v7975 = vsel %vm5440, %v7812, 0
        %7977 = vmatprep.subr.bf16.mxu0 0
        %7978 = vmatpush1.bf16.msra.mxu0 0
        %7979 = vmatprep.subr.bf16.mxu0 0
        %7980 = vmatpush1.bf16.msra.mxu0 0
        %7981 = vmatprep.subr.bf16.mxu0 0
        %7982 = vmatpush1.bf16.msra.mxu0 0
        %7983 = vmatprep.subr.bf16.mxu0 0
        %7984 = vmatpush1.bf16.msra.mxu0 0
        %7985 = vmatprep.subr.bf16.mxu0 0
        %7986 = vmatpush1.bf16.msra.mxu0 0
        %7987 = vmatprep.subr.bf16.mxu0 0
        %7988 = vmatpush1.bf16.msra.mxu0 0
        %7989 = vmatprep.subr.bf16.mxu0 0
        %7990 = vmatpush1.bf16.msra.mxu0 %v7971
        %7991 = vmatprep.subr.bf16.mxu0 0
        %7992 = vmatpush1.bf16.msra.mxu0 %v7970
        %7993 = vmatprep.subr.bf16.mxu0 0
        %7994 = vmatpush2.bf16.msra.mxu0 0
        %7995 = vmatprep.subr.bf16.mxu0 0
        %7996 = vmatpush2.bf16.msra.mxu0 0
        %7997 = vmatprep.subr.bf16.mxu0 0
        %7998 = vmatpush2.bf16.msra.mxu0 0
        %7999 = vmatprep.subr.bf16.mxu0 0
        %8000 = vmatpush2.bf16.msra.mxu0 0
        %8001 = vmatprep.subr.bf16.mxu0 0
        %8002 = vmatpush2.bf16.msra.mxu0 0
        %8003 = vmatprep.subr.bf16.mxu0 0
        %8004 = vmatpush2.bf16.msra.mxu0 0
        %8005 = vmatprep.subr.bf16.mxu0 0
        %8006 = vmatpush2.bf16.msra.mxu0 0
        %8007 = vmatprep.subr.bf16.mxu0 0
        %8008 = vmatpush2.bf16.msra.mxu0 0
        %8009 = vmatprep.mubr.bf16.mxu0 0
        %8010 = vmatmul.mubr.bf16.gmra.mxu0 %v7975
        %v8011 = vpop.f32.mrf.mxu0
        %v8012 = vadd.f32 0.0, %v8011
        %v8013 = vpop.f32.mrf.mxu0
        %v8014 = vpop.f32.mrf.mxu0
        %v8015 = vadd.f32 0.0, %v8014
        %v8016 = vpop.f32.mrf.mxu0
        %8017 = vdwg.mxu0
        %v8022 = vunpack.c.l.b16 %v7830
        %v8023 = vunpack.c.l.b16 %v7831
        %v8024 = vunpack.c.l.b16 %v7832
        %v8025 = vunpack.c.l.b16 %v7833
        %v8026 = vpack.c.b16 %v8023, %v8022
        %v8027 = vpack.c.b16 %v8025, %v8024
        %v8031 = vsel %vm5440, %v7813, 0
        %8033 = vmatprep.subr.bf16.mxu0 0
        %8034 = vmatpush1.bf16.msra.mxu0 0
        %8035 = vmatprep.subr.bf16.mxu0 0
        %8036 = vmatpush1.bf16.msra.mxu0 0
        %8037 = vmatprep.subr.bf16.mxu0 0
        %8038 = vmatpush1.bf16.msra.mxu0 0
        %8039 = vmatprep.subr.bf16.mxu0 0
        %8040 = vmatpush1.bf16.msra.mxu0 0
        %8041 = vmatprep.subr.bf16.mxu0 0
        %8042 = vmatpush1.bf16.msra.mxu0 0
        %8043 = vmatprep.subr.bf16.mxu0 0
        %8044 = vmatpush1.bf16.msra.mxu0 0
        %8045 = vmatprep.subr.bf16.mxu0 0
        %8046 = vmatpush1.bf16.msra.mxu0 %v8027
        %8047 = vmatprep.subr.bf16.mxu0 0
        %8048 = vmatpush1.bf16.msra.mxu0 %v8026
        %8049 = vmatprep.subr.bf16.mxu0 0
        %8050 = vmatpush2.bf16.msra.mxu0 0
        %8051 = vmatprep.subr.bf16.mxu0 0
        %8052 = vmatpush2.bf16.msra.mxu0 0
        %8053 = vmatprep.subr.bf16.mxu0 0
        %8054 = vmatpush2.bf16.msra.mxu0 0
        %8055 = vmatprep.subr.bf16.mxu0 0
        %8056 = vmatpush2.bf16.msra.mxu0 0
        %8057 = vmatprep.subr.bf16.mxu0 0
        %8058 = vmatpush2.bf16.msra.mxu0 0
        %8059 = vmatprep.subr.bf16.mxu0 0
        %8060 = vmatpush2.bf16.msra.mxu0 0
        %8061 = vmatprep.subr.bf16.mxu0 0
        %8062 = vmatpush2.bf16.msra.mxu0 0
        %8063 = vmatprep.subr.bf16.mxu0 0
        %8064 = vmatpush2.bf16.msra.mxu0 0
        %8065 = vmatprep.mubr.bf16.mxu0 0
        %8066 = vmatmul.mubr.bf16.gmra.mxu0 %v8031
        %v8067 = vpop.f32.mrf.mxu0
        %v8068 = vadd.f32 0.0, %v8067
        %v8069 = vpop.f32.mrf.mxu0
        %v8070 = vpop.f32.mrf.mxu0
        %v8071 = vadd.f32 0.0, %v8070
        %v8072 = vpop.f32.mrf.mxu0
        %8073 = vdwg.mxu0
        %v8078 = vunpack.c.l.b16 %v7834
        %v8079 = vunpack.c.l.b16 %v7835
        %v8080 = vunpack.c.l.b16 %v7836
        %v8081 = vunpack.c.l.b16 %v7837
        %v8082 = vpack.c.b16 %v8079, %v8078
        %v8083 = vpack.c.b16 %v8081, %v8080
        %v8087 = vsel %vm5440, %v7814, 0
        %8089 = vmatprep.subr.bf16.mxu0 0
        %8090 = vmatpush1.bf16.msra.mxu0 0
        %8091 = vmatprep.subr.bf16.mxu0 0
        %8092 = vmatpush1.bf16.msra.mxu0 0
        %8093 = vmatprep.subr.bf16.mxu0 0
        %8094 = vmatpush1.bf16.msra.mxu0 0
        %8095 = vmatprep.subr.bf16.mxu0 0
        %8096 = vmatpush1.bf16.msra.mxu0 0
        %8097 = vmatprep.subr.bf16.mxu0 0
        %8098 = vmatpush1.bf16.msra.mxu0 0
        %8099 = vmatprep.subr.bf16.mxu0 0
        %8100 = vmatpush1.bf16.msra.mxu0 0
        %8101 = vmatprep.subr.bf16.mxu0 0
        %8102 = vmatpush1.bf16.msra.mxu0 %v8083
        %8103 = vmatprep.subr.bf16.mxu0 0
        %8104 = vmatpush1.bf16.msra.mxu0 %v8082
        %8105 = vmatprep.subr.bf16.mxu0 0
        %8106 = vmatpush2.bf16.msra.mxu0 0
        %8107 = vmatprep.subr.bf16.mxu0 0
        %8108 = vmatpush2.bf16.msra.mxu0 0
        %8109 = vmatprep.subr.bf16.mxu0 0
        %8110 = vmatpush2.bf16.msra.mxu0 0
        %8111 = vmatprep.subr.bf16.mxu0 0
        %8112 = vmatpush2.bf16.msra.mxu0 0
        %8113 = vmatprep.subr.bf16.mxu0 0
        %8114 = vmatpush2.bf16.msra.mxu0 0
        %8115 = vmatprep.subr.bf16.mxu0 0
        %8116 = vmatpush2.bf16.msra.mxu0 0
        %8117 = vmatprep.subr.bf16.mxu0 0
        %8118 = vmatpush2.bf16.msra.mxu0 0
        %8119 = vmatprep.subr.bf16.mxu0 0
        %8120 = vmatpush2.bf16.msra.mxu0 0
        %8121 = vmatprep.mubr.bf16.mxu0 0
        %8122 = vmatmul.mubr.bf16.gmra.mxu0 %v8087
        %v8123 = vpop.f32.mrf.mxu0
        %v8124 = vadd.f32 0.0, %v8123
        %v8125 = vpop.f32.mrf.mxu0
        %v8126 = vpop.f32.mrf.mxu0
        %v8127 = vadd.f32 0.0, %v8126
        %v8128 = vpop.f32.mrf.mxu0
        %8129 = vdwg.mxu0
        %v8134 = vunpack.c.l.b16 %v7838
        %v8135 = vunpack.c.l.b16 %v7839
        %v8136 = vunpack.c.l.b16 %v7840
        %v8137 = vunpack.c.l.b16 %v7841
        %v8138 = vpack.c.b16 %v8135, %v8134
        %v8139 = vpack.c.b16 %v8137, %v8136
        %v8143 = vsel %vm5440, %v7815, 0
        %8145 = vmatprep.subr.bf16.mxu0 0
        %8146 = vmatpush1.bf16.msra.mxu0 0
        %8147 = vmatprep.subr.bf16.mxu0 0
        %8148 = vmatpush1.bf16.msra.mxu0 0
        %8149 = vmatprep.subr.bf16.mxu0 0
        %8150 = vmatpush1.bf16.msra.mxu0 0
        %8151 = vmatprep.subr.bf16.mxu0 0
        %8152 = vmatpush1.bf16.msra.mxu0 0
        %8153 = vmatprep.subr.bf16.mxu0 0
        %8154 = vmatpush1.bf16.msra.mxu0 0
        %8155 = vmatprep.subr.bf16.mxu0 0
        %8156 = vmatpush1.bf16.msra.mxu0 0
        %8157 = vmatprep.subr.bf16.mxu0 0
        %8158 = vmatpush1.bf16.msra.mxu0 %v8139
        %8159 = vmatprep.subr.bf16.mxu0 0
        %8160 = vmatpush1.bf16.msra.mxu0 %v8138
        %8161 = vmatprep.subr.bf16.mxu0 0
        %8162 = vmatpush2.bf16.msra.mxu0 0
        %8163 = vmatprep.subr.bf16.mxu0 0
        %8164 = vmatpush2.bf16.msra.mxu0 0
        %8165 = vmatprep.subr.bf16.mxu0 0
        %8166 = vmatpush2.bf16.msra.mxu0 0
        %8167 = vmatprep.subr.bf16.mxu0 0
        %8168 = vmatpush2.bf16.msra.mxu0 0
        %8169 = vmatprep.subr.bf16.mxu0 0
        %8170 = vmatpush2.bf16.msra.mxu0 0
        %8171 = vmatprep.subr.bf16.mxu0 0
        %8172 = vmatpush2.bf16.msra.mxu0 0
        %8173 = vmatprep.subr.bf16.mxu0 0
        %8174 = vmatpush2.bf16.msra.mxu0 0
        %8175 = vmatprep.subr.bf16.mxu0 0
        %8176 = vmatpush2.bf16.msra.mxu0 0
        %8177 = vmatprep.mubr.bf16.mxu0 0
        %8178 = vmatmul.mubr.bf16.gmra.mxu0 %v8143
        %v8179 = vpop.f32.mrf.mxu0
        %v8180 = vadd.f32 0.0, %v8179
        %v8181 = vpop.f32.mrf.mxu0
        %v8182 = vpop.f32.mrf.mxu0
        %v8183 = vadd.f32 0.0, %v8182
        %v8184 = vpop.f32.mrf.mxu0
        %8185 = vdwg.mxu0
        %v8190 = vunpack.c.l.b16 %v7842
        %v8191 = vunpack.c.l.b16 %v7843
        %v8192 = vunpack.c.l.b16 %v7844
        %v8193 = vunpack.c.l.b16 %v7845
        %v8194 = vpack.c.b16 %v8191, %v8190
        %v8195 = vpack.c.b16 %v8193, %v8192
        %v8199 = vsel %vm5440, %v7816, 0
        %8201 = vmatprep.subr.bf16.mxu0 0
        %8202 = vmatpush1.bf16.msra.mxu0 0
        %8203 = vmatprep.subr.bf16.mxu0 0
        %8204 = vmatpush1.bf16.msra.mxu0 0
        %8205 = vmatprep.subr.bf16.mxu0 0
        %8206 = vmatpush1.bf16.msra.mxu0 0
        %8207 = vmatprep.subr.bf16.mxu0 0
        %8208 = vmatpush1.bf16.msra.mxu0 0
        %8209 = vmatprep.subr.bf16.mxu0 0
        %8210 = vmatpush1.bf16.msra.mxu0 0
        %8211 = vmatprep.subr.bf16.mxu0 0
        %8212 = vmatpush1.bf16.msra.mxu0 0
        %8213 = vmatprep.subr.bf16.mxu0 0
        %8214 = vmatpush1.bf16.msra.mxu0 %v8195
        %8215 = vmatprep.subr.bf16.mxu0 0
        %8216 = vmatpush1.bf16.msra.mxu0 %v8194
        %8217 = vmatprep.subr.bf16.mxu0 0
        %8218 = vmatpush2.bf16.msra.mxu0 0
        %8219 = vmatprep.subr.bf16.mxu0 0
        %8220 = vmatpush2.bf16.msra.mxu0 0
        %8221 = vmatprep.subr.bf16.mxu0 0
        %8222 = vmatpush2.bf16.msra.mxu0 0
        %8223 = vmatprep.subr.bf16.mxu0 0
        %8224 = vmatpush2.bf16.msra.mxu0 0
        %8225 = vmatprep.subr.bf16.mxu0 0
        %8226 = vmatpush2.bf16.msra.mxu0 0
        %8227 = vmatprep.subr.bf16.mxu0 0
        %8228 = vmatpush2.bf16.msra.mxu0 0
        %8229 = vmatprep.subr.bf16.mxu0 0
        %8230 = vmatpush2.bf16.msra.mxu0 0
        %8231 = vmatprep.subr.bf16.mxu0 0
        %8232 = vmatpush2.bf16.msra.mxu0 0
        %8233 = vmatprep.mubr.bf16.mxu0 0
        %8234 = vmatmul.mubr.bf16.gmra.mxu0 %v8199
        %v8235 = vpop.f32.mrf.mxu0
        %v8236 = vadd.f32 0.0, %v8235
        %v8237 = vpop.f32.mrf.mxu0
        %v8238 = vpop.f32.mrf.mxu0
        %v8239 = vadd.f32 0.0, %v8238
        %v8240 = vpop.f32.mrf.mxu0
        %8241 = vdwg.mxu0
        %v8246 = vunpack.c.l.b16 %v7846
        %v8247 = vunpack.c.l.b16 %v7847
        %v8248 = vunpack.c.l.b16 %v7848
        %v8249 = vunpack.c.l.b16 %v7849
        %v8250 = vpack.c.b16 %v8247, %v8246
        %v8251 = vpack.c.b16 %v8249, %v8248
        %v8255 = vsel %vm5440, %v7817, 0
        %8257 = vmatprep.subr.bf16.mxu0 0
        %8258 = vmatpush1.bf16.msra.mxu0 0
        %8259 = vmatprep.subr.bf16.mxu0 0
        %8260 = vmatpush1.bf16.msra.mxu0 0
        %8261 = vmatprep.subr.bf16.mxu0 0
        %8262 = vmatpush1.bf16.msra.mxu0 0
        %8263 = vmatprep.subr.bf16.mxu0 0
        %8264 = vmatpush1.bf16.msra.mxu0 0
        %8265 = vmatprep.subr.bf16.mxu0 0
        %8266 = vmatpush1.bf16.msra.mxu0 0
        %8267 = vmatprep.subr.bf16.mxu0 0
        %8268 = vmatpush1.bf16.msra.mxu0 0
        %8269 = vmatprep.subr.bf16.mxu0 0
        %8270 = vmatpush1.bf16.msra.mxu0 %v8251
        %8271 = vmatprep.subr.bf16.mxu0 0
        %8272 = vmatpush1.bf16.msra.mxu0 %v8250
        %8273 = vmatprep.subr.bf16.mxu0 0
        %8274 = vmatpush2.bf16.msra.mxu0 0
        %8275 = vmatprep.subr.bf16.mxu0 0
        %8276 = vmatpush2.bf16.msra.mxu0 0
        %8277 = vmatprep.subr.bf16.mxu0 0
        %8278 = vmatpush2.bf16.msra.mxu0 0
        %8279 = vmatprep.subr.bf16.mxu0 0
        %8280 = vmatpush2.bf16.msra.mxu0 0
        %8281 = vmatprep.subr.bf16.mxu0 0
        %8282 = vmatpush2.bf16.msra.mxu0 0
        %8283 = vmatprep.subr.bf16.mxu0 0
        %8284 = vmatpush2.bf16.msra.mxu0 0
        %8285 = vmatprep.subr.bf16.mxu0 0
        %8286 = vmatpush2.bf16.msra.mxu0 0
        %8287 = vmatprep.subr.bf16.mxu0 0
        %8288 = vmatpush2.bf16.msra.mxu0 0
        %8289 = vmatprep.mubr.bf16.mxu0 0
        %8290 = vmatmul.mubr.bf16.gmra.mxu0 %v8255
        %v8291 = vpop.f32.mrf.mxu0
        %v8292 = vadd.f32 0.0, %v8291
        %v8293 = vpop.f32.mrf.mxu0
        %v8294 = vpop.f32.mrf.mxu0
        %v8295 = vadd.f32 0.0, %v8294
        %v8296 = vpop.f32.mrf.mxu0
        %8297 = vdwg.mxu0
        %v8298 = vmul.f32 %v7900, %v4656
        %v8299 = vmul.f32 %v7903, %v4792
        %v8300 = vmul.f32 %v7956, %v4657
        %v8301 = vmul.f32 %v7959, %v4793
        %v8302 = vmul.f32 %v8012, %v4658
        %v8303 = vmul.f32 %v8015, %v4794
        %v8304 = vmul.f32 %v8068, %v4659
        %v8305 = vmul.f32 %v8071, %v4795
        %v8306 = vmul.f32 %v8124, %v4660
        %v8307 = vmul.f32 %v8127, %v4796
        %v8308 = vmul.f32 %v8180, %v4661
        %v8309 = vmul.f32 %v8183, %v4797
        %v8310 = vmul.f32 %v8236, %v4662
        %v8311 = vmul.f32 %v8239, %v4798
        %v8312 = vmul.f32 %v8292, %v4663
        %v8313 = vmul.f32 %v8295, %v4799
        %v8314 = vld [vmem:[%s8] sm:$0xff]
        %v8315 = vld [vmem:[%s8 + $0x8] sm:$0xff]
        %v8316 = vld [vmem:[%s8 + $0x10] sm:$0xff]
        %v8317 = vld [vmem:[%s8 + $0x18] sm:$0xff]
        %v8318 = vld [vmem:[%s8 + $0x20] sm:$0xff]
        %v8319 = vld [vmem:[%s8 + $0x28] sm:$0xff]
        %v8320 = vld [vmem:[%s8 + $0x30] sm:$0xff]
        %v8321 = vld [vmem:[%s8 + $0x38] sm:$0xff]
        %v8322 = vld [vmem:[%s8 + $0x40] sm:$0xff]
        %v8323 = vld [vmem:[%s8 + $0x48] sm:$0xff]
        %v8324 = vld [vmem:[%s8 + $0x50] sm:$0xff]
        %v8325 = vld [vmem:[%s8 + $0x58] sm:$0xff]
        %v8326 = vld [vmem:[%s8 + $0x60] sm:$0xff]
        %v8327 = vld [vmem:[%s8 + $0x68] sm:$0xff]
        %v8328 = vld [vmem:[%s8 + $0x70] sm:$0xff]
        %v8329 = vld [vmem:[%s8 + $0x78] sm:$0xff]
        %v8330 = vld [vmem:[%s8 + $0x80] sm:$0xff]
        %v8331 = vld [vmem:[%s8 + $0x88] sm:$0xff]
        %v8332 = vld [vmem:[%s8 + $0x90] sm:$0xff]
        %v8333 = vld [vmem:[%s8 + $0x98] sm:$0xff]
        %v8334 = vld [vmem:[%s8 + $0xa0] sm:$0xff]
        %v8335 = vld [vmem:[%s8 + $0xa8] sm:$0xff]
        %v8336 = vld [vmem:[%s8 + $0xb0] sm:$0xff]
        %v8337 = vld [vmem:[%s8 + $0xb8] sm:$0xff]
        %v8338 = vld [vmem:[%s8 + $0xc0] sm:$0xff]
        %v8339 = vld [vmem:[%s8 + $0xc8] sm:$0xff]
        %v8340 = vld [vmem:[%s8 + $0xd0] sm:$0xff]
        %v8341 = vld [vmem:[%s8 + $0xd8] sm:$0xff]
        %v8342 = vld [vmem:[%s8 + $0xe0] sm:$0xff]
        %v8343 = vld [vmem:[%s8 + $0xe8] sm:$0xff]
        %v8344 = vld [vmem:[%s8 + $0xf0] sm:$0xff]
        %v8345 = vld [vmem:[%s8 + $0xf8] sm:$0xff]
        %v8347 = vsel %vm5440, %v8298, 0
        %v8350 = vsel %vm5440, %v8299, 0
        %8352 = vmatprep.subr.mxu0 0.0
        %8353 = vmatpush1.msra.mxu0 0.0
        %8354 = vmatprep.subr.mxu0 0.0
        %8355 = vmatpush1.msra.mxu0 0.0
        %8356 = vmatprep.subr.mxu0 0.0
        %8357 = vmatpush1.msra.mxu0 0.0
        %8358 = vmatprep.subr.mxu0 0.0
        %8359 = vmatpush1.msra.mxu0 0.0
        %8360 = vmatprep.subr.mxu0 0.0
        %8361 = vmatpush1.msra.mxu0 0.0
        %8362 = vmatprep.subr.mxu0 0.0
        %8363 = vmatpush1.msra.mxu0 0.0
        %8364 = vmatprep.subr.mxu0 0.0
        %8365 = vmatpush1.msra.mxu0 0.0
        %8366 = vmatprep.subr.mxu0 0.0
        %8367 = vmatpush1.msra.mxu0 0.0
        %8368 = vmatprep.subr.mxu0 0.0
        %8369 = vmatpush1.msra.mxu0 0.0
        %8370 = vmatprep.subr.mxu0 0.0
        %8371 = vmatpush1.msra.mxu0 0.0
        %8372 = vmatprep.subr.mxu0 0.0
        %8373 = vmatpush1.msra.mxu0 0.0
        %8374 = vmatprep.subr.mxu0 0.0
        %8375 = vmatpush1.msra.mxu0 0.0
        %8376 = vmatprep.subr.mxu0 0.0
        %8377 = vmatpush1.msra.mxu0 %v8317
        %8378 = vmatprep.subr.mxu0 0.0
        %8379 = vmatpush1.msra.mxu0 %v8316
        %8380 = vmatprep.subr.mxu0 0.0
        %8381 = vmatpush1.msra.mxu0 %v8315
        %8382 = vmatprep.subr.mxu0 0.0
        %8383 = vmatpush1.msra.mxu0 %v8314
        %8384 = vmatprep.subr.mxu0 0.0
        %8385 = vmatpush2.msra.mxu0 0.0
        %8386 = vmatprep.subr.mxu0 0.0
        %8387 = vmatpush2.msra.mxu0 0.0
        %8388 = vmatprep.subr.mxu0 0.0
        %8389 = vmatpush2.msra.mxu0 0.0
        %8390 = vmatprep.subr.mxu0 0.0
        %8391 = vmatpush2.msra.mxu0 0.0
        %8392 = vmatprep.subr.mxu0 0.0
        %8393 = vmatpush2.msra.mxu0 0.0
        %8394 = vmatprep.subr.mxu0 0.0
        %8395 = vmatpush2.msra.mxu0 0.0
        %8396 = vmatprep.subr.mxu0 0.0
        %8397 = vmatpush2.msra.mxu0 0.0
        %8398 = vmatprep.subr.mxu0 0.0
        %8399 = vmatpush2.msra.mxu0 0.0
        %8400 = vmatprep.subr.mxu0 0.0
        %8401 = vmatpush2.msra.mxu0 0.0
        %8402 = vmatprep.subr.mxu0 0.0
        %8403 = vmatpush2.msra.mxu0 0.0
        %8404 = vmatprep.subr.mxu0 0.0
        %8405 = vmatpush2.msra.mxu0 0.0
        %8406 = vmatprep.subr.mxu0 0.0
        %8407 = vmatpush2.msra.mxu0 0.0
        %8408 = vmatprep.subr.mxu0 0.0
        %8409 = vmatpush2.msra.mxu0 0.0
        %8410 = vmatprep.subr.mxu0 0.0
        %8411 = vmatpush2.msra.mxu0 0.0
        %8412 = vmatprep.subr.mxu0 0.0
        %8413 = vmatpush2.msra.mxu0 0.0
        %8414 = vmatprep.subr.mxu0 0.0
        %8415 = vmatpush2.msra.mxu0 0.0
        %8416 = vmatprep.mubr.f32.mxu0 0.0
        %8417 = vmatmul.mubr.f32.gmra.mxu0 %v8347
        %v8418 = vpop.f32.mrf.mxu0
        %v8419 = vadd.f32 0.0, %v8418
        %v8420 = vpop.f32.mrf.mxu0
        %8421 = vmatprep.mubr.f32.mxu0 0.0
        %8422 = vmatmul.mubr.f32.gmra.mxu0 %v8350
        %v8423 = vpop.f32.mrf.mxu0
        %v8424 = vadd.f32 0.0, %v8423
        %v8425 = vpop.f32.mrf.mxu0
        %8426 = vdwg.mxu0
        %v8428 = vsel %vm5440, %v8300, 0
        %v8431 = vsel %vm5440, %v8301, 0
        %8433 = vmatprep.subr.mxu0 0.0
        %8434 = vmatpush1.msra.mxu0 0.0
        %8435 = vmatprep.subr.mxu0 0.0
        %8436 = vmatpush1.msra.mxu0 0.0
        %8437 = vmatprep.subr.mxu0 0.0
        %8438 = vmatpush1.msra.mxu0 0.0
        %8439 = vmatprep.subr.mxu0 0.0
        %8440 = vmatpush1.msra.mxu0 0.0
        %8441 = vmatprep.subr.mxu0 0.0
        %8442 = vmatpush1.msra.mxu0 0.0
        %8443 = vmatprep.subr.mxu0 0.0
        %8444 = vmatpush1.msra.mxu0 0.0
        %8445 = vmatprep.subr.mxu0 0.0
        %8446 = vmatpush1.msra.mxu0 0.0
        %8447 = vmatprep.subr.mxu0 0.0
        %8448 = vmatpush1.msra.mxu0 0.0
        %8449 = vmatprep.subr.mxu0 0.0
        %8450 = vmatpush1.msra.mxu0 0.0
        %8451 = vmatprep.subr.mxu0 0.0
        %8452 = vmatpush1.msra.mxu0 0.0
        %8453 = vmatprep.subr.mxu0 0.0
        %8454 = vmatpush1.msra.mxu0 0.0
        %8455 = vmatprep.subr.mxu0 0.0
        %8456 = vmatpush1.msra.mxu0 0.0
        %8457 = vmatprep.subr.mxu0 0.0
        %8458 = vmatpush1.msra.mxu0 %v8321
        %8459 = vmatprep.subr.mxu0 0.0
        %8460 = vmatpush1.msra.mxu0 %v8320
        %8461 = vmatprep.subr.mxu0 0.0
        %8462 = vmatpush1.msra.mxu0 %v8319
        %8463 = vmatprep.subr.mxu0 0.0
        %8464 = vmatpush1.msra.mxu0 %v8318
        %8465 = vmatprep.subr.mxu0 0.0
        %8466 = vmatpush2.msra.mxu0 0.0
        %8467 = vmatprep.subr.mxu0 0.0
        %8468 = vmatpush2.msra.mxu0 0.0
        %8469 = vmatprep.subr.mxu0 0.0
        %8470 = vmatpush2.msra.mxu0 0.0
        %8471 = vmatprep.subr.mxu0 0.0
        %8472 = vmatpush2.msra.mxu0 0.0
        %8473 = vmatprep.subr.mxu0 0.0
        %8474 = vmatpush2.msra.mxu0 0.0
        %8475 = vmatprep.subr.mxu0 0.0
        %8476 = vmatpush2.msra.mxu0 0.0
        %8477 = vmatprep.subr.mxu0 0.0
        %8478 = vmatpush2.msra.mxu0 0.0
        %8479 = vmatprep.subr.mxu0 0.0
        %8480 = vmatpush2.msra.mxu0 0.0
        %8481 = vmatprep.subr.mxu0 0.0
        %8482 = vmatpush2.msra.mxu0 0.0
        %8483 = vmatprep.subr.mxu0 0.0
        %8484 = vmatpush2.msra.mxu0 0.0
        %8485 = vmatprep.subr.mxu0 0.0
        %8486 = vmatpush2.msra.mxu0 0.0
        %8487 = vmatprep.subr.mxu0 0.0
        %8488 = vmatpush2.msra.mxu0 0.0
        %8489 = vmatprep.subr.mxu0 0.0
        %8490 = vmatpush2.msra.mxu0 0.0
        %8491 = vmatprep.subr.mxu0 0.0
        %8492 = vmatpush2.msra.mxu0 0.0
        %8493 = vmatprep.subr.mxu0 0.0
        %8494 = vmatpush2.msra.mxu0 0.0
        %8495 = vmatprep.subr.mxu0 0.0
        %8496 = vmatpush2.msra.mxu0 0.0
        %8497 = vmatprep.mubr.f32.mxu0 0.0
        %8498 = vmatmul.mubr.f32.gmra.mxu0 %v8428
        %v8499 = vpop.f32.mrf.mxu0
        %v8500 = vadd.f32 0.0, %v8499
        %v8501 = vpop.f32.mrf.mxu0
        %8502 = vmatprep.mubr.f32.mxu0 0.0
        %8503 = vmatmul.mubr.f32.gmra.mxu0 %v8431
        %v8504 = vpop.f32.mrf.mxu0
        %v8505 = vadd.f32 0.0, %v8504
        %v8506 = vpop.f32.mrf.mxu0
        %8507 = vdwg.mxu0
        %v8509 = vsel %vm5440, %v8302, 0
        %v8512 = vsel %vm5440, %v8303, 0
        %8514 = vmatprep.subr.mxu0 0.0
        %8515 = vmatpush1.msra.mxu0 0.0
        %8516 = vmatprep.subr.mxu0 0.0
        %8517 = vmatpush1.msra.mxu0 0.0
        %8518 = vmatprep.subr.mxu0 0.0
        %8519 = vmatpush1.msra.mxu0 0.0
        %8520 = vmatprep.subr.mxu0 0.0
        %8521 = vmatpush1.msra.mxu0 0.0
        %8522 = vmatprep.subr.mxu0 0.0
        %8523 = vmatpush1.msra.mxu0 0.0
        %8524 = vmatprep.subr.mxu0 0.0
        %8525 = vmatpush1.msra.mxu0 0.0
        %8526 = vmatprep.subr.mxu0 0.0
        %8527 = vmatpush1.msra.mxu0 0.0
        %8528 = vmatprep.subr.mxu0 0.0
        %8529 = vmatpush1.msra.mxu0 0.0
        %8530 = vmatprep.subr.mxu0 0.0
        %8531 = vmatpush1.msra.mxu0 0.0
        %8532 = vmatprep.subr.mxu0 0.0
        %8533 = vmatpush1.msra.mxu0 0.0
        %8534 = vmatprep.subr.mxu0 0.0
        %8535 = vmatpush1.msra.mxu0 0.0
        %8536 = vmatprep.subr.mxu0 0.0
        %8537 = vmatpush1.msra.mxu0 0.0
        %8538 = vmatprep.subr.mxu0 0.0
        %8539 = vmatpush1.msra.mxu0 %v8325
        %8540 = vmatprep.subr.mxu0 0.0
        %8541 = vmatpush1.msra.mxu0 %v8324
        %8542 = vmatprep.subr.mxu0 0.0
        %8543 = vmatpush1.msra.mxu0 %v8323
        %8544 = vmatprep.subr.mxu0 0.0
        %8545 = vmatpush1.msra.mxu0 %v8322
        %8546 = vmatprep.subr.mxu0 0.0
        %8547 = vmatpush2.msra.mxu0 0.0
        %8548 = vmatprep.subr.mxu0 0.0
        %8549 = vmatpush2.msra.mxu0 0.0
        %8550 = vmatprep.subr.mxu0 0.0
        %8551 = vmatpush2.msra.mxu0 0.0
        %8552 = vmatprep.subr.mxu0 0.0
        %8553 = vmatpush2.msra.mxu0 0.0
        %8554 = vmatprep.subr.mxu0 0.0
        %8555 = vmatpush2.msra.mxu0 0.0
        %8556 = vmatprep.subr.mxu0 0.0
        %8557 = vmatpush2.msra.mxu0 0.0
        %8558 = vmatprep.subr.mxu0 0.0
        %8559 = vmatpush2.msra.mxu0 0.0
        %8560 = vmatprep.subr.mxu0 0.0
        %8561 = vmatpush2.msra.mxu0 0.0
        %8562 = vmatprep.subr.mxu0 0.0
        %8563 = vmatpush2.msra.mxu0 0.0
        %8564 = vmatprep.subr.mxu0 0.0
        %8565 = vmatpush2.msra.mxu0 0.0
        %8566 = vmatprep.subr.mxu0 0.0
        %8567 = vmatpush2.msra.mxu0 0.0
        %8568 = vmatprep.subr.mxu0 0.0
        %8569 = vmatpush2.msra.mxu0 0.0
        %8570 = vmatprep.subr.mxu0 0.0
        %8571 = vmatpush2.msra.mxu0 0.0
        %8572 = vmatprep.subr.mxu0 0.0
        %8573 = vmatpush2.msra.mxu0 0.0
        %8574 = vmatprep.subr.mxu0 0.0
        %8575 = vmatpush2.msra.mxu0 0.0
        %8576 = vmatprep.subr.mxu0 0.0
        %8577 = vmatpush2.msra.mxu0 0.0
        %8578 = vmatprep.mubr.f32.mxu0 0.0
        %8579 = vmatmul.mubr.f32.gmra.mxu0 %v8509
        %v8580 = vpop.f32.mrf.mxu0
        %v8581 = vadd.f32 0.0, %v8580
        %v8582 = vpop.f32.mrf.mxu0
        %8583 = vmatprep.mubr.f32.mxu0 0.0
        %8584 = vmatmul.mubr.f32.gmra.mxu0 %v8512
        %v8585 = vpop.f32.mrf.mxu0
        %v8586 = vadd.f32 0.0, %v8585
        %v8587 = vpop.f32.mrf.mxu0
        %8588 = vdwg.mxu0
        %v8590 = vsel %vm5440, %v8304, 0
        %v8593 = vsel %vm5440, %v8305, 0
        %8595 = vmatprep.subr.mxu0 0.0
        %8596 = vmatpush1.msra.mxu0 0.0
        %8597 = vmatprep.subr.mxu0 0.0
        %8598 = vmatpush1.msra.mxu0 0.0
        %8599 = vmatprep.subr.mxu0 0.0
        %8600 = vmatpush1.msra.mxu0 0.0
        %8601 = vmatprep.subr.mxu0 0.0
        %8602 = vmatpush1.msra.mxu0 0.0
        %8603 = vmatprep.subr.mxu0 0.0
        %8604 = vmatpush1.msra.mxu0 0.0
        %8605 = vmatprep.subr.mxu0 0.0
        %8606 = vmatpush1.msra.mxu0 0.0
        %8607 = vmatprep.subr.mxu0 0.0
        %8608 = vmatpush1.msra.mxu0 0.0
        %8609 = vmatprep.subr.mxu0 0.0
        %8610 = vmatpush1.msra.mxu0 0.0
        %8611 = vmatprep.subr.mxu0 0.0
        %8612 = vmatpush1.msra.mxu0 0.0
        %8613 = vmatprep.subr.mxu0 0.0
        %8614 = vmatpush1.msra.mxu0 0.0
        %8615 = vmatprep.subr.mxu0 0.0
        %8616 = vmatpush1.msra.mxu0 0.0
        %8617 = vmatprep.subr.mxu0 0.0
        %8618 = vmatpush1.msra.mxu0 0.0
        %8619 = vmatprep.subr.mxu0 0.0
        %8620 = vmatpush1.msra.mxu0 %v8329
        %8621 = vmatprep.subr.mxu0 0.0
        %8622 = vmatpush1.msra.mxu0 %v8328
        %8623 = vmatprep.subr.mxu0 0.0
        %8624 = vmatpush1.msra.mxu0 %v8327
        %8625 = vmatprep.subr.mxu0 0.0
        %8626 = vmatpush1.msra.mxu0 %v8326
        %8627 = vmatprep.subr.mxu0 0.0
        %8628 = vmatpush2.msra.mxu0 0.0
        %8629 = vmatprep.subr.mxu0 0.0
        %8630 = vmatpush2.msra.mxu0 0.0
        %8631 = vmatprep.subr.mxu0 0.0
        %8632 = vmatpush2.msra.mxu0 0.0
        %8633 = vmatprep.subr.mxu0 0.0
        %8634 = vmatpush2.msra.mxu0 0.0
        %8635 = vmatprep.subr.mxu0 0.0
        %8636 = vmatpush2.msra.mxu0 0.0
        %8637 = vmatprep.subr.mxu0 0.0
        %8638 = vmatpush2.msra.mxu0 0.0
        %8639 = vmatprep.subr.mxu0 0.0
        %8640 = vmatpush2.msra.mxu0 0.0
        %8641 = vmatprep.subr.mxu0 0.0
        %8642 = vmatpush2.msra.mxu0 0.0
        %8643 = vmatprep.subr.mxu0 0.0
        %8644 = vmatpush2.msra.mxu0 0.0
        %8645 = vmatprep.subr.mxu0 0.0
        %8646 = vmatpush2.msra.mxu0 0.0
        %8647 = vmatprep.subr.mxu0 0.0
        %8648 = vmatpush2.msra.mxu0 0.0
        %8649 = vmatprep.subr.mxu0 0.0
        %8650 = vmatpush2.msra.mxu0 0.0
        %8651 = vmatprep.subr.mxu0 0.0
        %8652 = vmatpush2.msra.mxu0 0.0
        %8653 = vmatprep.subr.mxu0 0.0
        %8654 = vmatpush2.msra.mxu0 0.0
        %8655 = vmatprep.subr.mxu0 0.0
        %8656 = vmatpush2.msra.mxu0 0.0
        %8657 = vmatprep.subr.mxu0 0.0
        %8658 = vmatpush2.msra.mxu0 0.0
        %8659 = vmatprep.mubr.f32.mxu0 0.0
        %8660 = vmatmul.mubr.f32.gmra.mxu0 %v8590
        %v8661 = vpop.f32.mrf.mxu0
        %v8662 = vadd.f32 0.0, %v8661
        %v8663 = vpop.f32.mrf.mxu0
        %8664 = vmatprep.mubr.f32.mxu0 0.0
        %8665 = vmatmul.mubr.f32.gmra.mxu0 %v8593
        %v8666 = vpop.f32.mrf.mxu0
        %v8667 = vadd.f32 0.0, %v8666
        %v8668 = vpop.f32.mrf.mxu0
        %8669 = vdwg.mxu0
        %v8671 = vsel %vm5440, %v8306, 0
        %v8674 = vsel %vm5440, %v8307, 0
        %8676 = vmatprep.subr.mxu0 0.0
        %8677 = vmatpush1.msra.mxu0 0.0
        %8678 = vmatprep.subr.mxu0 0.0
        %8679 = vmatpush1.msra.mxu0 0.0
        %8680 = vmatprep.subr.mxu0 0.0
        %8681 = vmatpush1.msra.mxu0 0.0
        %8682 = vmatprep.subr.mxu0 0.0
        %8683 = vmatpush1.msra.mxu0 0.0
        %8684 = vmatprep.subr.mxu0 0.0
        %8685 = vmatpush1.msra.mxu0 0.0
        %8686 = vmatprep.subr.mxu0 0.0
        %8687 = vmatpush1.msra.mxu0 0.0
        %8688 = vmatprep.subr.mxu0 0.0
        %8689 = vmatpush1.msra.mxu0 0.0
        %8690 = vmatprep.subr.mxu0 0.0
        %8691 = vmatpush1.msra.mxu0 0.0
        %8692 = vmatprep.subr.mxu0 0.0
        %8693 = vmatpush1.msra.mxu0 0.0
        %8694 = vmatprep.subr.mxu0 0.0
        %8695 = vmatpush1.msra.mxu0 0.0
        %8696 = vmatprep.subr.mxu0 0.0
        %8697 = vmatpush1.msra.mxu0 0.0
        %8698 = vmatprep.subr.mxu0 0.0
        %8699 = vmatpush1.msra.mxu0 0.0
        %8700 = vmatprep.subr.mxu0 0.0
        %8701 = vmatpush1.msra.mxu0 %v8333
        %8702 = vmatprep.subr.mxu0 0.0
        %8703 = vmatpush1.msra.mxu0 %v8332
        %8704 = vmatprep.subr.mxu0 0.0
        %8705 = vmatpush1.msra.mxu0 %v8331
        %8706 = vmatprep.subr.mxu0 0.0
        %8707 = vmatpush1.msra.mxu0 %v8330
        %8708 = vmatprep.subr.mxu0 0.0
        %8709 = vmatpush2.msra.mxu0 0.0
        %8710 = vmatprep.subr.mxu0 0.0
        %8711 = vmatpush2.msra.mxu0 0.0
        %8712 = vmatprep.subr.mxu0 0.0
        %8713 = vmatpush2.msra.mxu0 0.0
        %8714 = vmatprep.subr.mxu0 0.0
        %8715 = vmatpush2.msra.mxu0 0.0
        %8716 = vmatprep.subr.mxu0 0.0
        %8717 = vmatpush2.msra.mxu0 0.0
        %8718 = vmatprep.subr.mxu0 0.0
        %8719 = vmatpush2.msra.mxu0 0.0
        %8720 = vmatprep.subr.mxu0 0.0
        %8721 = vmatpush2.msra.mxu0 0.0
        %8722 = vmatprep.subr.mxu0 0.0
        %8723 = vmatpush2.msra.mxu0 0.0
        %8724 = vmatprep.subr.mxu0 0.0
        %8725 = vmatpush2.msra.mxu0 0.0
        %8726 = vmatprep.subr.mxu0 0.0
        %8727 = vmatpush2.msra.mxu0 0.0
        %8728 = vmatprep.subr.mxu0 0.0
        %8729 = vmatpush2.msra.mxu0 0.0
        %8730 = vmatprep.subr.mxu0 0.0
        %8731 = vmatpush2.msra.mxu0 0.0
        %8732 = vmatprep.subr.mxu0 0.0
        %8733 = vmatpush2.msra.mxu0 0.0
        %8734 = vmatprep.subr.mxu0 0.0
        %8735 = vmatpush2.msra.mxu0 0.0
        %8736 = vmatprep.subr.mxu0 0.0
        %8737 = vmatpush2.msra.mxu0 0.0
        %8738 = vmatprep.subr.mxu0 0.0
        %8739 = vmatpush2.msra.mxu0 0.0
        %8740 = vmatprep.mubr.f32.mxu0 0.0
        %8741 = vmatmul.mubr.f32.gmra.mxu0 %v8671
        %v8742 = vpop.f32.mrf.mxu0
        %v8743 = vadd.f32 0.0, %v8742
        %v8744 = vpop.f32.mrf.mxu0
        %8745 = vmatprep.mubr.f32.mxu0 0.0
        %8746 = vmatmul.mubr.f32.gmra.mxu0 %v8674
        %v8747 = vpop.f32.mrf.mxu0
        %v8748 = vadd.f32 0.0, %v8747
        %v8749 = vpop.f32.mrf.mxu0
        %8750 = vdwg.mxu0
        %v8752 = vsel %vm5440, %v8308, 0
        %v8755 = vsel %vm5440, %v8309, 0
        %8757 = vmatprep.subr.mxu0 0.0
        %8758 = vmatpush1.msra.mxu0 0.0
        %8759 = vmatprep.subr.mxu0 0.0
        %8760 = vmatpush1.msra.mxu0 0.0
        %8761 = vmatprep.subr.mxu0 0.0
        %8762 = vmatpush1.msra.mxu0 0.0
        %8763 = vmatprep.subr.mxu0 0.0
        %8764 = vmatpush1.msra.mxu0 0.0
        %8765 = vmatprep.subr.mxu0 0.0
        %8766 = vmatpush1.msra.mxu0 0.0
        %8767 = vmatprep.subr.mxu0 0.0
        %8768 = vmatpush1.msra.mxu0 0.0
        %8769 = vmatprep.subr.mxu0 0.0
        %8770 = vmatpush1.msra.mxu0 0.0
        %8771 = vmatprep.subr.mxu0 0.0
        %8772 = vmatpush1.msra.mxu0 0.0
        %8773 = vmatprep.subr.mxu0 0.0
        %8774 = vmatpush1.msra.mxu0 0.0
        %8775 = vmatprep.subr.mxu0 0.0
        %8776 = vmatpush1.msra.mxu0 0.0
        %8777 = vmatprep.subr.mxu0 0.0
        %8778 = vmatpush1.msra.mxu0 0.0
        %8779 = vmatprep.subr.mxu0 0.0
        %8780 = vmatpush1.msra.mxu0 0.0
        %8781 = vmatprep.subr.mxu0 0.0
        %8782 = vmatpush1.msra.mxu0 %v8337
        %8783 = vmatprep.subr.mxu0 0.0
        %8784 = vmatpush1.msra.mxu0 %v8336
        %8785 = vmatprep.subr.mxu0 0.0
        %8786 = vmatpush1.msra.mxu0 %v8335
        %8787 = vmatprep.subr.mxu0 0.0
        %8788 = vmatpush1.msra.mxu0 %v8334
        %8789 = vmatprep.subr.mxu0 0.0
        %8790 = vmatpush2.msra.mxu0 0.0
        %8791 = vmatprep.subr.mxu0 0.0
        %8792 = vmatpush2.msra.mxu0 0.0
        %8793 = vmatprep.subr.mxu0 0.0
        %8794 = vmatpush2.msra.mxu0 0.0
        %8795 = vmatprep.subr.mxu0 0.0
        %8796 = vmatpush2.msra.mxu0 0.0
        %8797 = vmatprep.subr.mxu0 0.0
        %8798 = vmatpush2.msra.mxu0 0.0
        %8799 = vmatprep.subr.mxu0 0.0
        %8800 = vmatpush2.msra.mxu0 0.0
        %8801 = vmatprep.subr.mxu0 0.0
        %8802 = vmatpush2.msra.mxu0 0.0
        %8803 = vmatprep.subr.mxu0 0.0
        %8804 = vmatpush2.msra.mxu0 0.0
        %8805 = vmatprep.subr.mxu0 0.0
        %8806 = vmatpush2.msra.mxu0 0.0
        %8807 = vmatprep.subr.mxu0 0.0
        %8808 = vmatpush2.msra.mxu0 0.0
        %8809 = vmatprep.subr.mxu0 0.0
        %8810 = vmatpush2.msra.mxu0 0.0
        %8811 = vmatprep.subr.mxu0 0.0
        %8812 = vmatpush2.msra.mxu0 0.0
        %8813 = vmatprep.subr.mxu0 0.0
        %8814 = vmatpush2.msra.mxu0 0.0
        %8815 = vmatprep.subr.mxu0 0.0
        %8816 = vmatpush2.msra.mxu0 0.0
        %8817 = vmatprep.subr.mxu0 0.0
        %8818 = vmatpush2.msra.mxu0 0.0
        %8819 = vmatprep.subr.mxu0 0.0
        %8820 = vmatpush2.msra.mxu0 0.0
        %8821 = vmatprep.mubr.f32.mxu0 0.0
        %8822 = vmatmul.mubr.f32.gmra.mxu0 %v8752
        %v8823 = vpop.f32.mrf.mxu0
        %v8824 = vadd.f32 0.0, %v8823
        %v8825 = vpop.f32.mrf.mxu0
        %8826 = vmatprep.mubr.f32.mxu0 0.0
        %8827 = vmatmul.mubr.f32.gmra.mxu0 %v8755
        %v8828 = vpop.f32.mrf.mxu0
        %v8829 = vadd.f32 0.0, %v8828
        %v8830 = vpop.f32.mrf.mxu0
        %8831 = vdwg.mxu0
        %v8833 = vsel %vm5440, %v8310, 0
        %v8836 = vsel %vm5440, %v8311, 0
        %8838 = vmatprep.subr.mxu0 0.0
        %8839 = vmatpush1.msra.mxu0 0.0
        %8840 = vmatprep.subr.mxu0 0.0
        %8841 = vmatpush1.msra.mxu0 0.0
        %8842 = vmatprep.subr.mxu0 0.0
        %8843 = vmatpush1.msra.mxu0 0.0
        %8844 = vmatprep.subr.mxu0 0.0
        %8845 = vmatpush1.msra.mxu0 0.0
        %8846 = vmatprep.subr.mxu0 0.0
        %8847 = vmatpush1.msra.mxu0 0.0
        %8848 = vmatprep.subr.mxu0 0.0
        %8849 = vmatpush1.msra.mxu0 0.0
        %8850 = vmatprep.subr.mxu0 0.0
        %8851 = vmatpush1.msra.mxu0 0.0
        %8852 = vmatprep.subr.mxu0 0.0
        %8853 = vmatpush1.msra.mxu0 0.0
        %8854 = vmatprep.subr.mxu0 0.0
        %8855 = vmatpush1.msra.mxu0 0.0
        %8856 = vmatprep.subr.mxu0 0.0
        %8857 = vmatpush1.msra.mxu0 0.0
        %8858 = vmatprep.subr.mxu0 0.0
        %8859 = vmatpush1.msra.mxu0 0.0
        %8860 = vmatprep.subr.mxu0 0.0
        %8861 = vmatpush1.msra.mxu0 0.0
        %8862 = vmatprep.subr.mxu0 0.0
        %8863 = vmatpush1.msra.mxu0 %v8341
        %8864 = vmatprep.subr.mxu0 0.0
        %8865 = vmatpush1.msra.mxu0 %v8340
        %8866 = vmatprep.subr.mxu0 0.0
        %8867 = vmatpush1.msra.mxu0 %v8339
        %8868 = vmatprep.subr.mxu0 0.0
        %8869 = vmatpush1.msra.mxu0 %v8338
        %8870 = vmatprep.subr.mxu0 0.0
        %8871 = vmatpush2.msra.mxu0 0.0
        %8872 = vmatprep.subr.mxu0 0.0
        %8873 = vmatpush2.msra.mxu0 0.0
        %8874 = vmatprep.subr.mxu0 0.0
        %8875 = vmatpush2.msra.mxu0 0.0
        %8876 = vmatprep.subr.mxu0 0.0
        %8877 = vmatpush2.msra.mxu0 0.0
        %8878 = vmatprep.subr.mxu0 0.0
        %8879 = vmatpush2.msra.mxu0 0.0
        %8880 = vmatprep.subr.mxu0 0.0
        %8881 = vmatpush2.msra.mxu0 0.0
        %8882 = vmatprep.subr.mxu0 0.0
        %8883 = vmatpush2.msra.mxu0 0.0
        %8884 = vmatprep.subr.mxu0 0.0
        %8885 = vmatpush2.msra.mxu0 0.0
        %8886 = vmatprep.subr.mxu0 0.0
        %8887 = vmatpush2.msra.mxu0 0.0
        %8888 = vmatprep.subr.mxu0 0.0
        %8889 = vmatpush2.msra.mxu0 0.0
        %8890 = vmatprep.subr.mxu0 0.0
        %8891 = vmatpush2.msra.mxu0 0.0
        %8892 = vmatprep.subr.mxu0 0.0
        %8893 = vmatpush2.msra.mxu0 0.0
        %8894 = vmatprep.subr.mxu0 0.0
        %8895 = vmatpush2.msra.mxu0 0.0
        %8896 = vmatprep.subr.mxu0 0.0
        %8897 = vmatpush2.msra.mxu0 0.0
        %8898 = vmatprep.subr.mxu0 0.0
        %8899 = vmatpush2.msra.mxu0 0.0
        %8900 = vmatprep.subr.mxu0 0.0
        %8901 = vmatpush2.msra.mxu0 0.0
        %8902 = vmatprep.mubr.f32.mxu0 0.0
        %8903 = vmatmul.mubr.f32.gmra.mxu0 %v8833
        %v8904 = vpop.f32.mrf.mxu0
        %v8905 = vadd.f32 0.0, %v8904
        %v8906 = vpop.f32.mrf.mxu0
        %8907 = vmatprep.mubr.f32.mxu0 0.0
        %8908 = vmatmul.mubr.f32.gmra.mxu0 %v8836
        %v8909 = vpop.f32.mrf.mxu0
        %v8910 = vadd.f32 0.0, %v8909
        %v8911 = vpop.f32.mrf.mxu0
        %8912 = vdwg.mxu0
        %v8914 = vsel %vm5440, %v8312, 0
        %v8917 = vsel %vm5440, %v8313, 0
        %8919 = vmatprep.subr.mxu0 0.0
        %8920 = vmatpush1.msra.mxu0 0.0
        %8921 = vmatprep.subr.mxu0 0.0
        %8922 = vmatpush1.msra.mxu0 0.0
        %8923 = vmatprep.subr.mxu0 0.0
        %8924 = vmatpush1.msra.mxu0 0.0
        %8925 = vmatprep.subr.mxu0 0.0
        %8926 = vmatpush1.msra.mxu0 0.0
        %8927 = vmatprep.subr.mxu0 0.0
        %8928 = vmatpush1.msra.mxu0 0.0
        %8929 = vmatprep.subr.mxu0 0.0
        %8930 = vmatpush1.msra.mxu0 0.0
        %8931 = vmatprep.subr.mxu0 0.0
        %8932 = vmatpush1.msra.mxu0 0.0
        %8933 = vmatprep.subr.mxu0 0.0
        %8934 = vmatpush1.msra.mxu0 0.0
        %8935 = vmatprep.subr.mxu0 0.0
        %8936 = vmatpush1.msra.mxu0 0.0
        %8937 = vmatprep.subr.mxu0 0.0
        %8938 = vmatpush1.msra.mxu0 0.0
        %8939 = vmatprep.subr.mxu0 0.0
        %8940 = vmatpush1.msra.mxu0 0.0
        %8941 = vmatprep.subr.mxu0 0.0
        %8942 = vmatpush1.msra.mxu0 0.0
        %8943 = vmatprep.subr.mxu0 0.0
        %8944 = vmatpush1.msra.mxu0 %v8345
        %8945 = vmatprep.subr.mxu0 0.0
        %8946 = vmatpush1.msra.mxu0 %v8344
        %8947 = vmatprep.subr.mxu0 0.0
        %8948 = vmatpush1.msra.mxu0 %v8343
        %8949 = vmatprep.subr.mxu0 0.0
        %8950 = vmatpush1.msra.mxu0 %v8342
        %8951 = vmatprep.subr.mxu0 0.0
        %8952 = vmatpush2.msra.mxu0 0.0
        %8953 = vmatprep.subr.mxu0 0.0
        %8954 = vmatpush2.msra.mxu0 0.0
        %8955 = vmatprep.subr.mxu0 0.0
        %8956 = vmatpush2.msra.mxu0 0.0
        %8957 = vmatprep.subr.mxu0 0.0
        %8958 = vmatpush2.msra.mxu0 0.0
        %8959 = vmatprep.subr.mxu0 0.0
        %8960 = vmatpush2.msra.mxu0 0.0
        %8961 = vmatprep.subr.mxu0 0.0
        %8962 = vmatpush2.msra.mxu0 0.0
        %8963 = vmatprep.subr.mxu0 0.0
        %8964 = vmatpush2.msra.mxu0 0.0
        %8965 = vmatprep.subr.mxu0 0.0
        %8966 = vmatpush2.msra.mxu0 0.0
        %8967 = vmatprep.subr.mxu0 0.0
        %8968 = vmatpush2.msra.mxu0 0.0
        %8969 = vmatprep.subr.mxu0 0.0
        %8970 = vmatpush2.msra.mxu0 0.0
        %8971 = vmatprep.subr.mxu0 0.0
        %8972 = vmatpush2.msra.mxu0 0.0
        %8973 = vmatprep.subr.mxu0 0.0
        %8974 = vmatpush2.msra.mxu0 0.0
        %8975 = vmatprep.subr.mxu0 0.0
        %8976 = vmatpush2.msra.mxu0 0.0
        %8977 = vmatprep.subr.mxu0 0.0
        %8978 = vmatpush2.msra.mxu0 0.0
        %8979 = vmatprep.subr.mxu0 0.0
        %8980 = vmatpush2.msra.mxu0 0.0
        %8981 = vmatprep.subr.mxu0 0.0
        %8982 = vmatpush2.msra.mxu0 0.0
        %8983 = vmatprep.mubr.f32.mxu0 0.0
        %8984 = vmatmul.mubr.f32.gmra.mxu0 %v8914
        %v8985 = vpop.f32.mrf.mxu0
        %v8986 = vadd.f32 0.0, %v8985
        %v8987 = vpop.f32.mrf.mxu0
        %8988 = vmatprep.mubr.f32.mxu0 0.0
        %8989 = vmatmul.mubr.f32.gmra.mxu0 %v8917
        %v8990 = vpop.f32.mrf.mxu0
        %v8991 = vadd.f32 0.0, %v8990
        %v8992 = vpop.f32.mrf.mxu0
        %8993 = vdwg.mxu0
        %v8994 = vsel %vm5440, %v8419, 0.0
        %v8995 = vsel %vm5440, %v8500, 0.0
        %v8996 = vadd.f32 %v8994, %v8995
        %v8997 = vsel %vm5440, %v8581, 0.0
        %v8998 = vadd.f32 %v8996, %v8997
        %v8999 = vsel %vm5440, %v8662, 0.0
        %v9000 = vadd.f32 %v8998, %v8999
        %v9001 = vsel %vm5440, %v8743, 0.0
        %v9002 = vadd.f32 %v9000, %v9001
        %v9003 = vsel %vm5440, %v8824, 0.0
        %v9004 = vadd.f32 %v9002, %v9003
        %v9005 = vsel %vm5440, %v8905, 0.0
        %v9006 = vadd.f32 %v9004, %v9005
        %v9007 = vsel %vm5440, %v8986, 0.0
        %v9008 = vadd.f32 %v9006, %v9007
        %v9009 = vsel %vm5440, %v8424, 0.0
        %v9010 = vsel %vm5440, %v8505, 0.0
        %v9011 = vadd.f32 %v9009, %v9010
        %v9012 = vsel %vm5440, %v8586, 0.0
        %v9013 = vadd.f32 %v9011, %v9012
        %v9014 = vsel %vm5440, %v8667, 0.0
        %v9015 = vadd.f32 %v9013, %v9014
        %v9016 = vsel %vm5440, %v8748, 0.0
        %v9017 = vadd.f32 %v9015, %v9016
        %v9018 = vsel %vm5440, %v8829, 0.0
        %v9019 = vadd.f32 %v9017, %v9018
        %v9020 = vsel %vm5440, %v8910, 0.0
        %v9021 = vadd.f32 %v9019, %v9020
        %v9022 = vsel %vm5440, %v8991, 0.0
        %v9023 = vadd.f32 %v9021, %v9022
        %v9024 = vld [vmem:[%s9] sm:$0x1]
        %v9026 = vlaneseq
        %v9027 = vshrl.u32 %v9026, 7
        %v9028 = vsub.s32 0, %v9027
        %v9029 = vrot.slane %v9024, %v9028
        %v9031 = vadd.f32 %v9008, %v9029
        %v9032 = vadd.f32 %v9023, %v9029
        %9033 = vst.msk [vmem:[%s394] sm:$0xff] %vm5440, %v9031
        %9034 = vst.msk [vmem:[%s394 + $0x8] sm:$0xff] %vm5440, %v9032
        %s9035 = sand.u32 %s268, 1
        %s9036 = scalar_lea.sflag [#allocation6], %s9035
        %s9037 = sand.u32 %s268, 1
        %s9038 = smul.addr %s9037, 16
        %s9039 = scalar_lea.vmem [#allocation5], %s9038
        // Predicated region
        $region65: #{tpu_custom_call.1} parent=59 // pred_check
          %p9040 = pneg %p278
        $region66: #{tpu_custom_call.1} parent=59 // pred_check_branch
          %9042 = sbr.rel (%p9040) target = $region68
        $region67: #{tpu_custom_call.1} parent=59 // pred_region
          %s9043 = smul.u32 2, %s29
          %s9045 = ssub.s32 256, 256
          %9046 = vsyncadd %s9036, %s9045
          %s9047 = smul.addr %s28, 4
          %s9048 = sadd.s32 %s9043, %s9047
          %s9049 = smul.addr %s9048, 128
          %s9050 = scalar_lea.hbm %s10, %s9049
          %s9051 = sshll.u32 %s9039, 4
          %s9052 = int_to_ptr.vmem [resolvable:$true] %s9051
          %9057 = dma.vmem_to_hbm [thread:$0]  %s9052, 256, %s9050, %s9036, 128, 128, 8
        $region68: #{tpu_custom_call.1} parent=59 // pred_fallthru
          _
      $region60: #{tpu_custom_call.1} parent=5 // pred_fallthru
        _
      %p9058 = scmp.le.s32.totalorder 2, %s19
      // Predicated region
      $region69: #{tpu_custom_call.1} parent=5 // pred_check
        %p9059 = pneg %p9058
      $region70: #{tpu_custom_call.1} parent=5 // pred_check_branch
        %9061 = sbr.rel (%p9059) target = $region72
      $region71: #{tpu_custom_call.1} parent=5 // pred_region
        %s9062 = ssub.s32 %s19, 2
        // Predicated region
        $region73: #{tpu_custom_call.1} parent=71 // pred_check
          %p9063 = pneg %p284
        $region74: #{tpu_custom_call.1} parent=71 // pred_check_branch
          %9065 = sbr.rel (%p9063) target = $region76
        $region75: #{tpu_custom_call.1} parent=71 // pred_region
          %s9066 = sand.u32 %s269, 1
          %s9067 = scalar_lea.sflag [#allocation6], %s9066
          %s9068 = sand.u32 %s269, 1
          %s9069 = smul.addr %s9068, 16
          %s9070 = scalar_lea.vmem [#allocation5], %s9069
          %9071 = dma.done %s9067, 256
        $region76: #{tpu_custom_call.1} parent=71 // pred_fallthru
          _
      $region72: #{tpu_custom_call.1} parent=5 // pred_fallthru
        _
    $region6: #{tpu_custom_call.1} parent=1 // loop_footer
      %s23 = sadd.s32 1, %s19
    $region7: #{tpu_custom_call.1} parent=1 // loop_footer_branch
      %18 = sbr.rel target = $region3
    $region8: #{tpu_custom_call.1} parent=1 // loop_exit
      _
    %9072 = vsyncpa [#allocation6], 1
    %s9073 = scalar_lea.sflag [#allocation6], 1
    %9074 = vsyncpa %s9073, 1

</llo_original>
